<compile_context>
chip_gen: v7x
topology: tpu7x:2x2x1
jax: 0.10.0
libtpu: 0.0.40
codegen_flags: <defaults>
</compile_context>

<pallas_src>
import jax
import jax.numpy as jnp
from jax.experimental import pallas as pl
from jax.experimental.pallas import tpu as pltpu

# ----------------------------- sizes (small, synthetic) -----------------------------
B, T = 2, 4                 # batch, seqlen
BP = 8                      # per-timestep rows padded to one 8-sublane tile
NP = T * BP                 # padded row count inside the kernel (time-major)
C_IN, IMG = 3, 16           # image channels / spatial
C_CONV = 8                  # conv output channels (stand-in for ResNet trunk)
FEAT = 64                   # per-frame feature dim (stand-in for 2048)
H_FEAT = FEAT               # feat_encoder GRU hidden (== FEAT so residual applies)
H_MOT = 32                  # motion_encoder GRU hidden (stand-in for 512)
VAE_H = 32                  # vae hidden size (stand-in for 512)
MLP_H = 16                  # vae_init_mlp hidden (stand-in for 256)
NPOSE = 24 * 6              # 144, fixed by the module
NSHAPE = 10
NCAM = 3
H_REG = 128                 # regressor hidden (stand-in for 1024)
PACK = 256                  # packed [pose|shape|cam|pad] width (lane-dense, 2x128)
N_STATE = NPOSE + NSHAPE + NCAM   # 157
N_VERTS = 64                # SMPL-lite vertex count (stand-in for 6890)
N_JOINTS = 24

BF16 = jnp.bfloat16


# ================================== fused kernel ====================================

def _gru_step(gi, h, wh, bh):
    """PyTorch nn.GRU cell math with fused [r|z|n] gate layout.
    gi = x_t @ Wi + bi (precomputed/batched); only the h-side matmul is done here.
    Gate math is kept in f32 (v5e has no bf16 VPU/EUP); MXU operands are bf16."""
    hdim = h.shape[-1]
    hh = jnp.dot(h.astype(BF16), wh, preferred_element_type=jnp.float32) + bh
    r = jax.nn.sigmoid(gi[:, :hdim] + hh[:, :hdim])
    z = jax.nn.sigmoid(gi[:, hdim:2 * hdim] + hh[:, hdim:2 * hdim])
    n = jnp.tanh(gi[:, 2 * hdim:] + r * hh[:, 2 * hdim:])
    return (1.0 - z) * n + z * h


def _meva_fused_kernel(
    patches_ref, pool_ref,
    conv_w_ref, conv_b_ref, proj_w_ref, proj_b_ref,
    fg_wi_ref, fg_bi_ref, fg_wh_ref, fg_bh_ref,
    mg_wi_ref, mg_bi_ref, mg_wh_ref, mg_bh_ref,
    mot_lw_ref, mot_lb_ref,
    mlp1_w_ref, mlp1_b_ref, mlp2_w_ref, mlp2_b_ref,
    dg_wi_ref, dg_bi_ref, dg_wh_ref, dg_bh_ref,
    dec_ow_ref, dec_ob_ref,
    reg_w1x_ref, reg_w1p_ref, reg_b1_ref, reg_w2_ref, reg_b2_ref,
    reg_wh_ref, reg_init_ref,
    out_ref,
    y_scr, hdec_scr,
):
    # ---- 1. HMR-lite: conv(im2col matmul) + ReLU + global-avg-pool + feature proj ----
    # TODO(synk): real MEVA_demo loads a ResNet-50 SPIN checkpoint here.
    conv = jnp.dot(patches_ref[...], conv_w_ref[...],
                   preferred_element_type=jnp.float32) + conv_b_ref[...]
    conv = jnp.maximum(conv, 0.0)
    # The constant pool matrix also reorders rows to time-major and pads each
    # timestep's batch to BP=8 rows, so every later per-t slice/store is tile-aligned.
    pooled = jnp.dot(pool_ref[...], conv.astype(BF16),
                     preferred_element_type=jnp.float32)                    # (NP, C)
    feat = jnp.dot(pooled.astype(BF16), proj_w_ref[...],
                   preferred_element_type=jnp.float32) + proj_b_ref[...]    # (NP, FEAT)
    feat_bf = feat.astype(BF16)

    # ---- 2. feat_encoder GRU (+ residual); input proj batched over all NP rows ----
    xwi_feat = jnp.dot(feat_bf, fg_wi_ref[...],
                       preferred_element_type=jnp.float32) + fg_bi_ref[...]  # (NP, 3H)
    fg_wh = fg_wh_ref[...]
    fg_bh = fg_bh_ref[...]
    h = jnp.zeros((BP, H_FEAT), jnp.float32)
    for t in range(T):                                      # T static -> unrolled
        a = t * BP
        h = _gru_step(xwi_feat[a:a + BP, :], h, fg_wh, fg_bh)
        y_scr[a:a + BP, :] = h + feat[a:a + BP, :]          # use_residual (H_FEAT==FEAT)

    y = y_scr[...]                                          # (NP, H_FEAT), time-major
    y_bf = y.astype(BF16)

    # ---- 3. motion_encoder GRU -> tanh -> mean over time -> linear (all fused) ----
    xwi_mot = jnp.dot(y_bf, mg_wi_ref[...],
                      preferred_element_type=jnp.float32) + mg_bi_ref[...]   # (NP, 3Hm)
    mg_wh = mg_wh_ref[...]
    mg_bh = mg_bh_ref[...]
    hm = jnp.zeros((BP, H_MOT), jnp.float32)
    acc = jnp.zeros((BP, H_MOT), jnp.float32)
    for t in range(T):
        a = t * BP
        hm = _gru_step(xwi_mot[a:a + BP, :], hm, mg_wh, mg_bh)
        acc = acc + jnp.tanh(hm)
    motion_z = jnp.dot((acc * (1.0 / T)).astype(BF16), mot_lw_ref[...],
                       preferred_element_type=jnp.float32) + mot_lb_ref[...]  # (BP, VAE_H)

    # ---- 4. vae_init_mlp + decoder GRU input projection (constant over time) ----
    h1 = jnp.tanh(jnp.dot(motion_z.astype(BF16), mlp1_w_ref[...],
                          preferred_element_type=jnp.float32) + mlp1_b_ref[...])
    vae_pose = jnp.dot(h1.astype(BF16), mlp2_w_ref[...],
                       preferred_element_type=jnp.float32) + mlp2_b_ref[...]
    xwi_dec = jnp.dot(vae_pose.astype(BF16), dg_wi_ref[...],
                      preferred_element_type=jnp.float32) + dg_bi_ref[...]    # (BP, 3Hd)

    # ---- 5. simplified VAE decoder GRU; output proj batched & PACK-lane padded ----
    # TODO(synk): real pretrained VAErec decoder unavailable (uses constant input proj).
    dg_wh = dg_wh_ref[...]
    dg_bh = dg_bh_ref[...]
    hd = motion_z
    for t in range(T):
        hd = _gru_step(xwi_dec, hd, dg_wh, dg_bh)
        hdec_scr[t * BP:(t + 1) * BP, :] = hd
    x_r = jnp.dot(hdec_scr[...].astype(BF16), dec_ow_ref[...],
                  preferred_element_type=jnp.float32) + dec_ob_ref[...]       # (NP, PACK)

    # ---- 6. Regressor.iter_refine (n_iter=3 unrolled, packed [pose|shape|cam|0]) ----
    # init_pose = X_r; init_shape/init_cam folded into reg_init (mean params).
    state = x_r + reg_init_ref[...]
    xw1 = jnp.dot(y_bf, reg_w1x_ref[...],
                  preferred_element_type=jnp.float32) + reg_b1_ref[...]       # (NP, H_REG)
    b2b = jnp.broadcast_to(reg_b2_ref[...], (NP, H_REG))   # hoisted (no CSE in loop)
    for _ in range(3):                                      # n_iter = 3
        xc = xw1 + jnp.dot(state.astype(BF16), reg_w1p_ref[...],
                           preferred_element_type=jnp.float32)
        # TODO(synk): nn.Dropout (drop1/drop2) treated as identity (inference mode).
        xc = jnp.dot(xc.astype(BF16), reg_w2_ref[...],
                     preferred_element_type=jnp.float32) + b2b
        state = state + jnp.dot(xc.astype(BF16), reg_wh_ref[...],
                                preferred_element_type=jnp.float32)
    out_ref[...] = state                                     # (NP, 256) lane-dense


def meva_fused_pallas(patches_bf16, p):
    args = [
        patches_bf16, p["pool"],
        p["conv_w"], p["conv_b"], p["featproj_w"], p["featproj_b"],
        p["feat_gru"]["wi"], p["feat_gru"]["bi"],
        p["feat_gru"]["wh"], p["feat_gru"]["bh"],
        p["mot_gru"]["wi"], p["mot_gru"]["bi"],
        p["mot_gru"]["wh"], p["mot_gru"]["bh"],
        p["mot_lin_w"], p["mot_lin_b"],
        p["mlp1_w"], p["mlp1_b"], p["mlp2_w"], p["mlp2_b"],
        p["dec_gru"]["wi"], p["dec_gru"]["bi"],
        p["dec_gru"]["wh"], p["dec_gru"]["bh"],
        p["dec_out_w"], p["dec_out_b"],
        p["reg"]["w1x"], p["reg"]["w1pack"], p["reg"]["b1"],
        p["reg"]["w2"], p["reg"]["b2"], p["reg"]["whead"], p["reg"]["init_rest"],
    ]

    def full(a):
        nd = a.ndim
        return pl.BlockSpec(a.shape, lambda i, _nd=nd: (0,) * _nd)

    return pl.pallas_call(
        _meva_fused_kernel,
        out_shape=jax.ShapeDtypeStruct((NP, PACK), jnp.float32),
        grid=(1,),
        in_specs=[full(a) for a in args],
        out_specs=pl.BlockSpec((NP, PACK), lambda i: (0, 0)),
        scratch_shapes=[pltpu.VMEM((NP, H_FEAT), jnp.float32),
                        pltpu.VMEM((NP, VAE_H), jnp.float32)],
        compiler_params=pltpu.CompilerParams(
            dimension_semantics=("arbitrary",)),
    )(*args)


# ===================================== JAX glue ======================================

def im2col_3x3(x):
    """x: (N, C, H, W) NCHW, 3x3 conv, stride 1, pad 1 -> (N*H*W, C*9)."""
    n, c, h, w = x.shape
    xp = jnp.pad(x, ((0, 0), (0, 0), (1, 1), (1, 1)))
    cols = []
    for dh in range(3):
        for dw in range(3):
            cols.append(xp[:, :, dh:dh + h, dw:dw + w])
    patches = jnp.stack(cols, axis=2)                 # (N, C, 9, H, W)
    patches = patches.transpose(0, 3, 4, 1, 2)        # (N, H, W, C, 9)
    return patches.reshape(n * h * w, c * 9)


def rot6d_to_rotmat(x6):
    """(M, 6) -> (M, 3, 3), as in compute_rotation_matrix_from_ortho6d."""
    a1 = x6[:, 0:3]
    a2 = x6[:, 3:6]
    eps = 1e-8
    b1 = a1 / (jnp.linalg.norm(a1, axis=-1, keepdims=True) + eps)
    b3 = jnp.cross(b1, a2)
    b3 = b3 / (jnp.linalg.norm(b3, axis=-1, keepdims=True) + eps)
    b2 = jnp.cross(b3, b1)
    return jnp.stack([b1, b2, b3], axis=-1)


def rotmat_to_angle_axis(r):
    """(M, 3, 3) -> (M, 3) via quaternion (robust near both 0 and pi)."""
    m00, m01, m02 = r[:, 0, 0], r[:, 0, 1], r[:, 0, 2]
    m10, m11, m12 = r[:, 1, 0], r[:, 1, 1], r[:, 1, 2]
    m20, m21, m22 = r[:, 2, 0], r[:, 2, 1], r[:, 2, 2]
    qw = 0.5 * jnp.sqrt(jnp.maximum(1.0 + m00 + m11 + m22, 0.0))
    qx = 0.5 * jnp.sqrt(jnp.maximum(1.0 + m00 - m11 - m22, 0.0))
    qy = 0.5 * jnp.sqrt(jnp.maximum(1.0 - m00 + m11 - m22, 0.0))
    qz = 0.5 * jnp.sqrt(jnp.maximum(1.0 - m00 - m11 + m22, 0.0))
    qx = jnp.copysign(qx, m21 - m12)
    qy = jnp.copysign(qy, m02 - m20)
    qz = jnp.copysign(qz, m10 - m01)
    qvec = jnp.stack([qx, qy, qz], axis=-1)
    norm = jnp.linalg.norm(qvec, axis=-1)
    angle = 2.0 * jnp.arctan2(norm, qw)
    scale = jnp.where(norm > 1e-8, angle / jnp.maximum(norm, 1e-8), 2.0)
    return qvec * scale[:, None]


def projection(pred_joints, pred_camera):
    """Weak-perspective -> full-perspective projection, matching the torch code."""
    focal = 5000.0
    tz = 2.0 * focal / (224.0 * pred_camera[:, 0] + 1e-9)
    trans = jnp.stack([pred_camera[:, 1], pred_camera[:, 2], tz], axis=-1)
    pts = pred_joints + trans[:, None, :]             # rotation = identity
    z = pts[:, :, 2:3]
    z = jnp.where(jnp.abs(z) < 1e-6, jnp.where(z < 0, -1e-6, 1e-6), z)  # no div-by-0
    proj = pts / z
    kp = jnp.stack([focal * proj[:, :, 0], focal * proj[:, :, 1]], axis=-1)
    return kp / (224.0 / 2.0)


def smpl_lite(rotmat, betas, sp):
    """Synthetic SMPL: shaped template rotated by global orient, joints via regressor.
    # TODO(synk): full SMPL (pose blendshapes + LBS skinning) needs model data files."""
    v_shaped = sp["v_template"][None] + jnp.einsum("vdk,nk->nvd", sp["shapedirs"], betas)
    r0 = rotmat[:, 0]                                  # global orientation (N,3,3)
    verts = jnp.einsum("nij,nvj->nvi", r0, v_shaped)
    joints = jnp.einsum("jv,nvd->njd", sp["J_regressor"], verts)
    return verts, joints


# ================================ parameter creation =================================

def _w(key, shape, scale=0.05, dtype=jnp.float32):
    return (scale * jax.random.normal(key, shape, dtype=jnp.float32)).astype(dtype)


def _gru_params(key, fin, h):
    """Fused-gate GRU params: columns are [r | z | n] blocks (PyTorch gate order)."""
    ks = jax.random.split(key, 4)
    return {
        "wi": _w(ks[0], (fin, 3 * h), dtype=BF16),
        "wh": _w(ks[1], (h, 3 * h), dtype=BF16),
        "bi": _w(ks[2], (1, 3 * h)),
        "bh": _w(ks[3], (1, 3 * h)),
    }


def _make_pool_matrix():
    """(NP, B*T*HW) constant: row r = t*BP + j averages the HW pixels of frame
    (b = j % B, t) -> pooling, b-major->time-major reorder, and batch padding to
    BP=8 rows (pad rows replicate real rows; dropped in the glue) in one matmul."""
    hw = IMG * IMG
    n_frames = B * T
    rows = jnp.arange(T * BP)
    t_idx = rows // BP
    j_idx = rows % BP
    frame = (j_idx % B) * T + t_idx                     # b-major frame index
    col_frame = jnp.arange(n_frames * hw) // hw
    pool = (col_frame[None, :] == frame[:, None]).astype(jnp.float32) / float(hw)
    return pool.astype(BF16)


def init_params(key):
    keys = jax.random.split(key, 32)
    p = {}
    # HMR-lite feature extractor (TODO(synk): real HMR is ResNet-50 + .pth checkpoint).
    p["conv_w"] = _w(keys[0], (C_IN * 9, C_CONV), dtype=BF16)
    p["conv_b"] = _w(keys[1], (1, C_CONV))
    p["featproj_w"] = _w(keys[2], (C_CONV, FEAT), 0.2, dtype=BF16)
    p["featproj_b"] = _w(keys[3], (1, FEAT))
    # constant pool / reorder / batch-pad matrix (built once here, not in the forward)
    p["pool"] = _make_pool_matrix()
    # TemporalEncoders.
    p["feat_gru"] = _gru_params(keys[4], FEAT, H_FEAT)
    p["mot_gru"] = _gru_params(keys[5], H_FEAT, H_MOT)
    p["mot_lin_w"] = _w(keys[6], (H_MOT, VAE_H), dtype=BF16)
    p["mot_lin_b"] = _w(keys[7], (1, VAE_H))
    # vae_init_mlp.
    p["mlp1_w"] = _w(keys[8], (VAE_H, MLP_H), dtype=BF16)
    p["mlp1_b"] = _w(keys[9], (1, MLP_H))
    p["mlp2_w"] = _w(keys[10], (MLP_H, NPOSE), dtype=BF16)
    p["mlp2_b"] = _w(keys[11], (1, NPOSE))
    # VAE decoder (simplified; TODO(synk): real VAErec pretrained decoder unavailable).
    p["dec_gru"] = _gru_params(keys[12], NPOSE, VAE_H)
    # decoder output projection zero-padded to PACK lanes (lane-dense, doubles as the
    # packed regressor init_pose block).
    dec_w = _w(keys[13], (VAE_H, NPOSE))
    dec_b = _w(keys[14], (1, NPOSE))
    p["dec_out_w"] = (jnp.zeros((VAE_H, PACK), jnp.float32)
                      .at[:, :NPOSE].set(dec_w)).astype(BF16)
    p["dec_out_b"] = jnp.zeros((1, PACK), jnp.float32).at[:, :NPOSE].set(dec_b)
    # Regressor: fc1 split into [x | packed-state] blocks, heads packed + zero padded.
    w1p = _w(keys[16], (NPOSE, H_REG))
    w1s = _w(keys[17], (NSHAPE, H_REG))
    w1c = _w(keys[18], (NCAM, H_REG))
    w1pack = jnp.zeros((PACK, H_REG), jnp.float32)
    w1pack = (w1pack.at[:NPOSE].set(w1p)
              .at[NPOSE:NPOSE + NSHAPE].set(w1s)
              .at[NPOSE + NSHAPE:N_STATE].set(w1c))
    wp = _w(keys[22], (H_REG, NPOSE), 0.01)       # xavier gain 0.01 analogue
    ws = _w(keys[23], (H_REG, NSHAPE), 0.01)
    wc = _w(keys[24], (H_REG, NCAM), 0.01)
    whead = jnp.zeros((H_REG, PACK), jnp.float32)
    whead = (whead.at[:, :NPOSE].set(wp)
             .at[:, NPOSE:NPOSE + NSHAPE].set(ws)
             .at[:, NPOSE + NSHAPE:N_STATE].set(wc))
    # mean params folded into a packed init row: [0(pose) | shape | cam | 0 pad]
    # (stand-in for smpl_mean_params .npz buffers; head biases are zero).
    init_shape = 0.1 * jnp.ones((NSHAPE,), jnp.float32)
    init_cam = jnp.array([0.9, 0.0, 0.0], jnp.float32)
    init_rest = jnp.zeros((1, PACK), jnp.float32)
    init_rest = init_rest.at[0, NPOSE:NPOSE + NSHAPE].set(init_shape)
    init_rest = init_rest.at[0, NPOSE + NSHAPE:N_STATE].set(init_cam)
    p["reg"] = {
        "w1x": _w(keys[15], (FEAT, H_REG), dtype=BF16),
        "w1pack": w1pack.astype(BF16),
        "b1": _w(keys[19], (1, H_REG)),
        "w2": _w(keys[20], (H_REG, H_REG), dtype=BF16),
        "b2": _w(keys[21], (1, H_REG)),
        "whead": whead.astype(BF16),
        "init_rest": init_rest,
    }
    # SMPL-lite synthetic model data.
    p["smpl"] = {
        "v_template": _w(keys[25], (N_VERTS, 3), 1.0),
        "shapedirs": _w(keys[26], (N_VERTS, 3, NSHAPE), 0.02),
        "J_regressor": jnp.abs(_w(keys[27], (N_JOINTS, N_VERTS), 1.0)) / N_VERTS,
    }
    return p


# ==================================== full forward ===================================

def meva_demo_forward(x_btchw, p):
    b, t, c, h, w = x_btchw.shape
    n = b * t

    # im2col for the 3x3 conv trunk (stand-in for the ResNet-50 SPIN feature extractor)
    patches = im2col_3x3(x_btchw.reshape(n, c, h, w)).astype(BF16)       # (N*HW, C*9)

    # ONE fused Pallas kernel: conv/pool/proj -> feat GRU(+res) -> motion GRU ->
    # vae_init_mlp -> decoder GRU -> Regressor(3x). Output rows are time-major and
    # batch-padded to BP rows per timestep (pad rows dropped below).
    packed_p = meva_fused_pallas(patches, p)                              # (NP, 256)
    packed = packed_p.reshape(t, BP, PACK)[:, :b]                         # (T, B, 256)
    packed = jnp.transpose(packed, (1, 0, 2)).reshape(n, PACK)            # b-major rows

    pred_pose = packed[:, :NPOSE]
    pred_shape = packed[:, NPOSE:NPOSE + NSHAPE]
    pred_cam = packed[:, NPOSE + NSHAPE:N_STATE]

    # SMPL + projection + output dict (pure JAX glue)
    pred_rotmat = rot6d_to_rotmat(pred_pose.reshape(-1, 6)).reshape(n, 24, 3, 3)
    pred_vertices, pred_joints = smpl_lite(pred_rotmat, pred_shape, p["smpl"])
    pred_kp2d = projection(pred_joints, pred_cam)
    pose_aa = rotmat_to_angle_axis(pred_rotmat.reshape(-1, 3, 3)).reshape(n, 72)
    theta = jnp.concatenate([pred_cam, pose_aa, pred_shape], axis=1)      # (N, 85)

    out = {
        "theta": theta.reshape(b, t, -1),
        "verts": pred_vertices.reshape(b, t, -1, 3),
        "kp_2d": pred_kp2d.reshape(b, t, -1, 2),
        "kp_3d": pred_joints.reshape(b, t, -1, 3),
        "rotmat": pred_rotmat.reshape(b, t, -1, 3, 3),
    }
    return [out]


# ======================================== main =======================================

if __name__ == "__main__":
    params = init_params(jax.random.PRNGKey(42))
    x = jax.random.normal(jax.random.PRNGKey(0), (B, T, C_IN, IMG, IMG),
                          dtype=jnp.float32)
    forward = jax.jit(meva_demo_forward)
    smpl_output = forward(x, params)
    jax.tree_util.tree_map(jax.block_until_ready, smpl_output)
    s = smpl_output[0]
    assert s["theta"].shape == (B, T, 85)
    assert s["verts"].shape == (B, T, N_VERTS, 3)
    assert s["kp_2d"].shape == (B, T, N_JOINTS, 2)
    assert s["kp_3d"].shape == (B, T, N_JOINTS, 3)
    assert s["rotmat"].shape == (B, T, 24, 3, 3)
    assert all(bool(jnp.all(jnp.isfinite(v))) for v in s.values())
    print("KERNEL_OK")
</pallas_src>

<mosaic_0001>
module attributes {stable_mosaic.version = 11 : i64} {
  func.func @_meva_fused_kernel(%arg0: i32, %arg1: memref<2048x27xbf16, #tpu.memory_space<vmem>>, %arg2: memref<32x2048xbf16, #tpu.memory_space<vmem>>, %arg3: memref<27x8xbf16, #tpu.memory_space<vmem>>, %arg4: memref<1x8xf32, #tpu.memory_space<vmem>>, %arg5: memref<8x64xbf16, #tpu.memory_space<vmem>>, %arg6: memref<1x64xf32, #tpu.memory_space<vmem>>, %arg7: memref<64x192xbf16, #tpu.memory_space<vmem>>, %arg8: memref<1x192xf32, #tpu.memory_space<vmem>>, %arg9: memref<64x192xbf16, #tpu.memory_space<vmem>>, %arg10: memref<1x192xf32, #tpu.memory_space<vmem>>, %arg11: memref<64x96xbf16, #tpu.memory_space<vmem>>, %arg12: memref<1x96xf32, #tpu.memory_space<vmem>>, %arg13: memref<32x96xbf16, #tpu.memory_space<vmem>>, %arg14: memref<1x96xf32, #tpu.memory_space<vmem>>, %arg15: memref<32x32xbf16, #tpu.memory_space<vmem>>, %arg16: memref<1x32xf32, #tpu.memory_space<vmem>>, %arg17: memref<32x16xbf16, #tpu.memory_space<vmem>>, %arg18: memref<1x16xf32, #tpu.memory_space<vmem>>, %arg19: memref<16x144xbf16, #tpu.memory_space<vmem>>, %arg20: memref<1x144xf32, #tpu.memory_space<vmem>>, %arg21: memref<144x96xbf16, #tpu.memory_space<vmem>>, %arg22: memref<1x96xf32, #tpu.memory_space<vmem>>, %arg23: memref<32x96xbf16, #tpu.memory_space<vmem>>, %arg24: memref<1x96xf32, #tpu.memory_space<vmem>>, %arg25: memref<32x256xbf16, #tpu.memory_space<vmem>>, %arg26: memref<1x256xf32, #tpu.memory_space<vmem>>, %arg27: memref<64x128xbf16, #tpu.memory_space<vmem>>, %arg28: memref<256x128xbf16, #tpu.memory_space<vmem>>, %arg29: memref<1x128xf32, #tpu.memory_space<vmem>>, %arg30: memref<128x128xbf16, #tpu.memory_space<vmem>>, %arg31: memref<1x128xf32, #tpu.memory_space<vmem>>, %arg32: memref<128x256xbf16, #tpu.memory_space<vmem>>, %arg33: memref<1x256xf32, #tpu.memory_space<vmem>>, %arg34: memref<32x256xf32, #tpu.memory_space<vmem>>, %arg35: memref<32x64xf32, #tpu.memory_space<vmem>>, %arg36: memref<32x32xf32, #tpu.memory_space<vmem>>) attributes {dimension_semantics = [#tpu.dimension_semantics<arbitrary>], iteration_bounds = array<i64: 1>, scalar_prefetch = 0 : i64, scratch_operands = 2 : i64, tpu.core_type = #tpu.core_type<tc>, window_params = [{pipeline_mode = #tpu.pipeline_mode<synchronous>, transform_indices = @transform_0, window_bounds = array<i64: 2048, 27>}, {pipeline_mode = #tpu.pipeline_mode<synchronous>, transform_indices = @transform_1, window_bounds = array<i64: 32, 2048>}, {pipeline_mode = #tpu.pipeline_mode<synchronous>, transform_indices = @transform_2, window_bounds = array<i64: 27, 8>}, {pipeline_mode = #tpu.pipeline_mode<synchronous>, transform_indices = @transform_3, window_bounds = array<i64: 1, 8>}, {pipeline_mode = #tpu.pipeline_mode<synchronous>, transform_indices = @transform_4, window_bounds = array<i64: 8, 64>}, {pipeline_mode = #tpu.pipeline_mode<synchronous>, transform_indices = @transform_5, window_bounds = array<i64: 1, 64>}, {pipeline_mode = #tpu.pipeline_mode<synchronous>, transform_indices = @transform_6, window_bounds = array<i64: 64, 192>}, {pipeline_mode = #tpu.pipeline_mode<synchronous>, transform_indices = @transform_7, window_bounds = array<i64: 1, 192>}, {pipeline_mode = #tpu.pipeline_mode<synchronous>, transform_indices = @transform_8, window_bounds = array<i64: 64, 192>}, {pipeline_mode = #tpu.pipeline_mode<synchronous>, transform_indices = @transform_9, window_bounds = array<i64: 1, 192>}, {pipeline_mode = #tpu.pipeline_mode<synchronous>, transform_indices = @transform_10, window_bounds = array<i64: 64, 96>}, {pipeline_mode = #tpu.pipeline_mode<synchronous>, transform_indices = @transform_11, window_bounds = array<i64: 1, 96>}, {pipeline_mode = #tpu.pipeline_mode<synchronous>, transform_indices = @transform_12, window_bounds = array<i64: 32, 96>}, {pipeline_mode = #tpu.pipeline_mode<synchronous>, transform_indices = @transform_13, window_bounds = array<i64: 1, 96>}, {pipeline_mode = #tpu.pipeline_mode<synchronous>, transform_indices = @transform_14, window_bounds = array<i64: 32, 32>}, {pipeline_mode = #tpu.pipeline_mode<synchronous>, transform_indices = @transform_15, window_bounds = array<i64: 1, 32>}, {pipeline_mode = #tpu.pipeline_mode<synchronous>, transform_indices = @transform_16, window_bounds = array<i64: 32, 16>}, {pipeline_mode = #tpu.pipeline_mode<synchronous>, transform_indices = @transform_17, window_bounds = array<i64: 1, 16>}, {pipeline_mode = #tpu.pipeline_mode<synchronous>, transform_indices = @transform_18, window_bounds = array<i64: 16, 144>}, {pipeline_mode = #tpu.pipeline_mode<synchronous>, transform_indices = @transform_19, window_bounds = array<i64: 1, 144>}, {pipeline_mode = #tpu.pipeline_mode<synchronous>, transform_indices = @transform_20, window_bounds = array<i64: 144, 96>}, {pipeline_mode = #tpu.pipeline_mode<synchronous>, transform_indices = @transform_21, window_bounds = array<i64: 1, 96>}, {pipeline_mode = #tpu.pipeline_mode<synchronous>, transform_indices = @transform_22, window_bounds = array<i64: 32, 96>}, {pipeline_mode = #tpu.pipeline_mode<synchronous>, transform_indices = @transform_23, window_bounds = array<i64: 1, 96>}, {pipeline_mode = #tpu.pipeline_mode<synchronous>, transform_indices = @transform_24, window_bounds = array<i64: 32, 256>}, {pipeline_mode = #tpu.pipeline_mode<synchronous>, transform_indices = @transform_25, window_bounds = array<i64: 1, 256>}, {pipeline_mode = #tpu.pipeline_mode<synchronous>, transform_indices = @transform_26, window_bounds = array<i64: 64, 128>}, {pipeline_mode = #tpu.pipeline_mode<synchronous>, transform_indices = @transform_27, window_bounds = array<i64: 256, 128>}, {pipeline_mode = #tpu.pipeline_mode<synchronous>, transform_indices = @transform_28, window_bounds = array<i64: 1, 128>}, {pipeline_mode = #tpu.pipeline_mode<synchronous>, transform_indices = @transform_29, window_bounds = array<i64: 128, 128>}, {pipeline_mode = #tpu.pipeline_mode<synchronous>, transform_indices = @transform_30, window_bounds = array<i64: 1, 128>}, {pipeline_mode = #tpu.pipeline_mode<synchronous>, transform_indices = @transform_31, window_bounds = array<i64: 128, 256>}, {pipeline_mode = #tpu.pipeline_mode<synchronous>, transform_indices = @transform_32, window_bounds = array<i64: 1, 256>}, {pipeline_mode = #tpu.pipeline_mode<synchronous>, transform_indices = @transform_33, window_bounds = array<i64: 32, 256>}]} {
    %c0 = arith.constant 0 : index
    %c0_0 = arith.constant 0 : index
    %0 = vector.load %arg1[%c0, %c0_0] : memref<2048x27xbf16, #tpu.memory_space<vmem>>, vector<2048x27xbf16>
    %c0_1 = arith.constant 0 : index
    %c0_2 = arith.constant 0 : index
    %1 = vector.load %arg3[%c0_1, %c0_2] : memref<27x8xbf16, #tpu.memory_space<vmem>>, vector<27x8xbf16>
    %cst = arith.constant dense<0.000000e+00> : vector<2048x8xf32>
    %2 = tpu.matmul %0, %1, %cst {dimension_numbers = #tpu.dot_dimension_numbers<[1], [0], [0], [1], [0, 0, 1, 1], [], []>} : vector<2048x27xbf16>, vector<27x8xbf16>, vector<2048x8xf32> -> vector<2048x8xf32>
    %c0_3 = arith.constant 0 : index
    %c0_4 = arith.constant 0 : index
    %3 = vector.load %arg4[%c0_3, %c0_4] : memref<1x8xf32, #tpu.memory_space<vmem>>, vector<1x8xf32>
    %4 = vector.broadcast %3 : vector<1x8xf32> to vector<2048x8xf32>
    %5 = arith.addf %2, %4 : vector<2048x8xf32>
    %cst_5 = arith.constant 0.000000e+00 : f32
    %6 = vector.broadcast %cst_5 : f32 to vector<2048x8xf32>
    %7 = arith.maximumf %5, %6 : vector<2048x8xf32>
    %c0_6 = arith.constant 0 : index
    %c0_7 = arith.constant 0 : index
    %8 = vector.load %arg2[%c0_6, %c0_7] : memref<32x2048xbf16, #tpu.memory_space<vmem>>, vector<32x2048xbf16>
    %9 = arith.truncf %7 : vector<2048x8xf32> to vector<2048x8xbf16>
    %cst_8 = arith.constant dense<0.000000e+00> : vector<32x8xf32>
    %10 = tpu.matmul %8, %9, %cst_8 {dimension_numbers = #tpu.dot_dimension_numbers<[1], [0], [0], [1], [0, 0, 1, 1], [], []>} : vector<32x2048xbf16>, vector<2048x8xbf16>, vector<32x8xf32> -> vector<32x8xf32>
    %11 = arith.truncf %10 : vector<32x8xf32> to vector<32x8xbf16>
    %c0_9 = arith.constant 0 : index
    %c0_10 = arith.constant 0 : index
    %12 = vector.load %arg5[%c0_9, %c0_10] : memref<8x64xbf16, #tpu.memory_space<vmem>>, vector<8x64xbf16>
    %cst_11 = arith.constant dense<0.000000e+00> : vector<32x64xf32>
    %13 = tpu.matmul %11, %12, %cst_11 {dimension_numbers = #tpu.dot_dimension_numbers<[1], [0], [0], [1], [0, 0, 1, 1], [], []>} : vector<32x8xbf16>, vector<8x64xbf16>, vector<32x64xf32> -> vector<32x64xf32>
    %c0_12 = arith.constant 0 : index
    %c0_13 = arith.constant 0 : index
    %14 = vector.load %arg6[%c0_12, %c0_13] : memref<1x64xf32, #tpu.memory_space<vmem>>, vector<1x64xf32>
    %15 = vector.broadcast %14 : vector<1x64xf32> to vector<32x64xf32>
    %16 = arith.addf %13, %15 : vector<32x64xf32>
    %17 = arith.truncf %16 : vector<32x64xf32> to vector<32x64xbf16>
    %c0_14 = arith.constant 0 : index
    %c0_15 = arith.constant 0 : index
    %18 = vector.load %arg7[%c0_14, %c0_15] : memref<64x192xbf16, #tpu.memory_space<vmem>>, vector<64x192xbf16>
    %cst_16 = arith.constant dense<0.000000e+00> : vector<32x192xf32>
    %19 = tpu.matmul %17, %18, %cst_16 {dimension_numbers = #tpu.dot_dimension_numbers<[1], [0], [0], [1], [0, 0, 1, 1], [], []>} : vector<32x64xbf16>, vector<64x192xbf16>, vector<32x192xf32> -> vector<32x192xf32>
    %c0_17 = arith.constant 0 : index
    %c0_18 = arith.constant 0 : index
    %20 = vector.load %arg8[%c0_17, %c0_18] : memref<1x192xf32, #tpu.memory_space<vmem>>, vector<1x192xf32>
    %21 = vector.broadcast %20 : vector<1x192xf32> to vector<32x192xf32>
    %22 = arith.addf %19, %21 : vector<32x192xf32>
    %c0_19 = arith.constant 0 : index
    %c0_20 = arith.constant 0 : index
    %23 = vector.load %arg9[%c0_19, %c0_20] : memref<64x192xbf16, #tpu.memory_space<vmem>>, vector<64x192xbf16>
    %c0_21 = arith.constant 0 : index
    %c0_22 = arith.constant 0 : index
    %24 = vector.load %arg10[%c0_21, %c0_22] : memref<1x192xf32, #tpu.memory_space<vmem>>, vector<1x192xf32>
    %cst_23 = arith.constant 0.000000e+00 : f32
    %25 = vector.broadcast %cst_23 : f32 to vector<8x64xf32>
    %26 = vector.extract_strided_slice %22 {offsets = [0, 0], sizes = [8, 192], strides = [1, 1]} : vector<32x192xf32> to vector<8x192xf32>
    %27 = arith.truncf %25 : vector<8x64xf32> to vector<8x64xbf16>
    %cst_24 = arith.constant dense<0.000000e+00> : vector<8x192xf32>
    %28 = tpu.matmul %27, %23, %cst_24 {dimension_numbers = #tpu.dot_dimension_numbers<[1], [0], [0], [1], [0, 0, 1, 1], [], []>} : vector<8x64xbf16>, vector<64x192xbf16>, vector<8x192xf32> -> vector<8x192xf32>
    %29 = vector.broadcast %24 : vector<1x192xf32> to vector<8x192xf32>
    %30 = arith.addf %28, %29 : vector<8x192xf32>
    %31 = vector.extract_strided_slice %26 {offsets = [0, 0], sizes = [8, 64], strides = [1, 1]} : vector<8x192xf32> to vector<8x64xf32>
    %32 = vector.extract_strided_slice %30 {offsets = [0, 0], sizes = [8, 64], strides = [1, 1]} : vector<8x192xf32> to vector<8x64xf32>
    %33 = arith.addf %31, %32 : vector<8x64xf32>
    %34 = arith.negf %33 : vector<8x64xf32>
    %35 = math.exp %34 : vector<8x64xf32>
    %cst_25 = arith.constant 1.000000e+00 : f32
    %36 = vector.broadcast %cst_25 : f32 to vector<8x64xf32>
    %37 = arith.addf %36, %35 : vector<8x64xf32>
    %38 = arith.divf %36, %37 : vector<8x64xf32>
    %39 = vector.extract_strided_slice %26 {offsets = [0, 64], sizes = [8, 64], strides = [1, 1]} : vector<8x192xf32> to vector<8x64xf32>
    %40 = vector.extract_strided_slice %30 {offsets = [0, 64], sizes = [8, 64], strides = [1, 1]} : vector<8x192xf32> to vector<8x64xf32>
    %41 = arith.addf %39, %40 : vector<8x64xf32>
    %42 = arith.negf %41 : vector<8x64xf32>
    %43 = math.exp %42 : vector<8x64xf32>
    %cst_26 = arith.constant 1.000000e+00 : f32
    %44 = vector.broadcast %cst_26 : f32 to vector<8x64xf32>
    %45 = arith.addf %44, %43 : vector<8x64xf32>
    %46 = arith.divf %44, %45 : vector<8x64xf32>
    %47 = vector.extract_strided_slice %26 {offsets = [0, 128], sizes = [8, 64], strides = [1, 1]} : vector<8x192xf32> to vector<8x64xf32>
    %48 = vector.extract_strided_slice %30 {offsets = [0, 128], sizes = [8, 64], strides = [1, 1]} : vector<8x192xf32> to vector<8x64xf32>
    %49 = arith.mulf %38, %48 : vector<8x64xf32>
    %50 = arith.addf %47, %49 : vector<8x64xf32>
    %51 = math.tanh %50 : vector<8x64xf32>
    %cst_27 = arith.constant 1.000000e+00 : f32
    %52 = vector.broadcast %cst_27 : f32 to vector<8x64xf32>
    %53 = arith.subf %52, %46 : vector<8x64xf32>
    %54 = arith.mulf %53, %51 : vector<8x64xf32>
    %55 = arith.mulf %46, %25 : vector<8x64xf32>
    %56 = arith.addf %54, %55 : vector<8x64xf32>
    %57 = vector.extract_strided_slice %16 {offsets = [0, 0], sizes = [8, 64], strides = [1, 1]} : vector<32x64xf32> to vector<8x64xf32>
    %58 = arith.addf %56, %57 : vector<8x64xf32>
    %c0_28 = arith.constant 0 : index
    %c0_29 = arith.constant 0 : index
    %59 = vector.load %arg35[%c0_28, %c0_29] : memref<32x64xf32, #tpu.memory_space<vmem>>, vector<8x64xf32>
    tpu.vector_store %arg35[%c0_28, %c0_29], %58 {strides = array<i32>} : memref<32x64xf32, #tpu.memory_space<vmem>>, vector<8x64xf32>,
    %60 = vector.extract_strided_slice %22 {offsets = [8, 0], sizes = [8, 192], strides = [1, 1]} : vector<32x192xf32> to vector<8x192xf32>
    %61 = arith.truncf %56 : vector<8x64xf32> to vector<8x64xbf16>
    %cst_30 = arith.constant dense<0.000000e+00> : vector<8x192xf32>
    %62 = tpu.matmul %61, %23, %cst_30 {dimension_numbers = #tpu.dot_dimension_numbers<[1], [0], [0], [1], [0, 0, 1, 1], [], []>} : vector<8x64xbf16>, vector<64x192xbf16>, vector<8x192xf32> -> vector<8x192xf32>
    %63 = vector.broadcast %24 : vector<1x192xf32> to vector<8x192xf32>
    %64 = arith.addf %62, %63 : vector<8x192xf32>
    %65 = vector.extract_strided_slice %60 {offsets = [0, 0], sizes = [8, 64], strides = [1, 1]} : vector<8x192xf32> to vector<8x64xf32>
    %66 = vector.extract_strided_slice %64 {offsets = [0, 0], sizes = [8, 64], strides = [1, 1]} : vector<8x192xf32> to vector<8x64xf32>
    %67 = arith.addf %65, %66 : vector<8x64xf32>
    %68 = arith.negf %67 : vector<8x64xf32>
    %69 = math.exp %68 : vector<8x64xf32>
    %cst_31 = arith.constant 1.000000e+00 : f32
    %70 = vector.broadcast %cst_31 : f32 to vector<8x64xf32>
    %71 = arith.addf %70, %69 : vector<8x64xf32>
    %72 = arith.divf %70, %71 : vector<8x64xf32>
    %73 = vector.extract_strided_slice %60 {offsets = [0, 64], sizes = [8, 64], strides = [1, 1]} : vector<8x192xf32> to vector<8x64xf32>
    %74 = vector.extract_strided_slice %64 {offsets = [0, 64], sizes = [8, 64], strides = [1, 1]} : vector<8x192xf32> to vector<8x64xf32>
    %75 = arith.addf %73, %74 : vector<8x64xf32>
    %76 = arith.negf %75 : vector<8x64xf32>
    %77 = math.exp %76 : vector<8x64xf32>
    %cst_32 = arith.constant 1.000000e+00 : f32
    %78 = vector.broadcast %cst_32 : f32 to vector<8x64xf32>
    %79 = arith.addf %78, %77 : vector<8x64xf32>
    %80 = arith.divf %78, %79 : vector<8x64xf32>
    %81 = vector.extract_strided_slice %60 {offsets = [0, 128], sizes = [8, 64], strides = [1, 1]} : vector<8x192xf32> to vector<8x64xf32>
    %82 = vector.extract_strided_slice %64 {offsets = [0, 128], sizes = [8, 64], strides = [1, 1]} : vector<8x192xf32> to vector<8x64xf32>
    %83 = arith.mulf %72, %82 : vector<8x64xf32>
    %84 = arith.addf %81, %83 : vector<8x64xf32>
    %85 = math.tanh %84 : vector<8x64xf32>
    %cst_33 = arith.constant 1.000000e+00 : f32
    %86 = vector.broadcast %cst_33 : f32 to vector<8x64xf32>
    %87 = arith.subf %86, %80 : vector<8x64xf32>
    %88 = arith.mulf %87, %85 : vector<8x64xf32>
    %89 = arith.mulf %80, %56 : vector<8x64xf32>
    %90 = arith.addf %88, %89 : vector<8x64xf32>
    %91 = vector.extract_strided_slice %16 {offsets = [8, 0], sizes = [8, 64], strides = [1, 1]} : vector<32x64xf32> to vector<8x64xf32>
    %92 = arith.addf %90, %91 : vector<8x64xf32>
    %c8 = arith.constant 8 : index
    %c0_34 = arith.constant 0 : index
    %93 = vector.load %arg35[%c8, %c0_34] : memref<32x64xf32, #tpu.memory_space<vmem>>, vector<8x64xf32>
    tpu.vector_store %arg35[%c8, %c0_34], %92 {strides = array<i32>} : memref<32x64xf32, #tpu.memory_space<vmem>>, vector<8x64xf32>,
    %94 = vector.extract_strided_slice %22 {offsets = [16, 0], sizes = [8, 192], strides = [1, 1]} : vector<32x192xf32> to vector<8x192xf32>
    %95 = arith.truncf %90 : vector<8x64xf32> to vector<8x64xbf16>
    %cst_35 = arith.constant dense<0.000000e+00> : vector<8x192xf32>
    %96 = tpu.matmul %95, %23, %cst_35 {dimension_numbers = #tpu.dot_dimension_numbers<[1], [0], [0], [1], [0, 0, 1, 1], [], []>} : vector<8x64xbf16>, vector<64x192xbf16>, vector<8x192xf32> -> vector<8x192xf32>
    %97 = vector.broadcast %24 : vector<1x192xf32> to vector<8x192xf32>
    %98 = arith.addf %96, %97 : vector<8x192xf32>
    %99 = vector.extract_strided_slice %94 {offsets = [0, 0], sizes = [8, 64], strides = [1, 1]} : vector<8x192xf32> to vector<8x64xf32>
    %100 = vector.extract_strided_slice %98 {offsets = [0, 0], sizes = [8, 64], strides = [1, 1]} : vector<8x192xf32> to vector<8x64xf32>
    %101 = arith.addf %99, %100 : vector<8x64xf32>
    %102 = arith.negf %101 : vector<8x64xf32>
    %103 = math.exp %102 : vector<8x64xf32>
    %cst_36 = arith.constant 1.000000e+00 : f32
    %104 = vector.broadcast %cst_36 : f32 to vector<8x64xf32>
    %105 = arith.addf %104, %103 : vector<8x64xf32>
    %106 = arith.divf %104, %105 : vector<8x64xf32>
    %107 = vector.extract_strided_slice %94 {offsets = [0, 64], sizes = [8, 64], strides = [1, 1]} : vector<8x192xf32> to vector<8x64xf32>
    %108 = vector.extract_strided_slice %98 {offsets = [0, 64], sizes = [8, 64], strides = [1, 1]} : vector<8x192xf32> to vector<8x64xf32>
    %109 = arith.addf %107, %108 : vector<8x64xf32>
    %110 = arith.negf %109 : vector<8x64xf32>
    %111 = math.exp %110 : vector<8x64xf32>
    %cst_37 = arith.constant 1.000000e+00 : f32
    %112 = vector.broadcast %cst_37 : f32 to vector<8x64xf32>
    %113 = arith.addf %112, %111 : vector<8x64xf32>
    %114 = arith.divf %112, %113 : vector<8x64xf32>
    %115 = vector.extract_strided_slice %94 {offsets = [0, 128], sizes = [8, 64], strides = [1, 1]} : vector<8x192xf32> to vector<8x64xf32>
    %116 = vector.extract_strided_slice %98 {offsets = [0, 128], sizes = [8, 64], strides = [1, 1]} : vector<8x192xf32> to vector<8x64xf32>
    %117 = arith.mulf %106, %116 : vector<8x64xf32>
    %118 = arith.addf %115, %117 : vector<8x64xf32>
    %119 = math.tanh %118 : vector<8x64xf32>
    %cst_38 = arith.constant 1.000000e+00 : f32
    %120 = vector.broadcast %cst_38 : f32 to vector<8x64xf32>
    %121 = arith.subf %120, %114 : vector<8x64xf32>
    %122 = arith.mulf %121, %119 : vector<8x64xf32>
    %123 = arith.mulf %114, %90 : vector<8x64xf32>
    %124 = arith.addf %122, %123 : vector<8x64xf32>
    %125 = vector.extract_strided_slice %16 {offsets = [16, 0], sizes = [8, 64], strides = [1, 1]} : vector<32x64xf32> to vector<8x64xf32>
    %126 = arith.addf %124, %125 : vector<8x64xf32>
    %c16 = arith.constant 16 : index
    %c0_39 = arith.constant 0 : index
    %127 = vector.load %arg35[%c16, %c0_39] : memref<32x64xf32, #tpu.memory_space<vmem>>, vector<8x64xf32>
    tpu.vector_store %arg35[%c16, %c0_39], %126 {strides = array<i32>} : memref<32x64xf32, #tpu.memory_space<vmem>>, vector<8x64xf32>,
    %128 = vector.extract_strided_slice %22 {offsets = [24, 0], sizes = [8, 192], strides = [1, 1]} : vector<32x192xf32> to vector<8x192xf32>
    %129 = arith.truncf %124 : vector<8x64xf32> to vector<8x64xbf16>
    %cst_40 = arith.constant dense<0.000000e+00> : vector<8x192xf32>
    %130 = tpu.matmul %129, %23, %cst_40 {dimension_numbers = #tpu.dot_dimension_numbers<[1], [0], [0], [1], [0, 0, 1, 1], [], []>} : vector<8x64xbf16>, vector<64x192xbf16>, vector<8x192xf32> -> vector<8x192xf32>
    %131 = vector.broadcast %24 : vector<1x192xf32> to vector<8x192xf32>
    %132 = arith.addf %130, %131 : vector<8x192xf32>
    %133 = vector.extract_strided_slice %128 {offsets = [0, 0], sizes = [8, 64], strides = [1, 1]} : vector<8x192xf32> to vector<8x64xf32>
    %134 = vector.extract_strided_slice %132 {offsets = [0, 0], sizes = [8, 64], strides = [1, 1]} : vector<8x192xf32> to vector<8x64xf32>
    %135 = arith.addf %133, %134 : vector<8x64xf32>
    %136 = arith.negf %135 : vector<8x64xf32>
    %137 = math.exp %136 : vector<8x64xf32>
    %cst_41 = arith.constant 1.000000e+00 : f32
    %138 = vector.broadcast %cst_41 : f32 to vector<8x64xf32>
    %139 = arith.addf %138, %137 : vector<8x64xf32>
    %140 = arith.divf %138, %139 : vector<8x64xf32>
    %141 = vector.extract_strided_slice %128 {offsets = [0, 64], sizes = [8, 64], strides = [1, 1]} : vector<8x192xf32> to vector<8x64xf32>
    %142 = vector.extract_strided_slice %132 {offsets = [0, 64], sizes = [8, 64], strides = [1, 1]} : vector<8x192xf32> to vector<8x64xf32>
    %143 = arith.addf %141, %142 : vector<8x64xf32>
    %144 = arith.negf %143 : vector<8x64xf32>
    %145 = math.exp %144 : vector<8x64xf32>
    %cst_42 = arith.constant 1.000000e+00 : f32
    %146 = vector.broadcast %cst_42 : f32 to vector<8x64xf32>
    %147 = arith.addf %146, %145 : vector<8x64xf32>
    %148 = arith.divf %146, %147 : vector<8x64xf32>
    %149 = vector.extract_strided_slice %128 {offsets = [0, 128], sizes = [8, 64], strides = [1, 1]} : vector<8x192xf32> to vector<8x64xf32>
    %150 = vector.extract_strided_slice %132 {offsets = [0, 128], sizes = [8, 64], strides = [1, 1]} : vector<8x192xf32> to vector<8x64xf32>
    %151 = arith.mulf %140, %150 : vector<8x64xf32>
    %152 = arith.addf %149, %151 : vector<8x64xf32>
    %153 = math.tanh %152 : vector<8x64xf32>
    %cst_43 = arith.constant 1.000000e+00 : f32
    %154 = vector.broadcast %cst_43 : f32 to vector<8x64xf32>
    %155 = arith.subf %154, %148 : vector<8x64xf32>
    %156 = arith.mulf %155, %153 : vector<8x64xf32>
    %157 = arith.mulf %148, %124 : vector<8x64xf32>
    %158 = arith.addf %156, %157 : vector<8x64xf32>
    %159 = vector.extract_strided_slice %16 {offsets = [24, 0], sizes = [8, 64], strides = [1, 1]} : vector<32x64xf32> to vector<8x64xf32>
    %160 = arith.addf %158, %159 : vector<8x64xf32>
    %c24 = arith.constant 24 : index
    %c0_44 = arith.constant 0 : index
    %161 = vector.load %arg35[%c24, %c0_44] : memref<32x64xf32, #tpu.memory_space<vmem>>, vector<8x64xf32>
    tpu.vector_store %arg35[%c24, %c0_44], %160 {strides = array<i32>} : memref<32x64xf32, #tpu.memory_space<vmem>>, vector<8x64xf32>,
    %c0_45 = arith.constant 0 : index
    %c0_46 = arith.constant 0 : index
    %162 = vector.load %arg35[%c0_45, %c0_46] : memref<32x64xf32, #tpu.memory_space<vmem>>, vector<32x64xf32>
    %163 = arith.truncf %162 : vector<32x64xf32> to vector<32x64xbf16>
    %c0_47 = arith.constant 0 : index
    %c0_48 = arith.constant 0 : index
    %164 = vector.load %arg11[%c0_47, %c0_48] : memref<64x96xbf16, #tpu.memory_space<vmem>>, vector<64x96xbf16>
    %cst_49 = arith.constant dense<0.000000e+00> : vector<32x96xf32>
    %165 = tpu.matmul %163, %164, %cst_49 {dimension_numbers = #tpu.dot_dimension_numbers<[1], [0], [0], [1], [0, 0, 1, 1], [], []>} : vector<32x64xbf16>, vector<64x96xbf16>, vector<32x96xf32> -> vector<32x96xf32>
    %c0_50 = arith.constant 0 : index
    %c0_51 = arith.constant 0 : index
    %166 = vector.load %arg12[%c0_50, %c0_51] : memref<1x96xf32, #tpu.memory_space<vmem>>, vector<1x96xf32>
    %167 = vector.broadcast %166 : vector<1x96xf32> to vector<32x96xf32>
    %168 = arith.addf %165, %167 : vector<32x96xf32>
    %c0_52 = arith.constant 0 : index
    %c0_53 = arith.constant 0 : index
    %169 = vector.load %arg13[%c0_52, %c0_53] : memref<32x96xbf16, #tpu.memory_space<vmem>>, vector<32x96xbf16>
    %c0_54 = arith.constant 0 : index
    %c0_55 = arith.constant 0 : index
    %170 = vector.load %arg14[%c0_54, %c0_55] : memref<1x96xf32, #tpu.memory_space<vmem>>, vector<1x96xf32>
    %cst_56 = arith.constant 0.000000e+00 : f32
    %171 = vector.broadcast %cst_56 : f32 to vector<8x32xf32>
    %cst_57 = arith.constant 0.000000e+00 : f32
    %172 = vector.broadcast %cst_57 : f32 to vector<8x32xf32>
    %173 = vector.extract_strided_slice %168 {offsets = [0, 0], sizes = [8, 96], strides = [1, 1]} : vector<32x96xf32> to vector<8x96xf32>
    %174 = arith.truncf %171 : vector<8x32xf32> to vector<8x32xbf16>
    %cst_58 = arith.constant dense<0.000000e+00> : vector<8x96xf32>
    %175 = tpu.matmul %174, %169, %cst_58 {dimension_numbers = #tpu.dot_dimension_numbers<[1], [0], [0], [1], [0, 0, 1, 1], [], []>} : vector<8x32xbf16>, vector<32x96xbf16>, vector<8x96xf32> -> vector<8x96xf32>
    %176 = vector.broadcast %170 : vector<1x96xf32> to vector<8x96xf32>
    %177 = arith.addf %175, %176 : vector<8x96xf32>
    %178 = vector.extract_strided_slice %173 {offsets = [0, 0], sizes = [8, 32], strides = [1, 1]} : vector<8x96xf32> to vector<8x32xf32>
    %179 = vector.extract_strided_slice %177 {offsets = [0, 0], sizes = [8, 32], strides = [1, 1]} : vector<8x96xf32> to vector<8x32xf32>
    %180 = arith.addf %178, %179 : vector<8x32xf32>
    %181 = arith.negf %180 : vector<8x32xf32>
    %182 = math.exp %181 : vector<8x32xf32>
    %cst_59 = arith.constant 1.000000e+00 : f32
    %183 = vector.broadcast %cst_59 : f32 to vector<8x32xf32>
    %184 = arith.addf %183, %182 : vector<8x32xf32>
    %185 = arith.divf %183, %184 : vector<8x32xf32>
    %186 = vector.extract_strided_slice %173 {offsets = [0, 32], sizes = [8, 32], strides = [1, 1]} : vector<8x96xf32> to vector<8x32xf32>
    %187 = vector.extract_strided_slice %177 {offsets = [0, 32], sizes = [8, 32], strides = [1, 1]} : vector<8x96xf32> to vector<8x32xf32>
    %188 = arith.addf %186, %187 : vector<8x32xf32>
    %189 = arith.negf %188 : vector<8x32xf32>
    %190 = math.exp %189 : vector<8x32xf32>
    %cst_60 = arith.constant 1.000000e+00 : f32
    %191 = vector.broadcast %cst_60 : f32 to vector<8x32xf32>
    %192 = arith.addf %191, %190 : vector<8x32xf32>
    %193 = arith.divf %191, %192 : vector<8x32xf32>
    %194 = vector.extract_strided_slice %173 {offsets = [0, 64], sizes = [8, 32], strides = [1, 1]} : vector<8x96xf32> to vector<8x32xf32>
    %195 = vector.extract_strided_slice %177 {offsets = [0, 64], sizes = [8, 32], strides = [1, 1]} : vector<8x96xf32> to vector<8x32xf32>
    %196 = arith.mulf %185, %195 : vector<8x32xf32>
    %197 = arith.addf %194, %196 : vector<8x32xf32>
    %198 = math.tanh %197 : vector<8x32xf32>
    %cst_61 = arith.constant 1.000000e+00 : f32
    %199 = vector.broadcast %cst_61 : f32 to vector<8x32xf32>
    %200 = arith.subf %199, %193 : vector<8x32xf32>
    %201 = arith.mulf %200, %198 : vector<8x32xf32>
    %202 = arith.mulf %193, %171 : vector<8x32xf32>
    %203 = arith.addf %201, %202 : vector<8x32xf32>
    %204 = math.tanh %203 : vector<8x32xf32>
    %205 = arith.addf %172, %204 : vector<8x32xf32>
    %206 = vector.extract_strided_slice %168 {offsets = [8, 0], sizes = [8, 96], strides = [1, 1]} : vector<32x96xf32> to vector<8x96xf32>
    %207 = arith.truncf %203 : vector<8x32xf32> to vector<8x32xbf16>
    %cst_62 = arith.constant dense<0.000000e+00> : vector<8x96xf32>
    %208 = tpu.matmul %207, %169, %cst_62 {dimension_numbers = #tpu.dot_dimension_numbers<[1], [0], [0], [1], [0, 0, 1, 1], [], []>} : vector<8x32xbf16>, vector<32x96xbf16>, vector<8x96xf32> -> vector<8x96xf32>
    %209 = vector.broadcast %170 : vector<1x96xf32> to vector<8x96xf32>
    %210 = arith.addf %208, %209 : vector<8x96xf32>
    %211 = vector.extract_strided_slice %206 {offsets = [0, 0], sizes = [8, 32], strides = [1, 1]} : vector<8x96xf32> to vector<8x32xf32>
    %212 = vector.extract_strided_slice %210 {offsets = [0, 0], sizes = [8, 32], strides = [1, 1]} : vector<8x96xf32> to vector<8x32xf32>
    %213 = arith.addf %211, %212 : vector<8x32xf32>
    %214 = arith.negf %213 : vector<8x32xf32>
    %215 = math.exp %214 : vector<8x32xf32>
    %cst_63 = arith.constant 1.000000e+00 : f32
    %216 = vector.broadcast %cst_63 : f32 to vector<8x32xf32>
    %217 = arith.addf %216, %215 : vector<8x32xf32>
    %218 = arith.divf %216, %217 : vector<8x32xf32>
    %219 = vector.extract_strided_slice %206 {offsets = [0, 32], sizes = [8, 32], strides = [1, 1]} : vector<8x96xf32> to vector<8x32xf32>
    %220 = vector.extract_strided_slice %210 {offsets = [0, 32], sizes = [8, 32], strides = [1, 1]} : vector<8x96xf32> to vector<8x32xf32>
    %221 = arith.addf %219, %220 : vector<8x32xf32>
    %222 = arith.negf %221 : vector<8x32xf32>
    %223 = math.exp %222 : vector<8x32xf32>
    %cst_64 = arith.constant 1.000000e+00 : f32
    %224 = vector.broadcast %cst_64 : f32 to vector<8x32xf32>
    %225 = arith.addf %224, %223 : vector<8x32xf32>
    %226 = arith.divf %224, %225 : vector<8x32xf32>
    %227 = vector.extract_strided_slice %206 {offsets = [0, 64], sizes = [8, 32], strides = [1, 1]} : vector<8x96xf32> to vector<8x32xf32>
    %228 = vector.extract_strided_slice %210 {offsets = [0, 64], sizes = [8, 32], strides = [1, 1]} : vector<8x96xf32> to vector<8x32xf32>
    %229 = arith.mulf %218, %228 : vector<8x32xf32>
    %230 = arith.addf %227, %229 : vector<8x32xf32>
    %231 = math.tanh %230 : vector<8x32xf32>
    %cst_65 = arith.constant 1.000000e+00 : f32
    %232 = vector.broadcast %cst_65 : f32 to vector<8x32xf32>
    %233 = arith.subf %232, %226 : vector<8x32xf32>
    %234 = arith.mulf %233, %231 : vector<8x32xf32>
    %235 = arith.mulf %226, %203 : vector<8x32xf32>
    %236 = arith.addf %234, %235 : vector<8x32xf32>
    %237 = math.tanh %236 : vector<8x32xf32>
    %238 = arith.addf %205, %237 : vector<8x32xf32>
    %239 = vector.extract_strided_slice %168 {offsets = [16, 0], sizes = [8, 96], strides = [1, 1]} : vector<32x96xf32> to vector<8x96xf32>
    %240 = arith.truncf %236 : vector<8x32xf32> to vector<8x32xbf16>
    %cst_66 = arith.constant dense<0.000000e+00> : vector<8x96xf32>
    %241 = tpu.matmul %240, %169, %cst_66 {dimension_numbers = #tpu.dot_dimension_numbers<[1], [0], [0], [1], [0, 0, 1, 1], [], []>} : vector<8x32xbf16>, vector<32x96xbf16>, vector<8x96xf32> -> vector<8x96xf32>
    %242 = vector.broadcast %170 : vector<1x96xf32> to vector<8x96xf32>
    %243 = arith.addf %241, %242 : vector<8x96xf32>
    %244 = vector.extract_strided_slice %239 {offsets = [0, 0], sizes = [8, 32], strides = [1, 1]} : vector<8x96xf32> to vector<8x32xf32>
    %245 = vector.extract_strided_slice %243 {offsets = [0, 0], sizes = [8, 32], strides = [1, 1]} : vector<8x96xf32> to vector<8x32xf32>
    %246 = arith.addf %244, %245 : vector<8x32xf32>
    %247 = arith.negf %246 : vector<8x32xf32>
    %248 = math.exp %247 : vector<8x32xf32>
    %cst_67 = arith.constant 1.000000e+00 : f32
    %249 = vector.broadcast %cst_67 : f32 to vector<8x32xf32>
    %250 = arith.addf %249, %248 : vector<8x32xf32>
    %251 = arith.divf %249, %250 : vector<8x32xf32>
    %252 = vector.extract_strided_slice %239 {offsets = [0, 32], sizes = [8, 32], strides = [1, 1]} : vector<8x96xf32> to vector<8x32xf32>
    %253 = vector.extract_strided_slice %243 {offsets = [0, 32], sizes = [8, 32], strides = [1, 1]} : vector<8x96xf32> to vector<8x32xf32>
    %254 = arith.addf %252, %253 : vector<8x32xf32>
    %255 = arith.negf %254 : vector<8x32xf32>
    %256 = math.exp %255 : vector<8x32xf32>
    %cst_68 = arith.constant 1.000000e+00 : f32
    %257 = vector.broadcast %cst_68 : f32 to vector<8x32xf32>
    %258 = arith.addf %257, %256 : vector<8x32xf32>
    %259 = arith.divf %257, %258 : vector<8x32xf32>
    %260 = vector.extract_strided_slice %239 {offsets = [0, 64], sizes = [8, 32], strides = [1, 1]} : vector<8x96xf32> to vector<8x32xf32>
    %261 = vector.extract_strided_slice %243 {offsets = [0, 64], sizes = [8, 32], strides = [1, 1]} : vector<8x96xf32> to vector<8x32xf32>
    %262 = arith.mulf %251, %261 : vector<8x32xf32>
    %263 = arith.addf %260, %262 : vector<8x32xf32>
    %264 = math.tanh %263 : vector<8x32xf32>
    %cst_69 = arith.constant 1.000000e+00 : f32
    %265 = vector.broadcast %cst_69 : f32 to vector<8x32xf32>
    %266 = arith.subf %265, %259 : vector<8x32xf32>
    %267 = arith.mulf %266, %264 : vector<8x32xf32>
    %268 = arith.mulf %259, %236 : vector<8x32xf32>
    %269 = arith.addf %267, %268 : vector<8x32xf32>
    %270 = math.tanh %269 : vector<8x32xf32>
    %271 = arith.addf %238, %270 : vector<8x32xf32>
    %272 = vector.extract_strided_slice %168 {offsets = [24, 0], sizes = [8, 96], strides = [1, 1]} : vector<32x96xf32> to vector<8x96xf32>
    %273 = arith.truncf %269 : vector<8x32xf32> to vector<8x32xbf16>
    %cst_70 = arith.constant dense<0.000000e+00> : vector<8x96xf32>
    %274 = tpu.matmul %273, %169, %cst_70 {dimension_numbers = #tpu.dot_dimension_numbers<[1], [0], [0], [1], [0, 0, 1, 1], [], []>} : vector<8x32xbf16>, vector<32x96xbf16>, vector<8x96xf32> -> vector<8x96xf32>
    %275 = vector.broadcast %170 : vector<1x96xf32> to vector<8x96xf32>
    %276 = arith.addf %274, %275 : vector<8x96xf32>
    %277 = vector.extract_strided_slice %272 {offsets = [0, 0], sizes = [8, 32], strides = [1, 1]} : vector<8x96xf32> to vector<8x32xf32>
    %278 = vector.extract_strided_slice %276 {offsets = [0, 0], sizes = [8, 32], strides = [1, 1]} : vector<8x96xf32> to vector<8x32xf32>
    %279 = arith.addf %277, %278 : vector<8x32xf32>
    %280 = arith.negf %279 : vector<8x32xf32>
    %281 = math.exp %280 : vector<8x32xf32>
    %cst_71 = arith.constant 1.000000e+00 : f32
    %282 = vector.broadcast %cst_71 : f32 to vector<8x32xf32>
    %283 = arith.addf %282, %281 : vector<8x32xf32>
    %284 = arith.divf %282, %283 : vector<8x32xf32>
    %285 = vector.extract_strided_slice %272 {offsets = [0, 32], sizes = [8, 32], strides = [1, 1]} : vector<8x96xf32> to vector<8x32xf32>
    %286 = vector.extract_strided_slice %276 {offsets = [0, 32], sizes = [8, 32], strides = [1, 1]} : vector<8x96xf32> to vector<8x32xf32>
    %287 = arith.addf %285, %286 : vector<8x32xf32>
    %288 = arith.negf %287 : vector<8x32xf32>
    %289 = math.exp %288 : vector<8x32xf32>
    %cst_72 = arith.constant 1.000000e+00 : f32
    %290 = vector.broadcast %cst_72 : f32 to vector<8x32xf32>
    %291 = arith.addf %290, %289 : vector<8x32xf32>
    %292 = arith.divf %290, %291 : vector<8x32xf32>
    %293 = vector.extract_strided_slice %272 {offsets = [0, 64], sizes = [8, 32], strides = [1, 1]} : vector<8x96xf32> to vector<8x32xf32>
    %294 = vector.extract_strided_slice %276 {offsets = [0, 64], sizes = [8, 32], strides = [1, 1]} : vector<8x96xf32> to vector<8x32xf32>
    %295 = arith.mulf %284, %294 : vector<8x32xf32>
    %296 = arith.addf %293, %295 : vector<8x32xf32>
    %297 = math.tanh %296 : vector<8x32xf32>
    %cst_73 = arith.constant 1.000000e+00 : f32
    %298 = vector.broadcast %cst_73 : f32 to vector<8x32xf32>
    %299 = arith.subf %298, %292 : vector<8x32xf32>
    %300 = arith.mulf %299, %297 : vector<8x32xf32>
    %301 = arith.mulf %292, %269 : vector<8x32xf32>
    %302 = arith.addf %300, %301 : vector<8x32xf32>
    %303 = math.tanh %302 : vector<8x32xf32>
    %304 = arith.addf %271, %303 : vector<8x32xf32>
    %cst_74 = arith.constant 2.500000e-01 : f32
    %305 = vector.broadcast %cst_74 : f32 to vector<8x32xf32>
    %306 = arith.mulf %304, %305 : vector<8x32xf32>
    %307 = arith.truncf %306 : vector<8x32xf32> to vector<8x32xbf16>
    %c0_75 = arith.constant 0 : index
    %c0_76 = arith.constant 0 : index
    %308 = vector.load %arg15[%c0_75, %c0_76] : memref<32x32xbf16, #tpu.memory_space<vmem>>, vector<32x32xbf16>
    %cst_77 = arith.constant dense<0.000000e+00> : vector<8x32xf32>
    %309 = tpu.matmul %307, %308, %cst_77 {dimension_numbers = #tpu.dot_dimension_numbers<[1], [0], [0], [1], [0, 0, 1, 1], [], []>} : vector<8x32xbf16>, vector<32x32xbf16>, vector<8x32xf32> -> vector<8x32xf32>
    %c0_78 = arith.constant 0 : index
    %c0_79 = arith.constant 0 : index
    %310 = vector.load %arg16[%c0_78, %c0_79] : memref<1x32xf32, #tpu.memory_space<vmem>>, vector<1x32xf32>
    %311 = vector.broadcast %310 : vector<1x32xf32> to vector<8x32xf32>
    %312 = arith.addf %309, %311 : vector<8x32xf32>
    %313 = arith.truncf %312 : vector<8x32xf32> to vector<8x32xbf16>
    %c0_80 = arith.constant 0 : index
    %c0_81 = arith.constant 0 : index
    %314 = vector.load %arg17[%c0_80, %c0_81] : memref<32x16xbf16, #tpu.memory_space<vmem>>, vector<32x16xbf16>
    %cst_82 = arith.constant dense<0.000000e+00> : vector<8x16xf32>
    %315 = tpu.matmul %313, %314, %cst_82 {dimension_numbers = #tpu.dot_dimension_numbers<[1], [0], [0], [1], [0, 0, 1, 1], [], []>} : vector<8x32xbf16>, vector<32x16xbf16>, vector<8x16xf32> -> vector<8x16xf32>
    %c0_83 = arith.constant 0 : index
    %c0_84 = arith.constant 0 : index
    %316 = vector.load %arg18[%c0_83, %c0_84] : memref<1x16xf32, #tpu.memory_space<vmem>>, vector<1x16xf32>
    %317 = vector.broadcast %316 : vector<1x16xf32> to vector<8x16xf32>
    %318 = arith.addf %315, %317 : vector<8x16xf32>
    %319 = math.tanh %318 : vector<8x16xf32>
    %320 = arith.truncf %319 : vector<8x16xf32> to vector<8x16xbf16>
    %c0_85 = arith.constant 0 : index
    %c0_86 = arith.constant 0 : index
    %321 = vector.load %arg19[%c0_85, %c0_86] : memref<16x144xbf16, #tpu.memory_space<vmem>>, vector<16x144xbf16>
    %cst_87 = arith.constant dense<0.000000e+00> : vector<8x144xf32>
    %322 = tpu.matmul %320, %321, %cst_87 {dimension_numbers = #tpu.dot_dimension_numbers<[1], [0], [0], [1], [0, 0, 1, 1], [], []>} : vector<8x16xbf16>, vector<16x144xbf16>, vector<8x144xf32> -> vector<8x144xf32>
    %c0_88 = arith.constant 0 : index
    %c0_89 = arith.constant 0 : index
    %323 = vector.load %arg20[%c0_88, %c0_89] : memref<1x144xf32, #tpu.memory_space<vmem>>, vector<1x144xf32>
    %324 = vector.broadcast %323 : vector<1x144xf32> to vector<8x144xf32>
    %325 = arith.addf %322, %324 : vector<8x144xf32>
    %326 = arith.truncf %325 : vector<8x144xf32> to vector<8x144xbf16>
    %c0_90 = arith.constant 0 : index
    %c0_91 = arith.constant 0 : index
    %327 = vector.load %arg21[%c0_90, %c0_91] : memref<144x96xbf16, #tpu.memory_space<vmem>>, vector<144x96xbf16>
    %cst_92 = arith.constant dense<0.000000e+00> : vector<8x96xf32>
    %328 = tpu.matmul %326, %327, %cst_92 {dimension_numbers = #tpu.dot_dimension_numbers<[1], [0], [0], [1], [0, 0, 1, 1], [], []>} : vector<8x144xbf16>, vector<144x96xbf16>, vector<8x96xf32> -> vector<8x96xf32>
    %c0_93 = arith.constant 0 : index
    %c0_94 = arith.constant 0 : index
    %329 = vector.load %arg22[%c0_93, %c0_94] : memref<1x96xf32, #tpu.memory_space<vmem>>, vector<1x96xf32>
    %330 = vector.broadcast %329 : vector<1x96xf32> to vector<8x96xf32>
    %331 = arith.addf %328, %330 : vector<8x96xf32>
    %c0_95 = arith.constant 0 : index
    %c0_96 = arith.constant 0 : index
    %332 = vector.load %arg23[%c0_95, %c0_96] : memref<32x96xbf16, #tpu.memory_space<vmem>>, vector<32x96xbf16>
    %c0_97 = arith.constant 0 : index
    %c0_98 = arith.constant 0 : index
    %333 = vector.load %arg24[%c0_97, %c0_98] : memref<1x96xf32, #tpu.memory_space<vmem>>, vector<1x96xf32>
    %334 = arith.truncf %312 : vector<8x32xf32> to vector<8x32xbf16>
    %cst_99 = arith.constant dense<0.000000e+00> : vector<8x96xf32>
    %335 = tpu.matmul %334, %332, %cst_99 {dimension_numbers = #tpu.dot_dimension_numbers<[1], [0], [0], [1], [0, 0, 1, 1], [], []>} : vector<8x32xbf16>, vector<32x96xbf16>, vector<8x96xf32> -> vector<8x96xf32>
    %336 = vector.broadcast %333 : vector<1x96xf32> to vector<8x96xf32>
    %337 = arith.addf %335, %336 : vector<8x96xf32>
    %338 = vector.extract_strided_slice %331 {offsets = [0, 0], sizes = [8, 32], strides = [1, 1]} : vector<8x96xf32> to vector<8x32xf32>
    %339 = vector.extract_strided_slice %337 {offsets = [0, 0], sizes = [8, 32], strides = [1, 1]} : vector<8x96xf32> to vector<8x32xf32>
    %340 = arith.addf %338, %339 : vector<8x32xf32>
    %341 = arith.negf %340 : vector<8x32xf32>
    %342 = math.exp %341 : vector<8x32xf32>
    %cst_100 = arith.constant 1.000000e+00 : f32
    %343 = vector.broadcast %cst_100 : f32 to vector<8x32xf32>
    %344 = arith.addf %343, %342 : vector<8x32xf32>
    %345 = arith.divf %343, %344 : vector<8x32xf32>
    %346 = vector.extract_strided_slice %331 {offsets = [0, 32], sizes = [8, 32], strides = [1, 1]} : vector<8x96xf32> to vector<8x32xf32>
    %347 = vector.extract_strided_slice %337 {offsets = [0, 32], sizes = [8, 32], strides = [1, 1]} : vector<8x96xf32> to vector<8x32xf32>
    %348 = arith.addf %346, %347 : vector<8x32xf32>
    %349 = arith.negf %348 : vector<8x32xf32>
    %350 = math.exp %349 : vector<8x32xf32>
    %cst_101 = arith.constant 1.000000e+00 : f32
    %351 = vector.broadcast %cst_101 : f32 to vector<8x32xf32>
    %352 = arith.addf %351, %350 : vector<8x32xf32>
    %353 = arith.divf %351, %352 : vector<8x32xf32>
    %354 = vector.extract_strided_slice %331 {offsets = [0, 64], sizes = [8, 32], strides = [1, 1]} : vector<8x96xf32> to vector<8x32xf32>
    %355 = vector.extract_strided_slice %337 {offsets = [0, 64], sizes = [8, 32], strides = [1, 1]} : vector<8x96xf32> to vector<8x32xf32>
    %356 = arith.mulf %345, %355 : vector<8x32xf32>
    %357 = arith.addf %354, %356 : vector<8x32xf32>
    %358 = math.tanh %357 : vector<8x32xf32>
    %cst_102 = arith.constant 1.000000e+00 : f32
    %359 = vector.broadcast %cst_102 : f32 to vector<8x32xf32>
    %360 = arith.subf %359, %353 : vector<8x32xf32>
    %361 = arith.mulf %360, %358 : vector<8x32xf32>
    %362 = arith.mulf %353, %312 : vector<8x32xf32>
    %363 = arith.addf %361, %362 : vector<8x32xf32>
    %c0_103 = arith.constant 0 : index
    %c0_104 = arith.constant 0 : index
    %364 = vector.load %arg36[%c0_103, %c0_104] : memref<32x32xf32, #tpu.memory_space<vmem>>, vector<8x32xf32>
    tpu.vector_store %arg36[%c0_103, %c0_104], %363 {strides = array<i32>} : memref<32x32xf32, #tpu.memory_space<vmem>>, vector<8x32xf32>,
    %365 = arith.truncf %363 : vector<8x32xf32> to vector<8x32xbf16>
    %cst_105 = arith.constant dense<0.000000e+00> : vector<8x96xf32>
    %366 = tpu.matmul %365, %332, %cst_105 {dimension_numbers = #tpu.dot_dimension_numbers<[1], [0], [0], [1], [0, 0, 1, 1], [], []>} : vector<8x32xbf16>, vector<32x96xbf16>, vector<8x96xf32> -> vector<8x96xf32>
    %367 = vector.broadcast %333 : vector<1x96xf32> to vector<8x96xf32>
    %368 = arith.addf %366, %367 : vector<8x96xf32>
    %369 = vector.extract_strided_slice %331 {offsets = [0, 0], sizes = [8, 32], strides = [1, 1]} : vector<8x96xf32> to vector<8x32xf32>
    %370 = vector.extract_strided_slice %368 {offsets = [0, 0], sizes = [8, 32], strides = [1, 1]} : vector<8x96xf32> to vector<8x32xf32>
    %371 = arith.addf %369, %370 : vector<8x32xf32>
    %372 = arith.negf %371 : vector<8x32xf32>
    %373 = math.exp %372 : vector<8x32xf32>
    %cst_106 = arith.constant 1.000000e+00 : f32
    %374 = vector.broadcast %cst_106 : f32 to vector<8x32xf32>
    %375 = arith.addf %374, %373 : vector<8x32xf32>
    %376 = arith.divf %374, %375 : vector<8x32xf32>
    %377 = vector.extract_strided_slice %331 {offsets = [0, 32], sizes = [8, 32], strides = [1, 1]} : vector<8x96xf32> to vector<8x32xf32>
    %378 = vector.extract_strided_slice %368 {offsets = [0, 32], sizes = [8, 32], strides = [1, 1]} : vector<8x96xf32> to vector<8x32xf32>
    %379 = arith.addf %377, %378 : vector<8x32xf32>
    %380 = arith.negf %379 : vector<8x32xf32>
    %381 = math.exp %380 : vector<8x32xf32>
    %cst_107 = arith.constant 1.000000e+00 : f32
    %382 = vector.broadcast %cst_107 : f32 to vector<8x32xf32>
    %383 = arith.addf %382, %381 : vector<8x32xf32>
    %384 = arith.divf %382, %383 : vector<8x32xf32>
    %385 = vector.extract_strided_slice %331 {offsets = [0, 64], sizes = [8, 32], strides = [1, 1]} : vector<8x96xf32> to vector<8x32xf32>
    %386 = vector.extract_strided_slice %368 {offsets = [0, 64], sizes = [8, 32], strides = [1, 1]} : vector<8x96xf32> to vector<8x32xf32>
    %387 = arith.mulf %376, %386 : vector<8x32xf32>
    %388 = arith.addf %385, %387 : vector<8x32xf32>
    %389 = math.tanh %388 : vector<8x32xf32>
    %cst_108 = arith.constant 1.000000e+00 : f32
    %390 = vector.broadcast %cst_108 : f32 to vector<8x32xf32>
    %391 = arith.subf %390, %384 : vector<8x32xf32>
    %392 = arith.mulf %391, %389 : vector<8x32xf32>
    %393 = arith.mulf %384, %363 : vector<8x32xf32>
    %394 = arith.addf %392, %393 : vector<8x32xf32>
    %c8_109 = arith.constant 8 : index
    %c0_110 = arith.constant 0 : index
    %395 = vector.load %arg36[%c8_109, %c0_110] : memref<32x32xf32, #tpu.memory_space<vmem>>, vector<8x32xf32>
    tpu.vector_store %arg36[%c8_109, %c0_110], %394 {strides = array<i32>} : memref<32x32xf32, #tpu.memory_space<vmem>>, vector<8x32xf32>,
    %396 = arith.truncf %394 : vector<8x32xf32> to vector<8x32xbf16>
    %cst_111 = arith.constant dense<0.000000e+00> : vector<8x96xf32>
    %397 = tpu.matmul %396, %332, %cst_111 {dimension_numbers = #tpu.dot_dimension_numbers<[1], [0], [0], [1], [0, 0, 1, 1], [], []>} : vector<8x32xbf16>, vector<32x96xbf16>, vector<8x96xf32> -> vector<8x96xf32>
    %398 = vector.broadcast %333 : vector<1x96xf32> to vector<8x96xf32>
    %399 = arith.addf %397, %398 : vector<8x96xf32>
    %400 = vector.extract_strided_slice %331 {offsets = [0, 0], sizes = [8, 32], strides = [1, 1]} : vector<8x96xf32> to vector<8x32xf32>
    %401 = vector.extract_strided_slice %399 {offsets = [0, 0], sizes = [8, 32], strides = [1, 1]} : vector<8x96xf32> to vector<8x32xf32>
    %402 = arith.addf %400, %401 : vector<8x32xf32>
    %403 = arith.negf %402 : vector<8x32xf32>
    %404 = math.exp %403 : vector<8x32xf32>
    %cst_112 = arith.constant 1.000000e+00 : f32
    %405 = vector.broadcast %cst_112 : f32 to vector<8x32xf32>
    %406 = arith.addf %405, %404 : vector<8x32xf32>
    %407 = arith.divf %405, %406 : vector<8x32xf32>
    %408 = vector.extract_strided_slice %331 {offsets = [0, 32], sizes = [8, 32], strides = [1, 1]} : vector<8x96xf32> to vector<8x32xf32>
    %409 = vector.extract_strided_slice %399 {offsets = [0, 32], sizes = [8, 32], strides = [1, 1]} : vector<8x96xf32> to vector<8x32xf32>
    %410 = arith.addf %408, %409 : vector<8x32xf32>
    %411 = arith.negf %410 : vector<8x32xf32>
    %412 = math.exp %411 : vector<8x32xf32>
    %cst_113 = arith.constant 1.000000e+00 : f32
    %413 = vector.broadcast %cst_113 : f32 to vector<8x32xf32>
    %414 = arith.addf %413, %412 : vector<8x32xf32>
    %415 = arith.divf %413, %414 : vector<8x32xf32>
    %416 = vector.extract_strided_slice %331 {offsets = [0, 64], sizes = [8, 32], strides = [1, 1]} : vector<8x96xf32> to vector<8x32xf32>
    %417 = vector.extract_strided_slice %399 {offsets = [0, 64], sizes = [8, 32], strides = [1, 1]} : vector<8x96xf32> to vector<8x32xf32>
    %418 = arith.mulf %407, %417 : vector<8x32xf32>
    %419 = arith.addf %416, %418 : vector<8x32xf32>
    %420 = math.tanh %419 : vector<8x32xf32>
    %cst_114 = arith.constant 1.000000e+00 : f32
    %421 = vector.broadcast %cst_114 : f32 to vector<8x32xf32>
    %422 = arith.subf %421, %415 : vector<8x32xf32>
    %423 = arith.mulf %422, %420 : vector<8x32xf32>
    %424 = arith.mulf %415, %394 : vector<8x32xf32>
    %425 = arith.addf %423, %424 : vector<8x32xf32>
    %c16_115 = arith.constant 16 : index
    %c0_116 = arith.constant 0 : index
    %426 = vector.load %arg36[%c16_115, %c0_116] : memref<32x32xf32, #tpu.memory_space<vmem>>, vector<8x32xf32>
    tpu.vector_store %arg36[%c16_115, %c0_116], %425 {strides = array<i32>} : memref<32x32xf32, #tpu.memory_space<vmem>>, vector<8x32xf32>,
    %427 = arith.truncf %425 : vector<8x32xf32> to vector<8x32xbf16>
    %cst_117 = arith.constant dense<0.000000e+00> : vector<8x96xf32>
    %428 = tpu.matmul %427, %332, %cst_117 {dimension_numbers = #tpu.dot_dimension_numbers<[1], [0], [0], [1], [0, 0, 1, 1], [], []>} : vector<8x32xbf16>, vector<32x96xbf16>, vector<8x96xf32> -> vector<8x96xf32>
    %429 = vector.broadcast %333 : vector<1x96xf32> to vector<8x96xf32>
    %430 = arith.addf %428, %429 : vector<8x96xf32>
    %431 = vector.extract_strided_slice %331 {offsets = [0, 0], sizes = [8, 32], strides = [1, 1]} : vector<8x96xf32> to vector<8x32xf32>
    %432 = vector.extract_strided_slice %430 {offsets = [0, 0], sizes = [8, 32], strides = [1, 1]} : vector<8x96xf32> to vector<8x32xf32>
    %433 = arith.addf %431, %432 : vector<8x32xf32>
    %434 = arith.negf %433 : vector<8x32xf32>
    %435 = math.exp %434 : vector<8x32xf32>
    %cst_118 = arith.constant 1.000000e+00 : f32
    %436 = vector.broadcast %cst_118 : f32 to vector<8x32xf32>
    %437 = arith.addf %436, %435 : vector<8x32xf32>
    %438 = arith.divf %436, %437 : vector<8x32xf32>
    %439 = vector.extract_strided_slice %331 {offsets = [0, 32], sizes = [8, 32], strides = [1, 1]} : vector<8x96xf32> to vector<8x32xf32>
    %440 = vector.extract_strided_slice %430 {offsets = [0, 32], sizes = [8, 32], strides = [1, 1]} : vector<8x96xf32> to vector<8x32xf32>
    %441 = arith.addf %439, %440 : vector<8x32xf32>
    %442 = arith.negf %441 : vector<8x32xf32>
    %443 = math.exp %442 : vector<8x32xf32>
    %cst_119 = arith.constant 1.000000e+00 : f32
    %444 = vector.broadcast %cst_119 : f32 to vector<8x32xf32>
    %445 = arith.addf %444, %443 : vector<8x32xf32>
    %446 = arith.divf %444, %445 : vector<8x32xf32>
    %447 = vector.extract_strided_slice %331 {offsets = [0, 64], sizes = [8, 32], strides = [1, 1]} : vector<8x96xf32> to vector<8x32xf32>
    %448 = vector.extract_strided_slice %430 {offsets = [0, 64], sizes = [8, 32], strides = [1, 1]} : vector<8x96xf32> to vector<8x32xf32>
    %449 = arith.mulf %438, %448 : vector<8x32xf32>
    %450 = arith.addf %447, %449 : vector<8x32xf32>
    %451 = math.tanh %450 : vector<8x32xf32>
    %cst_120 = arith.constant 1.000000e+00 : f32
    %452 = vector.broadcast %cst_120 : f32 to vector<8x32xf32>
    %453 = arith.subf %452, %446 : vector<8x32xf32>
    %454 = arith.mulf %453, %451 : vector<8x32xf32>
    %455 = arith.mulf %446, %425 : vector<8x32xf32>
    %456 = arith.addf %454, %455 : vector<8x32xf32>
    %c24_121 = arith.constant 24 : index
    %c0_122 = arith.constant 0 : index
    %457 = vector.load %arg36[%c24_121, %c0_122] : memref<32x32xf32, #tpu.memory_space<vmem>>, vector<8x32xf32>
    tpu.vector_store %arg36[%c24_121, %c0_122], %456 {strides = array<i32>} : memref<32x32xf32, #tpu.memory_space<vmem>>, vector<8x32xf32>,
    %c0_123 = arith.constant 0 : index
    %c0_124 = arith.constant 0 : index
    %458 = vector.load %arg36[%c0_123, %c0_124] : memref<32x32xf32, #tpu.memory_space<vmem>>, vector<32x32xf32>
    %459 = arith.truncf %458 : vector<32x32xf32> to vector<32x32xbf16>
    %c0_125 = arith.constant 0 : index
    %c0_126 = arith.constant 0 : index
    %460 = vector.load %arg25[%c0_125, %c0_126] : memref<32x256xbf16, #tpu.memory_space<vmem>>, vector<32x256xbf16>
    %cst_127 = arith.constant dense<0.000000e+00> : vector<32x256xf32>
    %461 = tpu.matmul %459, %460, %cst_127 {dimension_numbers = #tpu.dot_dimension_numbers<[1], [0], [0], [1], [0, 0, 1, 1], [], []>} : vector<32x32xbf16>, vector<32x256xbf16>, vector<32x256xf32> -> vector<32x256xf32>
    %c0_128 = arith.constant 0 : index
    %c0_129 = arith.constant 0 : index
    %462 = vector.load %arg26[%c0_128, %c0_129] : memref<1x256xf32, #tpu.memory_space<vmem>>, vector<1x256xf32>
    %463 = vector.broadcast %462 : vector<1x256xf32> to vector<32x256xf32>
    %464 = arith.addf %461, %463 : vector<32x256xf32>
    %c0_130 = arith.constant 0 : index
    %c0_131 = arith.constant 0 : index
    %465 = vector.load %arg33[%c0_130, %c0_131] : memref<1x256xf32, #tpu.memory_space<vmem>>, vector<1x256xf32>
    %466 = vector.broadcast %465 : vector<1x256xf32> to vector<32x256xf32>
    %467 = arith.addf %464, %466 : vector<32x256xf32>
    %c0_132 = arith.constant 0 : index
    %c0_133 = arith.constant 0 : index
    %468 = vector.load %arg27[%c0_132, %c0_133] : memref<64x128xbf16, #tpu.memory_space<vmem>>, vector<64x128xbf16>
    %cst_134 = arith.constant dense<0.000000e+00> : vector<32x128xf32>
    %469 = tpu.matmul %163, %468, %cst_134 {dimension_numbers = #tpu.dot_dimension_numbers<[1], [0], [0], [1], [0, 0, 1, 1], [], []>} : vector<32x64xbf16>, vector<64x128xbf16>, vector<32x128xf32> -> vector<32x128xf32>
    %c0_135 = arith.constant 0 : index
    %c0_136 = arith.constant 0 : index
    %470 = vector.load %arg29[%c0_135, %c0_136] : memref<1x128xf32, #tpu.memory_space<vmem>>, vector<1x128xf32>
    %471 = vector.broadcast %470 : vector<1x128xf32> to vector<32x128xf32>
    %472 = arith.addf %469, %471 : vector<32x128xf32>
    %c0_137 = arith.constant 0 : index
    %c0_138 = arith.constant 0 : index
    %473 = vector.load %arg31[%c0_137, %c0_138] : memref<1x128xf32, #tpu.memory_space<vmem>>, vector<1x128xf32>
    %474 = vector.shape_cast %473 : vector<1x128xf32> to vector<1x128xf32>
    %475 = vector.broadcast %474 : vector<1x128xf32> to vector<32x128xf32>
    %476 = arith.truncf %467 : vector<32x256xf32> to vector<32x256xbf16>
    %c0_139 = arith.constant 0 : index
    %c0_140 = arith.constant 0 : index
    %477 = vector.load %arg28[%c0_139, %c0_140] : memref<256x128xbf16, #tpu.memory_space<vmem>>, vector<256x128xbf16>
    %cst_141 = arith.constant dense<0.000000e+00> : vector<32x128xf32>
    %478 = tpu.matmul %476, %477, %cst_141 {dimension_numbers = #tpu.dot_dimension_numbers<[1], [0], [0], [1], [0, 0, 1, 1], [], []>} : vector<32x256xbf16>, vector<256x128xbf16>, vector<32x128xf32> -> vector<32x128xf32>
    %479 = arith.addf %472, %478 : vector<32x128xf32>
    %480 = arith.truncf %479 : vector<32x128xf32> to vector<32x128xbf16>
    %c0_142 = arith.constant 0 : index
    %c0_143 = arith.constant 0 : index
    %481 = vector.load %arg30[%c0_142, %c0_143] : memref<128x128xbf16, #tpu.memory_space<vmem>>, vector<128x128xbf16>
    %cst_144 = arith.constant dense<0.000000e+00> : vector<32x128xf32>
    %482 = tpu.matmul %480, %481, %cst_144 {dimension_numbers = #tpu.dot_dimension_numbers<[1], [0], [0], [1], [0, 0, 1, 1], [], []>} : vector<32x128xbf16>, vector<128x128xbf16>, vector<32x128xf32> -> vector<32x128xf32>
    %483 = arith.addf %482, %475 : vector<32x128xf32>
    %484 = arith.truncf %483 : vector<32x128xf32> to vector<32x128xbf16>
    %c0_145 = arith.constant 0 : index
    %c0_146 = arith.constant 0 : index
    %485 = vector.load %arg32[%c0_145, %c0_146] : memref<128x256xbf16, #tpu.memory_space<vmem>>, vector<128x256xbf16>
    %cst_147 = arith.constant dense<0.000000e+00> : vector<32x256xf32>
    %486 = tpu.matmul %484, %485, %cst_147 {dimension_numbers = #tpu.dot_dimension_numbers<[1], [0], [0], [1], [0, 0, 1, 1], [], []>} : vector<32x128xbf16>, vector<128x256xbf16>, vector<32x256xf32> -> vector<32x256xf32>
    %487 = arith.addf %467, %486 : vector<32x256xf32>
    %488 = arith.truncf %487 : vector<32x256xf32> to vector<32x256xbf16>
    %c0_148 = arith.constant 0 : index
    %c0_149 = arith.constant 0 : index
    %489 = vector.load %arg28[%c0_148, %c0_149] : memref<256x128xbf16, #tpu.memory_space<vmem>>, vector<256x128xbf16>
    %cst_150 = arith.constant dense<0.000000e+00> : vector<32x128xf32>
    %490 = tpu.matmul %488, %489, %cst_150 {dimension_numbers = #tpu.dot_dimension_numbers<[1], [0], [0], [1], [0, 0, 1, 1], [], []>} : vector<32x256xbf16>, vector<256x128xbf16>, vector<32x128xf32> -> vector<32x128xf32>
    %491 = arith.addf %472, %490 : vector<32x128xf32>
    %492 = arith.truncf %491 : vector<32x128xf32> to vector<32x128xbf16>
    %c0_151 = arith.constant 0 : index
    %c0_152 = arith.constant 0 : index
    %493 = vector.load %arg30[%c0_151, %c0_152] : memref<128x128xbf16, #tpu.memory_space<vmem>>, vector<128x128xbf16>
    %cst_153 = arith.constant dense<0.000000e+00> : vector<32x128xf32>
    %494 = tpu.matmul %492, %493, %cst_153 {dimension_numbers = #tpu.dot_dimension_numbers<[1], [0], [0], [1], [0, 0, 1, 1], [], []>} : vector<32x128xbf16>, vector<128x128xbf16>, vector<32x128xf32> -> vector<32x128xf32>
    %495 = arith.addf %494, %475 : vector<32x128xf32>
    %496 = arith.truncf %495 : vector<32x128xf32> to vector<32x128xbf16>
    %c0_154 = arith.constant 0 : index
    %c0_155 = arith.constant 0 : index
    %497 = vector.load %arg32[%c0_154, %c0_155] : memref<128x256xbf16, #tpu.memory_space<vmem>>, vector<128x256xbf16>
    %cst_156 = arith.constant dense<0.000000e+00> : vector<32x256xf32>
    %498 = tpu.matmul %496, %497, %cst_156 {dimension_numbers = #tpu.dot_dimension_numbers<[1], [0], [0], [1], [0, 0, 1, 1], [], []>} : vector<32x128xbf16>, vector<128x256xbf16>, vector<32x256xf32> -> vector<32x256xf32>
    %499 = arith.addf %487, %498 : vector<32x256xf32>
    %500 = arith.truncf %499 : vector<32x256xf32> to vector<32x256xbf16>
    %c0_157 = arith.constant 0 : index
    %c0_158 = arith.constant 0 : index
    %501 = vector.load %arg28[%c0_157, %c0_158] : memref<256x128xbf16, #tpu.memory_space<vmem>>, vector<256x128xbf16>
    %cst_159 = arith.constant dense<0.000000e+00> : vector<32x128xf32>
    %502 = tpu.matmul %500, %501, %cst_159 {dimension_numbers = #tpu.dot_dimension_numbers<[1], [0], [0], [1], [0, 0, 1, 1], [], []>} : vector<32x256xbf16>, vector<256x128xbf16>, vector<32x128xf32> -> vector<32x128xf32>
    %503 = arith.addf %472, %502 : vector<32x128xf32>
    %504 = arith.truncf %503 : vector<32x128xf32> to vector<32x128xbf16>
    %c0_160 = arith.constant 0 : index
    %c0_161 = arith.constant 0 : index
    %505 = vector.load %arg30[%c0_160, %c0_161] : memref<128x128xbf16, #tpu.memory_space<vmem>>, vector<128x128xbf16>
    %cst_162 = arith.constant dense<0.000000e+00> : vector<32x128xf32>
    %506 = tpu.matmul %504, %505, %cst_162 {dimension_numbers = #tpu.dot_dimension_numbers<[1], [0], [0], [1], [0, 0, 1, 1], [], []>} : vector<32x128xbf16>, vector<128x128xbf16>, vector<32x128xf32> -> vector<32x128xf32>
    %507 = arith.addf %506, %475 : vector<32x128xf32>
    %508 = arith.truncf %507 : vector<32x128xf32> to vector<32x128xbf16>
    %c0_163 = arith.constant 0 : index
    %c0_164 = arith.constant 0 : index
    %509 = vector.load %arg32[%c0_163, %c0_164] : memref<128x256xbf16, #tpu.memory_space<vmem>>, vector<128x256xbf16>
    %cst_165 = arith.constant dense<0.000000e+00> : vector<32x256xf32>
    %510 = tpu.matmul %508, %509, %cst_165 {dimension_numbers = #tpu.dot_dimension_numbers<[1], [0], [0], [1], [0, 0, 1, 1], [], []>} : vector<32x128xbf16>, vector<128x256xbf16>, vector<32x256xf32> -> vector<32x256xf32>
    %511 = arith.addf %499, %510 : vector<32x256xf32>
    %c0_166 = arith.constant 0 : index
    %c0_167 = arith.constant 0 : index
    %512 = vector.load %arg34[%c0_166, %c0_167] : memref<32x256xf32, #tpu.memory_space<vmem>>, vector<32x256xf32>
    tpu.vector_store %arg34[%c0_166, %c0_167], %511 {strides = array<i32>} : memref<32x256xf32, #tpu.memory_space<vmem>>, vector<32x256xf32>,
    return
  }
  func.func @transform_0(%arg0: i32) -> (i32, i32) {
    %c0_i32 = arith.constant 0 : i32
    %c0_i32_0 = arith.constant 0 : i32
    %c0_i32_1 = arith.constant 0 : i32
    return %c0_i32, %c0_i32_0 : i32, i32
  }
  func.func @transform_1(%arg0: i32) -> (i32, i32) {
    %c0_i32 = arith.constant 0 : i32
    %c0_i32_0 = arith.constant 0 : i32
    %c0_i32_1 = arith.constant 0 : i32
    return %c0_i32, %c0_i32_0 : i32, i32
  }
  func.func @transform_2(%arg0: i32) -> (i32, i32) {
    %c0_i32 = arith.constant 0 : i32
    %c0_i32_0 = arith.constant 0 : i32
    %c0_i32_1 = arith.constant 0 : i32
    return %c0_i32, %c0_i32_0 : i32, i32
  }
  func.func @transform_3(%arg0: i32) -> (i32, i32) {
    %c0_i32 = arith.constant 0 : i32
    %c0_i32_0 = arith.constant 0 : i32
    %c0_i32_1 = arith.constant 0 : i32
    return %c0_i32, %c0_i32_0 : i32, i32
  }
  func.func @transform_4(%arg0: i32) -> (i32, i32) {
    %c0_i32 = arith.constant 0 : i32
    %c0_i32_0 = arith.constant 0 : i32
    %c0_i32_1 = arith.constant 0 : i32
    return %c0_i32, %c0_i32_0 : i32, i32
  }
  func.func @transform_5(%arg0: i32) -> (i32, i32) {
    %c0_i32 = arith.constant 0 : i32
    %c0_i32_0 = arith.constant 0 : i32
    %c0_i32_1 = arith.constant 0 : i32
    return %c0_i32, %c0_i32_0 : i32, i32
  }
  func.func @transform_6(%arg0: i32) -> (i32, i32) {
    %c0_i32 = arith.constant 0 : i32
    %c0_i32_0 = arith.constant 0 : i32
    %c0_i32_1 = arith.constant 0 : i32
    return %c0_i32, %c0_i32_0 : i32, i32
  }
  func.func @transform_7(%arg0: i32) -> (i32, i32) {
    %c0_i32 = arith.constant 0 : i32
    %c0_i32_0 = arith.constant 0 : i32
    %c0_i32_1 = arith.constant 0 : i32
    return %c0_i32, %c0_i32_0 : i32, i32
  }
  func.func @transform_8(%arg0: i32) -> (i32, i32) {
    %c0_i32 = arith.constant 0 : i32
    %c0_i32_0 = arith.constant 0 : i32
    %c0_i32_1 = arith.constant 0 : i32
    return %c0_i32, %c0_i32_0 : i32, i32
  }
  func.func @transform_9(%arg0: i32) -> (i32, i32) {
    %c0_i32 = arith.constant 0 : i32
    %c0_i32_0 = arith.constant 0 : i32
    %c0_i32_1 = arith.constant 0 : i32
    return %c0_i32, %c0_i32_0 : i32, i32
  }
  func.func @transform_10(%arg0: i32) -> (i32, i32) {
    %c0_i32 = arith.constant 0 : i32
    %c0_i32_0 = arith.constant 0 : i32
    %c0_i32_1 = arith.constant 0 : i32
    return %c0_i32, %c0_i32_0 : i32, i32
  }
  func.func @transform_11(%arg0: i32) -> (i32, i32) {
    %c0_i32 = arith.constant 0 : i32
    %c0_i32_0 = arith.constant 0 : i32
    %c0_i32_1 = arith.constant 0 : i32
    return %c0_i32, %c0_i32_0 : i32, i32
  }
  func.func @transform_12(%arg0: i32) -> (i32, i32) {
    %c0_i32 = arith.constant 0 : i32
    %c0_i32_0 = arith.constant 0 : i32
    %c0_i32_1 = arith.constant 0 : i32
    return %c0_i32, %c0_i32_0 : i32, i32
  }
  func.func @transform_13(%arg0: i32) -> (i32, i32) {
    %c0_i32 = arith.constant 0 : i32
    %c0_i32_0 = arith.constant 0 : i32
    %c0_i32_1 = arith.constant 0 : i32
    return %c0_i32, %c0_i32_0 : i32, i32
  }
  func.func @transform_14(%arg0: i32) -> (i32, i32) {
    %c0_i32 = arith.constant 0 : i32
    %c0_i32_0 = arith.constant 0 : i32
    %c0_i32_1 = arith.constant 0 : i32
    return %c0_i32, %c0_i32_0 : i32, i32
  }
  func.func @transform_15(%arg0: i32) -> (i32, i32) {
    %c0_i32 = arith.constant 0 : i32
    %c0_i32_0 = arith.constant 0 : i32
    %c0_i32_1 = arith.constant 0 : i32
    return %c0_i32, %c0_i32_0 : i32, i32
  }
  func.func @transform_16(%arg0: i32) -> (i32, i32) {
    %c0_i32 = arith.constant 0 : i32
    %c0_i32_0 = arith.constant 0 : i32
    %c0_i32_1 = arith.constant 0 : i32
    return %c0_i32, %c0_i32_0 : i32, i32
  }
  func.func @transform_17(%arg0: i32) -> (i32, i32) {
    %c0_i32 = arith.constant 0 : i32
    %c0_i32_0 = arith.constant 0 : i32
    %c0_i32_1 = arith.constant 0 : i32
    return %c0_i32, %c0_i32_0 : i32, i32
  }
  func.func @transform_18(%arg0: i32) -> (i32, i32) {
    %c0_i32 = arith.constant 0 : i32
    %c0_i32_0 = arith.constant 0 : i32
    %c0_i32_1 = arith.constant 0 : i32
    return %c0_i32, %c0_i32_0 : i32, i32
  }
  func.func @transform_19(%arg0: i32) -> (i32, i32) {
    %c0_i32 = arith.constant 0 : i32
    %c0_i32_0 = arith.constant 0 : i32
    %c0_i32_1 = arith.constant 0 : i32
    return %c0_i32, %c0_i32_0 : i32, i32
  }
  func.func @transform_20(%arg0: i32) -> (i32, i32) {
    %c0_i32 = arith.constant 0 : i32
    %c0_i32_0 = arith.constant 0 : i32
    %c0_i32_1 = arith.constant 0 : i32
    return %c0_i32, %c0_i32_0 : i32, i32
  }
  func.func @transform_21(%arg0: i32) -> (i32, i32) {
    %c0_i32 = arith.constant 0 : i32
    %c0_i32_0 = arith.constant 0 : i32
    %c0_i32_1 = arith.constant 0 : i32
    return %c0_i32, %c0_i32_0 : i32, i32
  }
  func.func @transform_22(%arg0: i32) -> (i32, i32) {
    %c0_i32 = arith.constant 0 : i32
    %c0_i32_0 = arith.constant 0 : i32
    %c0_i32_1 = arith.constant 0 : i32
    return %c0_i32, %c0_i32_0 : i32, i32
  }
  func.func @transform_23(%arg0: i32) -> (i32, i32) {
    %c0_i32 = arith.constant 0 : i32
    %c0_i32_0 = arith.constant 0 : i32
    %c0_i32_1 = arith.constant 0 : i32
    return %c0_i32, %c0_i32_0 : i32, i32
  }
  func.func @transform_24(%arg0: i32) -> (i32, i32) {
    %c0_i32 = arith.constant 0 : i32
    %c0_i32_0 = arith.constant 0 : i32
    %c0_i32_1 = arith.constant 0 : i32
    return %c0_i32, %c0_i32_0 : i32, i32
  }
  func.func @transform_25(%arg0: i32) -> (i32, i32) {
    %c0_i32 = arith.constant 0 : i32
    %c0_i32_0 = arith.constant 0 : i32
    %c0_i32_1 = arith.constant 0 : i32
    return %c0_i32, %c0_i32_0 : i32, i32
  }
  func.func @transform_26(%arg0: i32) -> (i32, i32) {
    %c0_i32 = arith.constant 0 : i32
    %c0_i32_0 = arith.constant 0 : i32
    %c0_i32_1 = arith.constant 0 : i32
    return %c0_i32, %c0_i32_0 : i32, i32
  }
  func.func @transform_27(%arg0: i32) -> (i32, i32) {
    %c0_i32 = arith.constant 0 : i32
    %c0_i32_0 = arith.constant 0 : i32
    %c0_i32_1 = arith.constant 0 : i32
    return %c0_i32, %c0_i32_0 : i32, i32
  }
  func.func @transform_28(%arg0: i32) -> (i32, i32) {
    %c0_i32 = arith.constant 0 : i32
    %c0_i32_0 = arith.constant 0 : i32
    %c0_i32_1 = arith.constant 0 : i32
    return %c0_i32, %c0_i32_0 : i32, i32
  }
  func.func @transform_29(%arg0: i32) -> (i32, i32) {
    %c0_i32 = arith.constant 0 : i32
    %c0_i32_0 = arith.constant 0 : i32
    %c0_i32_1 = arith.constant 0 : i32
    return %c0_i32, %c0_i32_0 : i32, i32
  }
  func.func @transform_30(%arg0: i32) -> (i32, i32) {
    %c0_i32 = arith.constant 0 : i32
    %c0_i32_0 = arith.constant 0 : i32
    %c0_i32_1 = arith.constant 0 : i32
    return %c0_i32, %c0_i32_0 : i32, i32
  }
  func.func @transform_31(%arg0: i32) -> (i32, i32) {
    %c0_i32 = arith.constant 0 : i32
    %c0_i32_0 = arith.constant 0 : i32
    %c0_i32_1 = arith.constant 0 : i32
    return %c0_i32, %c0_i32_0 : i32, i32
  }
  func.func @transform_32(%arg0: i32) -> (i32, i32) {
    %c0_i32 = arith.constant 0 : i32
    %c0_i32_0 = arith.constant 0 : i32
    %c0_i32_1 = arith.constant 0 : i32
    return %c0_i32, %c0_i32_0 : i32, i32
  }
  func.func @transform_33(%arg0: i32) -> (i32, i32) {
    %c0_i32 = arith.constant 0 : i32
    %c0_i32_0 = arith.constant 0 : i32
    %c0_i32_1 = arith.constant 0 : i32
    return %c0_i32, %c0_i32_0 : i32, i32
  }
}

</mosaic_0001>

<llo_original>
// kernel: mul.26
$region0: #{mul.26}
  #allocation0 [shape = 's32[1]{0}', space=sflag, size = 0x4, scoped, tag = 'scoped memory for mul.26']
  %s0 = inlined_call_operand.vmem [shape: f32[2,4,72], index: 0, kind: input, shape index: {}]
  %s1 = inlined_call_operand.vmem [shape: f32[2,4,72], index: 1, kind: input, shape index: {}]
  %s2 = inlined_call_operand.vmem [shape: f32[2,4,72], index: 2, kind: output, shape index: {}]
  %v3 = vld [vmem:[%s0] sm:$0xf]
  %v4 = vld [vmem:[%s1] sm:$0xf]
  %5 = xla_tuple %v3, %v4
  %6 = xla_tuple %5
  %v7 = vmul.f32 %v3, %v4
  %8 = xla_tuple %v7
  %9 = vst [vmem:[%s2] sm:$0xf] %v7
  %s10 = scalar_lea.vmem %s0, 4
  %v11 = vld [vmem:[%s10] sm:$0xf]
  %s12 = scalar_lea.vmem %s1, 4
  %v13 = vld [vmem:[%s12] sm:$0xf]
  %14 = xla_tuple %v11, %v13
  %15 = xla_tuple %14
  %v16 = vmul.f32 %v11, %v13
  %17 = xla_tuple %v16
  %s18 = scalar_lea.vmem %s2, 4
  %19 = vst [vmem:[%s18] sm:$0xf] %v16

// kernel: meva_demo_forward.1
$region0: #{meva_demo_forward.1}
  #allocation0 [shape = 'u32[]', space=smem, size = 0x4, offset = 0x4, fixed_abs, tag = 'smem constant byte address 0x4 - core index']
  #allocation1 [shape = 'u32[144,128]{1,0:T(1,128)}', space=vmem, size = 0x12000, scoped, tag = 'internal scratch']
  #allocation2 [shape = 'f32[32,64]{1,0:T(8,128)}', space=vmem, size = 0x4000, scoped, tag = 'scratch operand']
  #allocation3 [shape = 'f32[32,32]{1,0:T(8,128)}', space=vmem, size = 0x4000, scoped, tag = 'scratch operand']
  %s0 = inlined_call_operand.smem [shape: u32[34], index: -1, kind: input, shape index: {}]
  %s1 = sld [smem:[%s0]]
  %s2 = scalar_lea.smem %s0, 1
  %s3 = sld [smem:[%s2]]
  %s4 = scalar_lea.smem %s0, 2
  %s5 = sld [smem:[%s4]]
  %s6 = scalar_lea.smem %s0, 3
  %s7 = sld [smem:[%s6]]
  %s8 = scalar_lea.smem %s0, 4
  %s9 = sld [smem:[%s8]]
  %s10 = scalar_lea.smem %s0, 5
  %s11 = sld [smem:[%s10]]
  %s12 = scalar_lea.smem %s0, 6
  %s13 = sld [smem:[%s12]]
  %s14 = scalar_lea.smem %s0, 7
  %s15 = sld [smem:[%s14]]
  %s16 = scalar_lea.smem %s0, 8
  %s17 = sld [smem:[%s16]]
  %s18 = scalar_lea.smem %s0, 9
  %s19 = sld [smem:[%s18]]
  %s20 = scalar_lea.smem %s0, 10
  %s21 = sld [smem:[%s20]]
  %s22 = scalar_lea.smem %s0, 11
  %s23 = sld [smem:[%s22]]
  %s24 = scalar_lea.smem %s0, 12
  %s25 = sld [smem:[%s24]]
  %s26 = scalar_lea.smem %s0, 13
  %s27 = sld [smem:[%s26]]
  %s28 = scalar_lea.smem %s0, 14
  %s29 = sld [smem:[%s28]]
  %s30 = scalar_lea.smem %s0, 15
  %s31 = sld [smem:[%s30]]
  %s32 = scalar_lea.smem %s0, 16
  %s33 = sld [smem:[%s32]]
  %s34 = scalar_lea.smem %s0, 17
  %s35 = sld [smem:[%s34]]
  %s36 = scalar_lea.smem %s0, 18
  %s37 = sld [smem:[%s36]]
  %s38 = scalar_lea.smem %s0, 19
  %s39 = sld [smem:[%s38]]
  %s40 = scalar_lea.smem %s0, 20
  %s41 = sld [smem:[%s40]]
  %s42 = scalar_lea.smem %s0, 21
  %s43 = sld [smem:[%s42]]
  %s44 = scalar_lea.smem %s0, 22
  %s45 = sld [smem:[%s44]]
  %s46 = scalar_lea.smem %s0, 23
  %s47 = sld [smem:[%s46]]
  %s48 = scalar_lea.smem %s0, 24
  %s49 = sld [smem:[%s48]]
  %s50 = scalar_lea.smem %s0, 25
  %s51 = sld [smem:[%s50]]
  %s52 = scalar_lea.smem %s0, 26
  %s53 = sld [smem:[%s52]]
  %s54 = scalar_lea.smem %s0, 27
  %s55 = sld [smem:[%s54]]
  %s56 = scalar_lea.smem %s0, 28
  %s57 = sld [smem:[%s56]]
  %s58 = scalar_lea.smem %s0, 29
  %s59 = sld [smem:[%s58]]
  %s60 = scalar_lea.smem %s0, 30
  %s61 = sld [smem:[%s60]]
  %s62 = scalar_lea.smem %s0, 31
  %s63 = sld [smem:[%s62]]
  %s64 = scalar_lea.smem %s0, 32
  %s65 = sld [smem:[%s64]]
  %s66 = scalar_lea.smem %s0, 33
  %s67 = sld [smem:[%s66]]
  %s68 = sld [smem:[#allocation0]]
  $region142: #{meva_demo_forward.1} parent=0
    _
  %s70 = ssub.s32 1, %s68
  %s71 = scalar_select 0, %s70, %s68
  // Predicated region
  $region2: #{meva_demo_forward.1} parent=0 // pred_check
    _
  $region3: #{meva_demo_forward.1} parent=0 // pred_check_branch
    %73 = sbr.rel (0) target = $region5
  $region4: #{meva_demo_forward.1} parent=0 // pred_region
    _
  $region5: #{meva_demo_forward.1} parent=0 // pred_fallthru
    _
  // Predicated region
  $region6: #{meva_demo_forward.1} parent=0 // pred_check
    _
  $region7: #{meva_demo_forward.1} parent=0 // pred_check_branch
    %75 = sbr.rel (0) target = $region9
  $region8: #{meva_demo_forward.1} parent=0 // pred_region
    _
  $region9: #{meva_demo_forward.1} parent=0 // pred_fallthru
    _
  // Predicated region
  $region10: #{meva_demo_forward.1} parent=0 // pred_check
    _
  $region11: #{meva_demo_forward.1} parent=0 // pred_check_branch
    %77 = sbr.rel (0) target = $region13
  $region12: #{meva_demo_forward.1} parent=0 // pred_region
    _
  $region13: #{meva_demo_forward.1} parent=0 // pred_fallthru
    _
  // Predicated region
  $region14: #{meva_demo_forward.1} parent=0 // pred_check
    _
  $region15: #{meva_demo_forward.1} parent=0 // pred_check_branch
    %79 = sbr.rel (0) target = $region17
  $region16: #{meva_demo_forward.1} parent=0 // pred_region
    _
  $region17: #{meva_demo_forward.1} parent=0 // pred_fallthru
    _
  // Predicated region
  $region18: #{meva_demo_forward.1} parent=0 // pred_check
    _
  $region19: #{meva_demo_forward.1} parent=0 // pred_check_branch
    %81 = sbr.rel (0) target = $region21
  $region20: #{meva_demo_forward.1} parent=0 // pred_region
    _
  $region21: #{meva_demo_forward.1} parent=0 // pred_fallthru
    _
  // Predicated region
  $region22: #{meva_demo_forward.1} parent=0 // pred_check
    _
  $region23: #{meva_demo_forward.1} parent=0 // pred_check_branch
    %83 = sbr.rel (0) target = $region25
  $region24: #{meva_demo_forward.1} parent=0 // pred_region
    _
  $region25: #{meva_demo_forward.1} parent=0 // pred_fallthru
    _
  // Predicated region
  $region26: #{meva_demo_forward.1} parent=0 // pred_check
    _
  $region27: #{meva_demo_forward.1} parent=0 // pred_check_branch
    %85 = sbr.rel (0) target = $region29
  $region28: #{meva_demo_forward.1} parent=0 // pred_region
    _
  $region29: #{meva_demo_forward.1} parent=0 // pred_fallthru
    _
  // Predicated region
  $region30: #{meva_demo_forward.1} parent=0 // pred_check
    _
  $region31: #{meva_demo_forward.1} parent=0 // pred_check_branch
    %87 = sbr.rel (0) target = $region33
  $region32: #{meva_demo_forward.1} parent=0 // pred_region
    _
  $region33: #{meva_demo_forward.1} parent=0 // pred_fallthru
    _
  // Predicated region
  $region34: #{meva_demo_forward.1} parent=0 // pred_check
    _
  $region35: #{meva_demo_forward.1} parent=0 // pred_check_branch
    %89 = sbr.rel (0) target = $region37
  $region36: #{meva_demo_forward.1} parent=0 // pred_region
    _
  $region37: #{meva_demo_forward.1} parent=0 // pred_fallthru
    _
  // Predicated region
  $region38: #{meva_demo_forward.1} parent=0 // pred_check
    _
  $region39: #{meva_demo_forward.1} parent=0 // pred_check_branch
    %91 = sbr.rel (0) target = $region41
  $region40: #{meva_demo_forward.1} parent=0 // pred_region
    _
  $region41: #{meva_demo_forward.1} parent=0 // pred_fallthru
    _
  // Predicated region
  $region42: #{meva_demo_forward.1} parent=0 // pred_check
    _
  $region43: #{meva_demo_forward.1} parent=0 // pred_check_branch
    %93 = sbr.rel (0) target = $region45
  $region44: #{meva_demo_forward.1} parent=0 // pred_region
    _
  $region45: #{meva_demo_forward.1} parent=0 // pred_fallthru
    _
  // Predicated region
  $region46: #{meva_demo_forward.1} parent=0 // pred_check
    _
  $region47: #{meva_demo_forward.1} parent=0 // pred_check_branch
    %95 = sbr.rel (0) target = $region49
  $region48: #{meva_demo_forward.1} parent=0 // pred_region
    _
  $region49: #{meva_demo_forward.1} parent=0 // pred_fallthru
    _
  // Predicated region
  $region50: #{meva_demo_forward.1} parent=0 // pred_check
    _
  $region51: #{meva_demo_forward.1} parent=0 // pred_check_branch
    %97 = sbr.rel (0) target = $region53
  $region52: #{meva_demo_forward.1} parent=0 // pred_region
    _
  $region53: #{meva_demo_forward.1} parent=0 // pred_fallthru
    _
  // Predicated region
  $region54: #{meva_demo_forward.1} parent=0 // pred_check
    _
  $region55: #{meva_demo_forward.1} parent=0 // pred_check_branch
    %99 = sbr.rel (0) target = $region57
  $region56: #{meva_demo_forward.1} parent=0 // pred_region
    _
  $region57: #{meva_demo_forward.1} parent=0 // pred_fallthru
    _
  // Predicated region
  $region58: #{meva_demo_forward.1} parent=0 // pred_check
    _
  $region59: #{meva_demo_forward.1} parent=0 // pred_check_branch
    %101 = sbr.rel (0) target = $region61
  $region60: #{meva_demo_forward.1} parent=0 // pred_region
    _
  $region61: #{meva_demo_forward.1} parent=0 // pred_fallthru
    _
  // Predicated region
  $region62: #{meva_demo_forward.1} parent=0 // pred_check
    _
  $region63: #{meva_demo_forward.1} parent=0 // pred_check_branch
    %103 = sbr.rel (0) target = $region65
  $region64: #{meva_demo_forward.1} parent=0 // pred_region
    _
  $region65: #{meva_demo_forward.1} parent=0 // pred_fallthru
    _
  // Predicated region
  $region66: #{meva_demo_forward.1} parent=0 // pred_check
    _
  $region67: #{meva_demo_forward.1} parent=0 // pred_check_branch
    %105 = sbr.rel (0) target = $region69
  $region68: #{meva_demo_forward.1} parent=0 // pred_region
    _
  $region69: #{meva_demo_forward.1} parent=0 // pred_fallthru
    _
  // Predicated region
  $region70: #{meva_demo_forward.1} parent=0 // pred_check
    _
  $region71: #{meva_demo_forward.1} parent=0 // pred_check_branch
    %107 = sbr.rel (0) target = $region73
  $region72: #{meva_demo_forward.1} parent=0 // pred_region
    _
  $region73: #{meva_demo_forward.1} parent=0 // pred_fallthru
    _
  // Predicated region
  $region74: #{meva_demo_forward.1} parent=0 // pred_check
    _
  $region75: #{meva_demo_forward.1} parent=0 // pred_check_branch
    %109 = sbr.rel (0) target = $region77
  $region76: #{meva_demo_forward.1} parent=0 // pred_region
    _
  $region77: #{meva_demo_forward.1} parent=0 // pred_fallthru
    _
  // Predicated region
  $region78: #{meva_demo_forward.1} parent=0 // pred_check
    _
  $region79: #{meva_demo_forward.1} parent=0 // pred_check_branch
    %111 = sbr.rel (0) target = $region81
  $region80: #{meva_demo_forward.1} parent=0 // pred_region
    _
  $region81: #{meva_demo_forward.1} parent=0 // pred_fallthru
    _
  // Predicated region
  $region82: #{meva_demo_forward.1} parent=0 // pred_check
    _
  $region83: #{meva_demo_forward.1} parent=0 // pred_check_branch
    %113 = sbr.rel (0) target = $region85
  $region84: #{meva_demo_forward.1} parent=0 // pred_region
    _
  $region85: #{meva_demo_forward.1} parent=0 // pred_fallthru
    _
  // Predicated region
  $region86: #{meva_demo_forward.1} parent=0 // pred_check
    _
  $region87: #{meva_demo_forward.1} parent=0 // pred_check_branch
    %115 = sbr.rel (0) target = $region89
  $region88: #{meva_demo_forward.1} parent=0 // pred_region
    _
  $region89: #{meva_demo_forward.1} parent=0 // pred_fallthru
    _
  // Predicated region
  $region90: #{meva_demo_forward.1} parent=0 // pred_check
    _
  $region91: #{meva_demo_forward.1} parent=0 // pred_check_branch
    %117 = sbr.rel (0) target = $region93
  $region92: #{meva_demo_forward.1} parent=0 // pred_region
    _
  $region93: #{meva_demo_forward.1} parent=0 // pred_fallthru
    _
  // Predicated region
  $region94: #{meva_demo_forward.1} parent=0 // pred_check
    _
  $region95: #{meva_demo_forward.1} parent=0 // pred_check_branch
    %119 = sbr.rel (0) target = $region97
  $region96: #{meva_demo_forward.1} parent=0 // pred_region
    _
  $region97: #{meva_demo_forward.1} parent=0 // pred_fallthru
    _
  // Predicated region
  $region98: #{meva_demo_forward.1} parent=0 // pred_check
    _
  $region99: #{meva_demo_forward.1} parent=0 // pred_check_branch
    %121 = sbr.rel (0) target = $region101
  $region100: #{meva_demo_forward.1} parent=0 // pred_region
    _
  $region101: #{meva_demo_forward.1} parent=0 // pred_fallthru
    _
  // Predicated region
  $region102: #{meva_demo_forward.1} parent=0 // pred_check
    _
  $region103: #{meva_demo_forward.1} parent=0 // pred_check_branch
    %123 = sbr.rel (0) target = $region105
  $region104: #{meva_demo_forward.1} parent=0 // pred_region
    _
  $region105: #{meva_demo_forward.1} parent=0 // pred_fallthru
    _
  // Predicated region
  $region106: #{meva_demo_forward.1} parent=0 // pred_check
    _
  $region107: #{meva_demo_forward.1} parent=0 // pred_check_branch
    %125 = sbr.rel (0) target = $region109
  $region108: #{meva_demo_forward.1} parent=0 // pred_region
    _
  $region109: #{meva_demo_forward.1} parent=0 // pred_fallthru
    _
  // Predicated region
  $region110: #{meva_demo_forward.1} parent=0 // pred_check
    _
  $region111: #{meva_demo_forward.1} parent=0 // pred_check_branch
    %127 = sbr.rel (0) target = $region113
  $region112: #{meva_demo_forward.1} parent=0 // pred_region
    _
  $region113: #{meva_demo_forward.1} parent=0 // pred_fallthru
    _
  // Predicated region
  $region114: #{meva_demo_forward.1} parent=0 // pred_check
    _
  $region115: #{meva_demo_forward.1} parent=0 // pred_check_branch
    %129 = sbr.rel (0) target = $region117
  $region116: #{meva_demo_forward.1} parent=0 // pred_region
    _
  $region117: #{meva_demo_forward.1} parent=0 // pred_fallthru
    _
  // Predicated region
  $region118: #{meva_demo_forward.1} parent=0 // pred_check
    _
  $region119: #{meva_demo_forward.1} parent=0 // pred_check_branch
    %131 = sbr.rel (0) target = $region121
  $region120: #{meva_demo_forward.1} parent=0 // pred_region
    _
  $region121: #{meva_demo_forward.1} parent=0 // pred_fallthru
    _
  // Predicated region
  $region122: #{meva_demo_forward.1} parent=0 // pred_check
    _
  $region123: #{meva_demo_forward.1} parent=0 // pred_check_branch
    %133 = sbr.rel (0) target = $region125
  $region124: #{meva_demo_forward.1} parent=0 // pred_region
    _
  $region125: #{meva_demo_forward.1} parent=0 // pred_fallthru
    _
  // Predicated region
  $region126: #{meva_demo_forward.1} parent=0 // pred_check
    _
  $region127: #{meva_demo_forward.1} parent=0 // pred_check_branch
    %135 = sbr.rel (0) target = $region129
  $region128: #{meva_demo_forward.1} parent=0 // pred_region
    _
  $region129: #{meva_demo_forward.1} parent=0 // pred_fallthru
    _
  // Predicated region
  $region130: #{meva_demo_forward.1} parent=0 // pred_check
    _
  $region131: #{meva_demo_forward.1} parent=0 // pred_check_branch
    %137 = sbr.rel (0) target = $region133
  $region132: #{meva_demo_forward.1} parent=0 // pred_region
    _
  $region133: #{meva_demo_forward.1} parent=0 // pred_fallthru
    _
  %v139 = vld [vmem:[%s1] sm:$0xf]
  %v140 = vld [vmem:[%s1 + $0x4] sm:$0xf]
  %v141 = vld [vmem:[%s1 + $0x8] sm:$0xf]
  %v142 = vld [vmem:[%s1 + $0xc] sm:$0xf]
  %v143 = vld [vmem:[%s1 + $0x10] sm:$0xf]
  %v144 = vld [vmem:[%s1 + $0x14] sm:$0xf]
  %v145 = vld [vmem:[%s1 + $0x18] sm:$0xf]
  %v146 = vld [vmem:[%s1 + $0x1c] sm:$0xf]
  %v147 = vld [vmem:[%s1 + $0x20] sm:$0xf]
  %v148 = vld [vmem:[%s1 + $0x24] sm:$0xf]
  %v149 = vld [vmem:[%s1 + $0x28] sm:$0xf]
  %v150 = vld [vmem:[%s1 + $0x2c] sm:$0xf]
  %v151 = vld [vmem:[%s1 + $0x30] sm:$0xf]
  %v152 = vld [vmem:[%s1 + $0x34] sm:$0xf]
  %v153 = vld [vmem:[%s1 + $0x38] sm:$0xf]
  %v154 = vld [vmem:[%s1 + $0x3c] sm:$0xf]
  %v155 = vld [vmem:[%s1 + $0x40] sm:$0xf]
  %v156 = vld [vmem:[%s1 + $0x44] sm:$0xf]
  %v157 = vld [vmem:[%s1 + $0x48] sm:$0xf]
  %v158 = vld [vmem:[%s1 + $0x4c] sm:$0xf]
  %v159 = vld [vmem:[%s1 + $0x50] sm:$0xf]
  %v160 = vld [vmem:[%s1 + $0x54] sm:$0xf]
  %v161 = vld [vmem:[%s1 + $0x58] sm:$0xf]
  %v162 = vld [vmem:[%s1 + $0x5c] sm:$0xf]
  %v163 = vld [vmem:[%s1 + $0x60] sm:$0xf]
  %v164 = vld [vmem:[%s1 + $0x64] sm:$0xf]
  %v165 = vld [vmem:[%s1 + $0x68] sm:$0xf]
  %v166 = vld [vmem:[%s1 + $0x6c] sm:$0xf]
  %v167 = vld [vmem:[%s1 + $0x70] sm:$0xf]
  %v168 = vld [vmem:[%s1 + $0x74] sm:$0xf]
  %v169 = vld [vmem:[%s1 + $0x78] sm:$0xf]
  %v170 = vld [vmem:[%s1 + $0x7c] sm:$0xf]
  %v171 = vld [vmem:[%s1 + $0x80] sm:$0xf]
  %v172 = vld [vmem:[%s1 + $0x84] sm:$0xf]
  %v173 = vld [vmem:[%s1 + $0x88] sm:$0xf]
  %v174 = vld [vmem:[%s1 + $0x8c] sm:$0xf]
  %v175 = vld [vmem:[%s1 + $0x90] sm:$0xf]
  %v176 = vld [vmem:[%s1 + $0x94] sm:$0xf]
  %v177 = vld [vmem:[%s1 + $0x98] sm:$0xf]
  %v178 = vld [vmem:[%s1 + $0x9c] sm:$0xf]
  %v179 = vld [vmem:[%s1 + $0xa0] sm:$0xf]
  %v180 = vld [vmem:[%s1 + $0xa4] sm:$0xf]
  %v181 = vld [vmem:[%s1 + $0xa8] sm:$0xf]
  %v182 = vld [vmem:[%s1 + $0xac] sm:$0xf]
  %v183 = vld [vmem:[%s1 + $0xb0] sm:$0xf]
  %v184 = vld [vmem:[%s1 + $0xb4] sm:$0xf]
  %v185 = vld [vmem:[%s1 + $0xb8] sm:$0xf]
  %v186 = vld [vmem:[%s1 + $0xbc] sm:$0xf]
  %v187 = vld [vmem:[%s1 + $0xc0] sm:$0xf]
  %v188 = vld [vmem:[%s1 + $0xc4] sm:$0xf]
  %v189 = vld [vmem:[%s1 + $0xc8] sm:$0xf]
  %v190 = vld [vmem:[%s1 + $0xcc] sm:$0xf]
  %v191 = vld [vmem:[%s1 + $0xd0] sm:$0xf]
  %v192 = vld [vmem:[%s1 + $0xd4] sm:$0xf]
  %v193 = vld [vmem:[%s1 + $0xd8] sm:$0xf]
  %v194 = vld [vmem:[%s1 + $0xdc] sm:$0xf]
  %v195 = vld [vmem:[%s1 + $0xe0] sm:$0xf]
  %v196 = vld [vmem:[%s1 + $0xe4] sm:$0xf]
  %v197 = vld [vmem:[%s1 + $0xe8] sm:$0xf]
  %v198 = vld [vmem:[%s1 + $0xec] sm:$0xf]
  %v199 = vld [vmem:[%s1 + $0xf0] sm:$0xf]
  %v200 = vld [vmem:[%s1 + $0xf4] sm:$0xf]
  %v201 = vld [vmem:[%s1 + $0xf8] sm:$0xf]
  %v202 = vld [vmem:[%s1 + $0xfc] sm:$0xf]
  %v203 = vld [vmem:[%s1 + $0x100] sm:$0xf]
  %v204 = vld [vmem:[%s1 + $0x104] sm:$0xf]
  %v205 = vld [vmem:[%s1 + $0x108] sm:$0xf]
  %v206 = vld [vmem:[%s1 + $0x10c] sm:$0xf]
  %v207 = vld [vmem:[%s1 + $0x110] sm:$0xf]
  %v208 = vld [vmem:[%s1 + $0x114] sm:$0xf]
  %v209 = vld [vmem:[%s1 + $0x118] sm:$0xf]
  %v210 = vld [vmem:[%s1 + $0x11c] sm:$0xf]
  %v211 = vld [vmem:[%s1 + $0x120] sm:$0xf]
  %v212 = vld [vmem:[%s1 + $0x124] sm:$0xf]
  %v213 = vld [vmem:[%s1 + $0x128] sm:$0xf]
  %v214 = vld [vmem:[%s1 + $0x12c] sm:$0xf]
  %v215 = vld [vmem:[%s1 + $0x130] sm:$0xf]
  %v216 = vld [vmem:[%s1 + $0x134] sm:$0xf]
  %v217 = vld [vmem:[%s1 + $0x138] sm:$0xf]
  %v218 = vld [vmem:[%s1 + $0x13c] sm:$0xf]
  %v219 = vld [vmem:[%s1 + $0x140] sm:$0xf]
  %v220 = vld [vmem:[%s1 + $0x144] sm:$0xf]
  %v221 = vld [vmem:[%s1 + $0x148] sm:$0xf]
  %v222 = vld [vmem:[%s1 + $0x14c] sm:$0xf]
  %v223 = vld [vmem:[%s1 + $0x150] sm:$0xf]
  %v224 = vld [vmem:[%s1 + $0x154] sm:$0xf]
  %v225 = vld [vmem:[%s1 + $0x158] sm:$0xf]
  %v226 = vld [vmem:[%s1 + $0x15c] sm:$0xf]
  %v227 = vld [vmem:[%s1 + $0x160] sm:$0xf]
  %v228 = vld [vmem:[%s1 + $0x164] sm:$0xf]
  %v229 = vld [vmem:[%s1 + $0x168] sm:$0xf]
  %v230 = vld [vmem:[%s1 + $0x16c] sm:$0xf]
  %v231 = vld [vmem:[%s1 + $0x170] sm:$0xf]
  %v232 = vld [vmem:[%s1 + $0x174] sm:$0xf]
  %v233 = vld [vmem:[%s1 + $0x178] sm:$0xf]
  %v234 = vld [vmem:[%s1 + $0x17c] sm:$0xf]
  %v235 = vld [vmem:[%s1 + $0x180] sm:$0xf]
  %v236 = vld [vmem:[%s1 + $0x184] sm:$0xf]
  %v237 = vld [vmem:[%s1 + $0x188] sm:$0xf]
  %v238 = vld [vmem:[%s1 + $0x18c] sm:$0xf]
  %v239 = vld [vmem:[%s1 + $0x190] sm:$0xf]
  %v240 = vld [vmem:[%s1 + $0x194] sm:$0xf]
  %v241 = vld [vmem:[%s1 + $0x198] sm:$0xf]
  %v242 = vld [vmem:[%s1 + $0x19c] sm:$0xf]
  %v243 = vld [vmem:[%s1 + $0x1a0] sm:$0xf]
  %v244 = vld [vmem:[%s1 + $0x1a4] sm:$0xf]
  %v245 = vld [vmem:[%s1 + $0x1a8] sm:$0xf]
  %v246 = vld [vmem:[%s1 + $0x1ac] sm:$0xf]
  %v247 = vld [vmem:[%s1 + $0x1b0] sm:$0xf]
  %v248 = vld [vmem:[%s1 + $0x1b4] sm:$0xf]
  %v249 = vld [vmem:[%s1 + $0x1b8] sm:$0xf]
  %v250 = vld [vmem:[%s1 + $0x1bc] sm:$0xf]
  %v251 = vld [vmem:[%s1 + $0x1c0] sm:$0xf]
  %v252 = vld [vmem:[%s1 + $0x1c4] sm:$0xf]
  %v253 = vld [vmem:[%s1 + $0x1c8] sm:$0xf]
  %v254 = vld [vmem:[%s1 + $0x1cc] sm:$0xf]
  %v255 = vld [vmem:[%s1 + $0x1d0] sm:$0xf]
  %v256 = vld [vmem:[%s1 + $0x1d4] sm:$0xf]
  %v257 = vld [vmem:[%s1 + $0x1d8] sm:$0xf]
  %v258 = vld [vmem:[%s1 + $0x1dc] sm:$0xf]
  %v259 = vld [vmem:[%s1 + $0x1e0] sm:$0xf]
  %v260 = vld [vmem:[%s1 + $0x1e4] sm:$0xf]
  %v261 = vld [vmem:[%s1 + $0x1e8] sm:$0xf]
  %v262 = vld [vmem:[%s1 + $0x1ec] sm:$0xf]
  %v263 = vld [vmem:[%s1 + $0x1f0] sm:$0xf]
  %v264 = vld [vmem:[%s1 + $0x1f4] sm:$0xf]
  %v265 = vld [vmem:[%s1 + $0x1f8] sm:$0xf]
  %v266 = vld [vmem:[%s1 + $0x1fc] sm:$0xf]
  %v267 = vld [vmem:[%s1 + $0x200] sm:$0xf]
  %v268 = vld [vmem:[%s1 + $0x204] sm:$0xf]
  %v269 = vld [vmem:[%s1 + $0x208] sm:$0xf]
  %v270 = vld [vmem:[%s1 + $0x20c] sm:$0xf]
  %v271 = vld [vmem:[%s1 + $0x210] sm:$0xf]
  %v272 = vld [vmem:[%s1 + $0x214] sm:$0xf]
  %v273 = vld [vmem:[%s1 + $0x218] sm:$0xf]
  %v274 = vld [vmem:[%s1 + $0x21c] sm:$0xf]
  %v275 = vld [vmem:[%s1 + $0x220] sm:$0xf]
  %v276 = vld [vmem:[%s1 + $0x224] sm:$0xf]
  %v277 = vld [vmem:[%s1 + $0x228] sm:$0xf]
  %v278 = vld [vmem:[%s1 + $0x22c] sm:$0xf]
  %v279 = vld [vmem:[%s1 + $0x230] sm:$0xf]
  %v280 = vld [vmem:[%s1 + $0x234] sm:$0xf]
  %v281 = vld [vmem:[%s1 + $0x238] sm:$0xf]
  %v282 = vld [vmem:[%s1 + $0x23c] sm:$0xf]
  %v283 = vld [vmem:[%s1 + $0x240] sm:$0xf]
  %v284 = vld [vmem:[%s1 + $0x244] sm:$0xf]
  %v285 = vld [vmem:[%s1 + $0x248] sm:$0xf]
  %v286 = vld [vmem:[%s1 + $0x24c] sm:$0xf]
  %v287 = vld [vmem:[%s1 + $0x250] sm:$0xf]
  %v288 = vld [vmem:[%s1 + $0x254] sm:$0xf]
  %v289 = vld [vmem:[%s1 + $0x258] sm:$0xf]
  %v290 = vld [vmem:[%s1 + $0x25c] sm:$0xf]
  %v291 = vld [vmem:[%s1 + $0x260] sm:$0xf]
  %v292 = vld [vmem:[%s1 + $0x264] sm:$0xf]
  %v293 = vld [vmem:[%s1 + $0x268] sm:$0xf]
  %v294 = vld [vmem:[%s1 + $0x26c] sm:$0xf]
  %v295 = vld [vmem:[%s1 + $0x270] sm:$0xf]
  %v296 = vld [vmem:[%s1 + $0x274] sm:$0xf]
  %v297 = vld [vmem:[%s1 + $0x278] sm:$0xf]
  %v298 = vld [vmem:[%s1 + $0x27c] sm:$0xf]
  %v299 = vld [vmem:[%s1 + $0x280] sm:$0xf]
  %v300 = vld [vmem:[%s1 + $0x284] sm:$0xf]
  %v301 = vld [vmem:[%s1 + $0x288] sm:$0xf]
  %v302 = vld [vmem:[%s1 + $0x28c] sm:$0xf]
  %v303 = vld [vmem:[%s1 + $0x290] sm:$0xf]
  %v304 = vld [vmem:[%s1 + $0x294] sm:$0xf]
  %v305 = vld [vmem:[%s1 + $0x298] sm:$0xf]
  %v306 = vld [vmem:[%s1 + $0x29c] sm:$0xf]
  %v307 = vld [vmem:[%s1 + $0x2a0] sm:$0xf]
  %v308 = vld [vmem:[%s1 + $0x2a4] sm:$0xf]
  %v309 = vld [vmem:[%s1 + $0x2a8] sm:$0xf]
  %v310 = vld [vmem:[%s1 + $0x2ac] sm:$0xf]
  %v311 = vld [vmem:[%s1 + $0x2b0] sm:$0xf]
  %v312 = vld [vmem:[%s1 + $0x2b4] sm:$0xf]
  %v313 = vld [vmem:[%s1 + $0x2b8] sm:$0xf]
  %v314 = vld [vmem:[%s1 + $0x2bc] sm:$0xf]
  %v315 = vld [vmem:[%s1 + $0x2c0] sm:$0xf]
  %v316 = vld [vmem:[%s1 + $0x2c4] sm:$0xf]
  %v317 = vld [vmem:[%s1 + $0x2c8] sm:$0xf]
  %v318 = vld [vmem:[%s1 + $0x2cc] sm:$0xf]
  %v319 = vld [vmem:[%s1 + $0x2d0] sm:$0xf]
  %v320 = vld [vmem:[%s1 + $0x2d4] sm:$0xf]
  %v321 = vld [vmem:[%s1 + $0x2d8] sm:$0xf]
  %v322 = vld [vmem:[%s1 + $0x2dc] sm:$0xf]
  %v323 = vld [vmem:[%s1 + $0x2e0] sm:$0xf]
  %v324 = vld [vmem:[%s1 + $0x2e4] sm:$0xf]
  %v325 = vld [vmem:[%s1 + $0x2e8] sm:$0xf]
  %v326 = vld [vmem:[%s1 + $0x2ec] sm:$0xf]
  %v327 = vld [vmem:[%s1 + $0x2f0] sm:$0xf]
  %v328 = vld [vmem:[%s1 + $0x2f4] sm:$0xf]
  %v329 = vld [vmem:[%s1 + $0x2f8] sm:$0xf]
  %v330 = vld [vmem:[%s1 + $0x2fc] sm:$0xf]
  %v331 = vld [vmem:[%s1 + $0x300] sm:$0xf]
  %v332 = vld [vmem:[%s1 + $0x304] sm:$0xf]
  %v333 = vld [vmem:[%s1 + $0x308] sm:$0xf]
  %v334 = vld [vmem:[%s1 + $0x30c] sm:$0xf]
  %v335 = vld [vmem:[%s1 + $0x310] sm:$0xf]
  %v336 = vld [vmem:[%s1 + $0x314] sm:$0xf]
  %v337 = vld [vmem:[%s1 + $0x318] sm:$0xf]
  %v338 = vld [vmem:[%s1 + $0x31c] sm:$0xf]
  %v339 = vld [vmem:[%s1 + $0x320] sm:$0xf]
  %v340 = vld [vmem:[%s1 + $0x324] sm:$0xf]
  %v341 = vld [vmem:[%s1 + $0x328] sm:$0xf]
  %v342 = vld [vmem:[%s1 + $0x32c] sm:$0xf]
  %v343 = vld [vmem:[%s1 + $0x330] sm:$0xf]
  %v344 = vld [vmem:[%s1 + $0x334] sm:$0xf]
  %v345 = vld [vmem:[%s1 + $0x338] sm:$0xf]
  %v346 = vld [vmem:[%s1 + $0x33c] sm:$0xf]
  %v347 = vld [vmem:[%s1 + $0x340] sm:$0xf]
  %v348 = vld [vmem:[%s1 + $0x344] sm:$0xf]
  %v349 = vld [vmem:[%s1 + $0x348] sm:$0xf]
  %v350 = vld [vmem:[%s1 + $0x34c] sm:$0xf]
  %v351 = vld [vmem:[%s1 + $0x350] sm:$0xf]
  %v352 = vld [vmem:[%s1 + $0x354] sm:$0xf]
  %v353 = vld [vmem:[%s1 + $0x358] sm:$0xf]
  %v354 = vld [vmem:[%s1 + $0x35c] sm:$0xf]
  %v355 = vld [vmem:[%s1 + $0x360] sm:$0xf]
  %v356 = vld [vmem:[%s1 + $0x364] sm:$0xf]
  %v357 = vld [vmem:[%s1 + $0x368] sm:$0xf]
  %v358 = vld [vmem:[%s1 + $0x36c] sm:$0xf]
  %v359 = vld [vmem:[%s1 + $0x370] sm:$0xf]
  %v360 = vld [vmem:[%s1 + $0x374] sm:$0xf]
  %v361 = vld [vmem:[%s1 + $0x378] sm:$0xf]
  %v362 = vld [vmem:[%s1 + $0x37c] sm:$0xf]
  %v363 = vld [vmem:[%s1 + $0x380] sm:$0xf]
  %v364 = vld [vmem:[%s1 + $0x384] sm:$0xf]
  %v365 = vld [vmem:[%s1 + $0x388] sm:$0xf]
  %v366 = vld [vmem:[%s1 + $0x38c] sm:$0xf]
  %v367 = vld [vmem:[%s1 + $0x390] sm:$0xf]
  %v368 = vld [vmem:[%s1 + $0x394] sm:$0xf]
  %v369 = vld [vmem:[%s1 + $0x398] sm:$0xf]
  %v370 = vld [vmem:[%s1 + $0x39c] sm:$0xf]
  %v371 = vld [vmem:[%s1 + $0x3a0] sm:$0xf]
  %v372 = vld [vmem:[%s1 + $0x3a4] sm:$0xf]
  %v373 = vld [vmem:[%s1 + $0x3a8] sm:$0xf]
  %v374 = vld [vmem:[%s1 + $0x3ac] sm:$0xf]
  %v375 = vld [vmem:[%s1 + $0x3b0] sm:$0xf]
  %v376 = vld [vmem:[%s1 + $0x3b4] sm:$0xf]
  %v377 = vld [vmem:[%s1 + $0x3b8] sm:$0xf]
  %v378 = vld [vmem:[%s1 + $0x3bc] sm:$0xf]
  %v379 = vld [vmem:[%s1 + $0x3c0] sm:$0xf]
  %v380 = vld [vmem:[%s1 + $0x3c4] sm:$0xf]
  %v381 = vld [vmem:[%s1 + $0x3c8] sm:$0xf]
  %v382 = vld [vmem:[%s1 + $0x3cc] sm:$0xf]
  %v383 = vld [vmem:[%s1 + $0x3d0] sm:$0xf]
  %v384 = vld [vmem:[%s1 + $0x3d4] sm:$0xf]
  %v385 = vld [vmem:[%s1 + $0x3d8] sm:$0xf]
  %v386 = vld [vmem:[%s1 + $0x3dc] sm:$0xf]
  %v387 = vld [vmem:[%s1 + $0x3e0] sm:$0xf]
  %v388 = vld [vmem:[%s1 + $0x3e4] sm:$0xf]
  %v389 = vld [vmem:[%s1 + $0x3e8] sm:$0xf]
  %v390 = vld [vmem:[%s1 + $0x3ec] sm:$0xf]
  %v391 = vld [vmem:[%s1 + $0x3f0] sm:$0xf]
  %v392 = vld [vmem:[%s1 + $0x3f4] sm:$0xf]
  %v393 = vld [vmem:[%s1 + $0x3f8] sm:$0xf]
  %v394 = vld [vmem:[%s1 + $0x3fc] sm:$0xf]
  %v395 = vld [vmem:[%s5] sm:$0xf]
  %v396 = vld [vmem:[%s5 + $0x4] sm:$0xf]
  %v397 = vld [vmem:[%s5 + $0x8] sm:$0xf]
  %v398 = vld [vmem:[%s5 + $0xc] sm:$0x3]
  %v399 = vld [vmem:[%s7] sm:$0x1]
  %v401 = vlaneseq
  %v402 = vshrl.u32 %v401, 7
  %v403 = vsub.s32 0, %v402
  %v404 = vrot.slane %v399, %v403
  %v662 = vunpack.c.l.b16 %v139
  %v663 = vunpack.c.l.b16 %v140
  %v664 = vunpack.c.l.b16 %v141
  %v665 = vunpack.c.l.b16 %v142
  %v666 = vunpack.c.l.b16 %v143
  %v667 = vunpack.c.l.b16 %v144
  %v668 = vunpack.c.l.b16 %v145
  %v669 = vunpack.c.l.b16 %v146
  %v670 = vunpack.c.l.b16 %v147
  %v671 = vunpack.c.l.b16 %v148
  %v672 = vunpack.c.l.b16 %v149
  %v673 = vunpack.c.l.b16 %v150
  %v674 = vunpack.c.l.b16 %v151
  %v675 = vunpack.c.l.b16 %v152
  %v676 = vunpack.c.l.b16 %v153
  %v677 = vunpack.c.l.b16 %v154
  %v678 = vunpack.c.l.b16 %v155
  %v679 = vunpack.c.l.b16 %v156
  %v680 = vunpack.c.l.b16 %v157
  %v681 = vunpack.c.l.b16 %v158
  %v682 = vunpack.c.l.b16 %v159
  %v683 = vunpack.c.l.b16 %v160
  %v684 = vunpack.c.l.b16 %v161
  %v685 = vunpack.c.l.b16 %v162
  %v686 = vunpack.c.l.b16 %v163
  %v687 = vunpack.c.l.b16 %v164
  %v688 = vunpack.c.l.b16 %v165
  %v689 = vunpack.c.l.b16 %v166
  %v690 = vunpack.c.l.b16 %v167
  %v691 = vunpack.c.l.b16 %v168
  %v692 = vunpack.c.l.b16 %v169
  %v693 = vunpack.c.l.b16 %v170
  %v694 = vunpack.c.l.b16 %v171
  %v695 = vunpack.c.l.b16 %v172
  %v696 = vunpack.c.l.b16 %v173
  %v697 = vunpack.c.l.b16 %v174
  %v698 = vunpack.c.l.b16 %v175
  %v699 = vunpack.c.l.b16 %v176
  %v700 = vunpack.c.l.b16 %v177
  %v701 = vunpack.c.l.b16 %v178
  %v702 = vunpack.c.l.b16 %v179
  %v703 = vunpack.c.l.b16 %v180
  %v704 = vunpack.c.l.b16 %v181
  %v705 = vunpack.c.l.b16 %v182
  %v706 = vunpack.c.l.b16 %v183
  %v707 = vunpack.c.l.b16 %v184
  %v708 = vunpack.c.l.b16 %v185
  %v709 = vunpack.c.l.b16 %v186
  %v710 = vunpack.c.l.b16 %v187
  %v711 = vunpack.c.l.b16 %v188
  %v712 = vunpack.c.l.b16 %v189
  %v713 = vunpack.c.l.b16 %v190
  %v714 = vunpack.c.l.b16 %v191
  %v715 = vunpack.c.l.b16 %v192
  %v716 = vunpack.c.l.b16 %v193
  %v717 = vunpack.c.l.b16 %v194
  %v718 = vunpack.c.l.b16 %v195
  %v719 = vunpack.c.l.b16 %v196
  %v720 = vunpack.c.l.b16 %v197
  %v721 = vunpack.c.l.b16 %v198
  %v722 = vunpack.c.l.b16 %v199
  %v723 = vunpack.c.l.b16 %v200
  %v724 = vunpack.c.l.b16 %v201
  %v725 = vunpack.c.l.b16 %v202
  %v726 = vunpack.c.l.b16 %v203
  %v727 = vunpack.c.l.b16 %v204
  %v728 = vunpack.c.l.b16 %v205
  %v729 = vunpack.c.l.b16 %v206
  %v730 = vunpack.c.l.b16 %v207
  %v731 = vunpack.c.l.b16 %v208
  %v732 = vunpack.c.l.b16 %v209
  %v733 = vunpack.c.l.b16 %v210
  %v734 = vunpack.c.l.b16 %v211
  %v735 = vunpack.c.l.b16 %v212
  %v736 = vunpack.c.l.b16 %v213
  %v737 = vunpack.c.l.b16 %v214
  %v738 = vunpack.c.l.b16 %v215
  %v739 = vunpack.c.l.b16 %v216
  %v740 = vunpack.c.l.b16 %v217
  %v741 = vunpack.c.l.b16 %v218
  %v742 = vunpack.c.l.b16 %v219
  %v743 = vunpack.c.l.b16 %v220
  %v744 = vunpack.c.l.b16 %v221
  %v745 = vunpack.c.l.b16 %v222
  %v746 = vunpack.c.l.b16 %v223
  %v747 = vunpack.c.l.b16 %v224
  %v748 = vunpack.c.l.b16 %v225
  %v749 = vunpack.c.l.b16 %v226
  %v750 = vunpack.c.l.b16 %v227
  %v751 = vunpack.c.l.b16 %v228
  %v752 = vunpack.c.l.b16 %v229
  %v753 = vunpack.c.l.b16 %v230
  %v754 = vunpack.c.l.b16 %v231
  %v755 = vunpack.c.l.b16 %v232
  %v756 = vunpack.c.l.b16 %v233
  %v757 = vunpack.c.l.b16 %v234
  %v758 = vunpack.c.l.b16 %v235
  %v759 = vunpack.c.l.b16 %v236
  %v760 = vunpack.c.l.b16 %v237
  %v761 = vunpack.c.l.b16 %v238
  %v762 = vunpack.c.l.b16 %v239
  %v763 = vunpack.c.l.b16 %v240
  %v764 = vunpack.c.l.b16 %v241
  %v765 = vunpack.c.l.b16 %v242
  %v766 = vunpack.c.l.b16 %v243
  %v767 = vunpack.c.l.b16 %v244
  %v768 = vunpack.c.l.b16 %v245
  %v769 = vunpack.c.l.b16 %v246
  %v770 = vunpack.c.l.b16 %v247
  %v771 = vunpack.c.l.b16 %v248
  %v772 = vunpack.c.l.b16 %v249
  %v773 = vunpack.c.l.b16 %v250
  %v774 = vunpack.c.l.b16 %v251
  %v775 = vunpack.c.l.b16 %v252
  %v776 = vunpack.c.l.b16 %v253
  %v777 = vunpack.c.l.b16 %v254
  %v778 = vunpack.c.l.b16 %v255
  %v779 = vunpack.c.l.b16 %v256
  %v780 = vunpack.c.l.b16 %v257
  %v781 = vunpack.c.l.b16 %v258
  %v782 = vunpack.c.l.b16 %v259
  %v783 = vunpack.c.l.b16 %v260
  %v784 = vunpack.c.l.b16 %v261
  %v785 = vunpack.c.l.b16 %v262
  %v786 = vunpack.c.l.b16 %v263
  %v787 = vunpack.c.l.b16 %v264
  %v788 = vunpack.c.l.b16 %v265
  %v789 = vunpack.c.l.b16 %v266
  %v790 = vunpack.c.l.b16 %v267
  %v791 = vunpack.c.l.b16 %v268
  %v792 = vunpack.c.l.b16 %v269
  %v793 = vunpack.c.l.b16 %v270
  %v794 = vunpack.c.l.b16 %v271
  %v795 = vunpack.c.l.b16 %v272
  %v796 = vunpack.c.l.b16 %v273
  %v797 = vunpack.c.l.b16 %v274
  %v798 = vunpack.c.l.b16 %v275
  %v799 = vunpack.c.l.b16 %v276
  %v800 = vunpack.c.l.b16 %v277
  %v801 = vunpack.c.l.b16 %v278
  %v802 = vunpack.c.l.b16 %v279
  %v803 = vunpack.c.l.b16 %v280
  %v804 = vunpack.c.l.b16 %v281
  %v805 = vunpack.c.l.b16 %v282
  %v806 = vunpack.c.l.b16 %v283
  %v807 = vunpack.c.l.b16 %v284
  %v808 = vunpack.c.l.b16 %v285
  %v809 = vunpack.c.l.b16 %v286
  %v810 = vunpack.c.l.b16 %v287
  %v811 = vunpack.c.l.b16 %v288
  %v812 = vunpack.c.l.b16 %v289
  %v813 = vunpack.c.l.b16 %v290
  %v814 = vunpack.c.l.b16 %v291
  %v815 = vunpack.c.l.b16 %v292
  %v816 = vunpack.c.l.b16 %v293
  %v817 = vunpack.c.l.b16 %v294
  %v818 = vunpack.c.l.b16 %v295
  %v819 = vunpack.c.l.b16 %v296
  %v820 = vunpack.c.l.b16 %v297
  %v821 = vunpack.c.l.b16 %v298
  %v822 = vunpack.c.l.b16 %v299
  %v823 = vunpack.c.l.b16 %v300
  %v824 = vunpack.c.l.b16 %v301
  %v825 = vunpack.c.l.b16 %v302
  %v826 = vunpack.c.l.b16 %v303
  %v827 = vunpack.c.l.b16 %v304
  %v828 = vunpack.c.l.b16 %v305
  %v829 = vunpack.c.l.b16 %v306
  %v830 = vunpack.c.l.b16 %v307
  %v831 = vunpack.c.l.b16 %v308
  %v832 = vunpack.c.l.b16 %v309
  %v833 = vunpack.c.l.b16 %v310
  %v834 = vunpack.c.l.b16 %v311
  %v835 = vunpack.c.l.b16 %v312
  %v836 = vunpack.c.l.b16 %v313
  %v837 = vunpack.c.l.b16 %v314
  %v838 = vunpack.c.l.b16 %v315
  %v839 = vunpack.c.l.b16 %v316
  %v840 = vunpack.c.l.b16 %v317
  %v841 = vunpack.c.l.b16 %v318
  %v842 = vunpack.c.l.b16 %v319
  %v843 = vunpack.c.l.b16 %v320
  %v844 = vunpack.c.l.b16 %v321
  %v845 = vunpack.c.l.b16 %v322
  %v846 = vunpack.c.l.b16 %v323
  %v847 = vunpack.c.l.b16 %v324
  %v848 = vunpack.c.l.b16 %v325
  %v849 = vunpack.c.l.b16 %v326
  %v850 = vunpack.c.l.b16 %v327
  %v851 = vunpack.c.l.b16 %v328
  %v852 = vunpack.c.l.b16 %v329
  %v853 = vunpack.c.l.b16 %v330
  %v854 = vunpack.c.l.b16 %v331
  %v855 = vunpack.c.l.b16 %v332
  %v856 = vunpack.c.l.b16 %v333
  %v857 = vunpack.c.l.b16 %v334
  %v858 = vunpack.c.l.b16 %v335
  %v859 = vunpack.c.l.b16 %v336
  %v860 = vunpack.c.l.b16 %v337
  %v861 = vunpack.c.l.b16 %v338
  %v862 = vunpack.c.l.b16 %v339
  %v863 = vunpack.c.l.b16 %v340
  %v864 = vunpack.c.l.b16 %v341
  %v865 = vunpack.c.l.b16 %v342
  %v866 = vunpack.c.l.b16 %v343
  %v867 = vunpack.c.l.b16 %v344
  %v868 = vunpack.c.l.b16 %v345
  %v869 = vunpack.c.l.b16 %v346
  %v870 = vunpack.c.l.b16 %v347
  %v871 = vunpack.c.l.b16 %v348
  %v872 = vunpack.c.l.b16 %v349
  %v873 = vunpack.c.l.b16 %v350
  %v874 = vunpack.c.l.b16 %v351
  %v875 = vunpack.c.l.b16 %v352
  %v876 = vunpack.c.l.b16 %v353
  %v877 = vunpack.c.l.b16 %v354
  %v878 = vunpack.c.l.b16 %v355
  %v879 = vunpack.c.l.b16 %v356
  %v880 = vunpack.c.l.b16 %v357
  %v881 = vunpack.c.l.b16 %v358
  %v882 = vunpack.c.l.b16 %v359
  %v883 = vunpack.c.l.b16 %v360
  %v884 = vunpack.c.l.b16 %v361
  %v885 = vunpack.c.l.b16 %v362
  %v886 = vunpack.c.l.b16 %v363
  %v887 = vunpack.c.l.b16 %v364
  %v888 = vunpack.c.l.b16 %v365
  %v889 = vunpack.c.l.b16 %v366
  %v890 = vunpack.c.l.b16 %v367
  %v891 = vunpack.c.l.b16 %v368
  %v892 = vunpack.c.l.b16 %v369
  %v893 = vunpack.c.l.b16 %v370
  %v894 = vunpack.c.l.b16 %v371
  %v895 = vunpack.c.l.b16 %v372
  %v896 = vunpack.c.l.b16 %v373
  %v897 = vunpack.c.l.b16 %v374
  %v898 = vunpack.c.l.b16 %v375
  %v899 = vunpack.c.l.b16 %v376
  %v900 = vunpack.c.l.b16 %v377
  %v901 = vunpack.c.l.b16 %v378
  %v902 = vunpack.c.l.b16 %v379
  %v903 = vunpack.c.l.b16 %v380
  %v904 = vunpack.c.l.b16 %v381
  %v905 = vunpack.c.l.b16 %v382
  %v906 = vunpack.c.l.b16 %v383
  %v907 = vunpack.c.l.b16 %v384
  %v908 = vunpack.c.l.b16 %v385
  %v909 = vunpack.c.l.b16 %v386
  %v910 = vunpack.c.l.b16 %v387
  %v911 = vunpack.c.l.b16 %v388
  %v912 = vunpack.c.l.b16 %v389
  %v913 = vunpack.c.l.b16 %v390
  %v914 = vunpack.c.l.b16 %v391
  %v915 = vunpack.c.l.b16 %v392
  %v916 = vunpack.c.l.b16 %v393
  %v917 = vunpack.c.l.b16 %v394
  %v918 = vpack.c.b16 %v663, %v662
  %v919 = vpack.c.b16 %v665, %v664
  %v920 = vpack.c.b16 %v667, %v666
  %v921 = vpack.c.b16 %v669, %v668
  %v922 = vpack.c.b16 %v671, %v670
  %v923 = vpack.c.b16 %v673, %v672
  %v924 = vpack.c.b16 %v675, %v674
  %v925 = vpack.c.b16 %v677, %v676
  %v926 = vpack.c.b16 %v679, %v678
  %v927 = vpack.c.b16 %v681, %v680
  %v928 = vpack.c.b16 %v683, %v682
  %v929 = vpack.c.b16 %v685, %v684
  %v930 = vpack.c.b16 %v687, %v686
  %v931 = vpack.c.b16 %v689, %v688
  %v932 = vpack.c.b16 %v691, %v690
  %v933 = vpack.c.b16 %v693, %v692
  %v934 = vpack.c.b16 %v695, %v694
  %v935 = vpack.c.b16 %v697, %v696
  %v936 = vpack.c.b16 %v699, %v698
  %v937 = vpack.c.b16 %v701, %v700
  %v938 = vpack.c.b16 %v703, %v702
  %v939 = vpack.c.b16 %v705, %v704
  %v940 = vpack.c.b16 %v707, %v706
  %v941 = vpack.c.b16 %v709, %v708
  %v942 = vpack.c.b16 %v711, %v710
  %v943 = vpack.c.b16 %v713, %v712
  %v944 = vpack.c.b16 %v715, %v714
  %v945 = vpack.c.b16 %v717, %v716
  %v946 = vpack.c.b16 %v719, %v718
  %v947 = vpack.c.b16 %v721, %v720
  %v948 = vpack.c.b16 %v723, %v722
  %v949 = vpack.c.b16 %v725, %v724
  %v950 = vpack.c.b16 %v727, %v726
  %v951 = vpack.c.b16 %v729, %v728
  %v952 = vpack.c.b16 %v731, %v730
  %v953 = vpack.c.b16 %v733, %v732
  %v954 = vpack.c.b16 %v735, %v734
  %v955 = vpack.c.b16 %v737, %v736
  %v956 = vpack.c.b16 %v739, %v738
  %v957 = vpack.c.b16 %v741, %v740
  %v958 = vpack.c.b16 %v743, %v742
  %v959 = vpack.c.b16 %v745, %v744
  %v960 = vpack.c.b16 %v747, %v746
  %v961 = vpack.c.b16 %v749, %v748
  %v962 = vpack.c.b16 %v751, %v750
  %v963 = vpack.c.b16 %v753, %v752
  %v964 = vpack.c.b16 %v755, %v754
  %v965 = vpack.c.b16 %v757, %v756
  %v966 = vpack.c.b16 %v759, %v758
  %v967 = vpack.c.b16 %v761, %v760
  %v968 = vpack.c.b16 %v763, %v762
  %v969 = vpack.c.b16 %v765, %v764
  %v970 = vpack.c.b16 %v767, %v766
  %v971 = vpack.c.b16 %v769, %v768
  %v972 = vpack.c.b16 %v771, %v770
  %v973 = vpack.c.b16 %v773, %v772
  %v974 = vpack.c.b16 %v775, %v774
  %v975 = vpack.c.b16 %v777, %v776
  %v976 = vpack.c.b16 %v779, %v778
  %v977 = vpack.c.b16 %v781, %v780
  %v978 = vpack.c.b16 %v783, %v782
  %v979 = vpack.c.b16 %v785, %v784
  %v980 = vpack.c.b16 %v787, %v786
  %v981 = vpack.c.b16 %v789, %v788
  %v982 = vpack.c.b16 %v791, %v790
  %v983 = vpack.c.b16 %v793, %v792
  %v984 = vpack.c.b16 %v795, %v794
  %v985 = vpack.c.b16 %v797, %v796
  %v986 = vpack.c.b16 %v799, %v798
  %v987 = vpack.c.b16 %v801, %v800
  %v988 = vpack.c.b16 %v803, %v802
  %v989 = vpack.c.b16 %v805, %v804
  %v990 = vpack.c.b16 %v807, %v806
  %v991 = vpack.c.b16 %v809, %v808
  %v992 = vpack.c.b16 %v811, %v810
  %v993 = vpack.c.b16 %v813, %v812
  %v994 = vpack.c.b16 %v815, %v814
  %v995 = vpack.c.b16 %v817, %v816
  %v996 = vpack.c.b16 %v819, %v818
  %v997 = vpack.c.b16 %v821, %v820
  %v998 = vpack.c.b16 %v823, %v822
  %v999 = vpack.c.b16 %v825, %v824
  %v1000 = vpack.c.b16 %v827, %v826
  %v1001 = vpack.c.b16 %v829, %v828
  %v1002 = vpack.c.b16 %v831, %v830
  %v1003 = vpack.c.b16 %v833, %v832
  %v1004 = vpack.c.b16 %v835, %v834
  %v1005 = vpack.c.b16 %v837, %v836
  %v1006 = vpack.c.b16 %v839, %v838
  %v1007 = vpack.c.b16 %v841, %v840
  %v1008 = vpack.c.b16 %v843, %v842
  %v1009 = vpack.c.b16 %v845, %v844
  %v1010 = vpack.c.b16 %v847, %v846
  %v1011 = vpack.c.b16 %v849, %v848
  %v1012 = vpack.c.b16 %v851, %v850
  %v1013 = vpack.c.b16 %v853, %v852
  %v1014 = vpack.c.b16 %v855, %v854
  %v1015 = vpack.c.b16 %v857, %v856
  %v1016 = vpack.c.b16 %v859, %v858
  %v1017 = vpack.c.b16 %v861, %v860
  %v1018 = vpack.c.b16 %v863, %v862
  %v1019 = vpack.c.b16 %v865, %v864
  %v1020 = vpack.c.b16 %v867, %v866
  %v1021 = vpack.c.b16 %v869, %v868
  %v1022 = vpack.c.b16 %v871, %v870
  %v1023 = vpack.c.b16 %v873, %v872
  %v1024 = vpack.c.b16 %v875, %v874
  %v1025 = vpack.c.b16 %v877, %v876
  %v1026 = vpack.c.b16 %v879, %v878
  %v1027 = vpack.c.b16 %v881, %v880
  %v1028 = vpack.c.b16 %v883, %v882
  %v1029 = vpack.c.b16 %v885, %v884
  %v1030 = vpack.c.b16 %v887, %v886
  %v1031 = vpack.c.b16 %v889, %v888
  %v1032 = vpack.c.b16 %v891, %v890
  %v1033 = vpack.c.b16 %v893, %v892
  %v1034 = vpack.c.b16 %v895, %v894
  %v1035 = vpack.c.b16 %v897, %v896
  %v1036 = vpack.c.b16 %v899, %v898
  %v1037 = vpack.c.b16 %v901, %v900
  %v1038 = vpack.c.b16 %v903, %v902
  %v1039 = vpack.c.b16 %v905, %v904
  %v1040 = vpack.c.b16 %v907, %v906
  %v1041 = vpack.c.b16 %v909, %v908
  %v1042 = vpack.c.b16 %v911, %v910
  %v1043 = vpack.c.b16 %v913, %v912
  %v1044 = vpack.c.b16 %v915, %v914
  %v1045 = vpack.c.b16 %v917, %v916
  %v1050 = vunpack.c.l.b16 %v395
  %v1051 = vunpack.c.l.b16 %v396
  %v1052 = vunpack.c.l.b16 %v397
  %v1053 = vunpack.c.l.b16 %v398
  %v1054 = vpack.c.b16 %v1051, %v1050
  %v1055 = vpack.c.b16 %v1053, %v1052
  %vm1057 = vcmask 220160
  %v1059 = vsel %vm1057, %v918, 0
  %v1062 = vsel %vm1057, %v919, 0
  %v1065 = vsel %vm1057, %v920, 0
  %v1068 = vsel %vm1057, %v921, 0
  %v1071 = vsel %vm1057, %v922, 0
  %v1074 = vsel %vm1057, %v923, 0
  %v1077 = vsel %vm1057, %v924, 0
  %v1080 = vsel %vm1057, %v925, 0
  %v1083 = vsel %vm1057, %v926, 0
  %v1086 = vsel %vm1057, %v927, 0
  %v1089 = vsel %vm1057, %v928, 0
  %v1092 = vsel %vm1057, %v929, 0
  %v1095 = vsel %vm1057, %v930, 0
  %v1098 = vsel %vm1057, %v931, 0
  %v1101 = vsel %vm1057, %v932, 0
  %v1104 = vsel %vm1057, %v933, 0
  %v1107 = vsel %vm1057, %v934, 0
  %v1110 = vsel %vm1057, %v935, 0
  %v1113 = vsel %vm1057, %v936, 0
  %v1116 = vsel %vm1057, %v937, 0
  %v1119 = vsel %vm1057, %v938, 0
  %v1122 = vsel %vm1057, %v939, 0
  %v1125 = vsel %vm1057, %v940, 0
  %v1128 = vsel %vm1057, %v941, 0
  %v1131 = vsel %vm1057, %v942, 0
  %v1134 = vsel %vm1057, %v943, 0
  %v1137 = vsel %vm1057, %v944, 0
  %v1140 = vsel %vm1057, %v945, 0
  %v1143 = vsel %vm1057, %v946, 0
  %v1146 = vsel %vm1057, %v947, 0
  %v1149 = vsel %vm1057, %v948, 0
  %v1152 = vsel %vm1057, %v949, 0
  %v1155 = vsel %vm1057, %v950, 0
  %v1158 = vsel %vm1057, %v951, 0
  %v1161 = vsel %vm1057, %v952, 0
  %v1164 = vsel %vm1057, %v953, 0
  %v1167 = vsel %vm1057, %v954, 0
  %v1170 = vsel %vm1057, %v955, 0
  %v1173 = vsel %vm1057, %v956, 0
  %v1176 = vsel %vm1057, %v957, 0
  %v1179 = vsel %vm1057, %v958, 0
  %v1182 = vsel %vm1057, %v959, 0
  %v1185 = vsel %vm1057, %v960, 0
  %v1188 = vsel %vm1057, %v961, 0
  %v1191 = vsel %vm1057, %v962, 0
  %v1194 = vsel %vm1057, %v963, 0
  %v1197 = vsel %vm1057, %v964, 0
  %v1200 = vsel %vm1057, %v965, 0
  %v1203 = vsel %vm1057, %v966, 0
  %v1206 = vsel %vm1057, %v967, 0
  %v1209 = vsel %vm1057, %v968, 0
  %v1212 = vsel %vm1057, %v969, 0
  %v1215 = vsel %vm1057, %v970, 0
  %v1218 = vsel %vm1057, %v971, 0
  %v1221 = vsel %vm1057, %v972, 0
  %v1224 = vsel %vm1057, %v973, 0
  %v1227 = vsel %vm1057, %v974, 0
  %v1230 = vsel %vm1057, %v975, 0
  %v1233 = vsel %vm1057, %v976, 0
  %v1236 = vsel %vm1057, %v977, 0
  %v1239 = vsel %vm1057, %v978, 0
  %v1242 = vsel %vm1057, %v979, 0
  %v1245 = vsel %vm1057, %v980, 0
  %v1248 = vsel %vm1057, %v981, 0
  %v1251 = vsel %vm1057, %v982, 0
  %v1254 = vsel %vm1057, %v983, 0
  %v1257 = vsel %vm1057, %v984, 0
  %v1260 = vsel %vm1057, %v985, 0
  %v1263 = vsel %vm1057, %v986, 0
  %v1266 = vsel %vm1057, %v987, 0
  %v1269 = vsel %vm1057, %v988, 0
  %v1272 = vsel %vm1057, %v989, 0
  %v1275 = vsel %vm1057, %v990, 0
  %v1278 = vsel %vm1057, %v991, 0
  %v1281 = vsel %vm1057, %v992, 0
  %v1284 = vsel %vm1057, %v993, 0
  %v1287 = vsel %vm1057, %v994, 0
  %v1290 = vsel %vm1057, %v995, 0
  %v1293 = vsel %vm1057, %v996, 0
  %v1296 = vsel %vm1057, %v997, 0
  %v1299 = vsel %vm1057, %v998, 0
  %v1302 = vsel %vm1057, %v999, 0
  %v1305 = vsel %vm1057, %v1000, 0
  %v1308 = vsel %vm1057, %v1001, 0
  %v1311 = vsel %vm1057, %v1002, 0
  %v1314 = vsel %vm1057, %v1003, 0
  %v1317 = vsel %vm1057, %v1004, 0
  %v1320 = vsel %vm1057, %v1005, 0
  %v1323 = vsel %vm1057, %v1006, 0
  %v1326 = vsel %vm1057, %v1007, 0
  %v1329 = vsel %vm1057, %v1008, 0
  %v1332 = vsel %vm1057, %v1009, 0
  %v1335 = vsel %vm1057, %v1010, 0
  %v1338 = vsel %vm1057, %v1011, 0
  %v1341 = vsel %vm1057, %v1012, 0
  %v1344 = vsel %vm1057, %v1013, 0
  %v1347 = vsel %vm1057, %v1014, 0
  %v1350 = vsel %vm1057, %v1015, 0
  %v1353 = vsel %vm1057, %v1016, 0
  %v1356 = vsel %vm1057, %v1017, 0
  %v1359 = vsel %vm1057, %v1018, 0
  %v1362 = vsel %vm1057, %v1019, 0
  %v1365 = vsel %vm1057, %v1020, 0
  %v1368 = vsel %vm1057, %v1021, 0
  %v1371 = vsel %vm1057, %v1022, 0
  %v1374 = vsel %vm1057, %v1023, 0
  %v1377 = vsel %vm1057, %v1024, 0
  %v1380 = vsel %vm1057, %v1025, 0
  %v1383 = vsel %vm1057, %v1026, 0
  %v1386 = vsel %vm1057, %v1027, 0
  %v1389 = vsel %vm1057, %v1028, 0
  %v1392 = vsel %vm1057, %v1029, 0
  %v1395 = vsel %vm1057, %v1030, 0
  %v1398 = vsel %vm1057, %v1031, 0
  %v1401 = vsel %vm1057, %v1032, 0
  %v1404 = vsel %vm1057, %v1033, 0
  %v1407 = vsel %vm1057, %v1034, 0
  %v1410 = vsel %vm1057, %v1035, 0
  %v1413 = vsel %vm1057, %v1036, 0
  %v1416 = vsel %vm1057, %v1037, 0
  %v1419 = vsel %vm1057, %v1038, 0
  %v1422 = vsel %vm1057, %v1039, 0
  %v1425 = vsel %vm1057, %v1040, 0
  %v1428 = vsel %vm1057, %v1041, 0
  %v1431 = vsel %vm1057, %v1042, 0
  %v1434 = vsel %vm1057, %v1043, 0
  %v1437 = vsel %vm1057, %v1044, 0
  %v1440 = vsel %vm1057, %v1045, 0
  %vm1442 = vcmask 1044480
  %vm1443 = vcmask 1045504
  %v1444 = vsel %vm1442, 4294967295, 65535
  %v1445 = vsel %vm1443, %v1444, 0
  %v1447 = vand.u32 %v1055, %v1445
  %1449 = vmatprep.subr.bf16.mxu0 0
  %1450 = vmatpush1.bf16.msra.mxu0 %v1054
  %1451 = vmatprep.subr.bf16.mxu0 0
  %1452 = vmatpush1.bf16.msra.mxu0 %v1447
  %1453 = vmatprep.subr.bf16.mxu0 0
  %1454 = vmatpush1.bf16.msra.mxu0 0
  %1455 = vmatprep.subr.bf16.mxu0 0
  %1456 = vmatpush1.bf16.msra.mxu0 0
  %1457 = vmatprep.subr.bf16.mxu0 0
  %1458 = vmatpush1.bf16.msra.mxu0 0
  %1459 = vmatprep.subr.bf16.mxu0 0
  %1460 = vmatpush1.bf16.msra.mxu0 0
  %1461 = vmatprep.subr.bf16.mxu0 0
  %1462 = vmatpush1.bf16.msra.mxu0 0
  %1463 = vmatprep.subr.bf16.mxu0 0
  %1464 = vmatpush1.bf16.msra.mxu0 0
  %1465 = vmatprep.subr.bf16.mxu0 0
  %1466 = vmatpush1.bf16.msra.mxu0 0
  %1467 = vmatprep.subr.bf16.mxu0 0
  %1468 = vmatpush1.bf16.msra.mxu0 0
  %1469 = vmatprep.subr.bf16.mxu0 0
  %1470 = vmatpush1.bf16.msra.mxu0 0
  %1471 = vmatprep.subr.bf16.mxu0 0
  %1472 = vmatpush1.bf16.msra.mxu0 0
  %1473 = vmatprep.subr.bf16.mxu0 0
  %1474 = vmatpush1.bf16.msra.mxu0 0
  %1475 = vmatprep.subr.bf16.mxu0 0
  %1476 = vmatpush1.bf16.msra.mxu0 0
  %1477 = vmatprep.subr.bf16.mxu0 0
  %1478 = vmatpush1.bf16.msra.mxu0 0
  %1479 = vmatprep.subr.bf16.mxu0 0
  %1480 = vmatpush1.bf16.msra.mxu0 0
  %1481 = vmatprep.mubr.bf16.mxu0 0
  %1482 = vmatmul.mubr.bf16.gmra.mrb[0].mxu0 %v1059
  %v1483 = vpop.f32.mrb[0].mxu0
  %v1484 = vadd.f32 %v404, %v1483
  %v1485 = vpop.f32.mrb[0].mxu0
  %v1486 = vpop.f32.mrb[0].mxu0
  %v1487 = vadd.f32 %v404, %v1486
  %v1488 = vpop.f32.mrb[0].mxu0
  %1489 = vmatprep.mubr.bf16.mxu0 0
  %1490 = vmatmul.mubr.bf16.gmra.mrb[0].mxu0 %v1062
  %v1491 = vpop.f32.mrb[0].mxu0
  %v1492 = vadd.f32 %v404, %v1491
  %v1493 = vpop.f32.mrb[0].mxu0
  %v1494 = vpop.f32.mrb[0].mxu0
  %v1495 = vadd.f32 %v404, %v1494
  %v1496 = vpop.f32.mrb[0].mxu0
  %1497 = vmatprep.mubr.bf16.mxu0 0
  %1498 = vmatmul.mubr.bf16.gmra.mrb[0].mxu0 %v1065
  %v1499 = vpop.f32.mrb[0].mxu0
  %v1500 = vadd.f32 %v404, %v1499
  %v1501 = vpop.f32.mrb[0].mxu0
  %v1502 = vpop.f32.mrb[0].mxu0
  %v1503 = vadd.f32 %v404, %v1502
  %v1504 = vpop.f32.mrb[0].mxu0
  %1505 = vmatprep.mubr.bf16.mxu0 0
  %1506 = vmatmul.mubr.bf16.gmra.mrb[0].mxu0 %v1068
  %v1507 = vpop.f32.mrb[0].mxu0
  %v1508 = vadd.f32 %v404, %v1507
  %v1509 = vpop.f32.mrb[0].mxu0
  %v1510 = vpop.f32.mrb[0].mxu0
  %v1511 = vadd.f32 %v404, %v1510
  %v1512 = vpop.f32.mrb[0].mxu0
  %1513 = vmatprep.mubr.bf16.mxu0 0
  %1514 = vmatmul.mubr.bf16.gmra.mrb[0].mxu0 %v1071
  %v1515 = vpop.f32.mrb[0].mxu0
  %v1516 = vadd.f32 %v404, %v1515
  %v1517 = vpop.f32.mrb[0].mxu0
  %v1518 = vpop.f32.mrb[0].mxu0
  %v1519 = vadd.f32 %v404, %v1518
  %v1520 = vpop.f32.mrb[0].mxu0
  %1521 = vmatprep.mubr.bf16.mxu0 0
  %1522 = vmatmul.mubr.bf16.gmra.mrb[0].mxu0 %v1074
  %v1523 = vpop.f32.mrb[0].mxu0
  %v1524 = vadd.f32 %v404, %v1523
  %v1525 = vpop.f32.mrb[0].mxu0
  %v1526 = vpop.f32.mrb[0].mxu0
  %v1527 = vadd.f32 %v404, %v1526
  %v1528 = vpop.f32.mrb[0].mxu0
  %1529 = vmatprep.mubr.bf16.mxu0 0
  %1530 = vmatmul.mubr.bf16.gmra.mrb[0].mxu0 %v1077
  %v1531 = vpop.f32.mrb[0].mxu0
  %v1532 = vadd.f32 %v404, %v1531
  %v1533 = vpop.f32.mrb[0].mxu0
  %v1534 = vpop.f32.mrb[0].mxu0
  %v1535 = vadd.f32 %v404, %v1534
  %v1536 = vpop.f32.mrb[0].mxu0
  %1537 = vmatprep.mubr.bf16.mxu0 0
  %1538 = vmatmul.mubr.bf16.gmra.mrb[0].mxu0 %v1080
  %v1539 = vpop.f32.mrb[0].mxu0
  %v1540 = vadd.f32 %v404, %v1539
  %v1541 = vpop.f32.mrb[0].mxu0
  %v1542 = vpop.f32.mrb[0].mxu0
  %v1543 = vadd.f32 %v404, %v1542
  %v1544 = vpop.f32.mrb[0].mxu0
  %1545 = vmatprep.mubr.bf16.mxu0 0
  %1546 = vmatmul.mubr.bf16.gmra.mrb[0].mxu0 %v1083
  %v1547 = vpop.f32.mrb[0].mxu0
  %v1548 = vadd.f32 %v404, %v1547
  %v1549 = vpop.f32.mrb[0].mxu0
  %v1550 = vpop.f32.mrb[0].mxu0
  %v1551 = vadd.f32 %v404, %v1550
  %v1552 = vpop.f32.mrb[0].mxu0
  %1553 = vmatprep.mubr.bf16.mxu0 0
  %1554 = vmatmul.mubr.bf16.gmra.mrb[0].mxu0 %v1086
  %v1555 = vpop.f32.mrb[0].mxu0
  %v1556 = vadd.f32 %v404, %v1555
  %v1557 = vpop.f32.mrb[0].mxu0
  %v1558 = vpop.f32.mrb[0].mxu0
  %v1559 = vadd.f32 %v404, %v1558
  %v1560 = vpop.f32.mrb[0].mxu0
  %1561 = vmatprep.mubr.bf16.mxu0 0
  %1562 = vmatmul.mubr.bf16.gmra.mrb[0].mxu0 %v1089
  %v1563 = vpop.f32.mrb[0].mxu0
  %v1564 = vadd.f32 %v404, %v1563
  %v1565 = vpop.f32.mrb[0].mxu0
  %v1566 = vpop.f32.mrb[0].mxu0
  %v1567 = vadd.f32 %v404, %v1566
  %v1568 = vpop.f32.mrb[0].mxu0
  %1569 = vmatprep.mubr.bf16.mxu0 0
  %1570 = vmatmul.mubr.bf16.gmra.mrb[0].mxu0 %v1092
  %v1571 = vpop.f32.mrb[0].mxu0
  %v1572 = vadd.f32 %v404, %v1571
  %v1573 = vpop.f32.mrb[0].mxu0
  %v1574 = vpop.f32.mrb[0].mxu0
  %v1575 = vadd.f32 %v404, %v1574
  %v1576 = vpop.f32.mrb[0].mxu0
  %1577 = vmatprep.mubr.bf16.mxu0 0
  %1578 = vmatmul.mubr.bf16.gmra.mrb[0].mxu0 %v1095
  %v1579 = vpop.f32.mrb[0].mxu0
  %v1580 = vadd.f32 %v404, %v1579
  %v1581 = vpop.f32.mrb[0].mxu0
  %v1582 = vpop.f32.mrb[0].mxu0
  %v1583 = vadd.f32 %v404, %v1582
  %v1584 = vpop.f32.mrb[0].mxu0
  %1585 = vmatprep.mubr.bf16.mxu0 0
  %1586 = vmatmul.mubr.bf16.gmra.mrb[0].mxu0 %v1098
  %v1587 = vpop.f32.mrb[0].mxu0
  %v1588 = vadd.f32 %v404, %v1587
  %v1589 = vpop.f32.mrb[0].mxu0
  %v1590 = vpop.f32.mrb[0].mxu0
  %v1591 = vadd.f32 %v404, %v1590
  %v1592 = vpop.f32.mrb[0].mxu0
  %1593 = vmatprep.mubr.bf16.mxu0 0
  %1594 = vmatmul.mubr.bf16.gmra.mrb[0].mxu0 %v1101
  %v1595 = vpop.f32.mrb[0].mxu0
  %v1596 = vadd.f32 %v404, %v1595
  %v1597 = vpop.f32.mrb[0].mxu0
  %v1598 = vpop.f32.mrb[0].mxu0
  %v1599 = vadd.f32 %v404, %v1598
  %v1600 = vpop.f32.mrb[0].mxu0
  %1601 = vmatprep.mubr.bf16.mxu0 0
  %1602 = vmatmul.mubr.bf16.gmra.mrb[0].mxu0 %v1104
  %v1603 = vpop.f32.mrb[0].mxu0
  %v1604 = vadd.f32 %v404, %v1603
  %v1605 = vpop.f32.mrb[0].mxu0
  %v1606 = vpop.f32.mrb[0].mxu0
  %v1607 = vadd.f32 %v404, %v1606
  %v1608 = vpop.f32.mrb[0].mxu0
  %1609 = vmatprep.mubr.bf16.mxu0 0
  %1610 = vmatmul.mubr.bf16.gmra.mrb[0].mxu0 %v1107
  %v1611 = vpop.f32.mrb[0].mxu0
  %v1612 = vadd.f32 %v404, %v1611
  %v1613 = vpop.f32.mrb[0].mxu0
  %v1614 = vpop.f32.mrb[0].mxu0
  %v1615 = vadd.f32 %v404, %v1614
  %v1616 = vpop.f32.mrb[0].mxu0
  %1617 = vmatprep.mubr.bf16.mxu0 0
  %1618 = vmatmul.mubr.bf16.gmra.mrb[0].mxu0 %v1110
  %v1619 = vpop.f32.mrb[0].mxu0
  %v1620 = vadd.f32 %v404, %v1619
  %v1621 = vpop.f32.mrb[0].mxu0
  %v1622 = vpop.f32.mrb[0].mxu0
  %v1623 = vadd.f32 %v404, %v1622
  %v1624 = vpop.f32.mrb[0].mxu0
  %1625 = vmatprep.mubr.bf16.mxu0 0
  %1626 = vmatmul.mubr.bf16.gmra.mrb[0].mxu0 %v1113
  %v1627 = vpop.f32.mrb[0].mxu0
  %v1628 = vadd.f32 %v404, %v1627
  %v1629 = vpop.f32.mrb[0].mxu0
  %v1630 = vpop.f32.mrb[0].mxu0
  %v1631 = vadd.f32 %v404, %v1630
  %v1632 = vpop.f32.mrb[0].mxu0
  %1633 = vmatprep.mubr.bf16.mxu0 0
  %1634 = vmatmul.mubr.bf16.gmra.mrb[0].mxu0 %v1116
  %v1635 = vpop.f32.mrb[0].mxu0
  %v1636 = vadd.f32 %v404, %v1635
  %v1637 = vpop.f32.mrb[0].mxu0
  %v1638 = vpop.f32.mrb[0].mxu0
  %v1639 = vadd.f32 %v404, %v1638
  %v1640 = vpop.f32.mrb[0].mxu0
  %1641 = vmatprep.mubr.bf16.mxu0 0
  %1642 = vmatmul.mubr.bf16.gmra.mrb[0].mxu0 %v1119
  %v1643 = vpop.f32.mrb[0].mxu0
  %v1644 = vadd.f32 %v404, %v1643
  %v1645 = vpop.f32.mrb[0].mxu0
  %v1646 = vpop.f32.mrb[0].mxu0
  %v1647 = vadd.f32 %v404, %v1646
  %v1648 = vpop.f32.mrb[0].mxu0
  %1649 = vmatprep.mubr.bf16.mxu0 0
  %1650 = vmatmul.mubr.bf16.gmra.mrb[0].mxu0 %v1122
  %v1651 = vpop.f32.mrb[0].mxu0
  %v1652 = vadd.f32 %v404, %v1651
  %v1653 = vpop.f32.mrb[0].mxu0
  %v1654 = vpop.f32.mrb[0].mxu0
  %v1655 = vadd.f32 %v404, %v1654
  %v1656 = vpop.f32.mrb[0].mxu0
  %1657 = vmatprep.mubr.bf16.mxu0 0
  %1658 = vmatmul.mubr.bf16.gmra.mrb[0].mxu0 %v1125
  %v1659 = vpop.f32.mrb[0].mxu0
  %v1660 = vadd.f32 %v404, %v1659
  %v1661 = vpop.f32.mrb[0].mxu0
  %v1662 = vpop.f32.mrb[0].mxu0
  %v1663 = vadd.f32 %v404, %v1662
  %v1664 = vpop.f32.mrb[0].mxu0
  %1665 = vmatprep.mubr.bf16.mxu0 0
  %1666 = vmatmul.mubr.bf16.gmra.mrb[0].mxu0 %v1128
  %v1667 = vpop.f32.mrb[0].mxu0
  %v1668 = vadd.f32 %v404, %v1667
  %v1669 = vpop.f32.mrb[0].mxu0
  %v1670 = vpop.f32.mrb[0].mxu0
  %v1671 = vadd.f32 %v404, %v1670
  %v1672 = vpop.f32.mrb[0].mxu0
  %1673 = vmatprep.mubr.bf16.mxu0 0
  %1674 = vmatmul.mubr.bf16.gmra.mrb[0].mxu0 %v1131
  %v1675 = vpop.f32.mrb[0].mxu0
  %v1676 = vadd.f32 %v404, %v1675
  %v1677 = vpop.f32.mrb[0].mxu0
  %v1678 = vpop.f32.mrb[0].mxu0
  %v1679 = vadd.f32 %v404, %v1678
  %v1680 = vpop.f32.mrb[0].mxu0
  %1681 = vmatprep.mubr.bf16.mxu0 0
  %1682 = vmatmul.mubr.bf16.gmra.mrb[0].mxu0 %v1134
  %v1683 = vpop.f32.mrb[0].mxu0
  %v1684 = vadd.f32 %v404, %v1683
  %v1685 = vpop.f32.mrb[0].mxu0
  %v1686 = vpop.f32.mrb[0].mxu0
  %v1687 = vadd.f32 %v404, %v1686
  %v1688 = vpop.f32.mrb[0].mxu0
  %1689 = vmatprep.mubr.bf16.mxu0 0
  %1690 = vmatmul.mubr.bf16.gmra.mrb[0].mxu0 %v1137
  %v1691 = vpop.f32.mrb[0].mxu0
  %v1692 = vadd.f32 %v404, %v1691
  %v1693 = vpop.f32.mrb[0].mxu0
  %v1694 = vpop.f32.mrb[0].mxu0
  %v1695 = vadd.f32 %v404, %v1694
  %v1696 = vpop.f32.mrb[0].mxu0
  %1697 = vmatprep.mubr.bf16.mxu0 0
  %1698 = vmatmul.mubr.bf16.gmra.mrb[0].mxu0 %v1140
  %v1699 = vpop.f32.mrb[0].mxu0
  %v1700 = vadd.f32 %v404, %v1699
  %v1701 = vpop.f32.mrb[0].mxu0
  %v1702 = vpop.f32.mrb[0].mxu0
  %v1703 = vadd.f32 %v404, %v1702
  %v1704 = vpop.f32.mrb[0].mxu0
  %1705 = vmatprep.mubr.bf16.mxu0 0
  %1706 = vmatmul.mubr.bf16.gmra.mrb[0].mxu0 %v1143
  %v1707 = vpop.f32.mrb[0].mxu0
  %v1708 = vadd.f32 %v404, %v1707
  %v1709 = vpop.f32.mrb[0].mxu0
  %v1710 = vpop.f32.mrb[0].mxu0
  %v1711 = vadd.f32 %v404, %v1710
  %v1712 = vpop.f32.mrb[0].mxu0
  %1713 = vmatprep.mubr.bf16.mxu0 0
  %1714 = vmatmul.mubr.bf16.gmra.mrb[0].mxu0 %v1146
  %v1715 = vpop.f32.mrb[0].mxu0
  %v1716 = vadd.f32 %v404, %v1715
  %v1717 = vpop.f32.mrb[0].mxu0
  %v1718 = vpop.f32.mrb[0].mxu0
  %v1719 = vadd.f32 %v404, %v1718
  %v1720 = vpop.f32.mrb[0].mxu0
  %1721 = vmatprep.mubr.bf16.mxu0 0
  %1722 = vmatmul.mubr.bf16.gmra.mrb[0].mxu0 %v1149
  %v1723 = vpop.f32.mrb[0].mxu0
  %v1724 = vadd.f32 %v404, %v1723
  %v1725 = vpop.f32.mrb[0].mxu0
  %v1726 = vpop.f32.mrb[0].mxu0
  %v1727 = vadd.f32 %v404, %v1726
  %v1728 = vpop.f32.mrb[0].mxu0
  %1729 = vmatprep.mubr.bf16.mxu0 0
  %1730 = vmatmul.mubr.bf16.gmra.mrb[0].mxu0 %v1152
  %v1731 = vpop.f32.mrb[0].mxu0
  %v1732 = vadd.f32 %v404, %v1731
  %v1733 = vpop.f32.mrb[0].mxu0
  %v1734 = vpop.f32.mrb[0].mxu0
  %v1735 = vadd.f32 %v404, %v1734
  %v1736 = vpop.f32.mrb[0].mxu0
  %1737 = vmatprep.mubr.bf16.mxu0 0
  %1738 = vmatmul.mubr.bf16.gmra.mrb[0].mxu0 %v1155
  %v1739 = vpop.f32.mrb[0].mxu0
  %v1740 = vadd.f32 %v404, %v1739
  %v1741 = vpop.f32.mrb[0].mxu0
  %v1742 = vpop.f32.mrb[0].mxu0
  %v1743 = vadd.f32 %v404, %v1742
  %v1744 = vpop.f32.mrb[0].mxu0
  %1745 = vmatprep.mubr.bf16.mxu0 0
  %1746 = vmatmul.mubr.bf16.gmra.mrb[0].mxu0 %v1158
  %v1747 = vpop.f32.mrb[0].mxu0
  %v1748 = vadd.f32 %v404, %v1747
  %v1749 = vpop.f32.mrb[0].mxu0
  %v1750 = vpop.f32.mrb[0].mxu0
  %v1751 = vadd.f32 %v404, %v1750
  %v1752 = vpop.f32.mrb[0].mxu0
  %1753 = vmatprep.mubr.bf16.mxu0 0
  %1754 = vmatmul.mubr.bf16.gmra.mrb[0].mxu0 %v1161
  %v1755 = vpop.f32.mrb[0].mxu0
  %v1756 = vadd.f32 %v404, %v1755
  %v1757 = vpop.f32.mrb[0].mxu0
  %v1758 = vpop.f32.mrb[0].mxu0
  %v1759 = vadd.f32 %v404, %v1758
  %v1760 = vpop.f32.mrb[0].mxu0
  %1761 = vmatprep.mubr.bf16.mxu0 0
  %1762 = vmatmul.mubr.bf16.gmra.mrb[0].mxu0 %v1164
  %v1763 = vpop.f32.mrb[0].mxu0
  %v1764 = vadd.f32 %v404, %v1763
  %v1765 = vpop.f32.mrb[0].mxu0
  %v1766 = vpop.f32.mrb[0].mxu0
  %v1767 = vadd.f32 %v404, %v1766
  %v1768 = vpop.f32.mrb[0].mxu0
  %1769 = vmatprep.mubr.bf16.mxu0 0
  %1770 = vmatmul.mubr.bf16.gmra.mrb[0].mxu0 %v1167
  %v1771 = vpop.f32.mrb[0].mxu0
  %v1772 = vadd.f32 %v404, %v1771
  %v1773 = vpop.f32.mrb[0].mxu0
  %v1774 = vpop.f32.mrb[0].mxu0
  %v1775 = vadd.f32 %v404, %v1774
  %v1776 = vpop.f32.mrb[0].mxu0
  %1777 = vmatprep.mubr.bf16.mxu0 0
  %1778 = vmatmul.mubr.bf16.gmra.mrb[0].mxu0 %v1170
  %v1779 = vpop.f32.mrb[0].mxu0
  %v1780 = vadd.f32 %v404, %v1779
  %v1781 = vpop.f32.mrb[0].mxu0
  %v1782 = vpop.f32.mrb[0].mxu0
  %v1783 = vadd.f32 %v404, %v1782
  %v1784 = vpop.f32.mrb[0].mxu0
  %1785 = vmatprep.mubr.bf16.mxu0 0
  %1786 = vmatmul.mubr.bf16.gmra.mrb[0].mxu0 %v1173
  %v1787 = vpop.f32.mrb[0].mxu0
  %v1788 = vadd.f32 %v404, %v1787
  %v1789 = vpop.f32.mrb[0].mxu0
  %v1790 = vpop.f32.mrb[0].mxu0
  %v1791 = vadd.f32 %v404, %v1790
  %v1792 = vpop.f32.mrb[0].mxu0
  %1793 = vmatprep.mubr.bf16.mxu0 0
  %1794 = vmatmul.mubr.bf16.gmra.mrb[0].mxu0 %v1176
  %v1795 = vpop.f32.mrb[0].mxu0
  %v1796 = vadd.f32 %v404, %v1795
  %v1797 = vpop.f32.mrb[0].mxu0
  %v1798 = vpop.f32.mrb[0].mxu0
  %v1799 = vadd.f32 %v404, %v1798
  %v1800 = vpop.f32.mrb[0].mxu0
  %1801 = vmatprep.mubr.bf16.mxu0 0
  %1802 = vmatmul.mubr.bf16.gmra.mrb[0].mxu0 %v1179
  %v1803 = vpop.f32.mrb[0].mxu0
  %v1804 = vadd.f32 %v404, %v1803
  %v1805 = vpop.f32.mrb[0].mxu0
  %v1806 = vpop.f32.mrb[0].mxu0
  %v1807 = vadd.f32 %v404, %v1806
  %v1808 = vpop.f32.mrb[0].mxu0
  %1809 = vmatprep.mubr.bf16.mxu0 0
  %1810 = vmatmul.mubr.bf16.gmra.mrb[0].mxu0 %v1182
  %v1811 = vpop.f32.mrb[0].mxu0
  %v1812 = vadd.f32 %v404, %v1811
  %v1813 = vpop.f32.mrb[0].mxu0
  %v1814 = vpop.f32.mrb[0].mxu0
  %v1815 = vadd.f32 %v404, %v1814
  %v1816 = vpop.f32.mrb[0].mxu0
  %1817 = vmatprep.mubr.bf16.mxu0 0
  %1818 = vmatmul.mubr.bf16.gmra.mrb[0].mxu0 %v1185
  %v1819 = vpop.f32.mrb[0].mxu0
  %v1820 = vadd.f32 %v404, %v1819
  %v1821 = vpop.f32.mrb[0].mxu0
  %v1822 = vpop.f32.mrb[0].mxu0
  %v1823 = vadd.f32 %v404, %v1822
  %v1824 = vpop.f32.mrb[0].mxu0
  %1825 = vmatprep.mubr.bf16.mxu0 0
  %1826 = vmatmul.mubr.bf16.gmra.mrb[0].mxu0 %v1188
  %v1827 = vpop.f32.mrb[0].mxu0
  %v1828 = vadd.f32 %v404, %v1827
  %v1829 = vpop.f32.mrb[0].mxu0
  %v1830 = vpop.f32.mrb[0].mxu0
  %v1831 = vadd.f32 %v404, %v1830
  %v1832 = vpop.f32.mrb[0].mxu0
  %1833 = vmatprep.mubr.bf16.mxu0 0
  %1834 = vmatmul.mubr.bf16.gmra.mrb[0].mxu0 %v1191
  %v1835 = vpop.f32.mrb[0].mxu0
  %v1836 = vadd.f32 %v404, %v1835
  %v1837 = vpop.f32.mrb[0].mxu0
  %v1838 = vpop.f32.mrb[0].mxu0
  %v1839 = vadd.f32 %v404, %v1838
  %v1840 = vpop.f32.mrb[0].mxu0
  %1841 = vmatprep.mubr.bf16.mxu0 0
  %1842 = vmatmul.mubr.bf16.gmra.mrb[0].mxu0 %v1194
  %v1843 = vpop.f32.mrb[0].mxu0
  %v1844 = vadd.f32 %v404, %v1843
  %v1845 = vpop.f32.mrb[0].mxu0
  %v1846 = vpop.f32.mrb[0].mxu0
  %v1847 = vadd.f32 %v404, %v1846
  %v1848 = vpop.f32.mrb[0].mxu0
  %1849 = vmatprep.mubr.bf16.mxu0 0
  %1850 = vmatmul.mubr.bf16.gmra.mrb[0].mxu0 %v1197
  %v1851 = vpop.f32.mrb[0].mxu0
  %v1852 = vadd.f32 %v404, %v1851
  %v1853 = vpop.f32.mrb[0].mxu0
  %v1854 = vpop.f32.mrb[0].mxu0
  %v1855 = vadd.f32 %v404, %v1854
  %v1856 = vpop.f32.mrb[0].mxu0
  %1857 = vmatprep.mubr.bf16.mxu0 0
  %1858 = vmatmul.mubr.bf16.gmra.mrb[0].mxu0 %v1200
  %v1859 = vpop.f32.mrb[0].mxu0
  %v1860 = vadd.f32 %v404, %v1859
  %v1861 = vpop.f32.mrb[0].mxu0
  %v1862 = vpop.f32.mrb[0].mxu0
  %v1863 = vadd.f32 %v404, %v1862
  %v1864 = vpop.f32.mrb[0].mxu0
  %1865 = vmatprep.mubr.bf16.mxu0 0
  %1866 = vmatmul.mubr.bf16.gmra.mrb[0].mxu0 %v1203
  %v1867 = vpop.f32.mrb[0].mxu0
  %v1868 = vadd.f32 %v404, %v1867
  %v1869 = vpop.f32.mrb[0].mxu0
  %v1870 = vpop.f32.mrb[0].mxu0
  %v1871 = vadd.f32 %v404, %v1870
  %v1872 = vpop.f32.mrb[0].mxu0
  %1873 = vmatprep.mubr.bf16.mxu0 0
  %1874 = vmatmul.mubr.bf16.gmra.mrb[0].mxu0 %v1206
  %v1875 = vpop.f32.mrb[0].mxu0
  %v1876 = vadd.f32 %v404, %v1875
  %v1877 = vpop.f32.mrb[0].mxu0
  %v1878 = vpop.f32.mrb[0].mxu0
  %v1879 = vadd.f32 %v404, %v1878
  %v1880 = vpop.f32.mrb[0].mxu0
  %1881 = vmatprep.mubr.bf16.mxu0 0
  %1882 = vmatmul.mubr.bf16.gmra.mrb[0].mxu0 %v1209
  %v1883 = vpop.f32.mrb[0].mxu0
  %v1884 = vadd.f32 %v404, %v1883
  %v1885 = vpop.f32.mrb[0].mxu0
  %v1886 = vpop.f32.mrb[0].mxu0
  %v1887 = vadd.f32 %v404, %v1886
  %v1888 = vpop.f32.mrb[0].mxu0
  %1889 = vmatprep.mubr.bf16.mxu0 0
  %1890 = vmatmul.mubr.bf16.gmra.mrb[0].mxu0 %v1212
  %v1891 = vpop.f32.mrb[0].mxu0
  %v1892 = vadd.f32 %v404, %v1891
  %v1893 = vpop.f32.mrb[0].mxu0
  %v1894 = vpop.f32.mrb[0].mxu0
  %v1895 = vadd.f32 %v404, %v1894
  %v1896 = vpop.f32.mrb[0].mxu0
  %1897 = vmatprep.mubr.bf16.mxu0 0
  %1898 = vmatmul.mubr.bf16.gmra.mrb[0].mxu0 %v1215
  %v1899 = vpop.f32.mrb[0].mxu0
  %v1900 = vadd.f32 %v404, %v1899
  %v1901 = vpop.f32.mrb[0].mxu0
  %v1902 = vpop.f32.mrb[0].mxu0
  %v1903 = vadd.f32 %v404, %v1902
  %v1904 = vpop.f32.mrb[0].mxu0
  %1905 = vmatprep.mubr.bf16.mxu0 0
  %1906 = vmatmul.mubr.bf16.gmra.mrb[0].mxu0 %v1218
  %v1907 = vpop.f32.mrb[0].mxu0
  %v1908 = vadd.f32 %v404, %v1907
  %v1909 = vpop.f32.mrb[0].mxu0
  %v1910 = vpop.f32.mrb[0].mxu0
  %v1911 = vadd.f32 %v404, %v1910
  %v1912 = vpop.f32.mrb[0].mxu0
  %1913 = vmatprep.mubr.bf16.mxu0 0
  %1914 = vmatmul.mubr.bf16.gmra.mrb[0].mxu0 %v1221
  %v1915 = vpop.f32.mrb[0].mxu0
  %v1916 = vadd.f32 %v404, %v1915
  %v1917 = vpop.f32.mrb[0].mxu0
  %v1918 = vpop.f32.mrb[0].mxu0
  %v1919 = vadd.f32 %v404, %v1918
  %v1920 = vpop.f32.mrb[0].mxu0
  %1921 = vmatprep.mubr.bf16.mxu0 0
  %1922 = vmatmul.mubr.bf16.gmra.mrb[0].mxu0 %v1224
  %v1923 = vpop.f32.mrb[0].mxu0
  %v1924 = vadd.f32 %v404, %v1923
  %v1925 = vpop.f32.mrb[0].mxu0
  %v1926 = vpop.f32.mrb[0].mxu0
  %v1927 = vadd.f32 %v404, %v1926
  %v1928 = vpop.f32.mrb[0].mxu0
  %1929 = vmatprep.mubr.bf16.mxu0 0
  %1930 = vmatmul.mubr.bf16.gmra.mrb[0].mxu0 %v1227
  %v1931 = vpop.f32.mrb[0].mxu0
  %v1932 = vadd.f32 %v404, %v1931
  %v1933 = vpop.f32.mrb[0].mxu0
  %v1934 = vpop.f32.mrb[0].mxu0
  %v1935 = vadd.f32 %v404, %v1934
  %v1936 = vpop.f32.mrb[0].mxu0
  %1937 = vmatprep.mubr.bf16.mxu0 0
  %1938 = vmatmul.mubr.bf16.gmra.mrb[0].mxu0 %v1230
  %v1939 = vpop.f32.mrb[0].mxu0
  %v1940 = vadd.f32 %v404, %v1939
  %v1941 = vpop.f32.mrb[0].mxu0
  %v1942 = vpop.f32.mrb[0].mxu0
  %v1943 = vadd.f32 %v404, %v1942
  %v1944 = vpop.f32.mrb[0].mxu0
  %1945 = vmatprep.mubr.bf16.mxu0 0
  %1946 = vmatmul.mubr.bf16.gmra.mrb[0].mxu0 %v1233
  %v1947 = vpop.f32.mrb[0].mxu0
  %v1948 = vadd.f32 %v404, %v1947
  %v1949 = vpop.f32.mrb[0].mxu0
  %v1950 = vpop.f32.mrb[0].mxu0
  %v1951 = vadd.f32 %v404, %v1950
  %v1952 = vpop.f32.mrb[0].mxu0
  %1953 = vmatprep.mubr.bf16.mxu0 0
  %1954 = vmatmul.mubr.bf16.gmra.mrb[0].mxu0 %v1236
  %v1955 = vpop.f32.mrb[0].mxu0
  %v1956 = vadd.f32 %v404, %v1955
  %v1957 = vpop.f32.mrb[0].mxu0
  %v1958 = vpop.f32.mrb[0].mxu0
  %v1959 = vadd.f32 %v404, %v1958
  %v1960 = vpop.f32.mrb[0].mxu0
  %1961 = vmatprep.mubr.bf16.mxu0 0
  %1962 = vmatmul.mubr.bf16.gmra.mrb[0].mxu0 %v1239
  %v1963 = vpop.f32.mrb[0].mxu0
  %v1964 = vadd.f32 %v404, %v1963
  %v1965 = vpop.f32.mrb[0].mxu0
  %v1966 = vpop.f32.mrb[0].mxu0
  %v1967 = vadd.f32 %v404, %v1966
  %v1968 = vpop.f32.mrb[0].mxu0
  %1969 = vmatprep.mubr.bf16.mxu0 0
  %1970 = vmatmul.mubr.bf16.gmra.mrb[0].mxu0 %v1242
  %v1971 = vpop.f32.mrb[0].mxu0
  %v1972 = vadd.f32 %v404, %v1971
  %v1973 = vpop.f32.mrb[0].mxu0
  %v1974 = vpop.f32.mrb[0].mxu0
  %v1975 = vadd.f32 %v404, %v1974
  %v1976 = vpop.f32.mrb[0].mxu0
  %1977 = vmatprep.mubr.bf16.mxu0 0
  %1978 = vmatmul.mubr.bf16.gmra.mrb[0].mxu0 %v1245
  %v1979 = vpop.f32.mrb[0].mxu0
  %v1980 = vadd.f32 %v404, %v1979
  %v1981 = vpop.f32.mrb[0].mxu0
  %v1982 = vpop.f32.mrb[0].mxu0
  %v1983 = vadd.f32 %v404, %v1982
  %v1984 = vpop.f32.mrb[0].mxu0
  %1985 = vmatprep.mubr.bf16.mxu0 0
  %1986 = vmatmul.mubr.bf16.gmra.mrb[0].mxu0 %v1248
  %v1987 = vpop.f32.mrb[0].mxu0
  %v1988 = vadd.f32 %v404, %v1987
  %v1989 = vpop.f32.mrb[0].mxu0
  %v1990 = vpop.f32.mrb[0].mxu0
  %v1991 = vadd.f32 %v404, %v1990
  %v1992 = vpop.f32.mrb[0].mxu0
  %1993 = vmatprep.mubr.bf16.mxu0 0
  %1994 = vmatmul.mubr.bf16.gmra.mrb[0].mxu0 %v1251
  %v1995 = vpop.f32.mrb[0].mxu0
  %v1996 = vadd.f32 %v404, %v1995
  %v1997 = vpop.f32.mrb[0].mxu0
  %v1998 = vpop.f32.mrb[0].mxu0
  %v1999 = vadd.f32 %v404, %v1998
  %v2000 = vpop.f32.mrb[0].mxu0
  %2001 = vmatprep.mubr.bf16.mxu0 0
  %2002 = vmatmul.mubr.bf16.gmra.mrb[0].mxu0 %v1254
  %v2003 = vpop.f32.mrb[0].mxu0
  %v2004 = vadd.f32 %v404, %v2003
  %v2005 = vpop.f32.mrb[0].mxu0
  %v2006 = vpop.f32.mrb[0].mxu0
  %v2007 = vadd.f32 %v404, %v2006
  %v2008 = vpop.f32.mrb[0].mxu0
  %2009 = vmatprep.mubr.bf16.mxu0 0
  %2010 = vmatmul.mubr.bf16.gmra.mrb[0].mxu0 %v1257
  %v2011 = vpop.f32.mrb[0].mxu0
  %v2012 = vadd.f32 %v404, %v2011
  %v2013 = vpop.f32.mrb[0].mxu0
  %v2014 = vpop.f32.mrb[0].mxu0
  %v2015 = vadd.f32 %v404, %v2014
  %v2016 = vpop.f32.mrb[0].mxu0
  %2017 = vmatprep.mubr.bf16.mxu0 0
  %2018 = vmatmul.mubr.bf16.gmra.mrb[0].mxu0 %v1260
  %v2019 = vpop.f32.mrb[0].mxu0
  %v2020 = vadd.f32 %v404, %v2019
  %v2021 = vpop.f32.mrb[0].mxu0
  %v2022 = vpop.f32.mrb[0].mxu0
  %v2023 = vadd.f32 %v404, %v2022
  %v2024 = vpop.f32.mrb[0].mxu0
  %2025 = vmatprep.mubr.bf16.mxu0 0
  %2026 = vmatmul.mubr.bf16.gmra.mrb[0].mxu0 %v1263
  %v2027 = vpop.f32.mrb[0].mxu0
  %v2028 = vadd.f32 %v404, %v2027
  %v2029 = vpop.f32.mrb[0].mxu0
  %v2030 = vpop.f32.mrb[0].mxu0
  %v2031 = vadd.f32 %v404, %v2030
  %v2032 = vpop.f32.mrb[0].mxu0
  %2033 = vmatprep.mubr.bf16.mxu0 0
  %2034 = vmatmul.mubr.bf16.gmra.mrb[0].mxu0 %v1266
  %v2035 = vpop.f32.mrb[0].mxu0
  %v2036 = vadd.f32 %v404, %v2035
  %v2037 = vpop.f32.mrb[0].mxu0
  %v2038 = vpop.f32.mrb[0].mxu0
  %v2039 = vadd.f32 %v404, %v2038
  %v2040 = vpop.f32.mrb[0].mxu0
  %2041 = vmatprep.mubr.bf16.mxu0 0
  %2042 = vmatmul.mubr.bf16.gmra.mrb[0].mxu0 %v1269
  %v2043 = vpop.f32.mrb[0].mxu0
  %v2044 = vadd.f32 %v404, %v2043
  %v2045 = vpop.f32.mrb[0].mxu0
  %v2046 = vpop.f32.mrb[0].mxu0
  %v2047 = vadd.f32 %v404, %v2046
  %v2048 = vpop.f32.mrb[0].mxu0
  %2049 = vmatprep.mubr.bf16.mxu0 0
  %2050 = vmatmul.mubr.bf16.gmra.mrb[0].mxu0 %v1272
  %v2051 = vpop.f32.mrb[0].mxu0
  %v2052 = vadd.f32 %v404, %v2051
  %v2053 = vpop.f32.mrb[0].mxu0
  %v2054 = vpop.f32.mrb[0].mxu0
  %v2055 = vadd.f32 %v404, %v2054
  %v2056 = vpop.f32.mrb[0].mxu0
  %2057 = vmatprep.mubr.bf16.mxu0 0
  %2058 = vmatmul.mubr.bf16.gmra.mrb[0].mxu0 %v1275
  %v2059 = vpop.f32.mrb[0].mxu0
  %v2060 = vadd.f32 %v404, %v2059
  %v2061 = vpop.f32.mrb[0].mxu0
  %v2062 = vpop.f32.mrb[0].mxu0
  %v2063 = vadd.f32 %v404, %v2062
  %v2064 = vpop.f32.mrb[0].mxu0
  %2065 = vmatprep.mubr.bf16.mxu0 0
  %2066 = vmatmul.mubr.bf16.gmra.mrb[0].mxu0 %v1278
  %v2067 = vpop.f32.mrb[0].mxu0
  %v2068 = vadd.f32 %v404, %v2067
  %v2069 = vpop.f32.mrb[0].mxu0
  %v2070 = vpop.f32.mrb[0].mxu0
  %v2071 = vadd.f32 %v404, %v2070
  %v2072 = vpop.f32.mrb[0].mxu0
  %2073 = vmatprep.mubr.bf16.mxu0 0
  %2074 = vmatmul.mubr.bf16.gmra.mrb[0].mxu0 %v1281
  %v2075 = vpop.f32.mrb[0].mxu0
  %v2076 = vadd.f32 %v404, %v2075
  %v2077 = vpop.f32.mrb[0].mxu0
  %v2078 = vpop.f32.mrb[0].mxu0
  %v2079 = vadd.f32 %v404, %v2078
  %v2080 = vpop.f32.mrb[0].mxu0
  %2081 = vmatprep.mubr.bf16.mxu0 0
  %2082 = vmatmul.mubr.bf16.gmra.mrb[0].mxu0 %v1284
  %v2083 = vpop.f32.mrb[0].mxu0
  %v2084 = vadd.f32 %v404, %v2083
  %v2085 = vpop.f32.mrb[0].mxu0
  %v2086 = vpop.f32.mrb[0].mxu0
  %v2087 = vadd.f32 %v404, %v2086
  %v2088 = vpop.f32.mrb[0].mxu0
  %2089 = vmatprep.mubr.bf16.mxu0 0
  %2090 = vmatmul.mubr.bf16.gmra.mrb[0].mxu0 %v1287
  %v2091 = vpop.f32.mrb[0].mxu0
  %v2092 = vadd.f32 %v404, %v2091
  %v2093 = vpop.f32.mrb[0].mxu0
  %v2094 = vpop.f32.mrb[0].mxu0
  %v2095 = vadd.f32 %v404, %v2094
  %v2096 = vpop.f32.mrb[0].mxu0
  %2097 = vmatprep.mubr.bf16.mxu0 0
  %2098 = vmatmul.mubr.bf16.gmra.mrb[0].mxu0 %v1290
  %v2099 = vpop.f32.mrb[0].mxu0
  %v2100 = vadd.f32 %v404, %v2099
  %v2101 = vpop.f32.mrb[0].mxu0
  %v2102 = vpop.f32.mrb[0].mxu0
  %v2103 = vadd.f32 %v404, %v2102
  %v2104 = vpop.f32.mrb[0].mxu0
  %2105 = vmatprep.mubr.bf16.mxu0 0
  %2106 = vmatmul.mubr.bf16.gmra.mrb[0].mxu0 %v1293
  %v2107 = vpop.f32.mrb[0].mxu0
  %v2108 = vadd.f32 %v404, %v2107
  %v2109 = vpop.f32.mrb[0].mxu0
  %v2110 = vpop.f32.mrb[0].mxu0
  %v2111 = vadd.f32 %v404, %v2110
  %v2112 = vpop.f32.mrb[0].mxu0
  %2113 = vmatprep.mubr.bf16.mxu0 0
  %2114 = vmatmul.mubr.bf16.gmra.mrb[0].mxu0 %v1296
  %v2115 = vpop.f32.mrb[0].mxu0
  %v2116 = vadd.f32 %v404, %v2115
  %v2117 = vpop.f32.mrb[0].mxu0
  %v2118 = vpop.f32.mrb[0].mxu0
  %v2119 = vadd.f32 %v404, %v2118
  %v2120 = vpop.f32.mrb[0].mxu0
  %2121 = vmatprep.mubr.bf16.mxu0 0
  %2122 = vmatmul.mubr.bf16.gmra.mrb[0].mxu0 %v1299
  %v2123 = vpop.f32.mrb[0].mxu0
  %v2124 = vadd.f32 %v404, %v2123
  %v2125 = vpop.f32.mrb[0].mxu0
  %v2126 = vpop.f32.mrb[0].mxu0
  %v2127 = vadd.f32 %v404, %v2126
  %v2128 = vpop.f32.mrb[0].mxu0
  %2129 = vmatprep.mubr.bf16.mxu0 0
  %2130 = vmatmul.mubr.bf16.gmra.mrb[0].mxu0 %v1302
  %v2131 = vpop.f32.mrb[0].mxu0
  %v2132 = vadd.f32 %v404, %v2131
  %v2133 = vpop.f32.mrb[0].mxu0
  %v2134 = vpop.f32.mrb[0].mxu0
  %v2135 = vadd.f32 %v404, %v2134
  %v2136 = vpop.f32.mrb[0].mxu0
  %2137 = vmatprep.mubr.bf16.mxu0 0
  %2138 = vmatmul.mubr.bf16.gmra.mrb[0].mxu0 %v1305
  %v2139 = vpop.f32.mrb[0].mxu0
  %v2140 = vadd.f32 %v404, %v2139
  %v2141 = vpop.f32.mrb[0].mxu0
  %v2142 = vpop.f32.mrb[0].mxu0
  %v2143 = vadd.f32 %v404, %v2142
  %v2144 = vpop.f32.mrb[0].mxu0
  %2145 = vmatprep.mubr.bf16.mxu0 0
  %2146 = vmatmul.mubr.bf16.gmra.mrb[0].mxu0 %v1308
  %v2147 = vpop.f32.mrb[0].mxu0
  %v2148 = vadd.f32 %v404, %v2147
  %v2149 = vpop.f32.mrb[0].mxu0
  %v2150 = vpop.f32.mrb[0].mxu0
  %v2151 = vadd.f32 %v404, %v2150
  %v2152 = vpop.f32.mrb[0].mxu0
  %2153 = vmatprep.mubr.bf16.mxu0 0
  %2154 = vmatmul.mubr.bf16.gmra.mrb[0].mxu0 %v1311
  %v2155 = vpop.f32.mrb[0].mxu0
  %v2156 = vadd.f32 %v404, %v2155
  %v2157 = vpop.f32.mrb[0].mxu0
  %v2158 = vpop.f32.mrb[0].mxu0
  %v2159 = vadd.f32 %v404, %v2158
  %v2160 = vpop.f32.mrb[0].mxu0
  %2161 = vmatprep.mubr.bf16.mxu0 0
  %2162 = vmatmul.mubr.bf16.gmra.mrb[0].mxu0 %v1314
  %v2163 = vpop.f32.mrb[0].mxu0
  %v2164 = vadd.f32 %v404, %v2163
  %v2165 = vpop.f32.mrb[0].mxu0
  %v2166 = vpop.f32.mrb[0].mxu0
  %v2167 = vadd.f32 %v404, %v2166
  %v2168 = vpop.f32.mrb[0].mxu0
  %2169 = vmatprep.mubr.bf16.mxu0 0
  %2170 = vmatmul.mubr.bf16.gmra.mrb[0].mxu0 %v1317
  %v2171 = vpop.f32.mrb[0].mxu0
  %v2172 = vadd.f32 %v404, %v2171
  %v2173 = vpop.f32.mrb[0].mxu0
  %v2174 = vpop.f32.mrb[0].mxu0
  %v2175 = vadd.f32 %v404, %v2174
  %v2176 = vpop.f32.mrb[0].mxu0
  %2177 = vmatprep.mubr.bf16.mxu0 0
  %2178 = vmatmul.mubr.bf16.gmra.mrb[0].mxu0 %v1320
  %v2179 = vpop.f32.mrb[0].mxu0
  %v2180 = vadd.f32 %v404, %v2179
  %v2181 = vpop.f32.mrb[0].mxu0
  %v2182 = vpop.f32.mrb[0].mxu0
  %v2183 = vadd.f32 %v404, %v2182
  %v2184 = vpop.f32.mrb[0].mxu0
  %2185 = vmatprep.mubr.bf16.mxu0 0
  %2186 = vmatmul.mubr.bf16.gmra.mrb[0].mxu0 %v1323
  %v2187 = vpop.f32.mrb[0].mxu0
  %v2188 = vadd.f32 %v404, %v2187
  %v2189 = vpop.f32.mrb[0].mxu0
  %v2190 = vpop.f32.mrb[0].mxu0
  %v2191 = vadd.f32 %v404, %v2190
  %v2192 = vpop.f32.mrb[0].mxu0
  %2193 = vmatprep.mubr.bf16.mxu0 0
  %2194 = vmatmul.mubr.bf16.gmra.mrb[0].mxu0 %v1326
  %v2195 = vpop.f32.mrb[0].mxu0
  %v2196 = vadd.f32 %v404, %v2195
  %v2197 = vpop.f32.mrb[0].mxu0
  %v2198 = vpop.f32.mrb[0].mxu0
  %v2199 = vadd.f32 %v404, %v2198
  %v2200 = vpop.f32.mrb[0].mxu0
  %2201 = vmatprep.mubr.bf16.mxu0 0
  %2202 = vmatmul.mubr.bf16.gmra.mrb[0].mxu0 %v1329
  %v2203 = vpop.f32.mrb[0].mxu0
  %v2204 = vadd.f32 %v404, %v2203
  %v2205 = vpop.f32.mrb[0].mxu0
  %v2206 = vpop.f32.mrb[0].mxu0
  %v2207 = vadd.f32 %v404, %v2206
  %v2208 = vpop.f32.mrb[0].mxu0
  %2209 = vmatprep.mubr.bf16.mxu0 0
  %2210 = vmatmul.mubr.bf16.gmra.mrb[0].mxu0 %v1332
  %v2211 = vpop.f32.mrb[0].mxu0
  %v2212 = vadd.f32 %v404, %v2211
  %v2213 = vpop.f32.mrb[0].mxu0
  %v2214 = vpop.f32.mrb[0].mxu0
  %v2215 = vadd.f32 %v404, %v2214
  %v2216 = vpop.f32.mrb[0].mxu0
  %2217 = vmatprep.mubr.bf16.mxu0 0
  %2218 = vmatmul.mubr.bf16.gmra.mrb[0].mxu0 %v1335
  %v2219 = vpop.f32.mrb[0].mxu0
  %v2220 = vadd.f32 %v404, %v2219
  %v2221 = vpop.f32.mrb[0].mxu0
  %v2222 = vpop.f32.mrb[0].mxu0
  %v2223 = vadd.f32 %v404, %v2222
  %v2224 = vpop.f32.mrb[0].mxu0
  %2225 = vmatprep.mubr.bf16.mxu0 0
  %2226 = vmatmul.mubr.bf16.gmra.mrb[0].mxu0 %v1338
  %v2227 = vpop.f32.mrb[0].mxu0
  %v2228 = vadd.f32 %v404, %v2227
  %v2229 = vpop.f32.mrb[0].mxu0
  %v2230 = vpop.f32.mrb[0].mxu0
  %v2231 = vadd.f32 %v404, %v2230
  %v2232 = vpop.f32.mrb[0].mxu0
  %2233 = vmatprep.mubr.bf16.mxu0 0
  %2234 = vmatmul.mubr.bf16.gmra.mrb[0].mxu0 %v1341
  %v2235 = vpop.f32.mrb[0].mxu0
  %v2236 = vadd.f32 %v404, %v2235
  %v2237 = vpop.f32.mrb[0].mxu0
  %v2238 = vpop.f32.mrb[0].mxu0
  %v2239 = vadd.f32 %v404, %v2238
  %v2240 = vpop.f32.mrb[0].mxu0
  %2241 = vmatprep.mubr.bf16.mxu0 0
  %2242 = vmatmul.mubr.bf16.gmra.mrb[0].mxu0 %v1344
  %v2243 = vpop.f32.mrb[0].mxu0
  %v2244 = vadd.f32 %v404, %v2243
  %v2245 = vpop.f32.mrb[0].mxu0
  %v2246 = vpop.f32.mrb[0].mxu0
  %v2247 = vadd.f32 %v404, %v2246
  %v2248 = vpop.f32.mrb[0].mxu0
  %2249 = vmatprep.mubr.bf16.mxu0 0
  %2250 = vmatmul.mubr.bf16.gmra.mrb[0].mxu0 %v1347
  %v2251 = vpop.f32.mrb[0].mxu0
  %v2252 = vadd.f32 %v404, %v2251
  %v2253 = vpop.f32.mrb[0].mxu0
  %v2254 = vpop.f32.mrb[0].mxu0
  %v2255 = vadd.f32 %v404, %v2254
  %v2256 = vpop.f32.mrb[0].mxu0
  %2257 = vmatprep.mubr.bf16.mxu0 0
  %2258 = vmatmul.mubr.bf16.gmra.mrb[0].mxu0 %v1350
  %v2259 = vpop.f32.mrb[0].mxu0
  %v2260 = vadd.f32 %v404, %v2259
  %v2261 = vpop.f32.mrb[0].mxu0
  %v2262 = vpop.f32.mrb[0].mxu0
  %v2263 = vadd.f32 %v404, %v2262
  %v2264 = vpop.f32.mrb[0].mxu0
  %2265 = vmatprep.mubr.bf16.mxu0 0
  %2266 = vmatmul.mubr.bf16.gmra.mrb[0].mxu0 %v1353
  %v2267 = vpop.f32.mrb[0].mxu0
  %v2268 = vadd.f32 %v404, %v2267
  %v2269 = vpop.f32.mrb[0].mxu0
  %v2270 = vpop.f32.mrb[0].mxu0
  %v2271 = vadd.f32 %v404, %v2270
  %v2272 = vpop.f32.mrb[0].mxu0
  %2273 = vmatprep.mubr.bf16.mxu0 0
  %2274 = vmatmul.mubr.bf16.gmra.mrb[0].mxu0 %v1356
  %v2275 = vpop.f32.mrb[0].mxu0
  %v2276 = vadd.f32 %v404, %v2275
  %v2277 = vpop.f32.mrb[0].mxu0
  %v2278 = vpop.f32.mrb[0].mxu0
  %v2279 = vadd.f32 %v404, %v2278
  %v2280 = vpop.f32.mrb[0].mxu0
  %2281 = vmatprep.mubr.bf16.mxu0 0
  %2282 = vmatmul.mubr.bf16.gmra.mrb[0].mxu0 %v1359
  %v2283 = vpop.f32.mrb[0].mxu0
  %v2284 = vadd.f32 %v404, %v2283
  %v2285 = vpop.f32.mrb[0].mxu0
  %v2286 = vpop.f32.mrb[0].mxu0
  %v2287 = vadd.f32 %v404, %v2286
  %v2288 = vpop.f32.mrb[0].mxu0
  %2289 = vmatprep.mubr.bf16.mxu0 0
  %2290 = vmatmul.mubr.bf16.gmra.mrb[0].mxu0 %v1362
  %v2291 = vpop.f32.mrb[0].mxu0
  %v2292 = vadd.f32 %v404, %v2291
  %v2293 = vpop.f32.mrb[0].mxu0
  %v2294 = vpop.f32.mrb[0].mxu0
  %v2295 = vadd.f32 %v404, %v2294
  %v2296 = vpop.f32.mrb[0].mxu0
  %2297 = vmatprep.mubr.bf16.mxu0 0
  %2298 = vmatmul.mubr.bf16.gmra.mrb[0].mxu0 %v1365
  %v2299 = vpop.f32.mrb[0].mxu0
  %v2300 = vadd.f32 %v404, %v2299
  %v2301 = vpop.f32.mrb[0].mxu0
  %v2302 = vpop.f32.mrb[0].mxu0
  %v2303 = vadd.f32 %v404, %v2302
  %v2304 = vpop.f32.mrb[0].mxu0
  %2305 = vmatprep.mubr.bf16.mxu0 0
  %2306 = vmatmul.mubr.bf16.gmra.mrb[0].mxu0 %v1368
  %v2307 = vpop.f32.mrb[0].mxu0
  %v2308 = vadd.f32 %v404, %v2307
  %v2309 = vpop.f32.mrb[0].mxu0
  %v2310 = vpop.f32.mrb[0].mxu0
  %v2311 = vadd.f32 %v404, %v2310
  %v2312 = vpop.f32.mrb[0].mxu0
  %2313 = vmatprep.mubr.bf16.mxu0 0
  %2314 = vmatmul.mubr.bf16.gmra.mrb[0].mxu0 %v1371
  %v2315 = vpop.f32.mrb[0].mxu0
  %v2316 = vadd.f32 %v404, %v2315
  %v2317 = vpop.f32.mrb[0].mxu0
  %v2318 = vpop.f32.mrb[0].mxu0
  %v2319 = vadd.f32 %v404, %v2318
  %v2320 = vpop.f32.mrb[0].mxu0
  %2321 = vmatprep.mubr.bf16.mxu0 0
  %2322 = vmatmul.mubr.bf16.gmra.mrb[0].mxu0 %v1374
  %v2323 = vpop.f32.mrb[0].mxu0
  %v2324 = vadd.f32 %v404, %v2323
  %v2325 = vpop.f32.mrb[0].mxu0
  %v2326 = vpop.f32.mrb[0].mxu0
  %v2327 = vadd.f32 %v404, %v2326
  %v2328 = vpop.f32.mrb[0].mxu0
  %2329 = vmatprep.mubr.bf16.mxu0 0
  %2330 = vmatmul.mubr.bf16.gmra.mrb[0].mxu0 %v1377
  %v2331 = vpop.f32.mrb[0].mxu0
  %v2332 = vadd.f32 %v404, %v2331
  %v2333 = vpop.f32.mrb[0].mxu0
  %v2334 = vpop.f32.mrb[0].mxu0
  %v2335 = vadd.f32 %v404, %v2334
  %v2336 = vpop.f32.mrb[0].mxu0
  %2337 = vmatprep.mubr.bf16.mxu0 0
  %2338 = vmatmul.mubr.bf16.gmra.mrb[0].mxu0 %v1380
  %v2339 = vpop.f32.mrb[0].mxu0
  %v2340 = vadd.f32 %v404, %v2339
  %v2341 = vpop.f32.mrb[0].mxu0
  %v2342 = vpop.f32.mrb[0].mxu0
  %v2343 = vadd.f32 %v404, %v2342
  %v2344 = vpop.f32.mrb[0].mxu0
  %2345 = vmatprep.mubr.bf16.mxu0 0
  %2346 = vmatmul.mubr.bf16.gmra.mrb[0].mxu0 %v1383
  %v2347 = vpop.f32.mrb[0].mxu0
  %v2348 = vadd.f32 %v404, %v2347
  %v2349 = vpop.f32.mrb[0].mxu0
  %v2350 = vpop.f32.mrb[0].mxu0
  %v2351 = vadd.f32 %v404, %v2350
  %v2352 = vpop.f32.mrb[0].mxu0
  %2353 = vmatprep.mubr.bf16.mxu0 0
  %2354 = vmatmul.mubr.bf16.gmra.mrb[0].mxu0 %v1386
  %v2355 = vpop.f32.mrb[0].mxu0
  %v2356 = vadd.f32 %v404, %v2355
  %v2357 = vpop.f32.mrb[0].mxu0
  %v2358 = vpop.f32.mrb[0].mxu0
  %v2359 = vadd.f32 %v404, %v2358
  %v2360 = vpop.f32.mrb[0].mxu0
  %2361 = vmatprep.mubr.bf16.mxu0 0
  %2362 = vmatmul.mubr.bf16.gmra.mrb[0].mxu0 %v1389
  %v2363 = vpop.f32.mrb[0].mxu0
  %v2364 = vadd.f32 %v404, %v2363
  %v2365 = vpop.f32.mrb[0].mxu0
  %v2366 = vpop.f32.mrb[0].mxu0
  %v2367 = vadd.f32 %v404, %v2366
  %v2368 = vpop.f32.mrb[0].mxu0
  %2369 = vmatprep.mubr.bf16.mxu0 0
  %2370 = vmatmul.mubr.bf16.gmra.mrb[0].mxu0 %v1392
  %v2371 = vpop.f32.mrb[0].mxu0
  %v2372 = vadd.f32 %v404, %v2371
  %v2373 = vpop.f32.mrb[0].mxu0
  %v2374 = vpop.f32.mrb[0].mxu0
  %v2375 = vadd.f32 %v404, %v2374
  %v2376 = vpop.f32.mrb[0].mxu0
  %2377 = vmatprep.mubr.bf16.mxu0 0
  %2378 = vmatmul.mubr.bf16.gmra.mrb[0].mxu0 %v1395
  %v2379 = vpop.f32.mrb[0].mxu0
  %v2380 = vadd.f32 %v404, %v2379
  %v2381 = vpop.f32.mrb[0].mxu0
  %v2382 = vpop.f32.mrb[0].mxu0
  %v2383 = vadd.f32 %v404, %v2382
  %v2384 = vpop.f32.mrb[0].mxu0
  %2385 = vmatprep.mubr.bf16.mxu0 0
  %2386 = vmatmul.mubr.bf16.gmra.mrb[0].mxu0 %v1398
  %v2387 = vpop.f32.mrb[0].mxu0
  %v2388 = vadd.f32 %v404, %v2387
  %v2389 = vpop.f32.mrb[0].mxu0
  %v2390 = vpop.f32.mrb[0].mxu0
  %v2391 = vadd.f32 %v404, %v2390
  %v2392 = vpop.f32.mrb[0].mxu0
  %2393 = vmatprep.mubr.bf16.mxu0 0
  %2394 = vmatmul.mubr.bf16.gmra.mrb[0].mxu0 %v1401
  %v2395 = vpop.f32.mrb[0].mxu0
  %v2396 = vadd.f32 %v404, %v2395
  %v2397 = vpop.f32.mrb[0].mxu0
  %v2398 = vpop.f32.mrb[0].mxu0
  %v2399 = vadd.f32 %v404, %v2398
  %v2400 = vpop.f32.mrb[0].mxu0
  %2401 = vmatprep.mubr.bf16.mxu0 0
  %2402 = vmatmul.mubr.bf16.gmra.mrb[0].mxu0 %v1404
  %v2403 = vpop.f32.mrb[0].mxu0
  %v2404 = vadd.f32 %v404, %v2403
  %v2405 = vpop.f32.mrb[0].mxu0
  %v2406 = vpop.f32.mrb[0].mxu0
  %v2407 = vadd.f32 %v404, %v2406
  %v2408 = vpop.f32.mrb[0].mxu0
  %2409 = vmatprep.mubr.bf16.mxu0 0
  %2410 = vmatmul.mubr.bf16.gmra.mrb[0].mxu0 %v1407
  %v2411 = vpop.f32.mrb[0].mxu0
  %v2412 = vadd.f32 %v404, %v2411
  %v2413 = vpop.f32.mrb[0].mxu0
  %v2414 = vpop.f32.mrb[0].mxu0
  %v2415 = vadd.f32 %v404, %v2414
  %v2416 = vpop.f32.mrb[0].mxu0
  %2417 = vmatprep.mubr.bf16.mxu0 0
  %2418 = vmatmul.mubr.bf16.gmra.mrb[0].mxu0 %v1410
  %v2419 = vpop.f32.mrb[0].mxu0
  %v2420 = vadd.f32 %v404, %v2419
  %v2421 = vpop.f32.mrb[0].mxu0
  %v2422 = vpop.f32.mrb[0].mxu0
  %v2423 = vadd.f32 %v404, %v2422
  %v2424 = vpop.f32.mrb[0].mxu0
  %2425 = vmatprep.mubr.bf16.mxu0 0
  %2426 = vmatmul.mubr.bf16.gmra.mrb[0].mxu0 %v1413
  %v2427 = vpop.f32.mrb[0].mxu0
  %v2428 = vadd.f32 %v404, %v2427
  %v2429 = vpop.f32.mrb[0].mxu0
  %v2430 = vpop.f32.mrb[0].mxu0
  %v2431 = vadd.f32 %v404, %v2430
  %v2432 = vpop.f32.mrb[0].mxu0
  %2433 = vmatprep.mubr.bf16.mxu0 0
  %2434 = vmatmul.mubr.bf16.gmra.mrb[0].mxu0 %v1416
  %v2435 = vpop.f32.mrb[0].mxu0
  %v2436 = vadd.f32 %v404, %v2435
  %v2437 = vpop.f32.mrb[0].mxu0
  %v2438 = vpop.f32.mrb[0].mxu0
  %v2439 = vadd.f32 %v404, %v2438
  %v2440 = vpop.f32.mrb[0].mxu0
  %2441 = vmatprep.mubr.bf16.mxu0 0
  %2442 = vmatmul.mubr.bf16.gmra.mrb[0].mxu0 %v1419
  %v2443 = vpop.f32.mrb[0].mxu0
  %v2444 = vadd.f32 %v404, %v2443
  %v2445 = vpop.f32.mrb[0].mxu0
  %v2446 = vpop.f32.mrb[0].mxu0
  %v2447 = vadd.f32 %v404, %v2446
  %v2448 = vpop.f32.mrb[0].mxu0
  %2449 = vmatprep.mubr.bf16.mxu0 0
  %2450 = vmatmul.mubr.bf16.gmra.mrb[0].mxu0 %v1422
  %v2451 = vpop.f32.mrb[0].mxu0
  %v2452 = vadd.f32 %v404, %v2451
  %v2453 = vpop.f32.mrb[0].mxu0
  %v2454 = vpop.f32.mrb[0].mxu0
  %v2455 = vadd.f32 %v404, %v2454
  %v2456 = vpop.f32.mrb[0].mxu0
  %2457 = vmatprep.mubr.bf16.mxu0 0
  %2458 = vmatmul.mubr.bf16.gmra.mrb[0].mxu0 %v1425
  %v2459 = vpop.f32.mrb[0].mxu0
  %v2460 = vadd.f32 %v404, %v2459
  %v2461 = vpop.f32.mrb[0].mxu0
  %v2462 = vpop.f32.mrb[0].mxu0
  %v2463 = vadd.f32 %v404, %v2462
  %v2464 = vpop.f32.mrb[0].mxu0
  %2465 = vmatprep.mubr.bf16.mxu0 0
  %2466 = vmatmul.mubr.bf16.gmra.mrb[0].mxu0 %v1428
  %v2467 = vpop.f32.mrb[0].mxu0
  %v2468 = vadd.f32 %v404, %v2467
  %v2469 = vpop.f32.mrb[0].mxu0
  %v2470 = vpop.f32.mrb[0].mxu0
  %v2471 = vadd.f32 %v404, %v2470
  %v2472 = vpop.f32.mrb[0].mxu0
  %2473 = vmatprep.mubr.bf16.mxu0 0
  %2474 = vmatmul.mubr.bf16.gmra.mrb[0].mxu0 %v1431
  %v2475 = vpop.f32.mrb[0].mxu0
  %v2476 = vadd.f32 %v404, %v2475
  %v2477 = vpop.f32.mrb[0].mxu0
  %v2478 = vpop.f32.mrb[0].mxu0
  %v2479 = vadd.f32 %v404, %v2478
  %v2480 = vpop.f32.mrb[0].mxu0
  %2481 = vmatprep.mubr.bf16.mxu0 0
  %2482 = vmatmul.mubr.bf16.gmra.mrb[0].mxu0 %v1434
  %v2483 = vpop.f32.mrb[0].mxu0
  %v2484 = vadd.f32 %v404, %v2483
  %v2485 = vpop.f32.mrb[0].mxu0
  %v2486 = vpop.f32.mrb[0].mxu0
  %v2487 = vadd.f32 %v404, %v2486
  %v2488 = vpop.f32.mrb[0].mxu0
  %2489 = vmatprep.mubr.bf16.mxu0 0
  %2490 = vmatmul.mubr.bf16.gmra.mrb[0].mxu0 %v1437
  %v2491 = vpop.f32.mrb[0].mxu0
  %v2492 = vadd.f32 %v404, %v2491
  %v2493 = vpop.f32.mrb[0].mxu0
  %v2494 = vpop.f32.mrb[0].mxu0
  %v2495 = vadd.f32 %v404, %v2494
  %v2496 = vpop.f32.mrb[0].mxu0
  %2497 = vmatprep.mubr.bf16.mxu0 0
  %2498 = vmatmul.mubr.bf16.gmra.mrb[0].mxu0 %v1440
  %v2499 = vpop.f32.mrb[0].mxu0
  %v2500 = vadd.f32 %v404, %v2499
  %v2501 = vpop.f32.mrb[0].mxu0
  %v2502 = vpop.f32.mrb[0].mxu0
  %v2503 = vadd.f32 %v404, %v2502
  %v2504 = vpop.f32.mrb[0].mxu0
  %2505 = vdwg.mxu0
  %v2506 = vmax.f32 %v1484, 0.0
  %v2507 = vmax.f32 %v1487, 0.0
  %v2508 = vmax.f32 %v1492, 0.0
  %v2509 = vmax.f32 %v1495, 0.0
  %v2510 = vmax.f32 %v1500, 0.0
  %v2511 = vmax.f32 %v1503, 0.0
  %v2512 = vmax.f32 %v1508, 0.0
  %v2513 = vmax.f32 %v1511, 0.0
  %v2514 = vmax.f32 %v1516, 0.0
  %v2515 = vmax.f32 %v1519, 0.0
  %v2516 = vmax.f32 %v1524, 0.0
  %v2517 = vmax.f32 %v1527, 0.0
  %v2518 = vmax.f32 %v1532, 0.0
  %v2519 = vmax.f32 %v1535, 0.0
  %v2520 = vmax.f32 %v1540, 0.0
  %v2521 = vmax.f32 %v1543, 0.0
  %v2522 = vmax.f32 %v1548, 0.0
  %v2523 = vmax.f32 %v1551, 0.0
  %v2524 = vmax.f32 %v1556, 0.0
  %v2525 = vmax.f32 %v1559, 0.0
  %v2526 = vmax.f32 %v1564, 0.0
  %v2527 = vmax.f32 %v1567, 0.0
  %v2528 = vmax.f32 %v1572, 0.0
  %v2529 = vmax.f32 %v1575, 0.0
  %v2530 = vmax.f32 %v1580, 0.0
  %v2531 = vmax.f32 %v1583, 0.0
  %v2532 = vmax.f32 %v1588, 0.0
  %v2533 = vmax.f32 %v1591, 0.0
  %v2534 = vmax.f32 %v1596, 0.0
  %v2535 = vmax.f32 %v1599, 0.0
  %v2536 = vmax.f32 %v1604, 0.0
  %v2537 = vmax.f32 %v1607, 0.0
  %v2538 = vmax.f32 %v1612, 0.0
  %v2539 = vmax.f32 %v1615, 0.0
  %v2540 = vmax.f32 %v1620, 0.0
  %v2541 = vmax.f32 %v1623, 0.0
  %v2542 = vmax.f32 %v1628, 0.0
  %v2543 = vmax.f32 %v1631, 0.0
  %v2544 = vmax.f32 %v1636, 0.0
  %v2545 = vmax.f32 %v1639, 0.0
  %v2546 = vmax.f32 %v1644, 0.0
  %v2547 = vmax.f32 %v1647, 0.0
  %v2548 = vmax.f32 %v1652, 0.0
  %v2549 = vmax.f32 %v1655, 0.0
  %v2550 = vmax.f32 %v1660, 0.0
  %v2551 = vmax.f32 %v1663, 0.0
  %v2552 = vmax.f32 %v1668, 0.0
  %v2553 = vmax.f32 %v1671, 0.0
  %v2554 = vmax.f32 %v1676, 0.0
  %v2555 = vmax.f32 %v1679, 0.0
  %v2556 = vmax.f32 %v1684, 0.0
  %v2557 = vmax.f32 %v1687, 0.0
  %v2558 = vmax.f32 %v1692, 0.0
  %v2559 = vmax.f32 %v1695, 0.0
  %v2560 = vmax.f32 %v1700, 0.0
  %v2561 = vmax.f32 %v1703, 0.0
  %v2562 = vmax.f32 %v1708, 0.0
  %v2563 = vmax.f32 %v1711, 0.0
  %v2564 = vmax.f32 %v1716, 0.0
  %v2565 = vmax.f32 %v1719, 0.0
  %v2566 = vmax.f32 %v1724, 0.0
  %v2567 = vmax.f32 %v1727, 0.0
  %v2568 = vmax.f32 %v1732, 0.0
  %v2569 = vmax.f32 %v1735, 0.0
  %v2570 = vmax.f32 %v1740, 0.0
  %v2571 = vmax.f32 %v1743, 0.0
  %v2572 = vmax.f32 %v1748, 0.0
  %v2573 = vmax.f32 %v1751, 0.0
  %v2574 = vmax.f32 %v1756, 0.0
  %v2575 = vmax.f32 %v1759, 0.0
  %v2576 = vmax.f32 %v1764, 0.0
  %v2577 = vmax.f32 %v1767, 0.0
  %v2578 = vmax.f32 %v1772, 0.0
  %v2579 = vmax.f32 %v1775, 0.0
  %v2580 = vmax.f32 %v1780, 0.0
  %v2581 = vmax.f32 %v1783, 0.0
  %v2582 = vmax.f32 %v1788, 0.0
  %v2583 = vmax.f32 %v1791, 0.0
  %v2584 = vmax.f32 %v1796, 0.0
  %v2585 = vmax.f32 %v1799, 0.0
  %v2586 = vmax.f32 %v1804, 0.0
  %v2587 = vmax.f32 %v1807, 0.0
  %v2588 = vmax.f32 %v1812, 0.0
  %v2589 = vmax.f32 %v1815, 0.0
  %v2590 = vmax.f32 %v1820, 0.0
  %v2591 = vmax.f32 %v1823, 0.0
  %v2592 = vmax.f32 %v1828, 0.0
  %v2593 = vmax.f32 %v1831, 0.0
  %v2594 = vmax.f32 %v1836, 0.0
  %v2595 = vmax.f32 %v1839, 0.0
  %v2596 = vmax.f32 %v1844, 0.0
  %v2597 = vmax.f32 %v1847, 0.0
  %v2598 = vmax.f32 %v1852, 0.0
  %v2599 = vmax.f32 %v1855, 0.0
  %v2600 = vmax.f32 %v1860, 0.0
  %v2601 = vmax.f32 %v1863, 0.0
  %v2602 = vmax.f32 %v1868, 0.0
  %v2603 = vmax.f32 %v1871, 0.0
  %v2604 = vmax.f32 %v1876, 0.0
  %v2605 = vmax.f32 %v1879, 0.0
  %v2606 = vmax.f32 %v1884, 0.0
  %v2607 = vmax.f32 %v1887, 0.0
  %v2608 = vmax.f32 %v1892, 0.0
  %v2609 = vmax.f32 %v1895, 0.0
  %v2610 = vmax.f32 %v1900, 0.0
  %v2611 = vmax.f32 %v1903, 0.0
  %v2612 = vmax.f32 %v1908, 0.0
  %v2613 = vmax.f32 %v1911, 0.0
  %v2614 = vmax.f32 %v1916, 0.0
  %v2615 = vmax.f32 %v1919, 0.0
  %v2616 = vmax.f32 %v1924, 0.0
  %v2617 = vmax.f32 %v1927, 0.0
  %v2618 = vmax.f32 %v1932, 0.0
  %v2619 = vmax.f32 %v1935, 0.0
  %v2620 = vmax.f32 %v1940, 0.0
  %v2621 = vmax.f32 %v1943, 0.0
  %v2622 = vmax.f32 %v1948, 0.0
  %v2623 = vmax.f32 %v1951, 0.0
  %v2624 = vmax.f32 %v1956, 0.0
  %v2625 = vmax.f32 %v1959, 0.0
  %v2626 = vmax.f32 %v1964, 0.0
  %v2627 = vmax.f32 %v1967, 0.0
  %v2628 = vmax.f32 %v1972, 0.0
  %v2629 = vmax.f32 %v1975, 0.0
  %v2630 = vmax.f32 %v1980, 0.0
  %v2631 = vmax.f32 %v1983, 0.0
  %v2632 = vmax.f32 %v1988, 0.0
  %v2633 = vmax.f32 %v1991, 0.0
  %v2634 = vmax.f32 %v1996, 0.0
  %v2635 = vmax.f32 %v1999, 0.0
  %v2636 = vmax.f32 %v2004, 0.0
  %v2637 = vmax.f32 %v2007, 0.0
  %v2638 = vmax.f32 %v2012, 0.0
  %v2639 = vmax.f32 %v2015, 0.0
  %v2640 = vmax.f32 %v2020, 0.0
  %v2641 = vmax.f32 %v2023, 0.0
  %v2642 = vmax.f32 %v2028, 0.0
  %v2643 = vmax.f32 %v2031, 0.0
  %v2644 = vmax.f32 %v2036, 0.0
  %v2645 = vmax.f32 %v2039, 0.0
  %v2646 = vmax.f32 %v2044, 0.0
  %v2647 = vmax.f32 %v2047, 0.0
  %v2648 = vmax.f32 %v2052, 0.0
  %v2649 = vmax.f32 %v2055, 0.0
  %v2650 = vmax.f32 %v2060, 0.0
  %v2651 = vmax.f32 %v2063, 0.0
  %v2652 = vmax.f32 %v2068, 0.0
  %v2653 = vmax.f32 %v2071, 0.0
  %v2654 = vmax.f32 %v2076, 0.0
  %v2655 = vmax.f32 %v2079, 0.0
  %v2656 = vmax.f32 %v2084, 0.0
  %v2657 = vmax.f32 %v2087, 0.0
  %v2658 = vmax.f32 %v2092, 0.0
  %v2659 = vmax.f32 %v2095, 0.0
  %v2660 = vmax.f32 %v2100, 0.0
  %v2661 = vmax.f32 %v2103, 0.0
  %v2662 = vmax.f32 %v2108, 0.0
  %v2663 = vmax.f32 %v2111, 0.0
  %v2664 = vmax.f32 %v2116, 0.0
  %v2665 = vmax.f32 %v2119, 0.0
  %v2666 = vmax.f32 %v2124, 0.0
  %v2667 = vmax.f32 %v2127, 0.0
  %v2668 = vmax.f32 %v2132, 0.0
  %v2669 = vmax.f32 %v2135, 0.0
  %v2670 = vmax.f32 %v2140, 0.0
  %v2671 = vmax.f32 %v2143, 0.0
  %v2672 = vmax.f32 %v2148, 0.0
  %v2673 = vmax.f32 %v2151, 0.0
  %v2674 = vmax.f32 %v2156, 0.0
  %v2675 = vmax.f32 %v2159, 0.0
  %v2676 = vmax.f32 %v2164, 0.0
  %v2677 = vmax.f32 %v2167, 0.0
  %v2678 = vmax.f32 %v2172, 0.0
  %v2679 = vmax.f32 %v2175, 0.0
  %v2680 = vmax.f32 %v2180, 0.0
  %v2681 = vmax.f32 %v2183, 0.0
  %v2682 = vmax.f32 %v2188, 0.0
  %v2683 = vmax.f32 %v2191, 0.0
  %v2684 = vmax.f32 %v2196, 0.0
  %v2685 = vmax.f32 %v2199, 0.0
  %v2686 = vmax.f32 %v2204, 0.0
  %v2687 = vmax.f32 %v2207, 0.0
  %v2688 = vmax.f32 %v2212, 0.0
  %v2689 = vmax.f32 %v2215, 0.0
  %v2690 = vmax.f32 %v2220, 0.0
  %v2691 = vmax.f32 %v2223, 0.0
  %v2692 = vmax.f32 %v2228, 0.0
  %v2693 = vmax.f32 %v2231, 0.0
  %v2694 = vmax.f32 %v2236, 0.0
  %v2695 = vmax.f32 %v2239, 0.0
  %v2696 = vmax.f32 %v2244, 0.0
  %v2697 = vmax.f32 %v2247, 0.0
  %v2698 = vmax.f32 %v2252, 0.0
  %v2699 = vmax.f32 %v2255, 0.0
  %v2700 = vmax.f32 %v2260, 0.0
  %v2701 = vmax.f32 %v2263, 0.0
  %v2702 = vmax.f32 %v2268, 0.0
  %v2703 = vmax.f32 %v2271, 0.0
  %v2704 = vmax.f32 %v2276, 0.0
  %v2705 = vmax.f32 %v2279, 0.0
  %v2706 = vmax.f32 %v2284, 0.0
  %v2707 = vmax.f32 %v2287, 0.0
  %v2708 = vmax.f32 %v2292, 0.0
  %v2709 = vmax.f32 %v2295, 0.0
  %v2710 = vmax.f32 %v2300, 0.0
  %v2711 = vmax.f32 %v2303, 0.0
  %v2712 = vmax.f32 %v2308, 0.0
  %v2713 = vmax.f32 %v2311, 0.0
  %v2714 = vmax.f32 %v2316, 0.0
  %v2715 = vmax.f32 %v2319, 0.0
  %v2716 = vmax.f32 %v2324, 0.0
  %v2717 = vmax.f32 %v2327, 0.0
  %v2718 = vmax.f32 %v2332, 0.0
  %v2719 = vmax.f32 %v2335, 0.0
  %v2720 = vmax.f32 %v2340, 0.0
  %v2721 = vmax.f32 %v2343, 0.0
  %v2722 = vmax.f32 %v2348, 0.0
  %v2723 = vmax.f32 %v2351, 0.0
  %v2724 = vmax.f32 %v2356, 0.0
  %v2725 = vmax.f32 %v2359, 0.0
  %v2726 = vmax.f32 %v2364, 0.0
  %v2727 = vmax.f32 %v2367, 0.0
  %v2728 = vmax.f32 %v2372, 0.0
  %v2729 = vmax.f32 %v2375, 0.0
  %v2730 = vmax.f32 %v2380, 0.0
  %v2731 = vmax.f32 %v2383, 0.0
  %v2732 = vmax.f32 %v2388, 0.0
  %v2733 = vmax.f32 %v2391, 0.0
  %v2734 = vmax.f32 %v2396, 0.0
  %v2735 = vmax.f32 %v2399, 0.0
  %v2736 = vmax.f32 %v2404, 0.0
  %v2737 = vmax.f32 %v2407, 0.0
  %v2738 = vmax.f32 %v2412, 0.0
  %v2739 = vmax.f32 %v2415, 0.0
  %v2740 = vmax.f32 %v2420, 0.0
  %v2741 = vmax.f32 %v2423, 0.0
  %v2742 = vmax.f32 %v2428, 0.0
  %v2743 = vmax.f32 %v2431, 0.0
  %v2744 = vmax.f32 %v2436, 0.0
  %v2745 = vmax.f32 %v2439, 0.0
  %v2746 = vmax.f32 %v2444, 0.0
  %v2747 = vmax.f32 %v2447, 0.0
  %v2748 = vmax.f32 %v2452, 0.0
  %v2749 = vmax.f32 %v2455, 0.0
  %v2750 = vmax.f32 %v2460, 0.0
  %v2751 = vmax.f32 %v2463, 0.0
  %v2752 = vmax.f32 %v2468, 0.0
  %v2753 = vmax.f32 %v2471, 0.0
  %v2754 = vmax.f32 %v2476, 0.0
  %v2755 = vmax.f32 %v2479, 0.0
  %v2756 = vmax.f32 %v2484, 0.0
  %v2757 = vmax.f32 %v2487, 0.0
  %v2758 = vmax.f32 %v2492, 0.0
  %v2759 = vmax.f32 %v2495, 0.0
  %v2760 = vmax.f32 %v2500, 0.0
  %v2761 = vmax.f32 %v2503, 0.0
  %v2762 = vld [vmem:[%s3] sm:$0xff]
  %v2763 = vld [vmem:[%s3 + $0x8] sm:$0xff]
  %v2764 = vld [vmem:[%s3 + $0x10] sm:$0xff]
  %v2765 = vld [vmem:[%s3 + $0x18] sm:$0xff]
  %v2766 = vld [vmem:[%s3 + $0x20] sm:$0xff]
  %v2767 = vld [vmem:[%s3 + $0x28] sm:$0xff]
  %v2768 = vld [vmem:[%s3 + $0x30] sm:$0xff]
  %v2769 = vld [vmem:[%s3 + $0x38] sm:$0xff]
  %v2770 = vld [vmem:[%s3 + $0x40] sm:$0xff]
  %v2771 = vld [vmem:[%s3 + $0x48] sm:$0xff]
  %v2772 = vld [vmem:[%s3 + $0x50] sm:$0xff]
  %v2773 = vld [vmem:[%s3 + $0x58] sm:$0xff]
  %v2774 = vld [vmem:[%s3 + $0x60] sm:$0xff]
  %v2775 = vld [vmem:[%s3 + $0x68] sm:$0xff]
  %v2776 = vld [vmem:[%s3 + $0x70] sm:$0xff]
  %v2777 = vld [vmem:[%s3 + $0x78] sm:$0xff]
  %v2778 = vld [vmem:[%s3 + $0x80] sm:$0xff]
  %v2779 = vld [vmem:[%s3 + $0x88] sm:$0xff]
  %v2780 = vld [vmem:[%s3 + $0x90] sm:$0xff]
  %v2781 = vld [vmem:[%s3 + $0x98] sm:$0xff]
  %v2782 = vld [vmem:[%s3 + $0xa0] sm:$0xff]
  %v2783 = vld [vmem:[%s3 + $0xa8] sm:$0xff]
  %v2784 = vld [vmem:[%s3 + $0xb0] sm:$0xff]
  %v2785 = vld [vmem:[%s3 + $0xb8] sm:$0xff]
  %v2786 = vld [vmem:[%s3 + $0xc0] sm:$0xff]
  %v2787 = vld [vmem:[%s3 + $0xc8] sm:$0xff]
  %v2788 = vld [vmem:[%s3 + $0xd0] sm:$0xff]
  %v2789 = vld [vmem:[%s3 + $0xd8] sm:$0xff]
  %v2790 = vld [vmem:[%s3 + $0xe0] sm:$0xff]
  %v2791 = vld [vmem:[%s3 + $0xe8] sm:$0xff]
  %v2792 = vld [vmem:[%s3 + $0xf0] sm:$0xff]
  %v2793 = vld [vmem:[%s3 + $0xf8] sm:$0xff]
  %v2794 = vpack.c.bf16 %v2507, %v2506
  %v2795 = vpack.c.bf16 %v2509, %v2508
  %v2796 = vpack.c.bf16 %v2511, %v2510
  %v2797 = vpack.c.bf16 %v2513, %v2512
  %v2798 = vpack.c.bf16 %v2515, %v2514
  %v2799 = vpack.c.bf16 %v2517, %v2516
  %v2800 = vpack.c.bf16 %v2519, %v2518
  %v2801 = vpack.c.bf16 %v2521, %v2520
  %v2802 = vpack.c.bf16 %v2523, %v2522
  %v2803 = vpack.c.bf16 %v2525, %v2524
  %v2804 = vpack.c.bf16 %v2527, %v2526
  %v2805 = vpack.c.bf16 %v2529, %v2528
  %v2806 = vpack.c.bf16 %v2531, %v2530
  %v2807 = vpack.c.bf16 %v2533, %v2532
  %v2808 = vpack.c.bf16 %v2535, %v2534
  %v2809 = vpack.c.bf16 %v2537, %v2536
  %v2810 = vpack.c.bf16 %v2539, %v2538
  %v2811 = vpack.c.bf16 %v2541, %v2540
  %v2812 = vpack.c.bf16 %v2543, %v2542
  %v2813 = vpack.c.bf16 %v2545, %v2544
  %v2814 = vpack.c.bf16 %v2547, %v2546
  %v2815 = vpack.c.bf16 %v2549, %v2548
  %v2816 = vpack.c.bf16 %v2551, %v2550
  %v2817 = vpack.c.bf16 %v2553, %v2552
  %v2818 = vpack.c.bf16 %v2555, %v2554
  %v2819 = vpack.c.bf16 %v2557, %v2556
  %v2820 = vpack.c.bf16 %v2559, %v2558
  %v2821 = vpack.c.bf16 %v2561, %v2560
  %v2822 = vpack.c.bf16 %v2563, %v2562
  %v2823 = vpack.c.bf16 %v2565, %v2564
  %v2824 = vpack.c.bf16 %v2567, %v2566
  %v2825 = vpack.c.bf16 %v2569, %v2568
  %v2826 = vpack.c.bf16 %v2571, %v2570
  %v2827 = vpack.c.bf16 %v2573, %v2572
  %v2828 = vpack.c.bf16 %v2575, %v2574
  %v2829 = vpack.c.bf16 %v2577, %v2576
  %v2830 = vpack.c.bf16 %v2579, %v2578
  %v2831 = vpack.c.bf16 %v2581, %v2580
  %v2832 = vpack.c.bf16 %v2583, %v2582
  %v2833 = vpack.c.bf16 %v2585, %v2584
  %v2834 = vpack.c.bf16 %v2587, %v2586
  %v2835 = vpack.c.bf16 %v2589, %v2588
  %v2836 = vpack.c.bf16 %v2591, %v2590
  %v2837 = vpack.c.bf16 %v2593, %v2592
  %v2838 = vpack.c.bf16 %v2595, %v2594
  %v2839 = vpack.c.bf16 %v2597, %v2596
  %v2840 = vpack.c.bf16 %v2599, %v2598
  %v2841 = vpack.c.bf16 %v2601, %v2600
  %v2842 = vpack.c.bf16 %v2603, %v2602
  %v2843 = vpack.c.bf16 %v2605, %v2604
  %v2844 = vpack.c.bf16 %v2607, %v2606
  %v2845 = vpack.c.bf16 %v2609, %v2608
  %v2846 = vpack.c.bf16 %v2611, %v2610
  %v2847 = vpack.c.bf16 %v2613, %v2612
  %v2848 = vpack.c.bf16 %v2615, %v2614
  %v2849 = vpack.c.bf16 %v2617, %v2616
  %v2850 = vpack.c.bf16 %v2619, %v2618
  %v2851 = vpack.c.bf16 %v2621, %v2620
  %v2852 = vpack.c.bf16 %v2623, %v2622
  %v2853 = vpack.c.bf16 %v2625, %v2624
  %v2854 = vpack.c.bf16 %v2627, %v2626
  %v2855 = vpack.c.bf16 %v2629, %v2628
  %v2856 = vpack.c.bf16 %v2631, %v2630
  %v2857 = vpack.c.bf16 %v2633, %v2632
  %v2858 = vpack.c.bf16 %v2635, %v2634
  %v2859 = vpack.c.bf16 %v2637, %v2636
  %v2860 = vpack.c.bf16 %v2639, %v2638
  %v2861 = vpack.c.bf16 %v2641, %v2640
  %v2862 = vpack.c.bf16 %v2643, %v2642
  %v2863 = vpack.c.bf16 %v2645, %v2644
  %v2864 = vpack.c.bf16 %v2647, %v2646
  %v2865 = vpack.c.bf16 %v2649, %v2648
  %v2866 = vpack.c.bf16 %v2651, %v2650
  %v2867 = vpack.c.bf16 %v2653, %v2652
  %v2868 = vpack.c.bf16 %v2655, %v2654
  %v2869 = vpack.c.bf16 %v2657, %v2656
  %v2870 = vpack.c.bf16 %v2659, %v2658
  %v2871 = vpack.c.bf16 %v2661, %v2660
  %v2872 = vpack.c.bf16 %v2663, %v2662
  %v2873 = vpack.c.bf16 %v2665, %v2664
  %v2874 = vpack.c.bf16 %v2667, %v2666
  %v2875 = vpack.c.bf16 %v2669, %v2668
  %v2876 = vpack.c.bf16 %v2671, %v2670
  %v2877 = vpack.c.bf16 %v2673, %v2672
  %v2878 = vpack.c.bf16 %v2675, %v2674
  %v2879 = vpack.c.bf16 %v2677, %v2676
  %v2880 = vpack.c.bf16 %v2679, %v2678
  %v2881 = vpack.c.bf16 %v2681, %v2680
  %v2882 = vpack.c.bf16 %v2683, %v2682
  %v2883 = vpack.c.bf16 %v2685, %v2684
  %v2884 = vpack.c.bf16 %v2687, %v2686
  %v2885 = vpack.c.bf16 %v2689, %v2688
  %v2886 = vpack.c.bf16 %v2691, %v2690
  %v2887 = vpack.c.bf16 %v2693, %v2692
  %v2888 = vpack.c.bf16 %v2695, %v2694
  %v2889 = vpack.c.bf16 %v2697, %v2696
  %v2890 = vpack.c.bf16 %v2699, %v2698
  %v2891 = vpack.c.bf16 %v2701, %v2700
  %v2892 = vpack.c.bf16 %v2703, %v2702
  %v2893 = vpack.c.bf16 %v2705, %v2704
  %v2894 = vpack.c.bf16 %v2707, %v2706
  %v2895 = vpack.c.bf16 %v2709, %v2708
  %v2896 = vpack.c.bf16 %v2711, %v2710
  %v2897 = vpack.c.bf16 %v2713, %v2712
  %v2898 = vpack.c.bf16 %v2715, %v2714
  %v2899 = vpack.c.bf16 %v2717, %v2716
  %v2900 = vpack.c.bf16 %v2719, %v2718
  %v2901 = vpack.c.bf16 %v2721, %v2720
  %v2902 = vpack.c.bf16 %v2723, %v2722
  %v2903 = vpack.c.bf16 %v2725, %v2724
  %v2904 = vpack.c.bf16 %v2727, %v2726
  %v2905 = vpack.c.bf16 %v2729, %v2728
  %v2906 = vpack.c.bf16 %v2731, %v2730
  %v2907 = vpack.c.bf16 %v2733, %v2732
  %v2908 = vpack.c.bf16 %v2735, %v2734
  %v2909 = vpack.c.bf16 %v2737, %v2736
  %v2910 = vpack.c.bf16 %v2739, %v2738
  %v2911 = vpack.c.bf16 %v2741, %v2740
  %v2912 = vpack.c.bf16 %v2743, %v2742
  %v2913 = vpack.c.bf16 %v2745, %v2744
  %v2914 = vpack.c.bf16 %v2747, %v2746
  %v2915 = vpack.c.bf16 %v2749, %v2748
  %v2916 = vpack.c.bf16 %v2751, %v2750
  %v2917 = vpack.c.bf16 %v2753, %v2752
  %v2918 = vpack.c.bf16 %v2755, %v2754
  %v2919 = vpack.c.bf16 %v2757, %v2756
  %v2920 = vpack.c.bf16 %v2759, %v2758
  %v2921 = vpack.c.bf16 %v2761, %v2760
  %v2954 = vunpack.c.l.b16 %v2762
  %v2955 = vunpack.c.h.b16 %v2762
  %v2956 = vunpack.c.l.b16 %v2763
  %v2957 = vunpack.c.h.b16 %v2763
  %v2958 = vunpack.c.l.b16 %v2764
  %v2959 = vunpack.c.h.b16 %v2764
  %v2960 = vunpack.c.l.b16 %v2765
  %v2961 = vunpack.c.h.b16 %v2765
  %v2962 = vunpack.c.l.b16 %v2766
  %v2963 = vunpack.c.h.b16 %v2766
  %v2964 = vunpack.c.l.b16 %v2767
  %v2965 = vunpack.c.h.b16 %v2767
  %v2966 = vunpack.c.l.b16 %v2768
  %v2967 = vunpack.c.h.b16 %v2768
  %v2968 = vunpack.c.l.b16 %v2769
  %v2969 = vunpack.c.h.b16 %v2769
  %v2970 = vunpack.c.l.b16 %v2770
  %v2971 = vunpack.c.h.b16 %v2770
  %v2972 = vunpack.c.l.b16 %v2771
  %v2973 = vunpack.c.h.b16 %v2771
  %v2974 = vunpack.c.l.b16 %v2772
  %v2975 = vunpack.c.h.b16 %v2772
  %v2976 = vunpack.c.l.b16 %v2773
  %v2977 = vunpack.c.h.b16 %v2773
  %v2978 = vunpack.c.l.b16 %v2774
  %v2979 = vunpack.c.h.b16 %v2774
  %v2980 = vunpack.c.l.b16 %v2775
  %v2981 = vunpack.c.h.b16 %v2775
  %v2982 = vunpack.c.l.b16 %v2776
  %v2983 = vunpack.c.h.b16 %v2776
  %v2984 = vunpack.c.l.b16 %v2777
  %v2985 = vunpack.c.h.b16 %v2777
  %v2986 = vunpack.c.l.b16 %v2778
  %v2987 = vunpack.c.h.b16 %v2778
  %v2988 = vunpack.c.l.b16 %v2779
  %v2989 = vunpack.c.h.b16 %v2779
  %v2990 = vunpack.c.l.b16 %v2780
  %v2991 = vunpack.c.h.b16 %v2780
  %v2992 = vunpack.c.l.b16 %v2781
  %v2993 = vunpack.c.h.b16 %v2781
  %v2994 = vunpack.c.l.b16 %v2782
  %v2995 = vunpack.c.h.b16 %v2782
  %v2996 = vunpack.c.l.b16 %v2783
  %v2997 = vunpack.c.h.b16 %v2783
  %v2998 = vunpack.c.l.b16 %v2784
  %v2999 = vunpack.c.h.b16 %v2784
  %v3000 = vunpack.c.l.b16 %v2785
  %v3001 = vunpack.c.h.b16 %v2785
  %v3002 = vunpack.c.l.b16 %v2786
  %v3003 = vunpack.c.h.b16 %v2786
  %v3004 = vunpack.c.l.b16 %v2787
  %v3005 = vunpack.c.h.b16 %v2787
  %v3006 = vunpack.c.l.b16 %v2788
  %v3007 = vunpack.c.h.b16 %v2788
  %v3008 = vunpack.c.l.b16 %v2789
  %v3009 = vunpack.c.h.b16 %v2789
  %v3010 = vunpack.c.l.b16 %v2790
  %v3011 = vunpack.c.h.b16 %v2790
  %v3012 = vunpack.c.l.b16 %v2791
  %v3013 = vunpack.c.h.b16 %v2791
  %v3014 = vunpack.c.l.b16 %v2792
  %v3015 = vunpack.c.h.b16 %v2792
  %v3016 = vunpack.c.l.b16 %v2793
  %v3017 = vunpack.c.h.b16 %v2793
  %v3018 = vpack.c.b16 %v2970, %v2954
  %v3019 = vpack.c.b16 %v2971, %v2955
  %v3020 = vpack.c.b16 %v2972, %v2956
  %v3021 = vpack.c.b16 %v2973, %v2957
  %v3022 = vpack.c.b16 %v2974, %v2958
  %v3023 = vpack.c.b16 %v2975, %v2959
  %v3024 = vpack.c.b16 %v2976, %v2960
  %v3025 = vpack.c.b16 %v2977, %v2961
  %v3026 = vpack.c.b16 %v2978, %v2962
  %v3027 = vpack.c.b16 %v2979, %v2963
  %v3028 = vpack.c.b16 %v2980, %v2964
  %v3029 = vpack.c.b16 %v2981, %v2965
  %v3030 = vpack.c.b16 %v2982, %v2966
  %v3031 = vpack.c.b16 %v2983, %v2967
  %v3032 = vpack.c.b16 %v2984, %v2968
  %v3033 = vpack.c.b16 %v2985, %v2969
  %v3034 = vpack.c.b16 %v3002, %v2986
  %v3035 = vpack.c.b16 %v3003, %v2987
  %v3036 = vpack.c.b16 %v3004, %v2988
  %v3037 = vpack.c.b16 %v3005, %v2989
  %v3038 = vpack.c.b16 %v3006, %v2990
  %v3039 = vpack.c.b16 %v3007, %v2991
  %v3040 = vpack.c.b16 %v3008, %v2992
  %v3041 = vpack.c.b16 %v3009, %v2993
  %v3042 = vpack.c.b16 %v3010, %v2994
  %v3043 = vpack.c.b16 %v3011, %v2995
  %v3044 = vpack.c.b16 %v3012, %v2996
  %v3045 = vpack.c.b16 %v3013, %v2997
  %v3046 = vpack.c.b16 %v3014, %v2998
  %v3047 = vpack.c.b16 %v3015, %v2999
  %v3048 = vpack.c.b16 %v3016, %v3000
  %v3049 = vpack.c.b16 %v3017, %v3001
  %3082 = vmatprep.subr.bf16.mxu0 0
  %3083 = vmatpush1.bf16.msra.mxu0 %v2794
  %3084 = vmatprep.subr.bf16.mxu0 0
  %3085 = vmatpush1.bf16.msra.mxu0 %v2795
  %3086 = vmatprep.subr.bf16.mxu0 0
  %3087 = vmatpush1.bf16.msra.mxu0 %v2796
  %3088 = vmatprep.subr.bf16.mxu0 0
  %3089 = vmatpush1.bf16.msra.mxu0 %v2797
  %3090 = vmatprep.subr.bf16.mxu0 0
  %3091 = vmatpush1.bf16.msra.mxu0 %v2798
  %3092 = vmatprep.subr.bf16.mxu0 0
  %3093 = vmatpush1.bf16.msra.mxu0 %v2799
  %3094 = vmatprep.subr.bf16.mxu0 0
  %3095 = vmatpush1.bf16.msra.mxu0 %v2800
  %3096 = vmatprep.subr.bf16.mxu0 0
  %3097 = vmatpush1.bf16.msra.mxu0 %v2801
  %3098 = vmatprep.subr.bf16.mxu0 0
  %3099 = vmatpush1.bf16.msra.mxu0 %v2802
  %3100 = vmatprep.subr.bf16.mxu0 0
  %3101 = vmatpush1.bf16.msra.mxu0 %v2803
  %3102 = vmatprep.subr.bf16.mxu0 0
  %3103 = vmatpush1.bf16.msra.mxu0 %v2804
  %3104 = vmatprep.subr.bf16.mxu0 0
  %3105 = vmatpush1.bf16.msra.mxu0 %v2805
  %3106 = vmatprep.subr.bf16.mxu0 0
  %3107 = vmatpush1.bf16.msra.mxu0 %v2806
  %3108 = vmatprep.subr.bf16.mxu0 0
  %3109 = vmatpush1.bf16.msra.mxu0 %v2807
  %3110 = vmatprep.subr.bf16.mxu0 0
  %3111 = vmatpush1.bf16.msra.mxu0 %v2808
  %3112 = vmatprep.subr.bf16.mxu0 0
  %3113 = vmatpush1.bf16.msra.mxu0 %v2809
  %3114 = vmatprep.mubr.bf16.mxu0 %v3019
  %3115 = vmatmul.mubr.bf16.gmra.mrb[0].mxu0 %v3018
  %v3116 = vpop.f32.mrb[0].mxu0
  %v3117 = vadd.f32 0.0, %v3116
  %v3118 = vpop.f32.mrb[0].mxu0
  %v3119 = vpop.f32.mrb[0].mxu0
  %v3120 = vadd.f32 0.0, %v3119
  %v3121 = vpop.f32.mrb[0].mxu0
  %3122 = vmatprep.mubr.bf16.mxu0 %v3035
  %3123 = vmatmul.mubr.bf16.gmra.mrb[0].mxu0 %v3034
  %v3124 = vpop.f32.mrb[0].mxu0
  %v3125 = vadd.f32 0.0, %v3124
  %v3126 = vpop.f32.mrb[0].mxu0
  %v3127 = vpop.f32.mrb[0].mxu0
  %v3128 = vadd.f32 0.0, %v3127
  %v3129 = vpop.f32.mrb[0].mxu0
  %3130 = vdwg.mxu0
  %3131 = vmatprep.subr.bf16.mxu0 0
  %3132 = vmatpush1.bf16.msra.mxu0 %v2810
  %3133 = vmatprep.subr.bf16.mxu0 0
  %3134 = vmatpush1.bf16.msra.mxu0 %v2811
  %3135 = vmatprep.subr.bf16.mxu0 0
  %3136 = vmatpush1.bf16.msra.mxu0 %v2812
  %3137 = vmatprep.subr.bf16.mxu0 0
  %3138 = vmatpush1.bf16.msra.mxu0 %v2813
  %3139 = vmatprep.subr.bf16.mxu0 0
  %3140 = vmatpush1.bf16.msra.mxu0 %v2814
  %3141 = vmatprep.subr.bf16.mxu0 0
  %3142 = vmatpush1.bf16.msra.mxu0 %v2815
  %3143 = vmatprep.subr.bf16.mxu0 0
  %3144 = vmatpush1.bf16.msra.mxu0 %v2816
  %3145 = vmatprep.subr.bf16.mxu0 0
  %3146 = vmatpush1.bf16.msra.mxu0 %v2817
  %3147 = vmatprep.subr.bf16.mxu0 0
  %3148 = vmatpush1.bf16.msra.mxu0 %v2818
  %3149 = vmatprep.subr.bf16.mxu0 0
  %3150 = vmatpush1.bf16.msra.mxu0 %v2819
  %3151 = vmatprep.subr.bf16.mxu0 0
  %3152 = vmatpush1.bf16.msra.mxu0 %v2820
  %3153 = vmatprep.subr.bf16.mxu0 0
  %3154 = vmatpush1.bf16.msra.mxu0 %v2821
  %3155 = vmatprep.subr.bf16.mxu0 0
  %3156 = vmatpush1.bf16.msra.mxu0 %v2822
  %3157 = vmatprep.subr.bf16.mxu0 0
  %3158 = vmatpush1.bf16.msra.mxu0 %v2823
  %3159 = vmatprep.subr.bf16.mxu0 0
  %3160 = vmatpush1.bf16.msra.mxu0 %v2824
  %3161 = vmatprep.subr.bf16.mxu0 0
  %3162 = vmatpush1.bf16.msra.mxu0 %v2825
  %3163 = vmatprep.mubr.bf16.mxu0 %v3021
  %3164 = vmatmul.mubr.bf16.gmra.mrb[0].mxu0 %v3020
  %v3165 = vpop.f32.mrb[0].mxu0
  %v3166 = vadd.f32 %v3117, %v3165
  %v3167 = vpop.f32.mrb[0].mxu0
  %v3168 = vpop.f32.mrb[0].mxu0
  %v3169 = vadd.f32 %v3120, %v3168
  %v3170 = vpop.f32.mrb[0].mxu0
  %3171 = vmatprep.mubr.bf16.mxu0 %v3037
  %3172 = vmatmul.mubr.bf16.gmra.mrb[0].mxu0 %v3036
  %v3173 = vpop.f32.mrb[0].mxu0
  %v3174 = vadd.f32 %v3125, %v3173
  %v3175 = vpop.f32.mrb[0].mxu0
  %v3176 = vpop.f32.mrb[0].mxu0
  %v3177 = vadd.f32 %v3128, %v3176
  %v3178 = vpop.f32.mrb[0].mxu0
  %3179 = vdwg.mxu0
  %3180 = vmatprep.subr.bf16.mxu0 0
  %3181 = vmatpush1.bf16.msra.mxu0 %v2826
  %3182 = vmatprep.subr.bf16.mxu0 0
  %3183 = vmatpush1.bf16.msra.mxu0 %v2827
  %3184 = vmatprep.subr.bf16.mxu0 0
  %3185 = vmatpush1.bf16.msra.mxu0 %v2828
  %3186 = vmatprep.subr.bf16.mxu0 0
  %3187 = vmatpush1.bf16.msra.mxu0 %v2829
  %3188 = vmatprep.subr.bf16.mxu0 0
  %3189 = vmatpush1.bf16.msra.mxu0 %v2830
  %3190 = vmatprep.subr.bf16.mxu0 0
  %3191 = vmatpush1.bf16.msra.mxu0 %v2831
  %3192 = vmatprep.subr.bf16.mxu0 0
  %3193 = vmatpush1.bf16.msra.mxu0 %v2832
  %3194 = vmatprep.subr.bf16.mxu0 0
  %3195 = vmatpush1.bf16.msra.mxu0 %v2833
  %3196 = vmatprep.subr.bf16.mxu0 0
  %3197 = vmatpush1.bf16.msra.mxu0 %v2834
  %3198 = vmatprep.subr.bf16.mxu0 0
  %3199 = vmatpush1.bf16.msra.mxu0 %v2835
  %3200 = vmatprep.subr.bf16.mxu0 0
  %3201 = vmatpush1.bf16.msra.mxu0 %v2836
  %3202 = vmatprep.subr.bf16.mxu0 0
  %3203 = vmatpush1.bf16.msra.mxu0 %v2837
  %3204 = vmatprep.subr.bf16.mxu0 0
  %3205 = vmatpush1.bf16.msra.mxu0 %v2838
  %3206 = vmatprep.subr.bf16.mxu0 0
  %3207 = vmatpush1.bf16.msra.mxu0 %v2839
  %3208 = vmatprep.subr.bf16.mxu0 0
  %3209 = vmatpush1.bf16.msra.mxu0 %v2840
  %3210 = vmatprep.subr.bf16.mxu0 0
  %3211 = vmatpush1.bf16.msra.mxu0 %v2841
  %3212 = vmatprep.mubr.bf16.mxu0 %v3023
  %3213 = vmatmul.mubr.bf16.gmra.mrb[0].mxu0 %v3022
  %v3214 = vpop.f32.mrb[0].mxu0
  %v3215 = vadd.f32 %v3166, %v3214
  %v3216 = vpop.f32.mrb[0].mxu0
  %v3217 = vpop.f32.mrb[0].mxu0
  %v3218 = vadd.f32 %v3169, %v3217
  %v3219 = vpop.f32.mrb[0].mxu0
  %3220 = vmatprep.mubr.bf16.mxu0 %v3039
  %3221 = vmatmul.mubr.bf16.gmra.mrb[0].mxu0 %v3038
  %v3222 = vpop.f32.mrb[0].mxu0
  %v3223 = vadd.f32 %v3174, %v3222
  %v3224 = vpop.f32.mrb[0].mxu0
  %v3225 = vpop.f32.mrb[0].mxu0
  %v3226 = vadd.f32 %v3177, %v3225
  %v3227 = vpop.f32.mrb[0].mxu0
  %3228 = vdwg.mxu0
  %3229 = vmatprep.subr.bf16.mxu0 0
  %3230 = vmatpush1.bf16.msra.mxu0 %v2842
  %3231 = vmatprep.subr.bf16.mxu0 0
  %3232 = vmatpush1.bf16.msra.mxu0 %v2843
  %3233 = vmatprep.subr.bf16.mxu0 0
  %3234 = vmatpush1.bf16.msra.mxu0 %v2844
  %3235 = vmatprep.subr.bf16.mxu0 0
  %3236 = vmatpush1.bf16.msra.mxu0 %v2845
  %3237 = vmatprep.subr.bf16.mxu0 0
  %3238 = vmatpush1.bf16.msra.mxu0 %v2846
  %3239 = vmatprep.subr.bf16.mxu0 0
  %3240 = vmatpush1.bf16.msra.mxu0 %v2847
  %3241 = vmatprep.subr.bf16.mxu0 0
  %3242 = vmatpush1.bf16.msra.mxu0 %v2848
  %3243 = vmatprep.subr.bf16.mxu0 0
  %3244 = vmatpush1.bf16.msra.mxu0 %v2849
  %3245 = vmatprep.subr.bf16.mxu0 0
  %3246 = vmatpush1.bf16.msra.mxu0 %v2850
  %3247 = vmatprep.subr.bf16.mxu0 0
  %3248 = vmatpush1.bf16.msra.mxu0 %v2851
  %3249 = vmatprep.subr.bf16.mxu0 0
  %3250 = vmatpush1.bf16.msra.mxu0 %v2852
  %3251 = vmatprep.subr.bf16.mxu0 0
  %3252 = vmatpush1.bf16.msra.mxu0 %v2853
  %3253 = vmatprep.subr.bf16.mxu0 0
  %3254 = vmatpush1.bf16.msra.mxu0 %v2854
  %3255 = vmatprep.subr.bf16.mxu0 0
  %3256 = vmatpush1.bf16.msra.mxu0 %v2855
  %3257 = vmatprep.subr.bf16.mxu0 0
  %3258 = vmatpush1.bf16.msra.mxu0 %v2856
  %3259 = vmatprep.subr.bf16.mxu0 0
  %3260 = vmatpush1.bf16.msra.mxu0 %v2857
  %3261 = vmatprep.mubr.bf16.mxu0 %v3025
  %3262 = vmatmul.mubr.bf16.gmra.mrb[0].mxu0 %v3024
  %v3263 = vpop.f32.mrb[0].mxu0
  %v3264 = vadd.f32 %v3215, %v3263
  %v3265 = vpop.f32.mrb[0].mxu0
  %v3266 = vpop.f32.mrb[0].mxu0
  %v3267 = vadd.f32 %v3218, %v3266
  %v3268 = vpop.f32.mrb[0].mxu0
  %3269 = vmatprep.mubr.bf16.mxu0 %v3041
  %3270 = vmatmul.mubr.bf16.gmra.mrb[0].mxu0 %v3040
  %v3271 = vpop.f32.mrb[0].mxu0
  %v3272 = vadd.f32 %v3223, %v3271
  %v3273 = vpop.f32.mrb[0].mxu0
  %v3274 = vpop.f32.mrb[0].mxu0
  %v3275 = vadd.f32 %v3226, %v3274
  %v3276 = vpop.f32.mrb[0].mxu0
  %3277 = vdwg.mxu0
  %3278 = vmatprep.subr.bf16.mxu0 0
  %3279 = vmatpush1.bf16.msra.mxu0 %v2858
  %3280 = vmatprep.subr.bf16.mxu0 0
  %3281 = vmatpush1.bf16.msra.mxu0 %v2859
  %3282 = vmatprep.subr.bf16.mxu0 0
  %3283 = vmatpush1.bf16.msra.mxu0 %v2860
  %3284 = vmatprep.subr.bf16.mxu0 0
  %3285 = vmatpush1.bf16.msra.mxu0 %v2861
  %3286 = vmatprep.subr.bf16.mxu0 0
  %3287 = vmatpush1.bf16.msra.mxu0 %v2862
  %3288 = vmatprep.subr.bf16.mxu0 0
  %3289 = vmatpush1.bf16.msra.mxu0 %v2863
  %3290 = vmatprep.subr.bf16.mxu0 0
  %3291 = vmatpush1.bf16.msra.mxu0 %v2864
  %3292 = vmatprep.subr.bf16.mxu0 0
  %3293 = vmatpush1.bf16.msra.mxu0 %v2865
  %3294 = vmatprep.subr.bf16.mxu0 0
  %3295 = vmatpush1.bf16.msra.mxu0 %v2866
  %3296 = vmatprep.subr.bf16.mxu0 0
  %3297 = vmatpush1.bf16.msra.mxu0 %v2867
  %3298 = vmatprep.subr.bf16.mxu0 0
  %3299 = vmatpush1.bf16.msra.mxu0 %v2868
  %3300 = vmatprep.subr.bf16.mxu0 0
  %3301 = vmatpush1.bf16.msra.mxu0 %v2869
  %3302 = vmatprep.subr.bf16.mxu0 0
  %3303 = vmatpush1.bf16.msra.mxu0 %v2870
  %3304 = vmatprep.subr.bf16.mxu0 0
  %3305 = vmatpush1.bf16.msra.mxu0 %v2871
  %3306 = vmatprep.subr.bf16.mxu0 0
  %3307 = vmatpush1.bf16.msra.mxu0 %v2872
  %3308 = vmatprep.subr.bf16.mxu0 0
  %3309 = vmatpush1.bf16.msra.mxu0 %v2873
  %3310 = vmatprep.mubr.bf16.mxu0 %v3027
  %3311 = vmatmul.mubr.bf16.gmra.mrb[0].mxu0 %v3026
  %v3312 = vpop.f32.mrb[0].mxu0
  %v3313 = vadd.f32 %v3264, %v3312
  %v3314 = vpop.f32.mrb[0].mxu0
  %v3315 = vpop.f32.mrb[0].mxu0
  %v3316 = vadd.f32 %v3267, %v3315
  %v3317 = vpop.f32.mrb[0].mxu0
  %3318 = vmatprep.mubr.bf16.mxu0 %v3043
  %3319 = vmatmul.mubr.bf16.gmra.mrb[0].mxu0 %v3042
  %v3320 = vpop.f32.mrb[0].mxu0
  %v3321 = vadd.f32 %v3272, %v3320
  %v3322 = vpop.f32.mrb[0].mxu0
  %v3323 = vpop.f32.mrb[0].mxu0
  %v3324 = vadd.f32 %v3275, %v3323
  %v3325 = vpop.f32.mrb[0].mxu0
  %3326 = vdwg.mxu0
  %3327 = vmatprep.subr.bf16.mxu0 0
  %3328 = vmatpush1.bf16.msra.mxu0 %v2874
  %3329 = vmatprep.subr.bf16.mxu0 0
  %3330 = vmatpush1.bf16.msra.mxu0 %v2875
  %3331 = vmatprep.subr.bf16.mxu0 0
  %3332 = vmatpush1.bf16.msra.mxu0 %v2876
  %3333 = vmatprep.subr.bf16.mxu0 0
  %3334 = vmatpush1.bf16.msra.mxu0 %v2877
  %3335 = vmatprep.subr.bf16.mxu0 0
  %3336 = vmatpush1.bf16.msra.mxu0 %v2878
  %3337 = vmatprep.subr.bf16.mxu0 0
  %3338 = vmatpush1.bf16.msra.mxu0 %v2879
  %3339 = vmatprep.subr.bf16.mxu0 0
  %3340 = vmatpush1.bf16.msra.mxu0 %v2880
  %3341 = vmatprep.subr.bf16.mxu0 0
  %3342 = vmatpush1.bf16.msra.mxu0 %v2881
  %3343 = vmatprep.subr.bf16.mxu0 0
  %3344 = vmatpush1.bf16.msra.mxu0 %v2882
  %3345 = vmatprep.subr.bf16.mxu0 0
  %3346 = vmatpush1.bf16.msra.mxu0 %v2883
  %3347 = vmatprep.subr.bf16.mxu0 0
  %3348 = vmatpush1.bf16.msra.mxu0 %v2884
  %3349 = vmatprep.subr.bf16.mxu0 0
  %3350 = vmatpush1.bf16.msra.mxu0 %v2885
  %3351 = vmatprep.subr.bf16.mxu0 0
  %3352 = vmatpush1.bf16.msra.mxu0 %v2886
  %3353 = vmatprep.subr.bf16.mxu0 0
  %3354 = vmatpush1.bf16.msra.mxu0 %v2887
  %3355 = vmatprep.subr.bf16.mxu0 0
  %3356 = vmatpush1.bf16.msra.mxu0 %v2888
  %3357 = vmatprep.subr.bf16.mxu0 0
  %3358 = vmatpush1.bf16.msra.mxu0 %v2889
  %3359 = vmatprep.mubr.bf16.mxu0 %v3029
  %3360 = vmatmul.mubr.bf16.gmra.mrb[0].mxu0 %v3028
  %v3361 = vpop.f32.mrb[0].mxu0
  %v3362 = vadd.f32 %v3313, %v3361
  %v3363 = vpop.f32.mrb[0].mxu0
  %v3364 = vpop.f32.mrb[0].mxu0
  %v3365 = vadd.f32 %v3316, %v3364
  %v3366 = vpop.f32.mrb[0].mxu0
  %3367 = vmatprep.mubr.bf16.mxu0 %v3045
  %3368 = vmatmul.mubr.bf16.gmra.mrb[0].mxu0 %v3044
  %v3369 = vpop.f32.mrb[0].mxu0
  %v3370 = vadd.f32 %v3321, %v3369
  %v3371 = vpop.f32.mrb[0].mxu0
  %v3372 = vpop.f32.mrb[0].mxu0
  %v3373 = vadd.f32 %v3324, %v3372
  %v3374 = vpop.f32.mrb[0].mxu0
  %3375 = vdwg.mxu0
  %3376 = vmatprep.subr.bf16.mxu0 0
  %3377 = vmatpush1.bf16.msra.mxu0 %v2890
  %3378 = vmatprep.subr.bf16.mxu0 0
  %3379 = vmatpush1.bf16.msra.mxu0 %v2891
  %3380 = vmatprep.subr.bf16.mxu0 0
  %3381 = vmatpush1.bf16.msra.mxu0 %v2892
  %3382 = vmatprep.subr.bf16.mxu0 0
  %3383 = vmatpush1.bf16.msra.mxu0 %v2893
  %3384 = vmatprep.subr.bf16.mxu0 0
  %3385 = vmatpush1.bf16.msra.mxu0 %v2894
  %3386 = vmatprep.subr.bf16.mxu0 0
  %3387 = vmatpush1.bf16.msra.mxu0 %v2895
  %3388 = vmatprep.subr.bf16.mxu0 0
  %3389 = vmatpush1.bf16.msra.mxu0 %v2896
  %3390 = vmatprep.subr.bf16.mxu0 0
  %3391 = vmatpush1.bf16.msra.mxu0 %v2897
  %3392 = vmatprep.subr.bf16.mxu0 0
  %3393 = vmatpush1.bf16.msra.mxu0 %v2898
  %3394 = vmatprep.subr.bf16.mxu0 0
  %3395 = vmatpush1.bf16.msra.mxu0 %v2899
  %3396 = vmatprep.subr.bf16.mxu0 0
  %3397 = vmatpush1.bf16.msra.mxu0 %v2900
  %3398 = vmatprep.subr.bf16.mxu0 0
  %3399 = vmatpush1.bf16.msra.mxu0 %v2901
  %3400 = vmatprep.subr.bf16.mxu0 0
  %3401 = vmatpush1.bf16.msra.mxu0 %v2902
  %3402 = vmatprep.subr.bf16.mxu0 0
  %3403 = vmatpush1.bf16.msra.mxu0 %v2903
  %3404 = vmatprep.subr.bf16.mxu0 0
  %3405 = vmatpush1.bf16.msra.mxu0 %v2904
  %3406 = vmatprep.subr.bf16.mxu0 0
  %3407 = vmatpush1.bf16.msra.mxu0 %v2905
  %3408 = vmatprep.mubr.bf16.mxu0 %v3031
  %3409 = vmatmul.mubr.bf16.gmra.mrb[0].mxu0 %v3030
  %v3410 = vpop.f32.mrb[0].mxu0
  %v3411 = vadd.f32 %v3362, %v3410
  %v3412 = vpop.f32.mrb[0].mxu0
  %v3413 = vpop.f32.mrb[0].mxu0
  %v3414 = vadd.f32 %v3365, %v3413
  %v3415 = vpop.f32.mrb[0].mxu0
  %3416 = vmatprep.mubr.bf16.mxu0 %v3047
  %3417 = vmatmul.mubr.bf16.gmra.mrb[0].mxu0 %v3046
  %v3418 = vpop.f32.mrb[0].mxu0
  %v3419 = vadd.f32 %v3370, %v3418
  %v3420 = vpop.f32.mrb[0].mxu0
  %v3421 = vpop.f32.mrb[0].mxu0
  %v3422 = vadd.f32 %v3373, %v3421
  %v3423 = vpop.f32.mrb[0].mxu0
  %3424 = vdwg.mxu0
  %3425 = vmatprep.subr.bf16.mxu0 0
  %3426 = vmatpush1.bf16.msra.mxu0 %v2906
  %3427 = vmatprep.subr.bf16.mxu0 0
  %3428 = vmatpush1.bf16.msra.mxu0 %v2907
  %3429 = vmatprep.subr.bf16.mxu0 0
  %3430 = vmatpush1.bf16.msra.mxu0 %v2908
  %3431 = vmatprep.subr.bf16.mxu0 0
  %3432 = vmatpush1.bf16.msra.mxu0 %v2909
  %3433 = vmatprep.subr.bf16.mxu0 0
  %3434 = vmatpush1.bf16.msra.mxu0 %v2910
  %3435 = vmatprep.subr.bf16.mxu0 0
  %3436 = vmatpush1.bf16.msra.mxu0 %v2911
  %3437 = vmatprep.subr.bf16.mxu0 0
  %3438 = vmatpush1.bf16.msra.mxu0 %v2912
  %3439 = vmatprep.subr.bf16.mxu0 0
  %3440 = vmatpush1.bf16.msra.mxu0 %v2913
  %3441 = vmatprep.subr.bf16.mxu0 0
  %3442 = vmatpush1.bf16.msra.mxu0 %v2914
  %3443 = vmatprep.subr.bf16.mxu0 0
  %3444 = vmatpush1.bf16.msra.mxu0 %v2915
  %3445 = vmatprep.subr.bf16.mxu0 0
  %3446 = vmatpush1.bf16.msra.mxu0 %v2916
  %3447 = vmatprep.subr.bf16.mxu0 0
  %3448 = vmatpush1.bf16.msra.mxu0 %v2917
  %3449 = vmatprep.subr.bf16.mxu0 0
  %3450 = vmatpush1.bf16.msra.mxu0 %v2918
  %3451 = vmatprep.subr.bf16.mxu0 0
  %3452 = vmatpush1.bf16.msra.mxu0 %v2919
  %3453 = vmatprep.subr.bf16.mxu0 0
  %3454 = vmatpush1.bf16.msra.mxu0 %v2920
  %3455 = vmatprep.subr.bf16.mxu0 0
  %3456 = vmatpush1.bf16.msra.mxu0 %v2921
  %3457 = vmatprep.mubr.bf16.mxu0 %v3033
  %3458 = vmatmul.mubr.bf16.gmra.mrb[0].mxu0 %v3032
  %v3459 = vpop.f32.mrb[0].mxu0
  %v3460 = vadd.f32 %v3411, %v3459
  %v3461 = vpop.f32.mrb[0].mxu0
  %v3462 = vpop.f32.mrb[0].mxu0
  %v3463 = vadd.f32 %v3414, %v3462
  %v3464 = vpop.f32.mrb[0].mxu0
  %3465 = vmatprep.mubr.bf16.mxu0 %v3049
  %3466 = vmatmul.mubr.bf16.gmra.mrb[0].mxu0 %v3048
  %v3467 = vpop.f32.mrb[0].mxu0
  %v3468 = vadd.f32 %v3419, %v3467
  %v3469 = vpop.f32.mrb[0].mxu0
  %v3470 = vpop.f32.mrb[0].mxu0
  %v3471 = vadd.f32 %v3422, %v3470
  %v3472 = vpop.f32.mrb[0].mxu0
  %3473 = vdwg.mxu0
  %v3474 = vpack.c.bf16 %v3463, %v3460
  %v3475 = vpack.c.bf16 %v3471, %v3468
  %v3476 = vld [vmem:[%s9] sm:$0xf]
  %v3477 = vld [vmem:[%s11] sm:$0x1]
  %v3479 = vlaneseq
  %v3480 = vshrl.u32 %v3479, 7
  %v3481 = vsub.s32 0, %v3480
  %v3482 = vrot.slane %v3477, %v3481
  %vm3484 = vcmask 64512
  %v3486 = vsel %vm3484, %v3474, 0
  %v3489 = vsel %vm3484, %v3475, 0
  %vm3491 = vcmask 1043456
  %v3493 = vsel %vm3491, %v3476, 0
  %3495 = vmatprep.subr.bf16.mxu0 0
  %3496 = vmatpush1.bf16.msra.mxu0 %v3493
  %3497 = vmatprep.subr.bf16.mxu0 0
  %3498 = vmatpush1.bf16.msra.mxu0 0
  %3499 = vmatprep.subr.bf16.mxu0 0
  %3500 = vmatpush1.bf16.msra.mxu0 0
  %3501 = vmatprep.subr.bf16.mxu0 0
  %3502 = vmatpush1.bf16.msra.mxu0 0
  %3503 = vmatprep.subr.bf16.mxu0 0
  %3504 = vmatpush1.bf16.msra.mxu0 0
  %3505 = vmatprep.subr.bf16.mxu0 0
  %3506 = vmatpush1.bf16.msra.mxu0 0
  %3507 = vmatprep.subr.bf16.mxu0 0
  %3508 = vmatpush1.bf16.msra.mxu0 0
  %3509 = vmatprep.subr.bf16.mxu0 0
  %3510 = vmatpush1.bf16.msra.mxu0 0
  %3511 = vmatprep.subr.bf16.mxu0 0
  %3512 = vmatpush1.bf16.msra.mxu0 0
  %3513 = vmatprep.subr.bf16.mxu0 0
  %3514 = vmatpush1.bf16.msra.mxu0 0
  %3515 = vmatprep.subr.bf16.mxu0 0
  %3516 = vmatpush1.bf16.msra.mxu0 0
  %3517 = vmatprep.subr.bf16.mxu0 0
  %3518 = vmatpush1.bf16.msra.mxu0 0
  %3519 = vmatprep.subr.bf16.mxu0 0
  %3520 = vmatpush1.bf16.msra.mxu0 0
  %3521 = vmatprep.subr.bf16.mxu0 0
  %3522 = vmatpush1.bf16.msra.mxu0 0
  %3523 = vmatprep.subr.bf16.mxu0 0
  %3524 = vmatpush1.bf16.msra.mxu0 0
  %3525 = vmatprep.subr.bf16.mxu0 0
  %3526 = vmatpush1.bf16.msra.mxu0 0
  %3527 = vmatprep.mubr.bf16.mxu0 0
  %3528 = vmatmul.mubr.bf16.gmra.mrb[0].mxu0 %v3486
  %v3529 = vpop.f32.mrb[0].mxu0
  %v3530 = vadd.f32 %v3482, %v3529
  %v3531 = vpop.f32.mrb[0].mxu0
  %v3532 = vpop.f32.mrb[0].mxu0
  %v3533 = vadd.f32 %v3482, %v3532
  %v3534 = vpop.f32.mrb[0].mxu0
  %3535 = vmatprep.mubr.bf16.mxu0 0
  %3536 = vmatmul.mubr.bf16.gmra.mrb[0].mxu0 %v3489
  %v3537 = vpop.f32.mrb[0].mxu0
  %v3538 = vadd.f32 %v3482, %v3537
  %v3539 = vpop.f32.mrb[0].mxu0
  %v3540 = vpop.f32.mrb[0].mxu0
  %v3541 = vadd.f32 %v3482, %v3540
  %v3542 = vpop.f32.mrb[0].mxu0
  %3543 = vdwg.mxu0
  %v3544 = vpack.c.bf16 %v3533, %v3530
  %v3545 = vpack.c.bf16 %v3541, %v3538
  %v3546 = vld [vmem:[%s13] sm:$0xff]
  %v3547 = vld [vmem:[%s13 + $0x8] sm:$0xff]
  %v3548 = vld [vmem:[%s13 + $0x10] sm:$0xff]
  %v3549 = vld [vmem:[%s13 + $0x18] sm:$0xff]
  %v3550 = vld [vmem:[%s13 + $0x20] sm:$0xff]
  %v3551 = vld [vmem:[%s13 + $0x28] sm:$0xff]
  %v3552 = vld [vmem:[%s13 + $0x30] sm:$0xff]
  %v3553 = vld [vmem:[%s13 + $0x38] sm:$0xff]
  %v3554 = vld [vmem:[%s15] sm:$0x3]
  %v3556 = vlaneseq
  %v3557 = vshrl.u32 %v3556, 7
  %v3558 = vsub.s32 0, %v3557
  %v3559 = vrot.slane %v3554, %v3558
  %v3560 = vlaneseq
  %v3561 = vshrl.u32 %v3560, 7
  %v3562 = vsub.s32 1, %v3561
  %v3563 = vrot.slane %v3554, %v3562
  %v3574 = vunpack.c.l.b16 %v3546
  %v3575 = vunpack.c.h.b16 %v3546
  %v3576 = vunpack.c.l.b16 %v3547
  %v3577 = vunpack.c.h.b16 %v3547
  %v3578 = vunpack.c.l.b16 %v3548
  %v3579 = vunpack.c.h.b16 %v3548
  %v3580 = vunpack.c.l.b16 %v3549
  %v3581 = vunpack.c.h.b16 %v3549
  %v3582 = vunpack.c.l.b16 %v3550
  %v3583 = vunpack.c.h.b16 %v3550
  %v3584 = vunpack.c.l.b16 %v3551
  %v3585 = vunpack.c.h.b16 %v3551
  %v3586 = vunpack.c.l.b16 %v3552
  %v3587 = vunpack.c.h.b16 %v3552
  %v3588 = vunpack.c.l.b16 %v3553
  %v3589 = vunpack.c.h.b16 %v3553
  %v3590 = vpack.c.b16 %v3576, %v3574
  %v3591 = vpack.c.b16 %v3577, %v3575
  %v3592 = vpack.c.b16 %v3580, %v3578
  %v3593 = vpack.c.b16 %v3581, %v3579
  %v3594 = vpack.c.b16 %v3584, %v3582
  %v3595 = vpack.c.b16 %v3585, %v3583
  %v3596 = vpack.c.b16 %v3588, %v3586
  %v3597 = vpack.c.b16 %v3589, %v3587
  %vm3606 = vcmask 523264
  %v3608 = vsel %vm3606, %v3544, 0
  %v3611 = vsel %vm3606, %v3545, 0
  %3613 = vmatprep.subr.bf16.mxu0 %v3591
  %3614 = vmatpush1.bf16.msra.mxu0 %v3590
  %3615 = vmatprep.subr.bf16.mxu0 %v3593
  %3616 = vmatpush1.bf16.msra.mxu0 %v3592
  %3617 = vmatprep.subr.bf16.mxu0 %v3595
  %3618 = vmatpush1.bf16.msra.mxu0 %v3594
  %3619 = vmatprep.subr.bf16.mxu0 %v3597
  %3620 = vmatpush1.bf16.msra.mxu0 %v3596
  %3621 = vmatprep.subr.bf16.mxu0 0
  %3622 = vmatpush1.bf16.msra.mxu0 0
  %3623 = vmatprep.subr.bf16.mxu0 0
  %3624 = vmatpush1.bf16.msra.mxu0 0
  %3625 = vmatprep.subr.bf16.mxu0 0
  %3626 = vmatpush1.bf16.msra.mxu0 0
  %3627 = vmatprep.subr.bf16.mxu0 0
  %3628 = vmatpush1.bf16.msra.mxu0 0
  %3629 = vmatprep.subr.bf16.mxu0 0
  %3630 = vmatpush1.bf16.msra.mxu0 0
  %3631 = vmatprep.subr.bf16.mxu0 0
  %3632 = vmatpush1.bf16.msra.mxu0 0
  %3633 = vmatprep.subr.bf16.mxu0 0
  %3634 = vmatpush1.bf16.msra.mxu0 0
  %3635 = vmatprep.subr.bf16.mxu0 0
  %3636 = vmatpush1.bf16.msra.mxu0 0
  %3637 = vmatprep.subr.bf16.mxu0 0
  %3638 = vmatpush1.bf16.msra.mxu0 0
  %3639 = vmatprep.subr.bf16.mxu0 0
  %3640 = vmatpush1.bf16.msra.mxu0 0
  %3641 = vmatprep.subr.bf16.mxu0 0
  %3642 = vmatpush1.bf16.msra.mxu0 0
  %3643 = vmatprep.subr.bf16.mxu0 0
  %3644 = vmatpush1.bf16.msra.mxu0 0
  %3645 = vmatprep.mubr.bf16.mxu0 0
  %3646 = vmatmul.mubr.bf16.gmra.mrb[0].mxu0 %v3608
  %v3647 = vpop.f32.mrb[0].mxu0
  %v3648 = vadd.f32 %v3559, %v3647
  %v3649 = vpop.f32.mrb[0].mxu0
  %v3650 = vadd.f32 %v3563, %v3649
  %v3651 = vpop.f32.mrb[0].mxu0
  %v3652 = vadd.f32 %v3559, %v3651
  %v3653 = vpop.f32.mrb[0].mxu0
  %v3654 = vadd.f32 %v3563, %v3653
  %3655 = vmatprep.mubr.bf16.mxu0 0
  %3656 = vmatmul.mubr.bf16.gmra.mrb[0].mxu0 %v3611
  %v3657 = vpop.f32.mrb[0].mxu0
  %v3658 = vadd.f32 %v3559, %v3657
  %v3659 = vpop.f32.mrb[0].mxu0
  %v3660 = vadd.f32 %v3563, %v3659
  %v3661 = vpop.f32.mrb[0].mxu0
  %v3662 = vadd.f32 %v3559, %v3661
  %v3663 = vpop.f32.mrb[0].mxu0
  %v3664 = vadd.f32 %v3563, %v3663
  %3665 = vdwg.mxu0
  %v3666 = vld [vmem:[%s17] sm:$0xff]
  %v3667 = vld [vmem:[%s17 + $0x8] sm:$0xff]
  %v3668 = vld [vmem:[%s17 + $0x10] sm:$0xff]
  %v3669 = vld [vmem:[%s17 + $0x18] sm:$0xff]
  %v3670 = vld [vmem:[%s17 + $0x20] sm:$0xff]
  %v3671 = vld [vmem:[%s17 + $0x28] sm:$0xff]
  %v3672 = vld [vmem:[%s17 + $0x30] sm:$0xff]
  %v3673 = vld [vmem:[%s17 + $0x38] sm:$0xff]
  %v3674 = vld [vmem:[%s19] sm:$0x3]
  %v3676 = vlaneseq
  %v3677 = vshrl.u32 %v3676, 7
  %v3678 = vsub.s32 0, %v3677
  %v3679 = vrot.slane %v3674, %v3678
  %v3680 = vlaneseq
  %v3681 = vshrl.u32 %v3680, 7
  %v3682 = vsub.s32 1, %v3681
  %v3683 = vrot.slane %v3674, %v3682
  %v3694 = vunpack.c.l.b16 %v3666
  %v3695 = vunpack.c.h.b16 %v3666
  %v3696 = vunpack.c.l.b16 %v3667
  %v3697 = vunpack.c.h.b16 %v3667
  %v3698 = vunpack.c.l.b16 %v3668
  %v3699 = vunpack.c.h.b16 %v3668
  %v3700 = vunpack.c.l.b16 %v3669
  %v3701 = vunpack.c.h.b16 %v3669
  %v3702 = vunpack.c.l.b16 %v3670
  %v3703 = vunpack.c.h.b16 %v3670
  %v3704 = vunpack.c.l.b16 %v3671
  %v3705 = vunpack.c.h.b16 %v3671
  %v3706 = vunpack.c.l.b16 %v3672
  %v3707 = vunpack.c.h.b16 %v3672
  %v3708 = vunpack.c.l.b16 %v3673
  %v3709 = vunpack.c.h.b16 %v3673
  %v3710 = vpack.c.b16 %v3696, %v3694
  %v3711 = vpack.c.b16 %v3697, %v3695
  %v3712 = vpack.c.b16 %v3700, %v3698
  %v3713 = vpack.c.b16 %v3701, %v3699
  %v3714 = vpack.c.b16 %v3704, %v3702
  %v3715 = vpack.c.b16 %v3705, %v3703
  %v3716 = vpack.c.b16 %v3708, %v3706
  %v3717 = vpack.c.b16 %v3709, %v3707
  %v3727 = vsel %vm3606, 0, 0
  %3729 = vmatprep.subr.bf16.mxu0 %v3711
  %3730 = vmatpush1.bf16.msra.mxu0 %v3710
  %3731 = vmatprep.subr.bf16.mxu0 %v3713
  %3732 = vmatpush1.bf16.msra.mxu0 %v3712
  %3733 = vmatprep.subr.bf16.mxu0 %v3715
  %3734 = vmatpush1.bf16.msra.mxu0 %v3714
  %3735 = vmatprep.subr.bf16.mxu0 %v3717
  %3736 = vmatpush1.bf16.msra.mxu0 %v3716
  %3737 = vmatprep.subr.bf16.mxu0 0
  %3738 = vmatpush1.bf16.msra.mxu0 0
  %3739 = vmatprep.subr.bf16.mxu0 0
  %3740 = vmatpush1.bf16.msra.mxu0 0
  %3741 = vmatprep.subr.bf16.mxu0 0
  %3742 = vmatpush1.bf16.msra.mxu0 0
  %3743 = vmatprep.subr.bf16.mxu0 0
  %3744 = vmatpush1.bf16.msra.mxu0 0
  %3745 = vmatprep.subr.bf16.mxu0 0
  %3746 = vmatpush1.bf16.msra.mxu0 0
  %3747 = vmatprep.subr.bf16.mxu0 0
  %3748 = vmatpush1.bf16.msra.mxu0 0
  %3749 = vmatprep.subr.bf16.mxu0 0
  %3750 = vmatpush1.bf16.msra.mxu0 0
  %3751 = vmatprep.subr.bf16.mxu0 0
  %3752 = vmatpush1.bf16.msra.mxu0 0
  %3753 = vmatprep.subr.bf16.mxu0 0
  %3754 = vmatpush1.bf16.msra.mxu0 0
  %3755 = vmatprep.subr.bf16.mxu0 0
  %3756 = vmatpush1.bf16.msra.mxu0 0
  %3757 = vmatprep.subr.bf16.mxu0 0
  %3758 = vmatpush1.bf16.msra.mxu0 0
  %3759 = vmatprep.subr.bf16.mxu0 0
  %3760 = vmatpush1.bf16.msra.mxu0 0
  %3761 = vmatprep.mubr.bf16.mxu0 0
  %3762 = vmatmul.mubr.bf16.gmra.mrb[0].mxu0 %v3727
  %v3763 = vpop.f32.mrb[0].mxu0
  %v3764 = vadd.f32 %v3679, %v3763
  %v3765 = vpop.f32.mrb[0].mxu0
  %v3766 = vadd.f32 %v3683, %v3765
  %v3767 = vpop.f32.mrb[0].mxu0
  %v3768 = vpop.f32.mrb[0].mxu0
  %3769 = vdwg.mxu0
  %v3770 = vadd.f32 %v3648, %v3764
  %v3771 = vxor.u32 %v3770, 2147483648
  %v3772 = vmul.f32 %v3771, 1.442695
  %v3773 = vpow.pop %v3772
  %v3774 = vadd.f32 %v3773, 1.0
  %v3775 = vrcp.pop %v3774
  %v3776 = vmul.f32 1.0, %v3775
  %v3777 = vmul.f32 %v3776, %v3766
  %v3778 = vadd.f32 %v3650, %v3777
  %v3779 = vtanh.pop %v3778
  %v3780 = vsub.f32 1.0, %v3776
  %3782 = vrot.lane.b32.xlu0 %v3779, 64
  %v3783 = vpop.permute.xlu0 %3782
  %v3785 = vmul.f32 %v3780, %v3783
  %v3786 = vmul.f32 %v3776, 0.0
  %v3787 = vadd.f32 %v3785, %v3786
  %3789 = vrot.lane.b32.xlu0 %v3530, 64
  %v3790 = vpop.permute.xlu0 %3789
  %v3792 = vadd.f32 %v3787, %v3790
  %3794 = vrot.lane.b32.xlu0 %v3792, 64
  %v3795 = vpop.permute.xlu0 %3794
  %3797 = vst.msk [vmem:[#allocation2] sm:$0xff] %vm3606, %v3795
  %v3798 = vpack.c.bf16 %v3787, %v3787
  %3800 = vrot.lane.b32.xlu0 %v3798, 64
  %v3801 = vpop.permute.xlu0 %3800
  %v3803 = vsel %vm3606, %v3801, 0
  %3805 = vmatprep.subr.bf16.mxu0 %v3711
  %3806 = vmatpush1.bf16.msra.mxu0 %v3710
  %3807 = vmatprep.subr.bf16.mxu0 %v3713
  %3808 = vmatpush1.bf16.msra.mxu0 %v3712
  %3809 = vmatprep.subr.bf16.mxu0 %v3715
  %3810 = vmatpush1.bf16.msra.mxu0 %v3714
  %3811 = vmatprep.subr.bf16.mxu0 %v3717
  %3812 = vmatpush1.bf16.msra.mxu0 %v3716
  %3813 = vmatprep.subr.bf16.mxu0 0
  %3814 = vmatpush1.bf16.msra.mxu0 0
  %3815 = vmatprep.subr.bf16.mxu0 0
  %3816 = vmatpush1.bf16.msra.mxu0 0
  %3817 = vmatprep.subr.bf16.mxu0 0
  %3818 = vmatpush1.bf16.msra.mxu0 0
  %3819 = vmatprep.subr.bf16.mxu0 0
  %3820 = vmatpush1.bf16.msra.mxu0 0
  %3821 = vmatprep.subr.bf16.mxu0 0
  %3822 = vmatpush1.bf16.msra.mxu0 0
  %3823 = vmatprep.subr.bf16.mxu0 0
  %3824 = vmatpush1.bf16.msra.mxu0 0
  %3825 = vmatprep.subr.bf16.mxu0 0
  %3826 = vmatpush1.bf16.msra.mxu0 0
  %3827 = vmatprep.subr.bf16.mxu0 0
  %3828 = vmatpush1.bf16.msra.mxu0 0
  %3829 = vmatprep.subr.bf16.mxu0 0
  %3830 = vmatpush1.bf16.msra.mxu0 0
  %3831 = vmatprep.subr.bf16.mxu0 0
  %3832 = vmatpush1.bf16.msra.mxu0 0
  %3833 = vmatprep.subr.bf16.mxu0 0
  %3834 = vmatpush1.bf16.msra.mxu0 0
  %3835 = vmatprep.subr.bf16.mxu0 0
  %3836 = vmatpush1.bf16.msra.mxu0 0
  %3837 = vmatprep.mubr.bf16.mxu0 0
  %3838 = vmatmul.mubr.bf16.gmra.mrb[0].mxu0 %v3803
  %v3839 = vpop.f32.mrb[0].mxu0
  %v3840 = vadd.f32 %v3679, %v3839
  %v3841 = vpop.f32.mrb[0].mxu0
  %v3842 = vadd.f32 %v3683, %v3841
  %v3843 = vpop.f32.mrb[0].mxu0
  %v3844 = vpop.f32.mrb[0].mxu0
  %3845 = vdwg.mxu0
  %v3846 = vadd.f32 %v3652, %v3840
  %v3847 = vxor.u32 %v3846, 2147483648
  %v3848 = vmul.f32 %v3847, 1.442695
  %v3849 = vpow.pop %v3848
  %v3850 = vadd.f32 %v3849, 1.0
  %v3851 = vrcp.pop %v3850
  %v3852 = vmul.f32 1.0, %v3851
  %v3853 = vmul.f32 %v3852, %v3842
  %v3854 = vadd.f32 %v3654, %v3853
  %v3855 = vtanh.pop %v3854
  %v3856 = vsub.f32 1.0, %v3852
  %3858 = vrot.lane.b32.xlu0 %v3855, 64
  %v3859 = vpop.permute.xlu0 %3858
  %v3861 = vmul.f32 %v3856, %v3859
  %v3862 = vmul.f32 %v3852, %v3787
  %v3863 = vadd.f32 %v3861, %v3862
  %3865 = vrot.lane.b32.xlu0 %v3533, 64
  %v3866 = vpop.permute.xlu0 %3865
  %v3868 = vadd.f32 %v3863, %v3866
  %3870 = vrot.lane.b32.xlu0 %v3868, 64
  %v3871 = vpop.permute.xlu0 %3870
  %3873 = vst.msk [vmem:[#allocation2 + $0x8] sm:$0xff] %vm3606, %v3871
  %v3874 = vpack.c.bf16 %v3863, %v3863
  %3876 = vrot.lane.b32.xlu0 %v3874, 64
  %v3877 = vpop.permute.xlu0 %3876
  %v3879 = vsel %vm3606, %v3877, 0
  %3881 = vmatprep.subr.bf16.mxu0 %v3711
  %3882 = vmatpush1.bf16.msra.mxu0 %v3710
  %3883 = vmatprep.subr.bf16.mxu0 %v3713
  %3884 = vmatpush1.bf16.msra.mxu0 %v3712
  %3885 = vmatprep.subr.bf16.mxu0 %v3715
  %3886 = vmatpush1.bf16.msra.mxu0 %v3714
  %3887 = vmatprep.subr.bf16.mxu0 %v3717
  %3888 = vmatpush1.bf16.msra.mxu0 %v3716
  %3889 = vmatprep.subr.bf16.mxu0 0
  %3890 = vmatpush1.bf16.msra.mxu0 0
  %3891 = vmatprep.subr.bf16.mxu0 0
  %3892 = vmatpush1.bf16.msra.mxu0 0
  %3893 = vmatprep.subr.bf16.mxu0 0
  %3894 = vmatpush1.bf16.msra.mxu0 0
  %3895 = vmatprep.subr.bf16.mxu0 0
  %3896 = vmatpush1.bf16.msra.mxu0 0
  %3897 = vmatprep.subr.bf16.mxu0 0
  %3898 = vmatpush1.bf16.msra.mxu0 0
  %3899 = vmatprep.subr.bf16.mxu0 0
  %3900 = vmatpush1.bf16.msra.mxu0 0
  %3901 = vmatprep.subr.bf16.mxu0 0
  %3902 = vmatpush1.bf16.msra.mxu0 0
  %3903 = vmatprep.subr.bf16.mxu0 0
  %3904 = vmatpush1.bf16.msra.mxu0 0
  %3905 = vmatprep.subr.bf16.mxu0 0
  %3906 = vmatpush1.bf16.msra.mxu0 0
  %3907 = vmatprep.subr.bf16.mxu0 0
  %3908 = vmatpush1.bf16.msra.mxu0 0
  %3909 = vmatprep.subr.bf16.mxu0 0
  %3910 = vmatpush1.bf16.msra.mxu0 0
  %3911 = vmatprep.subr.bf16.mxu0 0
  %3912 = vmatpush1.bf16.msra.mxu0 0
  %3913 = vmatprep.mubr.bf16.mxu0 0
  %3914 = vmatmul.mubr.bf16.gmra.mrb[0].mxu0 %v3879
  %v3915 = vpop.f32.mrb[0].mxu0
  %v3916 = vadd.f32 %v3679, %v3915
  %v3917 = vpop.f32.mrb[0].mxu0
  %v3918 = vadd.f32 %v3683, %v3917
  %v3919 = vpop.f32.mrb[0].mxu0
  %v3920 = vpop.f32.mrb[0].mxu0
  %3921 = vdwg.mxu0
  %v3922 = vadd.f32 %v3658, %v3916
  %v3923 = vxor.u32 %v3922, 2147483648
  %v3924 = vmul.f32 %v3923, 1.442695
  %v3925 = vpow.pop %v3924
  %v3926 = vadd.f32 %v3925, 1.0
  %v3927 = vrcp.pop %v3926
  %v3928 = vmul.f32 1.0, %v3927
  %v3929 = vmul.f32 %v3928, %v3918
  %v3930 = vadd.f32 %v3660, %v3929
  %v3931 = vtanh.pop %v3930
  %v3932 = vsub.f32 1.0, %v3928
  %3934 = vrot.lane.b32.xlu0 %v3931, 64
  %v3935 = vpop.permute.xlu0 %3934
  %v3937 = vmul.f32 %v3932, %v3935
  %v3938 = vmul.f32 %v3928, %v3863
  %v3939 = vadd.f32 %v3937, %v3938
  %3941 = vrot.lane.b32.xlu0 %v3538, 64
  %v3942 = vpop.permute.xlu0 %3941
  %v3944 = vadd.f32 %v3939, %v3942
  %3946 = vrot.lane.b32.xlu0 %v3944, 64
  %v3947 = vpop.permute.xlu0 %3946
  %3949 = vst.msk [vmem:[#allocation2 + $0x10] sm:$0xff] %vm3606, %v3947
  %v3950 = vpack.c.bf16 %v3939, %v3939
  %3952 = vrot.lane.b32.xlu0 %v3950, 64
  %v3953 = vpop.permute.xlu0 %3952
  %v3955 = vsel %vm3606, %v3953, 0
  %3957 = vmatprep.subr.bf16.mxu0 %v3711
  %3958 = vmatpush1.bf16.msra.mxu0 %v3710
  %3959 = vmatprep.subr.bf16.mxu0 %v3713
  %3960 = vmatpush1.bf16.msra.mxu0 %v3712
  %3961 = vmatprep.subr.bf16.mxu0 %v3715
  %3962 = vmatpush1.bf16.msra.mxu0 %v3714
  %3963 = vmatprep.subr.bf16.mxu0 %v3717
  %3964 = vmatpush1.bf16.msra.mxu0 %v3716
  %3965 = vmatprep.subr.bf16.mxu0 0
  %3966 = vmatpush1.bf16.msra.mxu0 0
  %3967 = vmatprep.subr.bf16.mxu0 0
  %3968 = vmatpush1.bf16.msra.mxu0 0
  %3969 = vmatprep.subr.bf16.mxu0 0
  %3970 = vmatpush1.bf16.msra.mxu0 0
  %3971 = vmatprep.subr.bf16.mxu0 0
  %3972 = vmatpush1.bf16.msra.mxu0 0
  %3973 = vmatprep.subr.bf16.mxu0 0
  %3974 = vmatpush1.bf16.msra.mxu0 0
  %3975 = vmatprep.subr.bf16.mxu0 0
  %3976 = vmatpush1.bf16.msra.mxu0 0
  %3977 = vmatprep.subr.bf16.mxu0 0
  %3978 = vmatpush1.bf16.msra.mxu0 0
  %3979 = vmatprep.subr.bf16.mxu0 0
  %3980 = vmatpush1.bf16.msra.mxu0 0
  %3981 = vmatprep.subr.bf16.mxu0 0
  %3982 = vmatpush1.bf16.msra.mxu0 0
  %3983 = vmatprep.subr.bf16.mxu0 0
  %3984 = vmatpush1.bf16.msra.mxu0 0
  %3985 = vmatprep.subr.bf16.mxu0 0
  %3986 = vmatpush1.bf16.msra.mxu0 0
  %3987 = vmatprep.subr.bf16.mxu0 0
  %3988 = vmatpush1.bf16.msra.mxu0 0
  %3989 = vmatprep.mubr.bf16.mxu0 0
  %3990 = vmatmul.mubr.bf16.gmra.mrb[0].mxu0 %v3955
  %v3991 = vpop.f32.mrb[0].mxu0
  %v3992 = vadd.f32 %v3679, %v3991
  %v3993 = vpop.f32.mrb[0].mxu0
  %v3994 = vadd.f32 %v3683, %v3993
  %v3995 = vpop.f32.mrb[0].mxu0
  %v3996 = vpop.f32.mrb[0].mxu0
  %3997 = vdwg.mxu0
  %v3998 = vadd.f32 %v3662, %v3992
  %v3999 = vxor.u32 %v3998, 2147483648
  %v4000 = vmul.f32 %v3999, 1.442695
  %v4001 = vpow.pop %v4000
  %v4002 = vadd.f32 %v4001, 1.0
  %v4003 = vrcp.pop %v4002
  %v4004 = vmul.f32 1.0, %v4003
  %v4005 = vmul.f32 %v4004, %v3994
  %v4006 = vadd.f32 %v3664, %v4005
  %v4007 = vtanh.pop %v4006
  %v4008 = vsub.f32 1.0, %v4004
  %4010 = vrot.lane.b32.xlu0 %v4007, 64
  %v4011 = vpop.permute.xlu0 %4010
  %v4013 = vmul.f32 %v4008, %v4011
  %v4014 = vmul.f32 %v4004, %v3939
  %v4015 = vadd.f32 %v4013, %v4014
  %4017 = vrot.lane.b32.xlu0 %v3541, 64
  %v4018 = vpop.permute.xlu0 %4017
  %v4020 = vadd.f32 %v4015, %v4018
  %4022 = vrot.lane.b32.xlu0 %v4020, 64
  %v4023 = vpop.permute.xlu0 %4022
  %4025 = vst.msk [vmem:[#allocation2 + $0x18] sm:$0xff] %vm3606, %v4023
  %v4026 = vld [vmem:[#allocation2] sm:$0xff]
  %v4027 = vld [vmem:[#allocation2 + $0x8] sm:$0xff]
  %v4028 = vld [vmem:[#allocation2 + $0x10] sm:$0xff]
  %v4029 = vld [vmem:[#allocation2 + $0x18] sm:$0xff]
  %v4030 = vpack.c.bf16 %v4027, %v4026
  %v4031 = vpack.c.bf16 %v4029, %v4028
  %v4032 = vld [vmem:[%s21] sm:$0xf]
  %v4033 = vld [vmem:[%s21 + $0x4] sm:$0xf]
  %v4034 = vld [vmem:[%s21 + $0x8] sm:$0xf]
  %v4035 = vld [vmem:[%s21 + $0xc] sm:$0xf]
  %v4036 = vld [vmem:[%s21 + $0x10] sm:$0xf]
  %v4037 = vld [vmem:[%s21 + $0x14] sm:$0xf]
  %v4038 = vld [vmem:[%s21 + $0x18] sm:$0xf]
  %v4039 = vld [vmem:[%s21 + $0x1c] sm:$0xf]
  %v4040 = vld [vmem:[%s23] sm:$0x1]
  %v4042 = vlaneseq
  %v4043 = vshrl.u32 %v4042, 7
  %v4044 = vsub.s32 0, %v4043
  %v4045 = vrot.slane %v4040, %v4044
  %v4055 = vunpack.c.l.b16 %v4032
  %v4056 = vunpack.c.l.b16 %v4033
  %v4057 = vunpack.c.l.b16 %v4034
  %v4058 = vunpack.c.l.b16 %v4035
  %v4059 = vunpack.c.l.b16 %v4036
  %v4060 = vunpack.c.l.b16 %v4037
  %v4061 = vunpack.c.l.b16 %v4038
  %v4062 = vunpack.c.l.b16 %v4039
  %v4063 = vpack.c.b16 %v4056, %v4055
  %v4064 = vpack.c.b16 %v4058, %v4057
  %v4065 = vpack.c.b16 %v4060, %v4059
  %v4066 = vpack.c.b16 %v4062, %v4061
  %v4072 = vsel %vm3606, %v4030, 0
  %v4075 = vsel %vm3606, %v4031, 0
  %4077 = vmatprep.subr.bf16.mxu0 0
  %4078 = vmatpush1.bf16.msra.mxu0 %v4063
  %4079 = vmatprep.subr.bf16.mxu0 0
  %4080 = vmatpush1.bf16.msra.mxu0 %v4064
  %4081 = vmatprep.subr.bf16.mxu0 0
  %4082 = vmatpush1.bf16.msra.mxu0 %v4065
  %4083 = vmatprep.subr.bf16.mxu0 0
  %4084 = vmatpush1.bf16.msra.mxu0 %v4066
  %4085 = vmatprep.subr.bf16.mxu0 0
  %4086 = vmatpush1.bf16.msra.mxu0 0
  %4087 = vmatprep.subr.bf16.mxu0 0
  %4088 = vmatpush1.bf16.msra.mxu0 0
  %4089 = vmatprep.subr.bf16.mxu0 0
  %4090 = vmatpush1.bf16.msra.mxu0 0
  %4091 = vmatprep.subr.bf16.mxu0 0
  %4092 = vmatpush1.bf16.msra.mxu0 0
  %4093 = vmatprep.subr.bf16.mxu0 0
  %4094 = vmatpush1.bf16.msra.mxu0 0
  %4095 = vmatprep.subr.bf16.mxu0 0
  %4096 = vmatpush1.bf16.msra.mxu0 0
  %4097 = vmatprep.subr.bf16.mxu0 0
  %4098 = vmatpush1.bf16.msra.mxu0 0
  %4099 = vmatprep.subr.bf16.mxu0 0
  %4100 = vmatpush1.bf16.msra.mxu0 0
  %4101 = vmatprep.subr.bf16.mxu0 0
  %4102 = vmatpush1.bf16.msra.mxu0 0
  %4103 = vmatprep.subr.bf16.mxu0 0
  %4104 = vmatpush1.bf16.msra.mxu0 0
  %4105 = vmatprep.subr.bf16.mxu0 0
  %4106 = vmatpush1.bf16.msra.mxu0 0
  %4107 = vmatprep.subr.bf16.mxu0 0
  %4108 = vmatpush1.bf16.msra.mxu0 0
  %4109 = vmatprep.mubr.bf16.mxu0 0
  %4110 = vmatmul.mubr.bf16.gmra.mrb[0].mxu0 %v4072
  %v4111 = vpop.f32.mrb[0].mxu0
  %v4112 = vadd.f32 %v4045, %v4111
  %v4113 = vpop.f32.mrb[0].mxu0
  %v4114 = vpop.f32.mrb[0].mxu0
  %v4115 = vadd.f32 %v4045, %v4114
  %v4116 = vpop.f32.mrb[0].mxu0
  %4117 = vmatprep.mubr.bf16.mxu0 0
  %4118 = vmatmul.mubr.bf16.gmra.mrb[0].mxu0 %v4075
  %v4119 = vpop.f32.mrb[0].mxu0
  %v4120 = vadd.f32 %v4045, %v4119
  %v4121 = vpop.f32.mrb[0].mxu0
  %v4122 = vpop.f32.mrb[0].mxu0
  %v4123 = vadd.f32 %v4045, %v4122
  %v4124 = vpop.f32.mrb[0].mxu0
  %4125 = vdwg.mxu0
  %v4126 = vld [vmem:[%s25] sm:$0xf]
  %v4127 = vld [vmem:[%s25 + $0x4] sm:$0xf]
  %v4128 = vld [vmem:[%s25 + $0x8] sm:$0xf]
  %v4129 = vld [vmem:[%s25 + $0xc] sm:$0xf]
  %v4130 = vld [vmem:[%s27] sm:$0x1]
  %v4132 = vlaneseq
  %v4133 = vshrl.u32 %v4132, 7
  %v4134 = vsub.s32 0, %v4133
  %v4135 = vrot.slane %v4130, %v4134
  %v4141 = vunpack.c.l.b16 %v4126
  %v4142 = vunpack.c.l.b16 %v4127
  %v4143 = vunpack.c.l.b16 %v4128
  %v4144 = vunpack.c.l.b16 %v4129
  %v4145 = vpack.c.b16 %v4142, %v4141
  %v4146 = vpack.c.b16 %v4144, %v4143
  %vm4149 = vcmask 261120
  %v4150 = vsel %vm4149, 0, 0
  %4152 = vmatprep.subr.bf16.mxu0 0
  %4153 = vmatpush1.bf16.msra.mxu0 %v4145
  %4154 = vmatprep.subr.bf16.mxu0 0
  %4155 = vmatpush1.bf16.msra.mxu0 %v4146
  %4156 = vmatprep.subr.bf16.mxu0 0
  %4157 = vmatpush1.bf16.msra.mxu0 0
  %4158 = vmatprep.subr.bf16.mxu0 0
  %4159 = vmatpush1.bf16.msra.mxu0 0
  %4160 = vmatprep.subr.bf16.mxu0 0
  %4161 = vmatpush1.bf16.msra.mxu0 0
  %4162 = vmatprep.subr.bf16.mxu0 0
  %4163 = vmatpush1.bf16.msra.mxu0 0
  %4164 = vmatprep.subr.bf16.mxu0 0
  %4165 = vmatpush1.bf16.msra.mxu0 0
  %4166 = vmatprep.subr.bf16.mxu0 0
  %4167 = vmatpush1.bf16.msra.mxu0 0
  %4168 = vmatprep.subr.bf16.mxu0 0
  %4169 = vmatpush1.bf16.msra.mxu0 0
  %4170 = vmatprep.subr.bf16.mxu0 0
  %4171 = vmatpush1.bf16.msra.mxu0 0
  %4172 = vmatprep.subr.bf16.mxu0 0
  %4173 = vmatpush1.bf16.msra.mxu0 0
  %4174 = vmatprep.subr.bf16.mxu0 0
  %4175 = vmatpush1.bf16.msra.mxu0 0
  %4176 = vmatprep.subr.bf16.mxu0 0
  %4177 = vmatpush1.bf16.msra.mxu0 0
  %4178 = vmatprep.subr.bf16.mxu0 0
  %4179 = vmatpush1.bf16.msra.mxu0 0
  %4180 = vmatprep.subr.bf16.mxu0 0
  %4181 = vmatpush1.bf16.msra.mxu0 0
  %4182 = vmatprep.subr.bf16.mxu0 0
  %4183 = vmatpush1.bf16.msra.mxu0 0
  %4184 = vmatprep.mubr.bf16.mxu0 0
  %4185 = vmatmul.mubr.bf16.gmra.mrb[0].mxu0 %v4150
  %v4186 = vpop.f32.mrb[0].mxu0
  %v4187 = vadd.f32 %v4135, %v4186
  %v4188 = vpop.f32.mrb[0].mxu0
  %v4189 = vpop.f32.mrb[0].mxu0
  %v4190 = vpop.f32.mrb[0].mxu0
  %4191 = vdwg.mxu0
  %v4192 = vadd.f32 %v4112, %v4187
  %v4193 = vxor.u32 %v4192, 2147483648
  %v4194 = vmul.f32 %v4193, 1.442695
  %v4195 = vpow.pop %v4194
  %v4196 = vadd.f32 %v4195, 1.0
  %v4197 = vrcp.pop %v4196
  %v4198 = vmul.f32 1.0, %v4197
  %4200 = vrot.lane.b32.xlu0 %v4187, 64
  %v4201 = vpop.permute.xlu0 %4200
  %v4203 = vmul.f32 %v4198, %v4201
  %4205 = vrot.lane.b32.xlu0 %v4203, 64
  %v4206 = vpop.permute.xlu0 %4205
  %v4208 = vadd.f32 %v4112, %v4206
  %v4209 = vtanh.pop %v4208
  %v4210 = vsub.f32 1.0, %v4198
  %4212 = vrot.lane.b32.xlu0 %v4209, 96
  %v4213 = vpop.permute.xlu0 %4212
  %v4215 = vmul.f32 %v4210, %v4213
  %v4216 = vmul.f32 %v4198, 0.0
  %v4217 = vadd.f32 %v4215, %v4216
  %v4218 = vtanh.pop %v4217
  %v4219 = vadd.f32 %v4218, 0.0
  %v4220 = vpack.c.bf16 %v4217, %v4217
  %4222 = vrot.lane.b32.xlu0 %v4220, 96
  %v4223 = vpop.permute.xlu0 %4222
  %v4225 = vsel %vm4149, %v4223, 0
  %4227 = vmatprep.subr.bf16.mxu0 0
  %4228 = vmatpush1.bf16.msra.mxu0 %v4145
  %4229 = vmatprep.subr.bf16.mxu0 0
  %4230 = vmatpush1.bf16.msra.mxu0 %v4146
  %4231 = vmatprep.subr.bf16.mxu0 0
  %4232 = vmatpush1.bf16.msra.mxu0 0
  %4233 = vmatprep.subr.bf16.mxu0 0
  %4234 = vmatpush1.bf16.msra.mxu0 0
  %4235 = vmatprep.subr.bf16.mxu0 0
  %4236 = vmatpush1.bf16.msra.mxu0 0
  %4237 = vmatprep.subr.bf16.mxu0 0
  %4238 = vmatpush1.bf16.msra.mxu0 0
  %4239 = vmatprep.subr.bf16.mxu0 0
  %4240 = vmatpush1.bf16.msra.mxu0 0
  %4241 = vmatprep.subr.bf16.mxu0 0
  %4242 = vmatpush1.bf16.msra.mxu0 0
  %4243 = vmatprep.subr.bf16.mxu0 0
  %4244 = vmatpush1.bf16.msra.mxu0 0
  %4245 = vmatprep.subr.bf16.mxu0 0
  %4246 = vmatpush1.bf16.msra.mxu0 0
  %4247 = vmatprep.subr.bf16.mxu0 0
  %4248 = vmatpush1.bf16.msra.mxu0 0
  %4249 = vmatprep.subr.bf16.mxu0 0
  %4250 = vmatpush1.bf16.msra.mxu0 0
  %4251 = vmatprep.subr.bf16.mxu0 0
  %4252 = vmatpush1.bf16.msra.mxu0 0
  %4253 = vmatprep.subr.bf16.mxu0 0
  %4254 = vmatpush1.bf16.msra.mxu0 0
  %4255 = vmatprep.subr.bf16.mxu0 0
  %4256 = vmatpush1.bf16.msra.mxu0 0
  %4257 = vmatprep.subr.bf16.mxu0 0
  %4258 = vmatpush1.bf16.msra.mxu0 0
  %4259 = vmatprep.mubr.bf16.mxu0 0
  %4260 = vmatmul.mubr.bf16.gmra.mrb[0].mxu0 %v4225
  %v4261 = vpop.f32.mrb[0].mxu0
  %v4262 = vadd.f32 %v4135, %v4261
  %v4263 = vpop.f32.mrb[0].mxu0
  %v4264 = vpop.f32.mrb[0].mxu0
  %v4265 = vpop.f32.mrb[0].mxu0
  %4266 = vdwg.mxu0
  %v4267 = vadd.f32 %v4115, %v4262
  %v4268 = vxor.u32 %v4267, 2147483648
  %v4269 = vmul.f32 %v4268, 1.442695
  %v4270 = vpow.pop %v4269
  %v4271 = vadd.f32 %v4270, 1.0
  %v4272 = vrcp.pop %v4271
  %v4273 = vmul.f32 1.0, %v4272
  %4275 = vrot.lane.b32.xlu0 %v4262, 64
  %v4276 = vpop.permute.xlu0 %4275
  %v4278 = vmul.f32 %v4273, %v4276
  %4280 = vrot.lane.b32.xlu0 %v4278, 64
  %v4281 = vpop.permute.xlu0 %4280
  %v4283 = vadd.f32 %v4115, %v4281
  %v4284 = vtanh.pop %v4283
  %v4285 = vsub.f32 1.0, %v4273
  %4287 = vrot.lane.b32.xlu0 %v4284, 96
  %v4288 = vpop.permute.xlu0 %4287
  %v4290 = vmul.f32 %v4285, %v4288
  %v4291 = vmul.f32 %v4273, %v4217
  %v4292 = vadd.f32 %v4290, %v4291
  %v4293 = vtanh.pop %v4292
  %v4294 = vadd.f32 %v4219, %v4293
  %v4295 = vpack.c.bf16 %v4292, %v4292
  %4297 = vrot.lane.b32.xlu0 %v4295, 96
  %v4298 = vpop.permute.xlu0 %4297
  %v4300 = vsel %vm4149, %v4298, 0
  %4302 = vmatprep.subr.bf16.mxu0 0
  %4303 = vmatpush1.bf16.msra.mxu0 %v4145
  %4304 = vmatprep.subr.bf16.mxu0 0
  %4305 = vmatpush1.bf16.msra.mxu0 %v4146
  %4306 = vmatprep.subr.bf16.mxu0 0
  %4307 = vmatpush1.bf16.msra.mxu0 0
  %4308 = vmatprep.subr.bf16.mxu0 0
  %4309 = vmatpush1.bf16.msra.mxu0 0
  %4310 = vmatprep.subr.bf16.mxu0 0
  %4311 = vmatpush1.bf16.msra.mxu0 0
  %4312 = vmatprep.subr.bf16.mxu0 0
  %4313 = vmatpush1.bf16.msra.mxu0 0
  %4314 = vmatprep.subr.bf16.mxu0 0
  %4315 = vmatpush1.bf16.msra.mxu0 0
  %4316 = vmatprep.subr.bf16.mxu0 0
  %4317 = vmatpush1.bf16.msra.mxu0 0
  %4318 = vmatprep.subr.bf16.mxu0 0
  %4319 = vmatpush1.bf16.msra.mxu0 0
  %4320 = vmatprep.subr.bf16.mxu0 0
  %4321 = vmatpush1.bf16.msra.mxu0 0
  %4322 = vmatprep.subr.bf16.mxu0 0
  %4323 = vmatpush1.bf16.msra.mxu0 0
  %4324 = vmatprep.subr.bf16.mxu0 0
  %4325 = vmatpush1.bf16.msra.mxu0 0
  %4326 = vmatprep.subr.bf16.mxu0 0
  %4327 = vmatpush1.bf16.msra.mxu0 0
  %4328 = vmatprep.subr.bf16.mxu0 0
  %4329 = vmatpush1.bf16.msra.mxu0 0
  %4330 = vmatprep.subr.bf16.mxu0 0
  %4331 = vmatpush1.bf16.msra.mxu0 0
  %4332 = vmatprep.subr.bf16.mxu0 0
  %4333 = vmatpush1.bf16.msra.mxu0 0
  %4334 = vmatprep.mubr.bf16.mxu0 0
  %4335 = vmatmul.mubr.bf16.gmra.mrb[0].mxu0 %v4300
  %v4336 = vpop.f32.mrb[0].mxu0
  %v4337 = vadd.f32 %v4135, %v4336
  %v4338 = vpop.f32.mrb[0].mxu0
  %v4339 = vpop.f32.mrb[0].mxu0
  %v4340 = vpop.f32.mrb[0].mxu0
  %4341 = vdwg.mxu0
  %v4342 = vadd.f32 %v4120, %v4337
  %v4343 = vxor.u32 %v4342, 2147483648
  %v4344 = vmul.f32 %v4343, 1.442695
  %v4345 = vpow.pop %v4344
  %v4346 = vadd.f32 %v4345, 1.0
  %v4347 = vrcp.pop %v4346
  %v4348 = vmul.f32 1.0, %v4347
  %4350 = vrot.lane.b32.xlu0 %v4337, 64
  %v4351 = vpop.permute.xlu0 %4350
  %v4353 = vmul.f32 %v4348, %v4351
  %4355 = vrot.lane.b32.xlu0 %v4353, 64
  %v4356 = vpop.permute.xlu0 %4355
  %v4358 = vadd.f32 %v4120, %v4356
  %v4359 = vtanh.pop %v4358
  %v4360 = vsub.f32 1.0, %v4348
  %4362 = vrot.lane.b32.xlu0 %v4359, 96
  %v4363 = vpop.permute.xlu0 %4362
  %v4365 = vmul.f32 %v4360, %v4363
  %v4366 = vmul.f32 %v4348, %v4292
  %v4367 = vadd.f32 %v4365, %v4366
  %v4368 = vtanh.pop %v4367
  %v4369 = vadd.f32 %v4294, %v4368
  %v4370 = vpack.c.bf16 %v4367, %v4367
  %4372 = vrot.lane.b32.xlu0 %v4370, 96
  %v4373 = vpop.permute.xlu0 %4372
  %v4375 = vsel %vm4149, %v4373, 0
  %4377 = vmatprep.subr.bf16.mxu0 0
  %4378 = vmatpush1.bf16.msra.mxu0 %v4145
  %4379 = vmatprep.subr.bf16.mxu0 0
  %4380 = vmatpush1.bf16.msra.mxu0 %v4146
  %4381 = vmatprep.subr.bf16.mxu0 0
  %4382 = vmatpush1.bf16.msra.mxu0 0
  %4383 = vmatprep.subr.bf16.mxu0 0
  %4384 = vmatpush1.bf16.msra.mxu0 0
  %4385 = vmatprep.subr.bf16.mxu0 0
  %4386 = vmatpush1.bf16.msra.mxu0 0
  %4387 = vmatprep.subr.bf16.mxu0 0
  %4388 = vmatpush1.bf16.msra.mxu0 0
  %4389 = vmatprep.subr.bf16.mxu0 0
  %4390 = vmatpush1.bf16.msra.mxu0 0
  %4391 = vmatprep.subr.bf16.mxu0 0
  %4392 = vmatpush1.bf16.msra.mxu0 0
  %4393 = vmatprep.subr.bf16.mxu0 0
  %4394 = vmatpush1.bf16.msra.mxu0 0
  %4395 = vmatprep.subr.bf16.mxu0 0
  %4396 = vmatpush1.bf16.msra.mxu0 0
  %4397 = vmatprep.subr.bf16.mxu0 0
  %4398 = vmatpush1.bf16.msra.mxu0 0
  %4399 = vmatprep.subr.bf16.mxu0 0
  %4400 = vmatpush1.bf16.msra.mxu0 0
  %4401 = vmatprep.subr.bf16.mxu0 0
  %4402 = vmatpush1.bf16.msra.mxu0 0
  %4403 = vmatprep.subr.bf16.mxu0 0
  %4404 = vmatpush1.bf16.msra.mxu0 0
  %4405 = vmatprep.subr.bf16.mxu0 0
  %4406 = vmatpush1.bf16.msra.mxu0 0
  %4407 = vmatprep.subr.bf16.mxu0 0
  %4408 = vmatpush1.bf16.msra.mxu0 0
  %4409 = vmatprep.mubr.bf16.mxu0 0
  %4410 = vmatmul.mubr.bf16.gmra.mrb[0].mxu0 %v4375
  %v4411 = vpop.f32.mrb[0].mxu0
  %v4412 = vadd.f32 %v4135, %v4411
  %v4413 = vpop.f32.mrb[0].mxu0
  %v4414 = vpop.f32.mrb[0].mxu0
  %v4415 = vpop.f32.mrb[0].mxu0
  %4416 = vdwg.mxu0
  %v4417 = vadd.f32 %v4123, %v4412
  %v4418 = vxor.u32 %v4417, 2147483648
  %v4419 = vmul.f32 %v4418, 1.442695
  %v4420 = vpow.pop %v4419
  %v4421 = vadd.f32 %v4420, 1.0
  %v4422 = vrcp.pop %v4421
  %v4423 = vmul.f32 1.0, %v4422
  %4425 = vrot.lane.b32.xlu0 %v4412, 64
  %v4426 = vpop.permute.xlu0 %4425
  %v4428 = vmul.f32 %v4423, %v4426
  %4430 = vrot.lane.b32.xlu0 %v4428, 64
  %v4431 = vpop.permute.xlu0 %4430
  %v4433 = vadd.f32 %v4123, %v4431
  %v4434 = vtanh.pop %v4433
  %v4435 = vsub.f32 1.0, %v4423
  %4437 = vrot.lane.b32.xlu0 %v4434, 96
  %v4438 = vpop.permute.xlu0 %4437
  %v4440 = vmul.f32 %v4435, %v4438
  %v4441 = vmul.f32 %v4423, %v4367
  %v4442 = vadd.f32 %v4440, %v4441
  %v4443 = vtanh.pop %v4442
  %v4444 = vadd.f32 %v4369, %v4443
  %v4445 = vmul.f32 %v4444, 0.25
  %v4446 = vpack.c.bf16 %v4445, %v4445
  %v4447 = vld [vmem:[%s29] sm:$0xf]
  %v4448 = vld [vmem:[%s29 + $0x4] sm:$0xf]
  %v4449 = vld [vmem:[%s29 + $0x8] sm:$0xf]
  %v4450 = vld [vmem:[%s29 + $0xc] sm:$0xf]
  %v4451 = vld [vmem:[%s31] sm:$0x1]
  %v4453 = vlaneseq
  %v4454 = vshrl.u32 %v4453, 7
  %v4455 = vsub.s32 0, %v4454
  %v4456 = vrot.slane %v4451, %v4455
  %4459 = vrot.lane.b32.xlu0 %v4446, 96
  %v4460 = vpop.permute.xlu0 %4459
  %v4465 = vunpack.c.l.b16 %v4447
  %v4466 = vunpack.c.l.b16 %v4448
  %v4467 = vunpack.c.l.b16 %v4449
  %v4468 = vunpack.c.l.b16 %v4450
  %v4469 = vpack.c.b16 %v4466, %v4465
  %v4470 = vpack.c.b16 %v4468, %v4467
  %v4474 = vsel %vm4149, %v4460, 0
  %4476 = vmatprep.subr.bf16.mxu0 0
  %4477 = vmatpush1.bf16.msra.mxu0 %v4469
  %4478 = vmatprep.subr.bf16.mxu0 0
  %4479 = vmatpush1.bf16.msra.mxu0 %v4470
  %4480 = vmatprep.subr.bf16.mxu0 0
  %4481 = vmatpush1.bf16.msra.mxu0 0
  %4482 = vmatprep.subr.bf16.mxu0 0
  %4483 = vmatpush1.bf16.msra.mxu0 0
  %4484 = vmatprep.subr.bf16.mxu0 0
  %4485 = vmatpush1.bf16.msra.mxu0 0
  %4486 = vmatprep.subr.bf16.mxu0 0
  %4487 = vmatpush1.bf16.msra.mxu0 0
  %4488 = vmatprep.subr.bf16.mxu0 0
  %4489 = vmatpush1.bf16.msra.mxu0 0
  %4490 = vmatprep.subr.bf16.mxu0 0
  %4491 = vmatpush1.bf16.msra.mxu0 0
  %4492 = vmatprep.subr.bf16.mxu0 0
  %4493 = vmatpush1.bf16.msra.mxu0 0
  %4494 = vmatprep.subr.bf16.mxu0 0
  %4495 = vmatpush1.bf16.msra.mxu0 0
  %4496 = vmatprep.subr.bf16.mxu0 0
  %4497 = vmatpush1.bf16.msra.mxu0 0
  %4498 = vmatprep.subr.bf16.mxu0 0
  %4499 = vmatpush1.bf16.msra.mxu0 0
  %4500 = vmatprep.subr.bf16.mxu0 0
  %4501 = vmatpush1.bf16.msra.mxu0 0
  %4502 = vmatprep.subr.bf16.mxu0 0
  %4503 = vmatpush1.bf16.msra.mxu0 0
  %4504 = vmatprep.subr.bf16.mxu0 0
  %4505 = vmatpush1.bf16.msra.mxu0 0
  %4506 = vmatprep.subr.bf16.mxu0 0
  %4507 = vmatpush1.bf16.msra.mxu0 0
  %4508 = vmatprep.mubr.bf16.mxu0 0
  %4509 = vmatmul.mubr.bf16.gmra.mrb[0].mxu0 %v4474
  %v4510 = vpop.f32.mrb[0].mxu0
  %v4511 = vadd.f32 %v4456, %v4510
  %v4512 = vpop.f32.mrb[0].mxu0
  %v4513 = vpop.f32.mrb[0].mxu0
  %v4514 = vpop.f32.mrb[0].mxu0
  %4515 = vdwg.mxu0
  %v4516 = vpack.c.bf16 %v4511, %v4511
  %v4517 = vld [vmem:[%s33] sm:$0xf]
  %v4518 = vld [vmem:[%s33 + $0x4] sm:$0xf]
  %v4519 = vld [vmem:[%s33 + $0x8] sm:$0xf]
  %v4520 = vld [vmem:[%s33 + $0xc] sm:$0xf]
  %v4521 = vld [vmem:[%s35] sm:$0x1]
  %v4523 = vlaneseq
  %v4524 = vshrl.u32 %v4523, 7
  %v4525 = vsub.s32 0, %v4524
  %v4526 = vrot.slane %v4521, %v4525
  %v4532 = vunpack.c.l.b16 %v4517
  %v4533 = vunpack.c.l.b16 %v4518
  %v4534 = vunpack.c.l.b16 %v4519
  %v4535 = vunpack.c.l.b16 %v4520
  %v4536 = vpack.c.b16 %v4533, %v4532
  %v4537 = vpack.c.b16 %v4535, %v4534
  %v4541 = vsel %vm4149, %v4516, 0
  %4543 = vmatprep.subr.bf16.mxu0 0
  %4544 = vmatpush1.bf16.msra.mxu0 %v4536
  %4545 = vmatprep.subr.bf16.mxu0 0
  %4546 = vmatpush1.bf16.msra.mxu0 %v4537
  %4547 = vmatprep.subr.bf16.mxu0 0
  %4548 = vmatpush1.bf16.msra.mxu0 0
  %4549 = vmatprep.subr.bf16.mxu0 0
  %4550 = vmatpush1.bf16.msra.mxu0 0
  %4551 = vmatprep.subr.bf16.mxu0 0
  %4552 = vmatpush1.bf16.msra.mxu0 0
  %4553 = vmatprep.subr.bf16.mxu0 0
  %4554 = vmatpush1.bf16.msra.mxu0 0
  %4555 = vmatprep.subr.bf16.mxu0 0
  %4556 = vmatpush1.bf16.msra.mxu0 0
  %4557 = vmatprep.subr.bf16.mxu0 0
  %4558 = vmatpush1.bf16.msra.mxu0 0
  %4559 = vmatprep.subr.bf16.mxu0 0
  %4560 = vmatpush1.bf16.msra.mxu0 0
  %4561 = vmatprep.subr.bf16.mxu0 0
  %4562 = vmatpush1.bf16.msra.mxu0 0
  %4563 = vmatprep.subr.bf16.mxu0 0
  %4564 = vmatpush1.bf16.msra.mxu0 0
  %4565 = vmatprep.subr.bf16.mxu0 0
  %4566 = vmatpush1.bf16.msra.mxu0 0
  %4567 = vmatprep.subr.bf16.mxu0 0
  %4568 = vmatpush1.bf16.msra.mxu0 0
  %4569 = vmatprep.subr.bf16.mxu0 0
  %4570 = vmatpush1.bf16.msra.mxu0 0
  %4571 = vmatprep.subr.bf16.mxu0 0
  %4572 = vmatpush1.bf16.msra.mxu0 0
  %4573 = vmatprep.subr.bf16.mxu0 0
  %4574 = vmatpush1.bf16.msra.mxu0 0
  %4575 = vmatprep.mubr.bf16.mxu0 0
  %4576 = vmatmul.mubr.bf16.gmra.mrb[0].mxu0 %v4541
  %v4577 = vpop.f32.mrb[0].mxu0
  %v4578 = vadd.f32 %v4526, %v4577
  %v4579 = vpop.f32.mrb[0].mxu0
  %v4580 = vpop.f32.mrb[0].mxu0
  %v4581 = vpop.f32.mrb[0].mxu0
  %4582 = vdwg.mxu0
  %v4583 = vtanh.pop %v4578
  %v4584 = vpack.c.bf16 %v4583, %v4583
  %v4585 = vld [vmem:[%s37] sm:$0xff]
  %v4586 = vld [vmem:[%s37 + $0x8] sm:$0xff]
  %v4587 = vld [vmem:[%s39] sm:$0x3]
  %v4589 = vlaneseq
  %v4590 = vshrl.u32 %v4589, 7
  %v4591 = vsub.s32 0, %v4590
  %v4592 = vrot.slane %v4587, %v4591
  %v4593 = vlaneseq
  %v4594 = vshrl.u32 %v4593, 7
  %v4595 = vsub.s32 1, %v4594
  %v4596 = vrot.slane %v4587, %v4595
  %v4601 = vunpack.c.l.b16 %v4585
  %v4602 = vunpack.c.h.b16 %v4585
  %v4603 = vunpack.c.l.b16 %v4586
  %v4604 = vunpack.c.h.b16 %v4586
  %v4605 = vpack.c.b16 %v4603, %v4601
  %v4606 = vpack.c.b16 %v4604, %v4602
  %vm4609 = vcmask 130048
  %v4611 = vsel %vm4609, %v4584, 0
  %4613 = vmatprep.subr.bf16.mxu0 %v4606
  %4614 = vmatpush1.bf16.msra.mxu0 %v4605
  %4615 = vmatprep.subr.bf16.mxu0 0
  %4616 = vmatpush1.bf16.msra.mxu0 0
  %4617 = vmatprep.subr.bf16.mxu0 0
  %4618 = vmatpush1.bf16.msra.mxu0 0
  %4619 = vmatprep.subr.bf16.mxu0 0
  %4620 = vmatpush1.bf16.msra.mxu0 0
  %4621 = vmatprep.subr.bf16.mxu0 0
  %4622 = vmatpush1.bf16.msra.mxu0 0
  %4623 = vmatprep.subr.bf16.mxu0 0
  %4624 = vmatpush1.bf16.msra.mxu0 0
  %4625 = vmatprep.subr.bf16.mxu0 0
  %4626 = vmatpush1.bf16.msra.mxu0 0
  %4627 = vmatprep.subr.bf16.mxu0 0
  %4628 = vmatpush1.bf16.msra.mxu0 0
  %4629 = vmatprep.subr.bf16.mxu0 0
  %4630 = vmatpush1.bf16.msra.mxu0 0
  %4631 = vmatprep.subr.bf16.mxu0 0
  %4632 = vmatpush1.bf16.msra.mxu0 0
  %4633 = vmatprep.subr.bf16.mxu0 0
  %4634 = vmatpush1.bf16.msra.mxu0 0
  %4635 = vmatprep.subr.bf16.mxu0 0
  %4636 = vmatpush1.bf16.msra.mxu0 0
  %4637 = vmatprep.subr.bf16.mxu0 0
  %4638 = vmatpush1.bf16.msra.mxu0 0
  %4639 = vmatprep.subr.bf16.mxu0 0
  %4640 = vmatpush1.bf16.msra.mxu0 0
  %4641 = vmatprep.subr.bf16.mxu0 0
  %4642 = vmatpush1.bf16.msra.mxu0 0
  %4643 = vmatprep.subr.bf16.mxu0 0
  %4644 = vmatpush1.bf16.msra.mxu0 0
  %4645 = vmatprep.mubr.bf16.mxu0 0
  %4646 = vmatmul.mubr.bf16.gmra.mrb[0].mxu0 %v4611
  %v4647 = vpop.f32.mrb[0].mxu0
  %v4648 = vadd.f32 %v4592, %v4647
  %v4649 = vpop.f32.mrb[0].mxu0
  %v4650 = vadd.f32 %v4596, %v4649
  %v4651 = vpop.f32.mrb[0].mxu0
  %v4652 = vpop.f32.mrb[0].mxu0
  %4653 = vdwg.mxu0
  %v4654 = vpack.c.bf16 %v4648, %v4648
  %v4655 = vpack.c.bf16 %v4650, %v4650
  %v4656 = vld [vmem:[%s41] sm:$0xf]
  %v4657 = vld [vmem:[%s41 + $0x4] sm:$0xf]
  %v4658 = vld [vmem:[%s41 + $0x8] sm:$0xf]
  %v4659 = vld [vmem:[%s41 + $0xc] sm:$0xf]
  %v4660 = vld [vmem:[%s41 + $0x10] sm:$0xf]
  %v4661 = vld [vmem:[%s41 + $0x14] sm:$0xf]
  %v4662 = vld [vmem:[%s41 + $0x18] sm:$0xf]
  %v4663 = vld [vmem:[%s41 + $0x1c] sm:$0xf]
  %v4664 = vld [vmem:[%s41 + $0x20] sm:$0xf]
  %v4665 = vld [vmem:[%s41 + $0x24] sm:$0xf]
  %v4666 = vld [vmem:[%s41 + $0x28] sm:$0xf]
  %v4667 = vld [vmem:[%s41 + $0x2c] sm:$0xf]
  %v4668 = vld [vmem:[%s41 + $0x30] sm:$0xf]
  %v4669 = vld [vmem:[%s41 + $0x34] sm:$0xf]
  %v4670 = vld [vmem:[%s41 + $0x38] sm:$0xf]
  %v4671 = vld [vmem:[%s41 + $0x3c] sm:$0xf]
  %v4672 = vld [vmem:[%s41 + $0x40] sm:$0xf]
  %v4673 = vld [vmem:[%s41 + $0x44] sm:$0xf]
  %v4674 = vld [vmem:[%s43] sm:$0x1]
  %v4676 = vlaneseq
  %v4677 = vshrl.u32 %v4676, 7
  %v4678 = vsub.s32 0, %v4677
  %v4679 = vrot.slane %v4674, %v4678
  %v4699 = vunpack.c.l.b16 %v4656
  %v4700 = vunpack.c.l.b16 %v4657
  %v4701 = vunpack.c.l.b16 %v4658
  %v4702 = vunpack.c.l.b16 %v4659
  %v4703 = vunpack.c.l.b16 %v4660
  %v4704 = vunpack.c.l.b16 %v4661
  %v4705 = vunpack.c.l.b16 %v4662
  %v4706 = vunpack.c.l.b16 %v4663
  %v4707 = vunpack.c.l.b16 %v4664
  %v4708 = vunpack.c.l.b16 %v4665
  %v4709 = vunpack.c.l.b16 %v4666
  %v4710 = vunpack.c.l.b16 %v4667
  %v4711 = vunpack.c.l.b16 %v4668
  %v4712 = vunpack.c.l.b16 %v4669
  %v4713 = vunpack.c.l.b16 %v4670
  %v4714 = vunpack.c.l.b16 %v4671
  %v4715 = vunpack.c.l.b16 %v4672
  %v4716 = vunpack.c.l.b16 %v4673
  %v4717 = vpack.c.b16 %v4700, %v4699
  %v4718 = vpack.c.b16 %v4702, %v4701
  %v4719 = vpack.c.b16 %v4704, %v4703
  %v4720 = vpack.c.b16 %v4706, %v4705
  %v4721 = vpack.c.b16 %v4708, %v4707
  %v4722 = vpack.c.b16 %v4710, %v4709
  %v4723 = vpack.c.b16 %v4712, %v4711
  %v4724 = vpack.c.b16 %v4714, %v4713
  %v4725 = vpack.c.b16 %v4716, %v4715
  %v4736 = vsel %vm4609, %v4655, 0
  %4738 = vmatprep.subr.bf16.mxu0 0
  %4739 = vmatpush1.bf16.msra.mxu0 %v4717
  %4740 = vmatprep.subr.bf16.mxu0 0
  %4741 = vmatpush1.bf16.msra.mxu0 %v4718
  %4742 = vmatprep.subr.bf16.mxu0 0
  %4743 = vmatpush1.bf16.msra.mxu0 %v4719
  %4744 = vmatprep.subr.bf16.mxu0 0
  %4745 = vmatpush1.bf16.msra.mxu0 %v4720
  %4746 = vmatprep.subr.bf16.mxu0 0
  %4747 = vmatpush1.bf16.msra.mxu0 %v4721
  %4748 = vmatprep.subr.bf16.mxu0 0
  %4749 = vmatpush1.bf16.msra.mxu0 %v4722
  %4750 = vmatprep.subr.bf16.mxu0 0
  %4751 = vmatpush1.bf16.msra.mxu0 %v4723
  %4752 = vmatprep.subr.bf16.mxu0 0
  %4753 = vmatpush1.bf16.msra.mxu0 %v4724
  %4754 = vmatprep.subr.bf16.mxu0 0
  %4755 = vmatpush1.bf16.msra.mxu0 %v4725
  %4756 = vmatprep.subr.bf16.mxu0 0
  %4757 = vmatpush1.bf16.msra.mxu0 0
  %4758 = vmatprep.subr.bf16.mxu0 0
  %4759 = vmatpush1.bf16.msra.mxu0 0
  %4760 = vmatprep.subr.bf16.mxu0 0
  %4761 = vmatpush1.bf16.msra.mxu0 0
  %4762 = vmatprep.subr.bf16.mxu0 0
  %4763 = vmatpush1.bf16.msra.mxu0 0
  %4764 = vmatprep.subr.bf16.mxu0 0
  %4765 = vmatpush1.bf16.msra.mxu0 0
  %4766 = vmatprep.subr.bf16.mxu0 0
  %4767 = vmatpush1.bf16.msra.mxu0 0
  %4768 = vmatprep.subr.bf16.mxu0 0
  %4769 = vmatpush1.bf16.msra.mxu0 0
  %4770 = vmatprep.mubr.bf16.mxu0 %v4736
  %4771 = vmatmul.mubr.bf16.gmra.mrb[0].mxu0 %v4654
  %v4772 = vpop.f32.mrb[0].mxu0
  %v4773 = vadd.f32 %v4679, %v4772
  %v4774 = vpop.f32.mrb[0].mxu0
  %v4775 = vpop.f32.mrb[0].mxu0
  %v4776 = vpop.f32.mrb[0].mxu0
  %4777 = vdwg.mxu0
  %v4778 = vld [vmem:[%s45] sm:$0xf]
  %v4779 = vld [vmem:[%s45 + $0x4] sm:$0xf]
  %v4780 = vld [vmem:[%s45 + $0x8] sm:$0xf]
  %v4781 = vld [vmem:[%s45 + $0xc] sm:$0xf]
  %v4782 = vld [vmem:[%s47] sm:$0x1]
  %v4784 = vlaneseq
  %v4785 = vshrl.u32 %v4784, 7
  %v4786 = vsub.s32 0, %v4785
  %v4787 = vrot.slane %v4782, %v4786
  %v4793 = vunpack.c.l.b16 %v4778
  %v4794 = vunpack.c.l.b16 %v4779
  %v4795 = vunpack.c.l.b16 %v4780
  %v4796 = vunpack.c.l.b16 %v4781
  %v4797 = vpack.c.b16 %v4794, %v4793
  %v4798 = vpack.c.b16 %v4796, %v4795
  %4801 = vmatprep.subr.bf16.mxu0 0
  %4802 = vmatpush1.bf16.msra.mxu0 %v4797
  %4803 = vmatprep.subr.bf16.mxu0 0
  %4804 = vmatpush1.bf16.msra.mxu0 %v4798
  %4805 = vmatprep.subr.bf16.mxu0 0
  %4806 = vmatpush1.bf16.msra.mxu0 0
  %4807 = vmatprep.subr.bf16.mxu0 0
  %4808 = vmatpush1.bf16.msra.mxu0 0
  %4809 = vmatprep.subr.bf16.mxu0 0
  %4810 = vmatpush1.bf16.msra.mxu0 0
  %4811 = vmatprep.subr.bf16.mxu0 0
  %4812 = vmatpush1.bf16.msra.mxu0 0
  %4813 = vmatprep.subr.bf16.mxu0 0
  %4814 = vmatpush1.bf16.msra.mxu0 0
  %4815 = vmatprep.subr.bf16.mxu0 0
  %4816 = vmatpush1.bf16.msra.mxu0 0
  %4817 = vmatprep.subr.bf16.mxu0 0
  %4818 = vmatpush1.bf16.msra.mxu0 0
  %4819 = vmatprep.subr.bf16.mxu0 0
  %4820 = vmatpush1.bf16.msra.mxu0 0
  %4821 = vmatprep.subr.bf16.mxu0 0
  %4822 = vmatpush1.bf16.msra.mxu0 0
  %4823 = vmatprep.subr.bf16.mxu0 0
  %4824 = vmatpush1.bf16.msra.mxu0 0
  %4825 = vmatprep.subr.bf16.mxu0 0
  %4826 = vmatpush1.bf16.msra.mxu0 0
  %4827 = vmatprep.subr.bf16.mxu0 0
  %4828 = vmatpush1.bf16.msra.mxu0 0
  %4829 = vmatprep.subr.bf16.mxu0 0
  %4830 = vmatpush1.bf16.msra.mxu0 0
  %4831 = vmatprep.subr.bf16.mxu0 0
  %4832 = vmatpush1.bf16.msra.mxu0 0
  %4833 = vmatprep.mubr.bf16.mxu0 0
  %4834 = vmatmul.mubr.bf16.gmra.mrb[0].mxu0 %v4541
  %v4835 = vpop.f32.mrb[0].mxu0
  %v4836 = vadd.f32 %v4787, %v4835
  %v4837 = vpop.f32.mrb[0].mxu0
  %v4838 = vpop.f32.mrb[0].mxu0
  %v4839 = vpop.f32.mrb[0].mxu0
  %4840 = vdwg.mxu0
  %v4841 = vadd.f32 %v4773, %v4836
  %v4842 = vxor.u32 %v4841, 2147483648
  %v4843 = vmul.f32 %v4842, 1.442695
  %v4844 = vpow.pop %v4843
  %v4845 = vadd.f32 %v4844, 1.0
  %v4846 = vrcp.pop %v4845
  %v4847 = vmul.f32 1.0, %v4846
  %4849 = vrot.lane.b32.xlu0 %v4836, 64
  %v4850 = vpop.permute.xlu0 %4849
  %v4852 = vmul.f32 %v4847, %v4850
  %4854 = vrot.lane.b32.xlu0 %v4852, 64
  %v4855 = vpop.permute.xlu0 %4854
  %v4857 = vadd.f32 %v4773, %v4855
  %v4858 = vtanh.pop %v4857
  %v4859 = vsub.f32 1.0, %v4847
  %4861 = vrot.lane.b32.xlu0 %v4858, 96
  %v4862 = vpop.permute.xlu0 %4861
  %v4864 = vmul.f32 %v4859, %v4862
  %4866 = vrot.lane.b32.xlu0 %v4511, 32
  %v4867 = vpop.permute.xlu0 %4866
  %v4869 = vmul.f32 %v4847, %v4867
  %v4870 = vadd.f32 %v4864, %v4869
  %4872 = vrot.lane.b32.xlu0 %v4870, 96
  %v4873 = vpop.permute.xlu0 %4872
  %4875 = vst.msk [vmem:[#allocation3] sm:$0xff] %vm4149, %v4873
  %v4876 = vpack.c.bf16 %v4870, %v4870
  %4878 = vrot.lane.b32.xlu0 %v4876, 96
  %v4879 = vpop.permute.xlu0 %4878
  %v4881 = vsel %vm4149, %v4879, 0
  %4883 = vmatprep.subr.bf16.mxu0 0
  %4884 = vmatpush1.bf16.msra.mxu0 %v4797
  %4885 = vmatprep.subr.bf16.mxu0 0
  %4886 = vmatpush1.bf16.msra.mxu0 %v4798
  %4887 = vmatprep.subr.bf16.mxu0 0
  %4888 = vmatpush1.bf16.msra.mxu0 0
  %4889 = vmatprep.subr.bf16.mxu0 0
  %4890 = vmatpush1.bf16.msra.mxu0 0
  %4891 = vmatprep.subr.bf16.mxu0 0
  %4892 = vmatpush1.bf16.msra.mxu0 0
  %4893 = vmatprep.subr.bf16.mxu0 0
  %4894 = vmatpush1.bf16.msra.mxu0 0
  %4895 = vmatprep.subr.bf16.mxu0 0
  %4896 = vmatpush1.bf16.msra.mxu0 0
  %4897 = vmatprep.subr.bf16.mxu0 0
  %4898 = vmatpush1.bf16.msra.mxu0 0
  %4899 = vmatprep.subr.bf16.mxu0 0
  %4900 = vmatpush1.bf16.msra.mxu0 0
  %4901 = vmatprep.subr.bf16.mxu0 0
  %4902 = vmatpush1.bf16.msra.mxu0 0
  %4903 = vmatprep.subr.bf16.mxu0 0
  %4904 = vmatpush1.bf16.msra.mxu0 0
  %4905 = vmatprep.subr.bf16.mxu0 0
  %4906 = vmatpush1.bf16.msra.mxu0 0
  %4907 = vmatprep.subr.bf16.mxu0 0
  %4908 = vmatpush1.bf16.msra.mxu0 0
  %4909 = vmatprep.subr.bf16.mxu0 0
  %4910 = vmatpush1.bf16.msra.mxu0 0
  %4911 = vmatprep.subr.bf16.mxu0 0
  %4912 = vmatpush1.bf16.msra.mxu0 0
  %4913 = vmatprep.subr.bf16.mxu0 0
  %4914 = vmatpush1.bf16.msra.mxu0 0
  %4915 = vmatprep.mubr.bf16.mxu0 0
  %4916 = vmatmul.mubr.bf16.gmra.mrb[0].mxu0 %v4881
  %v4917 = vpop.f32.mrb[0].mxu0
  %v4918 = vadd.f32 %v4787, %v4917
  %v4919 = vpop.f32.mrb[0].mxu0
  %v4920 = vpop.f32.mrb[0].mxu0
  %v4921 = vpop.f32.mrb[0].mxu0
  %4922 = vdwg.mxu0
  %v4923 = vadd.f32 %v4773, %v4918
  %v4924 = vxor.u32 %v4923, 2147483648
  %v4925 = vmul.f32 %v4924, 1.442695
  %v4926 = vpow.pop %v4925
  %v4927 = vadd.f32 %v4926, 1.0
  %v4928 = vrcp.pop %v4927
  %v4929 = vmul.f32 1.0, %v4928
  %4931 = vrot.lane.b32.xlu0 %v4918, 64
  %v4932 = vpop.permute.xlu0 %4931
  %v4934 = vmul.f32 %v4929, %v4932
  %4936 = vrot.lane.b32.xlu0 %v4934, 64
  %v4937 = vpop.permute.xlu0 %4936
  %v4939 = vadd.f32 %v4773, %v4937
  %v4940 = vtanh.pop %v4939
  %v4941 = vsub.f32 1.0, %v4929
  %4943 = vrot.lane.b32.xlu0 %v4940, 96
  %v4944 = vpop.permute.xlu0 %4943
  %v4946 = vmul.f32 %v4941, %v4944
  %v4947 = vmul.f32 %v4929, %v4870
  %v4948 = vadd.f32 %v4946, %v4947
  %4950 = vrot.lane.b32.xlu0 %v4948, 96
  %v4951 = vpop.permute.xlu0 %4950
  %4953 = vst.msk [vmem:[#allocation3 + $0x8] sm:$0xff] %vm4149, %v4951
  %v4954 = vpack.c.bf16 %v4948, %v4948
  %4956 = vrot.lane.b32.xlu0 %v4954, 96
  %v4957 = vpop.permute.xlu0 %4956
  %v4959 = vsel %vm4149, %v4957, 0
  %4961 = vmatprep.subr.bf16.mxu0 0
  %4962 = vmatpush1.bf16.msra.mxu0 %v4797
  %4963 = vmatprep.subr.bf16.mxu0 0
  %4964 = vmatpush1.bf16.msra.mxu0 %v4798
  %4965 = vmatprep.subr.bf16.mxu0 0
  %4966 = vmatpush1.bf16.msra.mxu0 0
  %4967 = vmatprep.subr.bf16.mxu0 0
  %4968 = vmatpush1.bf16.msra.mxu0 0
  %4969 = vmatprep.subr.bf16.mxu0 0
  %4970 = vmatpush1.bf16.msra.mxu0 0
  %4971 = vmatprep.subr.bf16.mxu0 0
  %4972 = vmatpush1.bf16.msra.mxu0 0
  %4973 = vmatprep.subr.bf16.mxu0 0
  %4974 = vmatpush1.bf16.msra.mxu0 0
  %4975 = vmatprep.subr.bf16.mxu0 0
  %4976 = vmatpush1.bf16.msra.mxu0 0
  %4977 = vmatprep.subr.bf16.mxu0 0
  %4978 = vmatpush1.bf16.msra.mxu0 0
  %4979 = vmatprep.subr.bf16.mxu0 0
  %4980 = vmatpush1.bf16.msra.mxu0 0
  %4981 = vmatprep.subr.bf16.mxu0 0
  %4982 = vmatpush1.bf16.msra.mxu0 0
  %4983 = vmatprep.subr.bf16.mxu0 0
  %4984 = vmatpush1.bf16.msra.mxu0 0
  %4985 = vmatprep.subr.bf16.mxu0 0
  %4986 = vmatpush1.bf16.msra.mxu0 0
  %4987 = vmatprep.subr.bf16.mxu0 0
  %4988 = vmatpush1.bf16.msra.mxu0 0
  %4989 = vmatprep.subr.bf16.mxu0 0
  %4990 = vmatpush1.bf16.msra.mxu0 0
  %4991 = vmatprep.subr.bf16.mxu0 0
  %4992 = vmatpush1.bf16.msra.mxu0 0
  %4993 = vmatprep.mubr.bf16.mxu0 0
  %4994 = vmatmul.mubr.bf16.gmra.mrb[0].mxu0 %v4959
  %v4995 = vpop.f32.mrb[0].mxu0
  %v4996 = vadd.f32 %v4787, %v4995
  %v4997 = vpop.f32.mrb[0].mxu0
  %v4998 = vpop.f32.mrb[0].mxu0
  %v4999 = vpop.f32.mrb[0].mxu0
  %5000 = vdwg.mxu0
  %v5001 = vadd.f32 %v4773, %v4996
  %v5002 = vxor.u32 %v5001, 2147483648
  %v5003 = vmul.f32 %v5002, 1.442695
  %v5004 = vpow.pop %v5003
  %v5005 = vadd.f32 %v5004, 1.0
  %v5006 = vrcp.pop %v5005
  %v5007 = vmul.f32 1.0, %v5006
  %5009 = vrot.lane.b32.xlu0 %v4996, 64
  %v5010 = vpop.permute.xlu0 %5009
  %v5012 = vmul.f32 %v5007, %v5010
  %5014 = vrot.lane.b32.xlu0 %v5012, 64
  %v5015 = vpop.permute.xlu0 %5014
  %v5017 = vadd.f32 %v4773, %v5015
  %v5018 = vtanh.pop %v5017
  %v5019 = vsub.f32 1.0, %v5007
  %5021 = vrot.lane.b32.xlu0 %v5018, 96
  %v5022 = vpop.permute.xlu0 %5021
  %v5024 = vmul.f32 %v5019, %v5022
  %v5025 = vmul.f32 %v5007, %v4948
  %v5026 = vadd.f32 %v5024, %v5025
  %5028 = vrot.lane.b32.xlu0 %v5026, 96
  %v5029 = vpop.permute.xlu0 %5028
  %5031 = vst.msk [vmem:[#allocation3 + $0x10] sm:$0xff] %vm4149, %v5029
  %v5032 = vpack.c.bf16 %v5026, %v5026
  %5034 = vrot.lane.b32.xlu0 %v5032, 96
  %v5035 = vpop.permute.xlu0 %5034
  %v5037 = vsel %vm4149, %v5035, 0
  %5039 = vmatprep.subr.bf16.mxu0 0
  %5040 = vmatpush1.bf16.msra.mxu0 %v4797
  %5041 = vmatprep.subr.bf16.mxu0 0
  %5042 = vmatpush1.bf16.msra.mxu0 %v4798
  %5043 = vmatprep.subr.bf16.mxu0 0
  %5044 = vmatpush1.bf16.msra.mxu0 0
  %5045 = vmatprep.subr.bf16.mxu0 0
  %5046 = vmatpush1.bf16.msra.mxu0 0
  %5047 = vmatprep.subr.bf16.mxu0 0
  %5048 = vmatpush1.bf16.msra.mxu0 0
  %5049 = vmatprep.subr.bf16.mxu0 0
  %5050 = vmatpush1.bf16.msra.mxu0 0
  %5051 = vmatprep.subr.bf16.mxu0 0
  %5052 = vmatpush1.bf16.msra.mxu0 0
  %5053 = vmatprep.subr.bf16.mxu0 0
  %5054 = vmatpush1.bf16.msra.mxu0 0
  %5055 = vmatprep.subr.bf16.mxu0 0
  %5056 = vmatpush1.bf16.msra.mxu0 0
  %5057 = vmatprep.subr.bf16.mxu0 0
  %5058 = vmatpush1.bf16.msra.mxu0 0
  %5059 = vmatprep.subr.bf16.mxu0 0
  %5060 = vmatpush1.bf16.msra.mxu0 0
  %5061 = vmatprep.subr.bf16.mxu0 0
  %5062 = vmatpush1.bf16.msra.mxu0 0
  %5063 = vmatprep.subr.bf16.mxu0 0
  %5064 = vmatpush1.bf16.msra.mxu0 0
  %5065 = vmatprep.subr.bf16.mxu0 0
  %5066 = vmatpush1.bf16.msra.mxu0 0
  %5067 = vmatprep.subr.bf16.mxu0 0
  %5068 = vmatpush1.bf16.msra.mxu0 0
  %5069 = vmatprep.subr.bf16.mxu0 0
  %5070 = vmatpush1.bf16.msra.mxu0 0
  %5071 = vmatprep.mubr.bf16.mxu0 0
  %5072 = vmatmul.mubr.bf16.gmra.mrb[0].mxu0 %v5037
  %v5073 = vpop.f32.mrb[0].mxu0
  %v5074 = vadd.f32 %v4787, %v5073
  %v5075 = vpop.f32.mrb[0].mxu0
  %v5076 = vpop.f32.mrb[0].mxu0
  %v5077 = vpop.f32.mrb[0].mxu0
  %5078 = vdwg.mxu0
  %v5079 = vadd.f32 %v4773, %v5074
  %v5080 = vxor.u32 %v5079, 2147483648
  %v5081 = vmul.f32 %v5080, 1.442695
  %v5082 = vpow.pop %v5081
  %v5083 = vadd.f32 %v5082, 1.0
  %v5084 = vrcp.pop %v5083
  %v5085 = vmul.f32 1.0, %v5084
  %5087 = vrot.lane.b32.xlu0 %v5074, 64
  %v5088 = vpop.permute.xlu0 %5087
  %v5090 = vmul.f32 %v5085, %v5088
  %5092 = vrot.lane.b32.xlu0 %v5090, 64
  %v5093 = vpop.permute.xlu0 %5092
  %v5095 = vadd.f32 %v4773, %v5093
  %v5096 = vtanh.pop %v5095
  %v5097 = vsub.f32 1.0, %v5085
  %5099 = vrot.lane.b32.xlu0 %v5096, 96
  %v5100 = vpop.permute.xlu0 %5099
  %v5102 = vmul.f32 %v5097, %v5100
  %v5103 = vmul.f32 %v5085, %v5026
  %v5104 = vadd.f32 %v5102, %v5103
  %5106 = vrot.lane.b32.xlu0 %v5104, 96
  %v5107 = vpop.permute.xlu0 %5106
  %5109 = vst.msk [vmem:[#allocation3 + $0x18] sm:$0xff] %vm4149, %v5107
  %v5110 = vld [vmem:[#allocation3] sm:$0xff]
  %v5111 = vld [vmem:[#allocation3 + $0x8] sm:$0xff]
  %v5112 = vld [vmem:[#allocation3 + $0x10] sm:$0xff]
  %v5113 = vld [vmem:[#allocation3 + $0x18] sm:$0xff]
  %v5114 = vpack.c.bf16 %v5111, %v5110
  %v5115 = vpack.c.bf16 %v5113, %v5112
  %v5116 = vld [vmem:[%s49] sm:$0xff]
  %v5117 = vld [vmem:[%s49 + $0x8] sm:$0xff]
  %v5118 = vld [vmem:[%s49 + $0x10] sm:$0xff]
  %v5119 = vld [vmem:[%s49 + $0x18] sm:$0xff]
  %v5120 = vld [vmem:[%s51] sm:$0x3]
  %v5122 = vlaneseq
  %v5123 = vshrl.u32 %v5122, 7
  %v5124 = vsub.s32 0, %v5123
  %v5125 = vrot.slane %v5120, %v5124
  %v5126 = vlaneseq
  %v5127 = vshrl.u32 %v5126, 7
  %v5128 = vsub.s32 1, %v5127
  %v5129 = vrot.slane %v5120, %v5128
  %v5136 = vunpack.c.l.b16 %v5116
  %v5137 = vunpack.c.h.b16 %v5116
  %v5138 = vunpack.c.l.b16 %v5117
  %v5139 = vunpack.c.h.b16 %v5117
  %v5140 = vunpack.c.l.b16 %v5118
  %v5141 = vunpack.c.h.b16 %v5118
  %v5142 = vunpack.c.l.b16 %v5119
  %v5143 = vunpack.c.h.b16 %v5119
  %v5144 = vpack.c.b16 %v5138, %v5136
  %v5145 = vpack.c.b16 %v5139, %v5137
  %v5146 = vpack.c.b16 %v5142, %v5140
  %v5147 = vpack.c.b16 %v5143, %v5141
  %v5153 = vsel %vm4149, %v5114, 0
  %v5156 = vsel %vm4149, %v5115, 0
  %5158 = vmatprep.subr.bf16.mxu0 %v5145
  %5159 = vmatpush1.bf16.msra.mxu0 %v5144
  %5160 = vmatprep.subr.bf16.mxu0 %v5147
  %5161 = vmatpush1.bf16.msra.mxu0 %v5146
  %5162 = vmatprep.subr.bf16.mxu0 0
  %5163 = vmatpush1.bf16.msra.mxu0 0
  %5164 = vmatprep.subr.bf16.mxu0 0
  %5165 = vmatpush1.bf16.msra.mxu0 0
  %5166 = vmatprep.subr.bf16.mxu0 0
  %5167 = vmatpush1.bf16.msra.mxu0 0
  %5168 = vmatprep.subr.bf16.mxu0 0
  %5169 = vmatpush1.bf16.msra.mxu0 0
  %5170 = vmatprep.subr.bf16.mxu0 0
  %5171 = vmatpush1.bf16.msra.mxu0 0
  %5172 = vmatprep.subr.bf16.mxu0 0
  %5173 = vmatpush1.bf16.msra.mxu0 0
  %5174 = vmatprep.subr.bf16.mxu0 0
  %5175 = vmatpush1.bf16.msra.mxu0 0
  %5176 = vmatprep.subr.bf16.mxu0 0
  %5177 = vmatpush1.bf16.msra.mxu0 0
  %5178 = vmatprep.subr.bf16.mxu0 0
  %5179 = vmatpush1.bf16.msra.mxu0 0
  %5180 = vmatprep.subr.bf16.mxu0 0
  %5181 = vmatpush1.bf16.msra.mxu0 0
  %5182 = vmatprep.subr.bf16.mxu0 0
  %5183 = vmatpush1.bf16.msra.mxu0 0
  %5184 = vmatprep.subr.bf16.mxu0 0
  %5185 = vmatpush1.bf16.msra.mxu0 0
  %5186 = vmatprep.subr.bf16.mxu0 0
  %5187 = vmatpush1.bf16.msra.mxu0 0
  %5188 = vmatprep.subr.bf16.mxu0 0
  %5189 = vmatpush1.bf16.msra.mxu0 0
  %5190 = vmatprep.mubr.bf16.mxu0 0
  %5191 = vmatmul.mubr.bf16.gmra.mrb[0].mxu0 %v5153
  %v5192 = vpop.f32.mrb[0].mxu0
  %v5193 = vadd.f32 %v5125, %v5192
  %v5194 = vpop.f32.mrb[0].mxu0
  %v5195 = vadd.f32 %v5129, %v5194
  %v5196 = vpop.f32.mrb[0].mxu0
  %v5197 = vadd.f32 %v5125, %v5196
  %v5198 = vpop.f32.mrb[0].mxu0
  %v5199 = vadd.f32 %v5129, %v5198
  %5200 = vmatprep.mubr.bf16.mxu0 0
  %5201 = vmatmul.mubr.bf16.gmra.mrb[0].mxu0 %v5156
  %v5202 = vpop.f32.mrb[0].mxu0
  %v5203 = vadd.f32 %v5125, %v5202
  %v5204 = vpop.f32.mrb[0].mxu0
  %v5205 = vadd.f32 %v5129, %v5204
  %v5206 = vpop.f32.mrb[0].mxu0
  %v5207 = vadd.f32 %v5125, %v5206
  %v5208 = vpop.f32.mrb[0].mxu0
  %v5209 = vadd.f32 %v5129, %v5208
  %5210 = vdwg.mxu0
  %v5211 = vld [vmem:[%s65] sm:$0x3]
  %v5213 = vlaneseq
  %v5214 = vshrl.u32 %v5213, 7
  %v5215 = vsub.s32 0, %v5214
  %v5216 = vrot.slane %v5211, %v5215
  %v5217 = vlaneseq
  %v5218 = vshrl.u32 %v5217, 7
  %v5219 = vsub.s32 1, %v5218
  %v5220 = vrot.slane %v5211, %v5219
  %v5223 = vadd.f32 %v5193, %v5216
  %v5224 = vadd.f32 %v5195, %v5220
  %v5225 = vadd.f32 %v5197, %v5216
  %v5226 = vadd.f32 %v5199, %v5220
  %v5227 = vadd.f32 %v5203, %v5216
  %v5228 = vadd.f32 %v5205, %v5220
  %v5229 = vadd.f32 %v5207, %v5216
  %v5230 = vadd.f32 %v5209, %v5220
  %v5231 = vld [vmem:[%s53] sm:$0xf]
  %v5232 = vld [vmem:[%s53 + $0x4] sm:$0xf]
  %v5233 = vld [vmem:[%s53 + $0x8] sm:$0xf]
  %v5234 = vld [vmem:[%s53 + $0xc] sm:$0xf]
  %v5235 = vld [vmem:[%s53 + $0x10] sm:$0xf]
  %v5236 = vld [vmem:[%s53 + $0x14] sm:$0xf]
  %v5237 = vld [vmem:[%s53 + $0x18] sm:$0xf]
  %v5238 = vld [vmem:[%s53 + $0x1c] sm:$0xf]
  %v5239 = vld [vmem:[%s57] sm:$0x1]
  %v5241 = vlaneseq
  %v5242 = vshrl.u32 %v5241, 7
  %v5243 = vsub.s32 0, %v5242
  %v5244 = vrot.slane %v5239, %v5243
  %v5254 = vunpack.c.l.b16 %v5231
  %v5255 = vunpack.c.l.b16 %v5232
  %v5256 = vunpack.c.l.b16 %v5233
  %v5257 = vunpack.c.l.b16 %v5234
  %v5258 = vunpack.c.l.b16 %v5235
  %v5259 = vunpack.c.l.b16 %v5236
  %v5260 = vunpack.c.l.b16 %v5237
  %v5261 = vunpack.c.l.b16 %v5238
  %v5262 = vpack.c.b16 %v5255, %v5254
  %v5263 = vpack.c.b16 %v5257, %v5256
  %v5264 = vpack.c.b16 %v5259, %v5258
  %v5265 = vpack.c.b16 %v5261, %v5260
  %5270 = vmatprep.subr.bf16.mxu0 0
  %5271 = vmatpush1.bf16.msra.mxu0 %v5262
  %5272 = vmatprep.subr.bf16.mxu0 0
  %5273 = vmatpush1.bf16.msra.mxu0 %v5263
  %5274 = vmatprep.subr.bf16.mxu0 0
  %5275 = vmatpush1.bf16.msra.mxu0 %v5264
  %5276 = vmatprep.subr.bf16.mxu0 0
  %5277 = vmatpush1.bf16.msra.mxu0 %v5265
  %5278 = vmatprep.subr.bf16.mxu0 0
  %5279 = vmatpush1.bf16.msra.mxu0 0
  %5280 = vmatprep.subr.bf16.mxu0 0
  %5281 = vmatpush1.bf16.msra.mxu0 0
  %5282 = vmatprep.subr.bf16.mxu0 0
  %5283 = vmatpush1.bf16.msra.mxu0 0
  %5284 = vmatprep.subr.bf16.mxu0 0
  %5285 = vmatpush1.bf16.msra.mxu0 0
  %5286 = vmatprep.subr.bf16.mxu0 0
  %5287 = vmatpush1.bf16.msra.mxu0 0
  %5288 = vmatprep.subr.bf16.mxu0 0
  %5289 = vmatpush1.bf16.msra.mxu0 0
  %5290 = vmatprep.subr.bf16.mxu0 0
  %5291 = vmatpush1.bf16.msra.mxu0 0
  %5292 = vmatprep.subr.bf16.mxu0 0
  %5293 = vmatpush1.bf16.msra.mxu0 0
  %5294 = vmatprep.subr.bf16.mxu0 0
  %5295 = vmatpush1.bf16.msra.mxu0 0
  %5296 = vmatprep.subr.bf16.mxu0 0
  %5297 = vmatpush1.bf16.msra.mxu0 0
  %5298 = vmatprep.subr.bf16.mxu0 0
  %5299 = vmatpush1.bf16.msra.mxu0 0
  %5300 = vmatprep.subr.bf16.mxu0 0
  %5301 = vmatpush1.bf16.msra.mxu0 0
  %5302 = vmatprep.mubr.bf16.mxu0 0
  %5303 = vmatmul.mubr.bf16.gmra.mrb[0].mxu0 %v4072
  %v5304 = vpop.f32.mrb[0].mxu0
  %v5305 = vadd.f32 %v5244, %v5304
  %v5306 = vpop.f32.mrb[0].mxu0
  %v5307 = vpop.f32.mrb[0].mxu0
  %v5308 = vadd.f32 %v5244, %v5307
  %v5309 = vpop.f32.mrb[0].mxu0
  %5310 = vmatprep.mubr.bf16.mxu0 0
  %5311 = vmatmul.mubr.bf16.gmra.mrb[0].mxu0 %v4075
  %v5312 = vpop.f32.mrb[0].mxu0
  %v5313 = vadd.f32 %v5244, %v5312
  %v5314 = vpop.f32.mrb[0].mxu0
  %v5315 = vpop.f32.mrb[0].mxu0
  %v5316 = vadd.f32 %v5244, %v5315
  %v5317 = vpop.f32.mrb[0].mxu0
  %5318 = vdwg.mxu0
  %v5319 = vld [vmem:[%s61] sm:$0x1]
  %v5321 = vlaneseq
  %v5322 = vshrl.u32 %v5321, 7
  %v5323 = vsub.s32 0, %v5322
  %v5324 = vrot.slane %v5319, %v5323
  %v5326 = vpack.c.bf16 %v5225, %v5223
  %v5327 = vpack.c.bf16 %v5226, %v5224
  %v5328 = vpack.c.bf16 %v5229, %v5227
  %v5329 = vpack.c.bf16 %v5230, %v5228
  %v5330 = vld [vmem:[%s55] sm:$0xf]
  %v5331 = vld [vmem:[%s55 + $0x4] sm:$0xf]
  %v5332 = vld [vmem:[%s55 + $0x8] sm:$0xf]
  %v5333 = vld [vmem:[%s55 + $0xc] sm:$0xf]
  %v5334 = vld [vmem:[%s55 + $0x10] sm:$0xf]
  %v5335 = vld [vmem:[%s55 + $0x14] sm:$0xf]
  %v5336 = vld [vmem:[%s55 + $0x18] sm:$0xf]
  %v5337 = vld [vmem:[%s55 + $0x1c] sm:$0xf]
  %v5338 = vld [vmem:[%s55 + $0x20] sm:$0xf]
  %v5339 = vld [vmem:[%s55 + $0x24] sm:$0xf]
  %v5340 = vld [vmem:[%s55 + $0x28] sm:$0xf]
  %v5341 = vld [vmem:[%s55 + $0x2c] sm:$0xf]
  %v5342 = vld [vmem:[%s55 + $0x30] sm:$0xf]
  %v5343 = vld [vmem:[%s55 + $0x34] sm:$0xf]
  %v5344 = vld [vmem:[%s55 + $0x38] sm:$0xf]
  %v5345 = vld [vmem:[%s55 + $0x3c] sm:$0xf]
  %v5346 = vld [vmem:[%s55 + $0x40] sm:$0xf]
  %v5347 = vld [vmem:[%s55 + $0x44] sm:$0xf]
  %v5348 = vld [vmem:[%s55 + $0x48] sm:$0xf]
  %v5349 = vld [vmem:[%s55 + $0x4c] sm:$0xf]
  %v5350 = vld [vmem:[%s55 + $0x50] sm:$0xf]
  %v5351 = vld [vmem:[%s55 + $0x54] sm:$0xf]
  %v5352 = vld [vmem:[%s55 + $0x58] sm:$0xf]
  %v5353 = vld [vmem:[%s55 + $0x5c] sm:$0xf]
  %v5354 = vld [vmem:[%s55 + $0x60] sm:$0xf]
  %v5355 = vld [vmem:[%s55 + $0x64] sm:$0xf]
  %v5356 = vld [vmem:[%s55 + $0x68] sm:$0xf]
  %v5357 = vld [vmem:[%s55 + $0x6c] sm:$0xf]
  %v5358 = vld [vmem:[%s55 + $0x70] sm:$0xf]
  %v5359 = vld [vmem:[%s55 + $0x74] sm:$0xf]
  %v5360 = vld [vmem:[%s55 + $0x78] sm:$0xf]
  %v5361 = vld [vmem:[%s55 + $0x7c] sm:$0xf]
  %v5394 = vunpack.c.l.b16 %v5330
  %v5395 = vunpack.c.l.b16 %v5331
  %v5396 = vunpack.c.l.b16 %v5332
  %v5397 = vunpack.c.l.b16 %v5333
  %v5398 = vunpack.c.l.b16 %v5334
  %v5399 = vunpack.c.l.b16 %v5335
  %v5400 = vunpack.c.l.b16 %v5336
  %v5401 = vunpack.c.l.b16 %v5337
  %v5402 = vunpack.c.l.b16 %v5338
  %v5403 = vunpack.c.l.b16 %v5339
  %v5404 = vunpack.c.l.b16 %v5340
  %v5405 = vunpack.c.l.b16 %v5341
  %v5406 = vunpack.c.l.b16 %v5342
  %v5407 = vunpack.c.l.b16 %v5343
  %v5408 = vunpack.c.l.b16 %v5344
  %v5409 = vunpack.c.l.b16 %v5345
  %v5410 = vunpack.c.l.b16 %v5346
  %v5411 = vunpack.c.l.b16 %v5347
  %v5412 = vunpack.c.l.b16 %v5348
  %v5413 = vunpack.c.l.b16 %v5349
  %v5414 = vunpack.c.l.b16 %v5350
  %v5415 = vunpack.c.l.b16 %v5351
  %v5416 = vunpack.c.l.b16 %v5352
  %v5417 = vunpack.c.l.b16 %v5353
  %v5418 = vunpack.c.l.b16 %v5354
  %v5419 = vunpack.c.l.b16 %v5355
  %v5420 = vunpack.c.l.b16 %v5356
  %v5421 = vunpack.c.l.b16 %v5357
  %v5422 = vunpack.c.l.b16 %v5358
  %v5423 = vunpack.c.l.b16 %v5359
  %v5424 = vunpack.c.l.b16 %v5360
  %v5425 = vunpack.c.l.b16 %v5361
  %v5426 = vpack.c.b16 %v5395, %v5394
  %v5427 = vpack.c.b16 %v5397, %v5396
  %v5428 = vpack.c.b16 %v5399, %v5398
  %v5429 = vpack.c.b16 %v5401, %v5400
  %v5430 = vpack.c.b16 %v5403, %v5402
  %v5431 = vpack.c.b16 %v5405, %v5404
  %v5432 = vpack.c.b16 %v5407, %v5406
  %v5433 = vpack.c.b16 %v5409, %v5408
  %v5434 = vpack.c.b16 %v5411, %v5410
  %v5435 = vpack.c.b16 %v5413, %v5412
  %v5436 = vpack.c.b16 %v5415, %v5414
  %v5437 = vpack.c.b16 %v5417, %v5416
  %v5438 = vpack.c.b16 %v5419, %v5418
  %v5439 = vpack.c.b16 %v5421, %v5420
  %v5440 = vpack.c.b16 %v5423, %v5422
  %v5441 = vpack.c.b16 %v5425, %v5424
  %5458 = vmatprep.subr.bf16.mxu0 0
  %5459 = vmatpush1.bf16.msra.mxu0 %v5426
  %5460 = vmatprep.subr.bf16.mxu0 0
  %5461 = vmatpush1.bf16.msra.mxu0 %v5427
  %5462 = vmatprep.subr.bf16.mxu0 0
  %5463 = vmatpush1.bf16.msra.mxu0 %v5428
  %5464 = vmatprep.subr.bf16.mxu0 0
  %5465 = vmatpush1.bf16.msra.mxu0 %v5429
  %5466 = vmatprep.subr.bf16.mxu0 0
  %5467 = vmatpush1.bf16.msra.mxu0 %v5430
  %5468 = vmatprep.subr.bf16.mxu0 0
  %5469 = vmatpush1.bf16.msra.mxu0 %v5431
  %5470 = vmatprep.subr.bf16.mxu0 0
  %5471 = vmatpush1.bf16.msra.mxu0 %v5432
  %5472 = vmatprep.subr.bf16.mxu0 0
  %5473 = vmatpush1.bf16.msra.mxu0 %v5433
  %5474 = vmatprep.subr.bf16.mxu0 0
  %5475 = vmatpush1.bf16.msra.mxu0 %v5434
  %5476 = vmatprep.subr.bf16.mxu0 0
  %5477 = vmatpush1.bf16.msra.mxu0 %v5435
  %5478 = vmatprep.subr.bf16.mxu0 0
  %5479 = vmatpush1.bf16.msra.mxu0 %v5436
  %5480 = vmatprep.subr.bf16.mxu0 0
  %5481 = vmatpush1.bf16.msra.mxu0 %v5437
  %5482 = vmatprep.subr.bf16.mxu0 0
  %5483 = vmatpush1.bf16.msra.mxu0 %v5438
  %5484 = vmatprep.subr.bf16.mxu0 0
  %5485 = vmatpush1.bf16.msra.mxu0 %v5439
  %5486 = vmatprep.subr.bf16.mxu0 0
  %5487 = vmatpush1.bf16.msra.mxu0 %v5440
  %5488 = vmatprep.subr.bf16.mxu0 0
  %5489 = vmatpush1.bf16.msra.mxu0 %v5441
  %5490 = vmatprep.mubr.bf16.mxu0 %v5327
  %5491 = vmatmul.mubr.bf16.gmra.mrb[0].mxu0 %v5326
  %v5492 = vpop.f32.mrb[0].mxu0
  %v5493 = vadd.f32 0.0, %v5492
  %v5494 = vpop.f32.mrb[0].mxu0
  %v5495 = vpop.f32.mrb[0].mxu0
  %v5496 = vadd.f32 0.0, %v5495
  %v5497 = vpop.f32.mrb[0].mxu0
  %5498 = vmatprep.mubr.bf16.mxu0 %v5329
  %5499 = vmatmul.mubr.bf16.gmra.mrb[0].mxu0 %v5328
  %v5500 = vpop.f32.mrb[0].mxu0
  %v5501 = vadd.f32 0.0, %v5500
  %v5502 = vpop.f32.mrb[0].mxu0
  %v5503 = vpop.f32.mrb[0].mxu0
  %v5504 = vadd.f32 0.0, %v5503
  %v5505 = vpop.f32.mrb[0].mxu0
  %5506 = vdwg.mxu0
  %v5507 = vadd.f32 %v5305, %v5493
  %v5508 = vadd.f32 %v5308, %v5496
  %v5509 = vadd.f32 %v5313, %v5501
  %v5510 = vadd.f32 %v5316, %v5504
  %v5511 = vpack.c.bf16 %v5508, %v5507
  %v5512 = vpack.c.bf16 %v5510, %v5509
  %v5513 = vld [vmem:[%s59] sm:$0xf]
  %v5514 = vld [vmem:[%s59 + $0x4] sm:$0xf]
  %v5515 = vld [vmem:[%s59 + $0x8] sm:$0xf]
  %v5516 = vld [vmem:[%s59 + $0xc] sm:$0xf]
  %v5517 = vld [vmem:[%s59 + $0x10] sm:$0xf]
  %v5518 = vld [vmem:[%s59 + $0x14] sm:$0xf]
  %v5519 = vld [vmem:[%s59 + $0x18] sm:$0xf]
  %v5520 = vld [vmem:[%s59 + $0x1c] sm:$0xf]
  %v5521 = vld [vmem:[%s59 + $0x20] sm:$0xf]
  %v5522 = vld [vmem:[%s59 + $0x24] sm:$0xf]
  %v5523 = vld [vmem:[%s59 + $0x28] sm:$0xf]
  %v5524 = vld [vmem:[%s59 + $0x2c] sm:$0xf]
  %v5525 = vld [vmem:[%s59 + $0x30] sm:$0xf]
  %v5526 = vld [vmem:[%s59 + $0x34] sm:$0xf]
  %v5527 = vld [vmem:[%s59 + $0x38] sm:$0xf]
  %v5528 = vld [vmem:[%s59 + $0x3c] sm:$0xf]
  %v5545 = vunpack.c.l.b16 %v5513
  %v5546 = vunpack.c.l.b16 %v5514
  %v5547 = vunpack.c.l.b16 %v5515
  %v5548 = vunpack.c.l.b16 %v5516
  %v5549 = vunpack.c.l.b16 %v5517
  %v5550 = vunpack.c.l.b16 %v5518
  %v5551 = vunpack.c.l.b16 %v5519
  %v5552 = vunpack.c.l.b16 %v5520
  %v5553 = vunpack.c.l.b16 %v5521
  %v5554 = vunpack.c.l.b16 %v5522
  %v5555 = vunpack.c.l.b16 %v5523
  %v5556 = vunpack.c.l.b16 %v5524
  %v5557 = vunpack.c.l.b16 %v5525
  %v5558 = vunpack.c.l.b16 %v5526
  %v5559 = vunpack.c.l.b16 %v5527
  %v5560 = vunpack.c.l.b16 %v5528
  %v5561 = vpack.c.b16 %v5546, %v5545
  %v5562 = vpack.c.b16 %v5548, %v5547
  %v5563 = vpack.c.b16 %v5550, %v5549
  %v5564 = vpack.c.b16 %v5552, %v5551
  %v5565 = vpack.c.b16 %v5554, %v5553
  %v5566 = vpack.c.b16 %v5556, %v5555
  %v5567 = vpack.c.b16 %v5558, %v5557
  %v5568 = vpack.c.b16 %v5560, %v5559
  %5577 = vmatprep.subr.bf16.mxu0 0
  %5578 = vmatpush1.bf16.msra.mxu0 %v5561
  %5579 = vmatprep.subr.bf16.mxu0 0
  %5580 = vmatpush1.bf16.msra.mxu0 %v5562
  %5581 = vmatprep.subr.bf16.mxu0 0
  %5582 = vmatpush1.bf16.msra.mxu0 %v5563
  %5583 = vmatprep.subr.bf16.mxu0 0
  %5584 = vmatpush1.bf16.msra.mxu0 %v5564
  %5585 = vmatprep.subr.bf16.mxu0 0
  %5586 = vmatpush1.bf16.msra.mxu0 %v5565
  %5587 = vmatprep.subr.bf16.mxu0 0
  %5588 = vmatpush1.bf16.msra.mxu0 %v5566
  %5589 = vmatprep.subr.bf16.mxu0 0
  %5590 = vmatpush1.bf16.msra.mxu0 %v5567
  %5591 = vmatprep.subr.bf16.mxu0 0
  %5592 = vmatpush1.bf16.msra.mxu0 %v5568
  %5593 = vmatprep.subr.bf16.mxu0 0
  %5594 = vmatpush1.bf16.msra.mxu0 0
  %5595 = vmatprep.subr.bf16.mxu0 0
  %5596 = vmatpush1.bf16.msra.mxu0 0
  %5597 = vmatprep.subr.bf16.mxu0 0
  %5598 = vmatpush1.bf16.msra.mxu0 0
  %5599 = vmatprep.subr.bf16.mxu0 0
  %5600 = vmatpush1.bf16.msra.mxu0 0
  %5601 = vmatprep.subr.bf16.mxu0 0
  %5602 = vmatpush1.bf16.msra.mxu0 0
  %5603 = vmatprep.subr.bf16.mxu0 0
  %5604 = vmatpush1.bf16.msra.mxu0 0
  %5605 = vmatprep.subr.bf16.mxu0 0
  %5606 = vmatpush1.bf16.msra.mxu0 0
  %5607 = vmatprep.subr.bf16.mxu0 0
  %5608 = vmatpush1.bf16.msra.mxu0 0
  %5609 = vmatprep.mubr.bf16.mxu0 0
  %5610 = vmatmul.mubr.bf16.gmra.mrb[0].mxu0 %v5511
  %v5611 = vpop.f32.mrb[0].mxu0
  %v5612 = vadd.f32 %v5324, %v5611
  %v5613 = vpop.f32.mrb[0].mxu0
  %v5614 = vpop.f32.mrb[0].mxu0
  %v5615 = vadd.f32 %v5324, %v5614
  %v5616 = vpop.f32.mrb[0].mxu0
  %5617 = vmatprep.mubr.bf16.mxu0 0
  %5618 = vmatmul.mubr.bf16.gmra.mrb[0].mxu0 %v5512
  %v5619 = vpop.f32.mrb[0].mxu0
  %v5620 = vadd.f32 %v5324, %v5619
  %v5621 = vpop.f32.mrb[0].mxu0
  %v5622 = vpop.f32.mrb[0].mxu0
  %v5623 = vadd.f32 %v5324, %v5622
  %v5624 = vpop.f32.mrb[0].mxu0
  %5625 = vdwg.mxu0
  %v5626 = vpack.c.bf16 %v5615, %v5612
  %v5627 = vpack.c.bf16 %v5623, %v5620
  %v5628 = vld [vmem:[%s63] sm:$0xff]
  %v5629 = vld [vmem:[%s63 + $0x8] sm:$0xff]
  %v5630 = vld [vmem:[%s63 + $0x10] sm:$0xff]
  %v5631 = vld [vmem:[%s63 + $0x18] sm:$0xff]
  %v5632 = vld [vmem:[%s63 + $0x20] sm:$0xff]
  %v5633 = vld [vmem:[%s63 + $0x28] sm:$0xff]
  %v5634 = vld [vmem:[%s63 + $0x30] sm:$0xff]
  %v5635 = vld [vmem:[%s63 + $0x38] sm:$0xff]
  %v5636 = vld [vmem:[%s63 + $0x40] sm:$0xff]
  %v5637 = vld [vmem:[%s63 + $0x48] sm:$0xff]
  %v5638 = vld [vmem:[%s63 + $0x50] sm:$0xff]
  %v5639 = vld [vmem:[%s63 + $0x58] sm:$0xff]
  %v5640 = vld [vmem:[%s63 + $0x60] sm:$0xff]
  %v5641 = vld [vmem:[%s63 + $0x68] sm:$0xff]
  %v5642 = vld [vmem:[%s63 + $0x70] sm:$0xff]
  %v5643 = vld [vmem:[%s63 + $0x78] sm:$0xff]
  %v5660 = vunpack.c.l.b16 %v5628
  %v5661 = vunpack.c.h.b16 %v5628
  %v5662 = vunpack.c.l.b16 %v5629
  %v5663 = vunpack.c.h.b16 %v5629
  %v5664 = vunpack.c.l.b16 %v5630
  %v5665 = vunpack.c.h.b16 %v5630
  %v5666 = vunpack.c.l.b16 %v5631
  %v5667 = vunpack.c.h.b16 %v5631
  %v5668 = vunpack.c.l.b16 %v5632
  %v5669 = vunpack.c.h.b16 %v5632
  %v5670 = vunpack.c.l.b16 %v5633
  %v5671 = vunpack.c.h.b16 %v5633
  %v5672 = vunpack.c.l.b16 %v5634
  %v5673 = vunpack.c.h.b16 %v5634
  %v5674 = vunpack.c.l.b16 %v5635
  %v5675 = vunpack.c.h.b16 %v5635
  %v5676 = vunpack.c.l.b16 %v5636
  %v5677 = vunpack.c.h.b16 %v5636
  %v5678 = vunpack.c.l.b16 %v5637
  %v5679 = vunpack.c.h.b16 %v5637
  %v5680 = vunpack.c.l.b16 %v5638
  %v5681 = vunpack.c.h.b16 %v5638
  %v5682 = vunpack.c.l.b16 %v5639
  %v5683 = vunpack.c.h.b16 %v5639
  %v5684 = vunpack.c.l.b16 %v5640
  %v5685 = vunpack.c.h.b16 %v5640
  %v5686 = vunpack.c.l.b16 %v5641
  %v5687 = vunpack.c.h.b16 %v5641
  %v5688 = vunpack.c.l.b16 %v5642
  %v5689 = vunpack.c.h.b16 %v5642
  %v5690 = vunpack.c.l.b16 %v5643
  %v5691 = vunpack.c.h.b16 %v5643
  %v5692 = vpack.c.b16 %v5662, %v5660
  %v5693 = vpack.c.b16 %v5663, %v5661
  %v5694 = vpack.c.b16 %v5666, %v5664
  %v5695 = vpack.c.b16 %v5667, %v5665
  %v5696 = vpack.c.b16 %v5670, %v5668
  %v5697 = vpack.c.b16 %v5671, %v5669
  %v5698 = vpack.c.b16 %v5674, %v5672
  %v5699 = vpack.c.b16 %v5675, %v5673
  %v5700 = vpack.c.b16 %v5678, %v5676
  %v5701 = vpack.c.b16 %v5679, %v5677
  %v5702 = vpack.c.b16 %v5682, %v5680
  %v5703 = vpack.c.b16 %v5683, %v5681
  %v5704 = vpack.c.b16 %v5686, %v5684
  %v5705 = vpack.c.b16 %v5687, %v5685
  %v5706 = vpack.c.b16 %v5690, %v5688
  %v5707 = vpack.c.b16 %v5691, %v5689
  %5724 = vmatprep.subr.bf16.mxu0 %v5693
  %5725 = vmatpush1.bf16.msra.mxu0 %v5692
  %5726 = vmatprep.subr.bf16.mxu0 %v5695
  %5727 = vmatpush1.bf16.msra.mxu0 %v5694
  %5728 = vmatprep.subr.bf16.mxu0 %v5697
  %5729 = vmatpush1.bf16.msra.mxu0 %v5696
  %5730 = vmatprep.subr.bf16.mxu0 %v5699
  %5731 = vmatpush1.bf16.msra.mxu0 %v5698
  %5732 = vmatprep.subr.bf16.mxu0 %v5701
  %5733 = vmatpush1.bf16.msra.mxu0 %v5700
  %5734 = vmatprep.subr.bf16.mxu0 %v5703
  %5735 = vmatpush1.bf16.msra.mxu0 %v5702
  %5736 = vmatprep.subr.bf16.mxu0 %v5705
  %5737 = vmatpush1.bf16.msra.mxu0 %v5704
  %5738 = vmatprep.subr.bf16.mxu0 %v5707
  %5739 = vmatpush1.bf16.msra.mxu0 %v5706
  %5740 = vmatprep.subr.bf16.mxu0 0
  %5741 = vmatpush1.bf16.msra.mxu0 0
  %5742 = vmatprep.subr.bf16.mxu0 0
  %5743 = vmatpush1.bf16.msra.mxu0 0
  %5744 = vmatprep.subr.bf16.mxu0 0
  %5745 = vmatpush1.bf16.msra.mxu0 0
  %5746 = vmatprep.subr.bf16.mxu0 0
  %5747 = vmatpush1.bf16.msra.mxu0 0
  %5748 = vmatprep.subr.bf16.mxu0 0
  %5749 = vmatpush1.bf16.msra.mxu0 0
  %5750 = vmatprep.subr.bf16.mxu0 0
  %5751 = vmatpush1.bf16.msra.mxu0 0
  %5752 = vmatprep.subr.bf16.mxu0 0
  %5753 = vmatpush1.bf16.msra.mxu0 0
  %5754 = vmatprep.subr.bf16.mxu0 0
  %5755 = vmatpush1.bf16.msra.mxu0 0
  %5756 = vmatprep.mubr.bf16.mxu0 0
  %5757 = vmatmul.mubr.bf16.gmra.mrb[0].mxu0 %v5626
  %v5758 = vpop.f32.mrb[0].mxu0
  %v5759 = vadd.f32 0.0, %v5758
  %v5760 = vpop.f32.mrb[0].mxu0
  %v5761 = vadd.f32 0.0, %v5760
  %v5762 = vpop.f32.mrb[0].mxu0
  %v5763 = vadd.f32 0.0, %v5762
  %v5764 = vpop.f32.mrb[0].mxu0
  %v5765 = vadd.f32 0.0, %v5764
  %5766 = vmatprep.mubr.bf16.mxu0 0
  %5767 = vmatmul.mubr.bf16.gmra.mrb[0].mxu0 %v5627
  %v5768 = vpop.f32.mrb[0].mxu0
  %v5769 = vadd.f32 0.0, %v5768
  %v5770 = vpop.f32.mrb[0].mxu0
  %v5771 = vadd.f32 0.0, %v5770
  %v5772 = vpop.f32.mrb[0].mxu0
  %v5773 = vadd.f32 0.0, %v5772
  %v5774 = vpop.f32.mrb[0].mxu0
  %v5775 = vadd.f32 0.0, %v5774
  %5776 = vdwg.mxu0
  %v5777 = vadd.f32 %v5223, %v5759
  %v5778 = vadd.f32 %v5224, %v5761
  %v5779 = vadd.f32 %v5225, %v5763
  %v5780 = vadd.f32 %v5226, %v5765
  %v5781 = vadd.f32 %v5227, %v5769
  %v5782 = vadd.f32 %v5228, %v5771
  %v5783 = vadd.f32 %v5229, %v5773
  %v5784 = vadd.f32 %v5230, %v5775
  %v5785 = vpack.c.bf16 %v5779, %v5777
  %v5786 = vpack.c.bf16 %v5780, %v5778
  %v5787 = vpack.c.bf16 %v5783, %v5781
  %v5788 = vpack.c.bf16 %v5784, %v5782
  %5789 = vmatprep.subr.bf16.mxu0 0
  %5790 = vmatpush1.bf16.msra.mxu0 %v5426
  %5791 = vmatprep.subr.bf16.mxu0 0
  %5792 = vmatpush1.bf16.msra.mxu0 %v5427
  %5793 = vmatprep.subr.bf16.mxu0 0
  %5794 = vmatpush1.bf16.msra.mxu0 %v5428
  %5795 = vmatprep.subr.bf16.mxu0 0
  %5796 = vmatpush1.bf16.msra.mxu0 %v5429
  %5797 = vmatprep.subr.bf16.mxu0 0
  %5798 = vmatpush1.bf16.msra.mxu0 %v5430
  %5799 = vmatprep.subr.bf16.mxu0 0
  %5800 = vmatpush1.bf16.msra.mxu0 %v5431
  %5801 = vmatprep.subr.bf16.mxu0 0
  %5802 = vmatpush1.bf16.msra.mxu0 %v5432
  %5803 = vmatprep.subr.bf16.mxu0 0
  %5804 = vmatpush1.bf16.msra.mxu0 %v5433
  %5805 = vmatprep.subr.bf16.mxu0 0
  %5806 = vmatpush1.bf16.msra.mxu0 %v5434
  %5807 = vmatprep.subr.bf16.mxu0 0
  %5808 = vmatpush1.bf16.msra.mxu0 %v5435
  %5809 = vmatprep.subr.bf16.mxu0 0
  %5810 = vmatpush1.bf16.msra.mxu0 %v5436
  %5811 = vmatprep.subr.bf16.mxu0 0
  %5812 = vmatpush1.bf16.msra.mxu0 %v5437
  %5813 = vmatprep.subr.bf16.mxu0 0
  %5814 = vmatpush1.bf16.msra.mxu0 %v5438
  %5815 = vmatprep.subr.bf16.mxu0 0
  %5816 = vmatpush1.bf16.msra.mxu0 %v5439
  %5817 = vmatprep.subr.bf16.mxu0 0
  %5818 = vmatpush1.bf16.msra.mxu0 %v5440
  %5819 = vmatprep.subr.bf16.mxu0 0
  %5820 = vmatpush1.bf16.msra.mxu0 %v5441
  %5821 = vmatprep.mubr.bf16.mxu0 %v5786
  %5822 = vmatmul.mubr.bf16.gmra.mrb[0].mxu0 %v5785
  %v5823 = vpop.f32.mrb[0].mxu0
  %v5824 = vadd.f32 0.0, %v5823
  %v5825 = vpop.f32.mrb[0].mxu0
  %v5826 = vpop.f32.mrb[0].mxu0
  %v5827 = vadd.f32 0.0, %v5826
  %v5828 = vpop.f32.mrb[0].mxu0
  %5829 = vmatprep.mubr.bf16.mxu0 %v5788
  %5830 = vmatmul.mubr.bf16.gmra.mrb[0].mxu0 %v5787
  %v5831 = vpop.f32.mrb[0].mxu0
  %v5832 = vadd.f32 0.0, %v5831
  %v5833 = vpop.f32.mrb[0].mxu0
  %v5834 = vpop.f32.mrb[0].mxu0
  %v5835 = vadd.f32 0.0, %v5834
  %v5836 = vpop.f32.mrb[0].mxu0
  %5837 = vdwg.mxu0
  %v5838 = vadd.f32 %v5305, %v5824
  %v5839 = vadd.f32 %v5308, %v5827
  %v5840 = vadd.f32 %v5313, %v5832
  %v5841 = vadd.f32 %v5316, %v5835
  %v5842 = vpack.c.bf16 %v5839, %v5838
  %v5843 = vpack.c.bf16 %v5841, %v5840
  %5844 = vmatprep.subr.bf16.mxu0 0
  %5845 = vmatpush1.bf16.msra.mxu0 %v5561
  %5846 = vmatprep.subr.bf16.mxu0 0
  %5847 = vmatpush1.bf16.msra.mxu0 %v5562
  %5848 = vmatprep.subr.bf16.mxu0 0
  %5849 = vmatpush1.bf16.msra.mxu0 %v5563
  %5850 = vmatprep.subr.bf16.mxu0 0
  %5851 = vmatpush1.bf16.msra.mxu0 %v5564
  %5852 = vmatprep.subr.bf16.mxu0 0
  %5853 = vmatpush1.bf16.msra.mxu0 %v5565
  %5854 = vmatprep.subr.bf16.mxu0 0
  %5855 = vmatpush1.bf16.msra.mxu0 %v5566
  %5856 = vmatprep.subr.bf16.mxu0 0
  %5857 = vmatpush1.bf16.msra.mxu0 %v5567
  %5858 = vmatprep.subr.bf16.mxu0 0
  %5859 = vmatpush1.bf16.msra.mxu0 %v5568
  %5860 = vmatprep.subr.bf16.mxu0 0
  %5861 = vmatpush1.bf16.msra.mxu0 0
  %5862 = vmatprep.subr.bf16.mxu0 0
  %5863 = vmatpush1.bf16.msra.mxu0 0
  %5864 = vmatprep.subr.bf16.mxu0 0
  %5865 = vmatpush1.bf16.msra.mxu0 0
  %5866 = vmatprep.subr.bf16.mxu0 0
  %5867 = vmatpush1.bf16.msra.mxu0 0
  %5868 = vmatprep.subr.bf16.mxu0 0
  %5869 = vmatpush1.bf16.msra.mxu0 0
  %5870 = vmatprep.subr.bf16.mxu0 0
  %5871 = vmatpush1.bf16.msra.mxu0 0
  %5872 = vmatprep.subr.bf16.mxu0 0
  %5873 = vmatpush1.bf16.msra.mxu0 0
  %5874 = vmatprep.subr.bf16.mxu0 0
  %5875 = vmatpush1.bf16.msra.mxu0 0
  %5876 = vmatprep.mubr.bf16.mxu0 0
  %5877 = vmatmul.mubr.bf16.gmra.mrb[0].mxu0 %v5842
  %v5878 = vpop.f32.mrb[0].mxu0
  %v5879 = vadd.f32 %v5324, %v5878
  %v5880 = vpop.f32.mrb[0].mxu0
  %v5881 = vpop.f32.mrb[0].mxu0
  %v5882 = vadd.f32 %v5324, %v5881
  %v5883 = vpop.f32.mrb[0].mxu0
  %5884 = vmatprep.mubr.bf16.mxu0 0
  %5885 = vmatmul.mubr.bf16.gmra.mrb[0].mxu0 %v5843
  %v5886 = vpop.f32.mrb[0].mxu0
  %v5887 = vadd.f32 %v5324, %v5886
  %v5888 = vpop.f32.mrb[0].mxu0
  %v5889 = vpop.f32.mrb[0].mxu0
  %v5890 = vadd.f32 %v5324, %v5889
  %v5891 = vpop.f32.mrb[0].mxu0
  %5892 = vdwg.mxu0
  %v5893 = vpack.c.bf16 %v5882, %v5879
  %v5894 = vpack.c.bf16 %v5890, %v5887
  %5895 = vmatprep.subr.bf16.mxu0 %v5693
  %5896 = vmatpush1.bf16.msra.mxu0 %v5692
  %5897 = vmatprep.subr.bf16.mxu0 %v5695
  %5898 = vmatpush1.bf16.msra.mxu0 %v5694
  %5899 = vmatprep.subr.bf16.mxu0 %v5697
  %5900 = vmatpush1.bf16.msra.mxu0 %v5696
  %5901 = vmatprep.subr.bf16.mxu0 %v5699
  %5902 = vmatpush1.bf16.msra.mxu0 %v5698
  %5903 = vmatprep.subr.bf16.mxu0 %v5701
  %5904 = vmatpush1.bf16.msra.mxu0 %v5700
  %5905 = vmatprep.subr.bf16.mxu0 %v5703
  %5906 = vmatpush1.bf16.msra.mxu0 %v5702
  %5907 = vmatprep.subr.bf16.mxu0 %v5705
  %5908 = vmatpush1.bf16.msra.mxu0 %v5704
  %5909 = vmatprep.subr.bf16.mxu0 %v5707
  %5910 = vmatpush1.bf16.msra.mxu0 %v5706
  %5911 = vmatprep.subr.bf16.mxu0 0
  %5912 = vmatpush1.bf16.msra.mxu0 0
  %5913 = vmatprep.subr.bf16.mxu0 0
  %5914 = vmatpush1.bf16.msra.mxu0 0
  %5915 = vmatprep.subr.bf16.mxu0 0
  %5916 = vmatpush1.bf16.msra.mxu0 0
  %5917 = vmatprep.subr.bf16.mxu0 0
  %5918 = vmatpush1.bf16.msra.mxu0 0
  %5919 = vmatprep.subr.bf16.mxu0 0
  %5920 = vmatpush1.bf16.msra.mxu0 0
  %5921 = vmatprep.subr.bf16.mxu0 0
  %5922 = vmatpush1.bf16.msra.mxu0 0
  %5923 = vmatprep.subr.bf16.mxu0 0
  %5924 = vmatpush1.bf16.msra.mxu0 0
  %5925 = vmatprep.subr.bf16.mxu0 0
  %5926 = vmatpush1.bf16.msra.mxu0 0
  %5927 = vmatprep.mubr.bf16.mxu0 0
  %5928 = vmatmul.mubr.bf16.gmra.mrb[0].mxu0 %v5893
  %v5929 = vpop.f32.mrb[0].mxu0
  %v5930 = vadd.f32 0.0, %v5929
  %v5931 = vpop.f32.mrb[0].mxu0
  %v5932 = vadd.f32 0.0, %v5931
  %v5933 = vpop.f32.mrb[0].mxu0
  %v5934 = vadd.f32 0.0, %v5933
  %v5935 = vpop.f32.mrb[0].mxu0
  %v5936 = vadd.f32 0.0, %v5935
  %5937 = vmatprep.mubr.bf16.mxu0 0
  %5938 = vmatmul.mubr.bf16.gmra.mrb[0].mxu0 %v5894
  %v5939 = vpop.f32.mrb[0].mxu0
  %v5940 = vadd.f32 0.0, %v5939
  %v5941 = vpop.f32.mrb[0].mxu0
  %v5942 = vadd.f32 0.0, %v5941
  %v5943 = vpop.f32.mrb[0].mxu0
  %v5944 = vadd.f32 0.0, %v5943
  %v5945 = vpop.f32.mrb[0].mxu0
  %v5946 = vadd.f32 0.0, %v5945
  %5947 = vdwg.mxu0
  %v5948 = vadd.f32 %v5777, %v5930
  %v5949 = vadd.f32 %v5778, %v5932
  %v5950 = vadd.f32 %v5779, %v5934
  %v5951 = vadd.f32 %v5780, %v5936
  %v5952 = vadd.f32 %v5781, %v5940
  %v5953 = vadd.f32 %v5782, %v5942
  %v5954 = vadd.f32 %v5783, %v5944
  %v5955 = vadd.f32 %v5784, %v5946
  %v5956 = vpack.c.bf16 %v5950, %v5948
  %v5957 = vpack.c.bf16 %v5951, %v5949
  %v5958 = vpack.c.bf16 %v5954, %v5952
  %v5959 = vpack.c.bf16 %v5955, %v5953
  %5960 = vmatprep.subr.bf16.mxu0 0
  %5961 = vmatpush1.bf16.msra.mxu0 %v5426
  %5962 = vmatprep.subr.bf16.mxu0 0
  %5963 = vmatpush1.bf16.msra.mxu0 %v5427
  %5964 = vmatprep.subr.bf16.mxu0 0
  %5965 = vmatpush1.bf16.msra.mxu0 %v5428
  %5966 = vmatprep.subr.bf16.mxu0 0
  %5967 = vmatpush1.bf16.msra.mxu0 %v5429
  %5968 = vmatprep.subr.bf16.mxu0 0
  %5969 = vmatpush1.bf16.msra.mxu0 %v5430
  %5970 = vmatprep.subr.bf16.mxu0 0
  %5971 = vmatpush1.bf16.msra.mxu0 %v5431
  %5972 = vmatprep.subr.bf16.mxu0 0
  %5973 = vmatpush1.bf16.msra.mxu0 %v5432
  %5974 = vmatprep.subr.bf16.mxu0 0
  %5975 = vmatpush1.bf16.msra.mxu0 %v5433
  %5976 = vmatprep.subr.bf16.mxu0 0
  %5977 = vmatpush1.bf16.msra.mxu0 %v5434
  %5978 = vmatprep.subr.bf16.mxu0 0
  %5979 = vmatpush1.bf16.msra.mxu0 %v5435
  %5980 = vmatprep.subr.bf16.mxu0 0
  %5981 = vmatpush1.bf16.msra.mxu0 %v5436
  %5982 = vmatprep.subr.bf16.mxu0 0
  %5983 = vmatpush1.bf16.msra.mxu0 %v5437
  %5984 = vmatprep.subr.bf16.mxu0 0
  %5985 = vmatpush1.bf16.msra.mxu0 %v5438
  %5986 = vmatprep.subr.bf16.mxu0 0
  %5987 = vmatpush1.bf16.msra.mxu0 %v5439
  %5988 = vmatprep.subr.bf16.mxu0 0
  %5989 = vmatpush1.bf16.msra.mxu0 %v5440
  %5990 = vmatprep.subr.bf16.mxu0 0
  %5991 = vmatpush1.bf16.msra.mxu0 %v5441
  %5992 = vmatprep.mubr.bf16.mxu0 %v5957
  %5993 = vmatmul.mubr.bf16.gmra.mrb[0].mxu0 %v5956
  %v5994 = vpop.f32.mrb[0].mxu0
  %v5995 = vadd.f32 0.0, %v5994
  %v5996 = vpop.f32.mrb[0].mxu0
  %v5997 = vpop.f32.mrb[0].mxu0
  %v5998 = vadd.f32 0.0, %v5997
  %v5999 = vpop.f32.mrb[0].mxu0
  %6000 = vmatprep.mubr.bf16.mxu0 %v5959
  %6001 = vmatmul.mubr.bf16.gmra.mrb[0].mxu0 %v5958
  %v6002 = vpop.f32.mrb[0].mxu0
  %v6003 = vadd.f32 0.0, %v6002
  %v6004 = vpop.f32.mrb[0].mxu0
  %v6005 = vpop.f32.mrb[0].mxu0
  %v6006 = vadd.f32 0.0, %v6005
  %v6007 = vpop.f32.mrb[0].mxu0
  %6008 = vdwg.mxu0
  %v6009 = vadd.f32 %v5305, %v5995
  %v6010 = vadd.f32 %v5308, %v5998
  %v6011 = vadd.f32 %v5313, %v6003
  %v6012 = vadd.f32 %v5316, %v6006
  %v6013 = vpack.c.bf16 %v6010, %v6009
  %v6014 = vpack.c.bf16 %v6012, %v6011
  %6015 = vmatprep.subr.bf16.mxu0 0
  %6016 = vmatpush1.bf16.msra.mxu0 %v5561
  %6017 = vmatprep.subr.bf16.mxu0 0
  %6018 = vmatpush1.bf16.msra.mxu0 %v5562
  %6019 = vmatprep.subr.bf16.mxu0 0
  %6020 = vmatpush1.bf16.msra.mxu0 %v5563
  %6021 = vmatprep.subr.bf16.mxu0 0
  %6022 = vmatpush1.bf16.msra.mxu0 %v5564
  %6023 = vmatprep.subr.bf16.mxu0 0
  %6024 = vmatpush1.bf16.msra.mxu0 %v5565
  %6025 = vmatprep.subr.bf16.mxu0 0
  %6026 = vmatpush1.bf16.msra.mxu0 %v5566
  %6027 = vmatprep.subr.bf16.mxu0 0
  %6028 = vmatpush1.bf16.msra.mxu0 %v5567
  %6029 = vmatprep.subr.bf16.mxu0 0
  %6030 = vmatpush1.bf16.msra.mxu0 %v5568
  %6031 = vmatprep.subr.bf16.mxu0 0
  %6032 = vmatpush1.bf16.msra.mxu0 0
  %6033 = vmatprep.subr.bf16.mxu0 0
  %6034 = vmatpush1.bf16.msra.mxu0 0
  %6035 = vmatprep.subr.bf16.mxu0 0
  %6036 = vmatpush1.bf16.msra.mxu0 0
  %6037 = vmatprep.subr.bf16.mxu0 0
  %6038 = vmatpush1.bf16.msra.mxu0 0
  %6039 = vmatprep.subr.bf16.mxu0 0
  %6040 = vmatpush1.bf16.msra.mxu0 0
  %6041 = vmatprep.subr.bf16.mxu0 0
  %6042 = vmatpush1.bf16.msra.mxu0 0
  %6043 = vmatprep.subr.bf16.mxu0 0
  %6044 = vmatpush1.bf16.msra.mxu0 0
  %6045 = vmatprep.subr.bf16.mxu0 0
  %6046 = vmatpush1.bf16.msra.mxu0 0
  %6047 = vmatprep.mubr.bf16.mxu0 0
  %6048 = vmatmul.mubr.bf16.gmra.mrb[0].mxu0 %v6013
  %v6049 = vpop.f32.mrb[0].mxu0
  %v6050 = vadd.f32 %v5324, %v6049
  %v6051 = vpop.f32.mrb[0].mxu0
  %v6052 = vpop.f32.mrb[0].mxu0
  %v6053 = vadd.f32 %v5324, %v6052
  %v6054 = vpop.f32.mrb[0].mxu0
  %6055 = vmatprep.mubr.bf16.mxu0 0
  %6056 = vmatmul.mubr.bf16.gmra.mrb[0].mxu0 %v6014
  %v6057 = vpop.f32.mrb[0].mxu0
  %v6058 = vadd.f32 %v5324, %v6057
  %v6059 = vpop.f32.mrb[0].mxu0
  %v6060 = vpop.f32.mrb[0].mxu0
  %v6061 = vadd.f32 %v5324, %v6060
  %v6062 = vpop.f32.mrb[0].mxu0
  %6063 = vdwg.mxu0
  %v6064 = vpack.c.bf16 %v6053, %v6050
  %v6065 = vpack.c.bf16 %v6061, %v6058
  %6066 = vmatprep.subr.bf16.mxu0 %v5693
  %6067 = vmatpush1.bf16.msra.mxu0 %v5692
  %6068 = vmatprep.subr.bf16.mxu0 %v5695
  %6069 = vmatpush1.bf16.msra.mxu0 %v5694
  %6070 = vmatprep.subr.bf16.mxu0 %v5697
  %6071 = vmatpush1.bf16.msra.mxu0 %v5696
  %6072 = vmatprep.subr.bf16.mxu0 %v5699
  %6073 = vmatpush1.bf16.msra.mxu0 %v5698
  %6074 = vmatprep.subr.bf16.mxu0 %v5701
  %6075 = vmatpush1.bf16.msra.mxu0 %v5700
  %6076 = vmatprep.subr.bf16.mxu0 %v5703
  %6077 = vmatpush1.bf16.msra.mxu0 %v5702
  %6078 = vmatprep.subr.bf16.mxu0 %v5705
  %6079 = vmatpush1.bf16.msra.mxu0 %v5704
  %6080 = vmatprep.subr.bf16.mxu0 %v5707
  %6081 = vmatpush1.bf16.msra.mxu0 %v5706
  %6082 = vmatprep.subr.bf16.mxu0 0
  %6083 = vmatpush1.bf16.msra.mxu0 0
  %6084 = vmatprep.subr.bf16.mxu0 0
  %6085 = vmatpush1.bf16.msra.mxu0 0
  %6086 = vmatprep.subr.bf16.mxu0 0
  %6087 = vmatpush1.bf16.msra.mxu0 0
  %6088 = vmatprep.subr.bf16.mxu0 0
  %6089 = vmatpush1.bf16.msra.mxu0 0
  %6090 = vmatprep.subr.bf16.mxu0 0
  %6091 = vmatpush1.bf16.msra.mxu0 0
  %6092 = vmatprep.subr.bf16.mxu0 0
  %6093 = vmatpush1.bf16.msra.mxu0 0
  %6094 = vmatprep.subr.bf16.mxu0 0
  %6095 = vmatpush1.bf16.msra.mxu0 0
  %6096 = vmatprep.subr.bf16.mxu0 0
  %6097 = vmatpush1.bf16.msra.mxu0 0
  %6098 = vmatprep.mubr.bf16.mxu0 0
  %6099 = vmatmul.mubr.bf16.gmra.mrb[0].mxu0 %v6064
  %v6100 = vpop.f32.mrb[0].mxu0
  %v6101 = vadd.f32 0.0, %v6100
  %v6102 = vpop.f32.mrb[0].mxu0
  %v6103 = vadd.f32 0.0, %v6102
  %v6104 = vpop.f32.mrb[0].mxu0
  %v6105 = vadd.f32 0.0, %v6104
  %v6106 = vpop.f32.mrb[0].mxu0
  %v6107 = vadd.f32 0.0, %v6106
  %6108 = vmatprep.mubr.bf16.mxu0 0
  %6109 = vmatmul.mubr.bf16.gmra.mrb[0].mxu0 %v6065
  %v6110 = vpop.f32.mrb[0].mxu0
  %v6111 = vadd.f32 0.0, %v6110
  %v6112 = vpop.f32.mrb[0].mxu0
  %v6113 = vadd.f32 0.0, %v6112
  %v6114 = vpop.f32.mrb[0].mxu0
  %v6115 = vadd.f32 0.0, %v6114
  %v6116 = vpop.f32.mrb[0].mxu0
  %v6117 = vadd.f32 0.0, %v6116
  %6118 = vdwg.mxu0
  %v6119 = vadd.f32 %v5948, %v6101
  %v6120 = vadd.f32 %v5949, %v6103
  %v6121 = vadd.f32 %v5950, %v6105
  %v6122 = vadd.f32 %v5951, %v6107
  %v6123 = vadd.f32 %v5952, %v6111
  %v6124 = vadd.f32 %v5953, %v6113
  %v6125 = vadd.f32 %v5954, %v6115
  %v6126 = vadd.f32 %v5955, %v6117
  %6127 = vst [vmem:[%s67] sm:$0xff] %v6119
  %6128 = vst [vmem:[%s67 + $0x8] sm:$0xff] %v6120
  %6129 = vst [vmem:[%s67 + $0x10] sm:$0xff] %v6121
  %6130 = vst [vmem:[%s67 + $0x18] sm:$0xff] %v6122
  %6131 = vst [vmem:[%s67 + $0x20] sm:$0xff] %v6123
  %6132 = vst [vmem:[%s67 + $0x28] sm:$0xff] %v6124
  %6133 = vst [vmem:[%s67 + $0x30] sm:$0xff] %v6125
  %6134 = vst [vmem:[%s67 + $0x38] sm:$0xff] %v6126
  // Predicated region
  $region134: #{meva_demo_forward.1} parent=0 // pred_check
    _
  $region135: #{meva_demo_forward.1} parent=0 // pred_check_branch
    %6136 = sbr.rel (0) target = $region137
  $region136: #{meva_demo_forward.1} parent=0 // pred_region
    _
  $region137: #{meva_demo_forward.1} parent=0 // pred_fallthru
    _
  // Predicated region
  $region138: #{meva_demo_forward.1} parent=0 // pred_check
    _
  $region139: #{meva_demo_forward.1} parent=0 // pred_check_branch
    %6138 = sbr.rel (0) target = $region141
  $region140: #{meva_demo_forward.1} parent=0 // pred_region
    _
  $region141: #{meva_demo_forward.1} parent=0 // pred_fallthru
    _

</llo_original>
